<compile_context>
chip_gen: v7x
topology: tpu7x:2x2x1
jax: 0.10.0
libtpu: 0.0.40
codegen_flags: <defaults>
</compile_context>

<pallas_src>
import functools

import jax
import jax.numpy as jnp
from jax.experimental import pallas as pl
from jax.experimental.pallas import tpu as pltpu


def _fused_decoder_kernel(x_ref, w1_ref, b1_ref, w2_ref, b2_ref,
                          w3_ref, b3_ref, w4_ref, b4_ref, o_ref):
    """One batch-row block of: Linear->ReLU (x3) -> Linear, all weights resident."""
    # Layer 1: (tm, F) @ (F, H)
    h = jnp.dot(x_ref[...].astype(jnp.bfloat16), w1_ref[...],
                preferred_element_type=jnp.float32) + b1_ref[...]
    h = jnp.maximum(h, 0.0)
    # Layer 2: (tm, H) @ (H, H)
    h = jnp.dot(h.astype(jnp.bfloat16), w2_ref[...],
                preferred_element_type=jnp.float32) + b2_ref[...]
    h = jnp.maximum(h, 0.0)
    # Layer 3: (tm, H) @ (H, H)
    h = jnp.dot(h.astype(jnp.bfloat16), w3_ref[...],
                preferred_element_type=jnp.float32) + b3_ref[...]
    h = jnp.maximum(h, 0.0)
    # Final projection: (tm, H) @ (H, Npad), no activation, lane-dense store.
    out = jnp.dot(h.astype(jnp.bfloat16), w4_ref[...],
                  preferred_element_type=jnp.float32) + b4_ref[...]
    o_ref[...] = out.astype(o_ref.dtype)


def fused_decoder(x, w1, b1, w2, b2, w3, b3, w4, b4):
    """x: (M, F) f32, M % 8 == 0; w*: bf16 (in, out); b*: f32 (1, out).

    Returns (M, Npad) f32 where Npad is the lane-padded final width.
    """
    M, F = x.shape
    H = w1.shape[1]
    Np = w4.shape[1]

    # Tile only over batch rows; weight/bias blocks have constant index -> resident.
    if M % 256 == 0:
        tm = 256
    elif M % 128 == 0:
        tm = 128
    else:
        tm = M  # block == full dim is always legal
    grid = (M // tm,)

    return pl.pallas_call(
        _fused_decoder_kernel,
        out_shape=jax.ShapeDtypeStruct((M, Np), jnp.float32),
        grid_spec=pltpu.PrefetchScalarGridSpec(
            num_scalar_prefetch=0,
            grid=grid,
            in_specs=[
                pl.BlockSpec((tm, F), lambda i: (i, 0)),   # x rows
                pl.BlockSpec((F, H), lambda i: (0, 0)),    # W1 (resident)
                pl.BlockSpec((1, H), lambda i: (0, 0)),    # b1
                pl.BlockSpec((H, H), lambda i: (0, 0)),    # W2 (resident)
                pl.BlockSpec((1, H), lambda i: (0, 0)),    # b2
                pl.BlockSpec((H, H), lambda i: (0, 0)),    # W3 (resident)
                pl.BlockSpec((1, H), lambda i: (0, 0)),    # b3
                pl.BlockSpec((H, Np), lambda i: (0, 0)),   # W4 (resident, lane-padded)
                pl.BlockSpec((1, Np), lambda i: (0, 0)),   # b4
            ],
            out_specs=pl.BlockSpec((tm, Np), lambda i: (i, 0)),
        ),
        compiler_params=pltpu.CompilerParams(
            dimension_semantics=("parallel",),
        ),
    )(x, w1, b1, w2, b2, w3, b3, w4, b4)


def init_decoder_params(key, input_dim, feature_dim, hidden=1024):
    """f32 master params mirroring nn.Linear's U(-1/sqrt(fan_in), 1/sqrt(fan_in)).

    Weights are stored (in_features, out_features) so y = x @ W + b.
    """
    dims = [(feature_dim, hidden), (hidden, hidden), (hidden, hidden), (hidden, input_dim)]
    params = []
    for fan_in, fan_out in dims:
        key, kw, kb = jax.random.split(key, 3)
        bound = 1.0 / jnp.sqrt(jnp.float32(fan_in))
        w = jax.random.uniform(kw, (fan_in, fan_out), jnp.float32, -bound, bound)
        b = jax.random.uniform(kb, (fan_out,), jnp.float32, -bound, bound)
        params.append((w, b))
    return params


def prepare_decoder_params(params_f32, lane_multiple=128):
    """Kernel-side params: bf16 weights, f32 (1, n) biases; final layer zero-padded
    to a multiple of 128 output lanes for a lane-dense store."""
    prepared = []
    last = len(params_f32) - 1
    for idx, (w, b) in enumerate(params_f32):
        wk = w.astype(jnp.bfloat16)
        bk = b.reshape(1, -1).astype(jnp.float32)
        if idx == last:
            n = wk.shape[1]
            n_pad = ((n + lane_multiple - 1) // lane_multiple) * lane_multiple
            if n_pad != n:
                wk = jnp.pad(wk, ((0, 0), (0, n_pad - n)))
                bk = jnp.pad(bk, ((0, 0), (0, n_pad - n)))
        prepared.append((wk, bk))
    return tuple(prepared)


@functools.partial(jax.jit, static_argnames=("out_dim",))
def decoder_forward(x, kernel_params, *, out_dim):
    (w1, b1), (w2, b2), (w3, b3), (w4, b4) = kernel_params
    m = x.shape[0]
    m_pad = ((m + 7) // 8) * 8            # sublane-align batch rows
    if m_pad != m:
        x = jnp.pad(x, ((0, m_pad - m), (0, 0)))
    y = fused_decoder(x, w1, b1, w2, b2, w3, b3, w4, b4)
    return y[:m, :out_dim]


def _reference_forward(x, params_f32):
    """Pure-JAX reference using the same bf16-weight / f32-accumulate numerics."""
    h = x
    last = len(params_f32) - 1
    for idx, (w, b) in enumerate(params_f32):
        h = jnp.dot(h.astype(jnp.bfloat16), w.astype(jnp.bfloat16),
                    preferred_element_type=jnp.float32) + b
        if idx != last:
            h = jnp.maximum(h, 0.0)
        # Dropout(p=0.2) is identity in eval mode.
    return h


if __name__ == "__main__":
    # Small shapes consistent with the module: batch=8, feature_dim=32, input_dim=64.
    batch, feature_dim, input_dim = 8, 32, 64

    key = jax.random.PRNGKey(0)
    key, kx = jax.random.split(key)
    x = jax.random.normal(kx, (batch, feature_dim), dtype=jnp.float32)

    params = init_decoder_params(key, input_dim=input_dim, feature_dim=feature_dim)
    kernel_params = prepare_decoder_params(params)

    out = decoder_forward(x, kernel_params, out_dim=input_dim)
    out = jax.block_until_ready(out)
    assert out.shape == (batch, input_dim), out.shape

    ref = _reference_forward(x, params)
    assert jnp.allclose(out, ref, atol=2e-2, rtol=2e-2), float(jnp.max(jnp.abs(out - ref)))

    print("KERNEL_OK")
</pallas_src>

<mosaic_0001>
module attributes {stable_mosaic.version = 11 : i64} {
  func.func @_fused_decoder_kernel(%arg0: i32, %arg1: memref<8x32xf32, #tpu.memory_space<vmem>>, %arg2: memref<32x1024xbf16, #tpu.memory_space<vmem>>, %arg3: memref<1x1024xf32, #tpu.memory_space<vmem>>, %arg4: memref<1024x1024xbf16, #tpu.memory_space<vmem>>, %arg5: memref<1x1024xf32, #tpu.memory_space<vmem>>, %arg6: memref<1024x1024xbf16, #tpu.memory_space<vmem>>, %arg7: memref<1x1024xf32, #tpu.memory_space<vmem>>, %arg8: memref<1024x128xbf16, #tpu.memory_space<vmem>>, %arg9: memref<1x128xf32, #tpu.memory_space<vmem>>, %arg10: memref<8x128xf32, #tpu.memory_space<vmem>>) attributes {dimension_semantics = [#tpu.dimension_semantics<parallel>], iteration_bounds = array<i64: 1>, scalar_prefetch = 0 : i64, scratch_operands = 0 : i64, tpu.core_type = #tpu.core_type<tc>, window_params = [{transform_indices = @transform_0, window_bounds = array<i64: 8, 32>}, {pipeline_mode = #tpu.pipeline_mode<synchronous>, transform_indices = @transform_1, window_bounds = array<i64: 32, 1024>}, {pipeline_mode = #tpu.pipeline_mode<synchronous>, transform_indices = @transform_2, window_bounds = array<i64: 1, 1024>}, {pipeline_mode = #tpu.pipeline_mode<synchronous>, transform_indices = @transform_3, window_bounds = array<i64: 1024, 1024>}, {pipeline_mode = #tpu.pipeline_mode<synchronous>, transform_indices = @transform_4, window_bounds = array<i64: 1, 1024>}, {pipeline_mode = #tpu.pipeline_mode<synchronous>, transform_indices = @transform_5, window_bounds = array<i64: 1024, 1024>}, {pipeline_mode = #tpu.pipeline_mode<synchronous>, transform_indices = @transform_6, window_bounds = array<i64: 1, 1024>}, {pipeline_mode = #tpu.pipeline_mode<synchronous>, transform_indices = @transform_7, window_bounds = array<i64: 1024, 128>}, {pipeline_mode = #tpu.pipeline_mode<synchronous>, transform_indices = @transform_8, window_bounds = array<i64: 1, 128>}, {transform_indices = @transform_9, window_bounds = array<i64: 8, 128>}]} {
    %c0 = arith.constant 0 : index
    %c0_0 = arith.constant 0 : index
    %0 = vector.load %arg1[%c0, %c0_0] : memref<8x32xf32, #tpu.memory_space<vmem>>, vector<8x32xf32>
    %1 = arith.truncf %0 : vector<8x32xf32> to vector<8x32xbf16>
    %c0_1 = arith.constant 0 : index
    %c0_2 = arith.constant 0 : index
    %2 = vector.load %arg2[%c0_1, %c0_2] : memref<32x1024xbf16, #tpu.memory_space<vmem>>, vector<32x1024xbf16>
    %cst = arith.constant dense<0.000000e+00> : vector<8x1024xf32>
    %3 = tpu.matmul %1, %2, %cst {dimension_numbers = #tpu.dot_dimension_numbers<[1], [0], [0], [1], [0, 0, 1, 1], [], []>} : vector<8x32xbf16>, vector<32x1024xbf16>, vector<8x1024xf32> -> vector<8x1024xf32>
    %c0_3 = arith.constant 0 : index
    %c0_4 = arith.constant 0 : index
    %4 = vector.load %arg3[%c0_3, %c0_4] : memref<1x1024xf32, #tpu.memory_space<vmem>>, vector<1x1024xf32>
    %5 = vector.broadcast %4 : vector<1x1024xf32> to vector<8x1024xf32>
    %6 = arith.addf %3, %5 : vector<8x1024xf32>
    %cst_5 = arith.constant 0.000000e+00 : f32
    %7 = vector.broadcast %cst_5 : f32 to vector<8x1024xf32>
    %8 = arith.maximumf %6, %7 : vector<8x1024xf32>
    %9 = arith.truncf %8 : vector<8x1024xf32> to vector<8x1024xbf16>
    %c0_6 = arith.constant 0 : index
    %c0_7 = arith.constant 0 : index
    %10 = vector.load %arg4[%c0_6, %c0_7] : memref<1024x1024xbf16, #tpu.memory_space<vmem>>, vector<1024x1024xbf16>
    %cst_8 = arith.constant dense<0.000000e+00> : vector<8x1024xf32>
    %11 = tpu.matmul %9, %10, %cst_8 {dimension_numbers = #tpu.dot_dimension_numbers<[1], [0], [0], [1], [0, 0, 1, 1], [], []>} : vector<8x1024xbf16>, vector<1024x1024xbf16>, vector<8x1024xf32> -> vector<8x1024xf32>
    %c0_9 = arith.constant 0 : index
    %c0_10 = arith.constant 0 : index
    %12 = vector.load %arg5[%c0_9, %c0_10] : memref<1x1024xf32, #tpu.memory_space<vmem>>, vector<1x1024xf32>
    %13 = vector.broadcast %12 : vector<1x1024xf32> to vector<8x1024xf32>
    %14 = arith.addf %11, %13 : vector<8x1024xf32>
    %cst_11 = arith.constant 0.000000e+00 : f32
    %15 = vector.broadcast %cst_11 : f32 to vector<8x1024xf32>
    %16 = arith.maximumf %14, %15 : vector<8x1024xf32>
    %17 = arith.truncf %16 : vector<8x1024xf32> to vector<8x1024xbf16>
    %c0_12 = arith.constant 0 : index
    %c0_13 = arith.constant 0 : index
    %18 = vector.load %arg6[%c0_12, %c0_13] : memref<1024x1024xbf16, #tpu.memory_space<vmem>>, vector<1024x1024xbf16>
    %cst_14 = arith.constant dense<0.000000e+00> : vector<8x1024xf32>
    %19 = tpu.matmul %17, %18, %cst_14 {dimension_numbers = #tpu.dot_dimension_numbers<[1], [0], [0], [1], [0, 0, 1, 1], [], []>} : vector<8x1024xbf16>, vector<1024x1024xbf16>, vector<8x1024xf32> -> vector<8x1024xf32>
    %c0_15 = arith.constant 0 : index
    %c0_16 = arith.constant 0 : index
    %20 = vector.load %arg7[%c0_15, %c0_16] : memref<1x1024xf32, #tpu.memory_space<vmem>>, vector<1x1024xf32>
    %21 = vector.broadcast %20 : vector<1x1024xf32> to vector<8x1024xf32>
    %22 = arith.addf %19, %21 : vector<8x1024xf32>
    %cst_17 = arith.constant 0.000000e+00 : f32
    %23 = vector.broadcast %cst_17 : f32 to vector<8x1024xf32>
    %24 = arith.maximumf %22, %23 : vector<8x1024xf32>
    %25 = arith.truncf %24 : vector<8x1024xf32> to vector<8x1024xbf16>
    %c0_18 = arith.constant 0 : index
    %c0_19 = arith.constant 0 : index
    %26 = vector.load %arg8[%c0_18, %c0_19] : memref<1024x128xbf16, #tpu.memory_space<vmem>>, vector<1024x128xbf16>
    %cst_20 = arith.constant dense<0.000000e+00> : vector<8x128xf32>
    %27 = tpu.matmul %25, %26, %cst_20 {dimension_numbers = #tpu.dot_dimension_numbers<[1], [0], [0], [1], [0, 0, 1, 1], [], []>} : vector<8x1024xbf16>, vector<1024x128xbf16>, vector<8x128xf32> -> vector<8x128xf32>
    %c0_21 = arith.constant 0 : index
    %c0_22 = arith.constant 0 : index
    %28 = vector.load %arg9[%c0_21, %c0_22] : memref<1x128xf32, #tpu.memory_space<vmem>>, vector<1x128xf32>
    %29 = vector.broadcast %28 : vector<1x128xf32> to vector<8x128xf32>
    %30 = arith.addf %27, %29 : vector<8x128xf32>
    %c0_23 = arith.constant 0 : index
    %c0_24 = arith.constant 0 : index
    %31 = vector.load %arg10[%c0_23, %c0_24] : memref<8x128xf32, #tpu.memory_space<vmem>>, vector<8x128xf32>
    tpu.vector_store %arg10[%c0_23, %c0_24], %30 {strides = array<i32>} : memref<8x128xf32, #tpu.memory_space<vmem>>, vector<8x128xf32>,
    return
  }
  func.func @transform_0(%arg0: i32) -> (i32, i32) {
    %c0_i32 = arith.constant 0 : i32
    %c0_i32_0 = arith.constant 0 : i32
    return %arg0, %c0_i32 : i32, i32
  }
  func.func @transform_1(%arg0: i32) -> (i32, i32) {
    %c0_i32 = arith.constant 0 : i32
    %c0_i32_0 = arith.constant 0 : i32
    %c0_i32_1 = arith.constant 0 : i32
    return %c0_i32, %c0_i32_0 : i32, i32
  }
  func.func @transform_2(%arg0: i32) -> (i32, i32) {
    %c0_i32 = arith.constant 0 : i32
    %c0_i32_0 = arith.constant 0 : i32
    %c0_i32_1 = arith.constant 0 : i32
    return %c0_i32, %c0_i32_0 : i32, i32
  }
  func.func @transform_3(%arg0: i32) -> (i32, i32) {
    %c0_i32 = arith.constant 0 : i32
    %c0_i32_0 = arith.constant 0 : i32
    %c0_i32_1 = arith.constant 0 : i32
    return %c0_i32, %c0_i32_0 : i32, i32
  }
  func.func @transform_4(%arg0: i32) -> (i32, i32) {
    %c0_i32 = arith.constant 0 : i32
    %c0_i32_0 = arith.constant 0 : i32
    %c0_i32_1 = arith.constant 0 : i32
    return %c0_i32, %c0_i32_0 : i32, i32
  }
  func.func @transform_5(%arg0: i32) -> (i32, i32) {
    %c0_i32 = arith.constant 0 : i32
    %c0_i32_0 = arith.constant 0 : i32
    %c0_i32_1 = arith.constant 0 : i32
    return %c0_i32, %c0_i32_0 : i32, i32
  }
  func.func @transform_6(%arg0: i32) -> (i32, i32) {
    %c0_i32 = arith.constant 0 : i32
    %c0_i32_0 = arith.constant 0 : i32
    %c0_i32_1 = arith.constant 0 : i32
    return %c0_i32, %c0_i32_0 : i32, i32
  }
  func.func @transform_7(%arg0: i32) -> (i32, i32) {
    %c0_i32 = arith.constant 0 : i32
    %c0_i32_0 = arith.constant 0 : i32
    %c0_i32_1 = arith.constant 0 : i32
    return %c0_i32, %c0_i32_0 : i32, i32
  }
  func.func @transform_8(%arg0: i32) -> (i32, i32) {
    %c0_i32 = arith.constant 0 : i32
    %c0_i32_0 = arith.constant 0 : i32
    %c0_i32_1 = arith.constant 0 : i32
    return %c0_i32, %c0_i32_0 : i32, i32
  }
  func.func @transform_9(%arg0: i32) -> (i32, i32) {
    %c0_i32 = arith.constant 0 : i32
    %c0_i32_0 = arith.constant 0 : i32
    return %arg0, %c0_i32 : i32, i32
  }
}

</mosaic_0001>

<llo_original>
// kernel: decoder_forward.1
$region0: #{decoder_forward.1}
  #allocation0 [shape = 'u32[]', space=smem, size = 0x4, offset = 0x4, fixed_abs, tag = 'smem constant byte address 0x4 - core index']
  #allocation1 [shape = 'u32[144,128]{1,0:T(1,128)}', space=vmem, size = 0x12000, scoped, tag = 'internal scratch']
  %s0 = inlined_call_operand.hbm [shape: f32[8,32], index: 0, kind: input, shape index: {}]
  %s1 = inlined_call_operand.hbm [shape: bf16[32,1024], index: 1, kind: input, shape index: {}]
  %s2 = inlined_call_operand.hbm [shape: f32[1,1024], index: 2, kind: input, shape index: {}]
  %s3 = inlined_call_operand.hbm [shape: bf16[1024,1024], index: 3, kind: input, shape index: {}]
  %s4 = inlined_call_operand.hbm [shape: f32[1,1024], index: 4, kind: input, shape index: {}]
  %s5 = inlined_call_operand.hbm [shape: bf16[1024,1024], index: 5, kind: input, shape index: {}]
  %s6 = inlined_call_operand.hbm [shape: f32[1,1024], index: 6, kind: input, shape index: {}]
  %s7 = inlined_call_operand.hbm [shape: bf16[1024,128], index: 7, kind: input, shape index: {}]
  %s8 = inlined_call_operand.hbm [shape: f32[1,128], index: 8, kind: input, shape index: {}]
  %s9 = inlined_call_operand.hbm [shape: f32[8,128], index: 9, kind: output, shape index: {}]
  %s10 = sld [smem:[#allocation0]]
  $region82: #{decoder_forward.1} parent=0
    _
  %s12 = ssub.s32 1, %s10
  %s13 = scalar_select 0, %s12, %s10
  $region1: #{decoder_forward.1} parent=0
    #allocation2 [shape = 'u8[4096]{0}', space=vmem, size = 0x1000, scoped, tag = 'input window, operand 0, single buffered']
    #allocation3 [shape = 's32[1]{0}', space=sflag, size = 0x4, scoped, tag = 'scoped memory for decoder_forward.1']
    #allocation4 [shape = 's32[1]{0}', space=sflag, size = 0x4, scoped, tag = 'scoped memory for decoder_forward.1']
    #allocation5 [shape = 'u8[65536]{0}', space=vmem, size = 0x10000, scoped, tag = 'input window, operand 1, single buffered']
    #allocation6 [shape = 's32[1]{0}', space=sflag, size = 0x4, scoped, tag = 'scoped memory for decoder_forward.1']
    #allocation7 [shape = 'u8[4096]{0}', space=vmem, size = 0x1000, scoped, tag = 'input window, operand 2, single buffered']
    #allocation8 [shape = 'u8[2097152]{0}', space=vmem, size = 0x200000, scoped, tag = 'input window, operand 3, single buffered']
    #allocation9 [shape = 's32[1]{0}', space=sflag, size = 0x4, scoped, tag = 'scoped memory for decoder_forward.1']
    #allocation10 [shape = 'u8[4096]{0}', space=vmem, size = 0x1000, scoped, tag = 'input window, operand 4, single buffered']
    #allocation11 [shape = 'u8[2097152]{0}', space=vmem, size = 0x200000, scoped, tag = 'input window, operand 5, single buffered']
    #allocation12 [shape = 's32[1]{0}', space=sflag, size = 0x4, scoped, tag = 'scoped memory for decoder_forward.1']
    #allocation13 [shape = 'u8[4096]{0}', space=vmem, size = 0x1000, scoped, tag = 'input window, operand 6, single buffered']
    #allocation14 [shape = 'u8[262144]{0}', space=vmem, size = 0x40000, scoped, tag = 'input window, operand 7, single buffered']
    #allocation15 [shape = 's32[1]{0}', space=sflag, size = 0x4, scoped, tag = 'scoped memory for decoder_forward.1']
    #allocation16 [shape = 'u8[512]{0}', space=vmem, size = 0x400, scoped, tag = 'input window, operand 8, single buffered']
    #allocation17 [shape = 'u8[4096]{0}', space=vmem, size = 0x1000, scoped, tag = 'output window, operand 0, single buffered']
    %14 = vsyncpa [#allocation3], 0
    %15 = vsyncpa [#allocation6], 0
    %16 = vsyncpa [#allocation9], 0
    %17 = vsyncpa [#allocation12], 0
    %18 = vsyncpa [#allocation15], 0
    %19 = vsyncpa [#allocation4], 0
    // Predicated region
    $region2: #{decoder_forward.1} parent=1 // pred_check
      _
    $region3: #{decoder_forward.1} parent=1 // pred_check_branch
      %21 = sbr.rel (0) target = $region5
    $region4: #{decoder_forward.1} parent=1 // pred_region
      %s23 = ssub.s32 128, 128
      %24 = vsyncadd [#allocation3], %s23
      %s26 = sshll.u32 [#allocation2], 4
      %s27 = int_to_ptr.vmem [resolvable:$true] %s26
      %29 = dma.hbm_to_vmem [thread:$0]  %s0, 128, %s27, [#allocation3]
    $region5: #{decoder_forward.1} parent=1 // pred_fallthru
      _
    // Predicated region
    $region6: #{decoder_forward.1} parent=1 // pred_check
      _
    $region7: #{decoder_forward.1} parent=1 // pred_check_branch
      %31 = sbr.rel (0) target = $region9
    $region8: #{decoder_forward.1} parent=1 // pred_region
      %s33 = ssub.s32 2048, 2048
      %34 = vsyncadd [#allocation6], %s33
      %s35 = sshll.u32 [#allocation5], 4
      %s36 = int_to_ptr.vmem [resolvable:$true] %s35
      %41 = dma.hbm_to_vmem [thread:$0]  %s1, 2048, %s36, [#allocation6], 512, 512, 32
    $region9: #{decoder_forward.1} parent=1 // pred_fallthru
      _
    // Predicated region
    $region10: #{decoder_forward.1} parent=1 // pred_check
      _
    $region11: #{decoder_forward.1} parent=1 // pred_check_branch
      %43 = sbr.rel (0) target = $region13
    $region12: #{decoder_forward.1} parent=1 // pred_region
      %s45 = ssub.s32 128, 128
      %46 = vsyncadd [#allocation6], %s45
      %s48 = sshll.u32 [#allocation7], 4
      %s49 = int_to_ptr.vmem [resolvable:$true] %s48
      %51 = dma.hbm_to_vmem [thread:$0]  %s2, 128, %s49, [#allocation6]
    $region13: #{decoder_forward.1} parent=1 // pred_fallthru
      _
    // Predicated region
    $region14: #{decoder_forward.1} parent=1 // pred_check
      _
    $region15: #{decoder_forward.1} parent=1 // pred_check_branch
      %53 = sbr.rel (0) target = $region17
    $region16: #{decoder_forward.1} parent=1 // pred_region
      %s55 = ssub.s32 65536, 65536
      %56 = vsyncadd [#allocation9], %s55
      %s57 = sshll.u32 [#allocation8], 4
      %s58 = int_to_ptr.vmem [resolvable:$true] %s57
      %63 = dma.hbm_to_vmem [thread:$0]  %s3, 65536, %s58, [#allocation9], 512, 512, 32
    $region17: #{decoder_forward.1} parent=1 // pred_fallthru
      _
    // Predicated region
    $region18: #{decoder_forward.1} parent=1 // pred_check
      _
    $region19: #{decoder_forward.1} parent=1 // pred_check_branch
      %65 = sbr.rel (0) target = $region21
    $region20: #{decoder_forward.1} parent=1 // pred_region
      %s67 = ssub.s32 128, 128
      %68 = vsyncadd [#allocation9], %s67
      %s70 = sshll.u32 [#allocation10], 4
      %s71 = int_to_ptr.vmem [resolvable:$true] %s70
      %73 = dma.hbm_to_vmem [thread:$0]  %s4, 128, %s71, [#allocation9]
    $region21: #{decoder_forward.1} parent=1 // pred_fallthru
      _
    // Predicated region
    $region22: #{decoder_forward.1} parent=1 // pred_check
      _
    $region23: #{decoder_forward.1} parent=1 // pred_check_branch
      %75 = sbr.rel (0) target = $region25
    $region24: #{decoder_forward.1} parent=1 // pred_region
      %s77 = ssub.s32 65536, 65536
      %78 = vsyncadd [#allocation12], %s77
      %s79 = sshll.u32 [#allocation11], 4
      %s80 = int_to_ptr.vmem [resolvable:$true] %s79
      %85 = dma.hbm_to_vmem [thread:$0]  %s5, 65536, %s80, [#allocation12], 512, 512, 32
    $region25: #{decoder_forward.1} parent=1 // pred_fallthru
      _
    // Predicated region
    $region26: #{decoder_forward.1} parent=1 // pred_check
      _
    $region27: #{decoder_forward.1} parent=1 // pred_check_branch
      %87 = sbr.rel (0) target = $region29
    $region28: #{decoder_forward.1} parent=1 // pred_region
      %s89 = ssub.s32 128, 128
      %90 = vsyncadd [#allocation12], %s89
      %s92 = sshll.u32 [#allocation13], 4
      %s93 = int_to_ptr.vmem [resolvable:$true] %s92
      %95 = dma.hbm_to_vmem [thread:$0]  %s6, 128, %s93, [#allocation12]
    $region29: #{decoder_forward.1} parent=1 // pred_fallthru
      _
    // Predicated region
    $region30: #{decoder_forward.1} parent=1 // pred_check
      _
    $region31: #{decoder_forward.1} parent=1 // pred_check_branch
      %97 = sbr.rel (0) target = $region33
    $region32: #{decoder_forward.1} parent=1 // pred_region
      %s99 = ssub.s32 8192, 8192
      %100 = vsyncadd [#allocation15], %s99
      %s101 = sshll.u32 [#allocation14], 4
      %s102 = int_to_ptr.vmem [resolvable:$true] %s101
      %107 = dma.hbm_to_vmem [thread:$0]  %s7, 8192, %s102, [#allocation15], 64, 64, 4
    $region33: #{decoder_forward.1} parent=1 // pred_fallthru
      _
    // Predicated region
    $region34: #{decoder_forward.1} parent=1 // pred_check
      _
    $region35: #{decoder_forward.1} parent=1 // pred_check_branch
      %109 = sbr.rel (0) target = $region37
    $region36: #{decoder_forward.1} parent=1 // pred_region
      %s111 = ssub.s32 16, 16
      %112 = vsyncadd [#allocation15], %s111
      %s114 = sshll.u32 [#allocation16], 4
      %s115 = int_to_ptr.vmem [resolvable:$true] %s114
      %117 = dma.hbm_to_vmem [thread:$0]  %s8, 16, %s115, [#allocation15]
    $region37: #{decoder_forward.1} parent=1 // pred_fallthru
      _
    // Predicated region
    $region38: #{decoder_forward.1} parent=1 // pred_check
      _
    $region39: #{decoder_forward.1} parent=1 // pred_check_branch
      %119 = sbr.rel (0) target = $region41
    $region40: #{decoder_forward.1} parent=1 // pred_region
      %120 = dma.done [#allocation3], 128
    $region41: #{decoder_forward.1} parent=1 // pred_fallthru
      _
    // Predicated region
    $region42: #{decoder_forward.1} parent=1 // pred_check
      _
    $region43: #{decoder_forward.1} parent=1 // pred_check_branch
      %122 = sbr.rel (0) target = $region45
    $region44: #{decoder_forward.1} parent=1 // pred_region
      %123 = dma.done [#allocation6], 2048
    $region45: #{decoder_forward.1} parent=1 // pred_fallthru
      _
    // Predicated region
    $region46: #{decoder_forward.1} parent=1 // pred_check
      _
    $region47: #{decoder_forward.1} parent=1 // pred_check_branch
      %125 = sbr.rel (0) target = $region49
    $region48: #{decoder_forward.1} parent=1 // pred_region
      %126 = dma.done [#allocation6], 128
    $region49: #{decoder_forward.1} parent=1 // pred_fallthru
      _
    // Predicated region
    $region50: #{decoder_forward.1} parent=1 // pred_check
      _
    $region51: #{decoder_forward.1} parent=1 // pred_check_branch
      %128 = sbr.rel (0) target = $region53
    $region52: #{decoder_forward.1} parent=1 // pred_region
      %129 = dma.done [#allocation9], 65536
    $region53: #{decoder_forward.1} parent=1 // pred_fallthru
      _
    // Predicated region
    $region54: #{decoder_forward.1} parent=1 // pred_check
      _
    $region55: #{decoder_forward.1} parent=1 // pred_check_branch
      %131 = sbr.rel (0) target = $region57
    $region56: #{decoder_forward.1} parent=1 // pred_region
      %132 = dma.done [#allocation9], 128
    $region57: #{decoder_forward.1} parent=1 // pred_fallthru
      _
    // Predicated region
    $region58: #{decoder_forward.1} parent=1 // pred_check
      _
    $region59: #{decoder_forward.1} parent=1 // pred_check_branch
      %134 = sbr.rel (0) target = $region61
    $region60: #{decoder_forward.1} parent=1 // pred_region
      %135 = dma.done [#allocation12], 65536
    $region61: #{decoder_forward.1} parent=1 // pred_fallthru
      _
    // Predicated region
    $region62: #{decoder_forward.1} parent=1 // pred_check
      _
    $region63: #{decoder_forward.1} parent=1 // pred_check_branch
      %137 = sbr.rel (0) target = $region65
    $region64: #{decoder_forward.1} parent=1 // pred_region
      %138 = dma.done [#allocation12], 128
    $region65: #{decoder_forward.1} parent=1 // pred_fallthru
      _
    // Predicated region
    $region66: #{decoder_forward.1} parent=1 // pred_check
      _
    $region67: #{decoder_forward.1} parent=1 // pred_check_branch
      %140 = sbr.rel (0) target = $region69
    $region68: #{decoder_forward.1} parent=1 // pred_region
      %141 = dma.done [#allocation15], 8192
    $region69: #{decoder_forward.1} parent=1 // pred_fallthru
      _
    // Predicated region
    $region70: #{decoder_forward.1} parent=1 // pred_check
      _
    $region71: #{decoder_forward.1} parent=1 // pred_check_branch
      %143 = sbr.rel (0) target = $region73
    $region72: #{decoder_forward.1} parent=1 // pred_region
      %144 = dma.done [#allocation15], 16
    $region73: #{decoder_forward.1} parent=1 // pred_fallthru
      _
    %v146 = vld [vmem:[#allocation2] sm:$0xff]
    %v147 = vpack.c.bf16 %v146, %v146
    %v148 = vld [vmem:[#allocation5] sm:$0xff]
    %v149 = vld [vmem:[#allocation5 + $0x8] sm:$0xff]
    %v150 = vld [vmem:[#allocation5 + $0x10] sm:$0xff]
    %v151 = vld [vmem:[#allocation5 + $0x18] sm:$0xff]
    %v152 = vld [vmem:[#allocation5 + $0x20] sm:$0xff]
    %v153 = vld [vmem:[#allocation5 + $0x28] sm:$0xff]
    %v154 = vld [vmem:[#allocation5 + $0x30] sm:$0xff]
    %v155 = vld [vmem:[#allocation5 + $0x38] sm:$0xff]
    %v156 = vld [vmem:[#allocation5 + $0x40] sm:$0xff]
    %v157 = vld [vmem:[#allocation5 + $0x48] sm:$0xff]
    %v158 = vld [vmem:[#allocation5 + $0x50] sm:$0xff]
    %v159 = vld [vmem:[#allocation5 + $0x58] sm:$0xff]
    %v160 = vld [vmem:[#allocation5 + $0x60] sm:$0xff]
    %v161 = vld [vmem:[#allocation5 + $0x68] sm:$0xff]
    %v162 = vld [vmem:[#allocation5 + $0x70] sm:$0xff]
    %v163 = vld [vmem:[#allocation5 + $0x78] sm:$0xff]
    %v164 = vld [vmem:[#allocation7] sm:$0xff]
    %v166 = vlaneseq
    %v167 = vshrl.u32 %v166, 7
    %v168 = vsub.s32 0, %v167
    %v169 = vrot.slane %v164, %v168
    %v170 = vlaneseq
    %v171 = vshrl.u32 %v170, 7
    %v172 = vsub.s32 1, %v171
    %v173 = vrot.slane %v164, %v172
    %v174 = vlaneseq
    %v175 = vshrl.u32 %v174, 7
    %v176 = vsub.s32 2, %v175
    %v177 = vrot.slane %v164, %v176
    %v178 = vlaneseq
    %v179 = vshrl.u32 %v178, 7
    %v180 = vsub.s32 3, %v179
    %v181 = vrot.slane %v164, %v180
    %v182 = vlaneseq
    %v183 = vshrl.u32 %v182, 7
    %v184 = vsub.s32 4, %v183
    %v185 = vrot.slane %v164, %v184
    %v186 = vlaneseq
    %v187 = vshrl.u32 %v186, 7
    %v188 = vsub.s32 5, %v187
    %v189 = vrot.slane %v164, %v188
    %v190 = vlaneseq
    %v191 = vshrl.u32 %v190, 7
    %v192 = vsub.s32 6, %v191
    %v193 = vrot.slane %v164, %v192
    %v194 = vlaneseq
    %v195 = vshrl.u32 %v194, 7
    %v196 = vsub.s32 7, %v195
    %v197 = vrot.slane %v164, %v196
    %v222 = vunpack.c.l.b16 %v148
    %v223 = vunpack.c.h.b16 %v148
    %v224 = vunpack.c.l.b16 %v149
    %v225 = vunpack.c.h.b16 %v149
    %v226 = vunpack.c.l.b16 %v150
    %v227 = vunpack.c.h.b16 %v150
    %v228 = vunpack.c.l.b16 %v151
    %v229 = vunpack.c.h.b16 %v151
    %v230 = vunpack.c.l.b16 %v152
    %v231 = vunpack.c.h.b16 %v152
    %v232 = vunpack.c.l.b16 %v153
    %v233 = vunpack.c.h.b16 %v153
    %v234 = vunpack.c.l.b16 %v154
    %v235 = vunpack.c.h.b16 %v154
    %v236 = vunpack.c.l.b16 %v155
    %v237 = vunpack.c.h.b16 %v155
    %v238 = vunpack.c.l.b16 %v156
    %v239 = vunpack.c.h.b16 %v156
    %v240 = vunpack.c.l.b16 %v157
    %v241 = vunpack.c.h.b16 %v157
    %v242 = vunpack.c.l.b16 %v158
    %v243 = vunpack.c.h.b16 %v158
    %v244 = vunpack.c.l.b16 %v159
    %v245 = vunpack.c.h.b16 %v159
    %v246 = vunpack.c.l.b16 %v160
    %v247 = vunpack.c.h.b16 %v160
    %v248 = vunpack.c.l.b16 %v161
    %v249 = vunpack.c.h.b16 %v161
    %v250 = vunpack.c.l.b16 %v162
    %v251 = vunpack.c.h.b16 %v162
    %v252 = vunpack.c.l.b16 %v163
    %v253 = vunpack.c.h.b16 %v163
    %v254 = vpack.c.b16 %v230, %v222
    %v255 = vpack.c.b16 %v231, %v223
    %v256 = vpack.c.b16 %v232, %v224
    %v257 = vpack.c.b16 %v233, %v225
    %v258 = vpack.c.b16 %v234, %v226
    %v259 = vpack.c.b16 %v235, %v227
    %v260 = vpack.c.b16 %v236, %v228
    %v261 = vpack.c.b16 %v237, %v229
    %v262 = vpack.c.b16 %v246, %v238
    %v263 = vpack.c.b16 %v247, %v239
    %v264 = vpack.c.b16 %v248, %v240
    %v265 = vpack.c.b16 %v249, %v241
    %v266 = vpack.c.b16 %v250, %v242
    %v267 = vpack.c.b16 %v251, %v243
    %v268 = vpack.c.b16 %v252, %v244
    %v269 = vpack.c.b16 %v253, %v245
    %vm286 = vcmask 261120
    %v288 = vsel %vm286, %v147, 0
    %290 = vmatprep.subr.bf16.mxu0 %v255
    %291 = vmatpush1.bf16.msra.mxu0 %v254
    %292 = vmatprep.subr.bf16.mxu0 %v263
    %293 = vmatpush1.bf16.msra.mxu0 %v262
    %294 = vmatprep.subr.bf16.mxu0 0
    %295 = vmatpush1.bf16.msra.mxu0 0
    %296 = vmatprep.subr.bf16.mxu0 0
    %297 = vmatpush1.bf16.msra.mxu0 0
    %298 = vmatprep.subr.bf16.mxu0 0
    %299 = vmatpush1.bf16.msra.mxu0 0
    %300 = vmatprep.subr.bf16.mxu0 0
    %301 = vmatpush1.bf16.msra.mxu0 0
    %302 = vmatprep.subr.bf16.mxu0 0
    %303 = vmatpush1.bf16.msra.mxu0 0
    %304 = vmatprep.subr.bf16.mxu0 0
    %305 = vmatpush1.bf16.msra.mxu0 0
    %306 = vmatprep.subr.bf16.mxu0 0
    %307 = vmatpush1.bf16.msra.mxu0 0
    %308 = vmatprep.subr.bf16.mxu0 0
    %309 = vmatpush1.bf16.msra.mxu0 0
    %310 = vmatprep.subr.bf16.mxu0 0
    %311 = vmatpush1.bf16.msra.mxu0 0
    %312 = vmatprep.subr.bf16.mxu0 0
    %313 = vmatpush1.bf16.msra.mxu0 0
    %314 = vmatprep.subr.bf16.mxu0 0
    %315 = vmatpush1.bf16.msra.mxu0 0
    %316 = vmatprep.subr.bf16.mxu0 0
    %317 = vmatpush1.bf16.msra.mxu0 0
    %318 = vmatprep.subr.bf16.mxu0 0
    %319 = vmatpush1.bf16.msra.mxu0 0
    %320 = vmatprep.subr.bf16.mxu0 0
    %321 = vmatpush1.bf16.msra.mxu0 0
    %322 = vmatprep.mubr.bf16.mxu0 0
    %323 = vmatmul.mubr.bf16.gmra.mrb[0].mxu0 %v288
    %v324 = vpop.f32.mrb[0].mxu0
    %v325 = vadd.f32 %v169, %v324
    %v326 = vpop.f32.mrb[0].mxu0
    %v327 = vadd.f32 %v173, %v326
    %v328 = vpop.f32.mrb[0].mxu0
    %v329 = vpop.f32.mrb[0].mxu0
    %330 = vdwg.mxu0
    %331 = vmatprep.subr.bf16.mxu0 %v257
    %332 = vmatpush1.bf16.msra.mxu0 %v256
    %333 = vmatprep.subr.bf16.mxu0 %v265
    %334 = vmatpush1.bf16.msra.mxu0 %v264
    %335 = vmatprep.subr.bf16.mxu0 0
    %336 = vmatpush1.bf16.msra.mxu0 0
    %337 = vmatprep.subr.bf16.mxu0 0
    %338 = vmatpush1.bf16.msra.mxu0 0
    %339 = vmatprep.subr.bf16.mxu0 0
    %340 = vmatpush1.bf16.msra.mxu0 0
    %341 = vmatprep.subr.bf16.mxu0 0
    %342 = vmatpush1.bf16.msra.mxu0 0
    %343 = vmatprep.subr.bf16.mxu0 0
    %344 = vmatpush1.bf16.msra.mxu0 0
    %345 = vmatprep.subr.bf16.mxu0 0
    %346 = vmatpush1.bf16.msra.mxu0 0
    %347 = vmatprep.subr.bf16.mxu0 0
    %348 = vmatpush1.bf16.msra.mxu0 0
    %349 = vmatprep.subr.bf16.mxu0 0
    %350 = vmatpush1.bf16.msra.mxu0 0
    %351 = vmatprep.subr.bf16.mxu0 0
    %352 = vmatpush1.bf16.msra.mxu0 0
    %353 = vmatprep.subr.bf16.mxu0 0
    %354 = vmatpush1.bf16.msra.mxu0 0
    %355 = vmatprep.subr.bf16.mxu0 0
    %356 = vmatpush1.bf16.msra.mxu0 0
    %357 = vmatprep.subr.bf16.mxu0 0
    %358 = vmatpush1.bf16.msra.mxu0 0
    %359 = vmatprep.subr.bf16.mxu0 0
    %360 = vmatpush1.bf16.msra.mxu0 0
    %361 = vmatprep.subr.bf16.mxu0 0
    %362 = vmatpush1.bf16.msra.mxu0 0
    %363 = vmatprep.mubr.bf16.mxu0 0
    %364 = vmatmul.mubr.bf16.gmra.mrb[0].mxu0 %v288
    %v365 = vpop.f32.mrb[0].mxu0
    %v366 = vadd.f32 %v177, %v365
    %v367 = vpop.f32.mrb[0].mxu0
    %v368 = vadd.f32 %v181, %v367
    %v369 = vpop.f32.mrb[0].mxu0
    %v370 = vpop.f32.mrb[0].mxu0
    %371 = vdwg.mxu0
    %372 = vmatprep.subr.bf16.mxu0 %v259
    %373 = vmatpush1.bf16.msra.mxu0 %v258
    %374 = vmatprep.subr.bf16.mxu0 %v267
    %375 = vmatpush1.bf16.msra.mxu0 %v266
    %376 = vmatprep.subr.bf16.mxu0 0
    %377 = vmatpush1.bf16.msra.mxu0 0
    %378 = vmatprep.subr.bf16.mxu0 0
    %379 = vmatpush1.bf16.msra.mxu0 0
    %380 = vmatprep.subr.bf16.mxu0 0
    %381 = vmatpush1.bf16.msra.mxu0 0
    %382 = vmatprep.subr.bf16.mxu0 0
    %383 = vmatpush1.bf16.msra.mxu0 0
    %384 = vmatprep.subr.bf16.mxu0 0
    %385 = vmatpush1.bf16.msra.mxu0 0
    %386 = vmatprep.subr.bf16.mxu0 0
    %387 = vmatpush1.bf16.msra.mxu0 0
    %388 = vmatprep.subr.bf16.mxu0 0
    %389 = vmatpush1.bf16.msra.mxu0 0
    %390 = vmatprep.subr.bf16.mxu0 0
    %391 = vmatpush1.bf16.msra.mxu0 0
    %392 = vmatprep.subr.bf16.mxu0 0
    %393 = vmatpush1.bf16.msra.mxu0 0
    %394 = vmatprep.subr.bf16.mxu0 0
    %395 = vmatpush1.bf16.msra.mxu0 0
    %396 = vmatprep.subr.bf16.mxu0 0
    %397 = vmatpush1.bf16.msra.mxu0 0
    %398 = vmatprep.subr.bf16.mxu0 0
    %399 = vmatpush1.bf16.msra.mxu0 0
    %400 = vmatprep.subr.bf16.mxu0 0
    %401 = vmatpush1.bf16.msra.mxu0 0
    %402 = vmatprep.subr.bf16.mxu0 0
    %403 = vmatpush1.bf16.msra.mxu0 0
    %404 = vmatprep.mubr.bf16.mxu0 0
    %405 = vmatmul.mubr.bf16.gmra.mrb[0].mxu0 %v288
    %v406 = vpop.f32.mrb[0].mxu0
    %v407 = vadd.f32 %v185, %v406
    %v408 = vpop.f32.mrb[0].mxu0
    %v409 = vadd.f32 %v189, %v408
    %v410 = vpop.f32.mrb[0].mxu0
    %v411 = vpop.f32.mrb[0].mxu0
    %412 = vdwg.mxu0
    %413 = vmatprep.subr.bf16.mxu0 %v261
    %414 = vmatpush1.bf16.msra.mxu0 %v260
    %415 = vmatprep.subr.bf16.mxu0 %v269
    %416 = vmatpush1.bf16.msra.mxu0 %v268
    %417 = vmatprep.subr.bf16.mxu0 0
    %418 = vmatpush1.bf16.msra.mxu0 0
    %419 = vmatprep.subr.bf16.mxu0 0
    %420 = vmatpush1.bf16.msra.mxu0 0
    %421 = vmatprep.subr.bf16.mxu0 0
    %422 = vmatpush1.bf16.msra.mxu0 0
    %423 = vmatprep.subr.bf16.mxu0 0
    %424 = vmatpush1.bf16.msra.mxu0 0
    %425 = vmatprep.subr.bf16.mxu0 0
    %426 = vmatpush1.bf16.msra.mxu0 0
    %427 = vmatprep.subr.bf16.mxu0 0
    %428 = vmatpush1.bf16.msra.mxu0 0
    %429 = vmatprep.subr.bf16.mxu0 0
    %430 = vmatpush1.bf16.msra.mxu0 0
    %431 = vmatprep.subr.bf16.mxu0 0
    %432 = vmatpush1.bf16.msra.mxu0 0
    %433 = vmatprep.subr.bf16.mxu0 0
    %434 = vmatpush1.bf16.msra.mxu0 0
    %435 = vmatprep.subr.bf16.mxu0 0
    %436 = vmatpush1.bf16.msra.mxu0 0
    %437 = vmatprep.subr.bf16.mxu0 0
    %438 = vmatpush1.bf16.msra.mxu0 0
    %439 = vmatprep.subr.bf16.mxu0 0
    %440 = vmatpush1.bf16.msra.mxu0 0
    %441 = vmatprep.subr.bf16.mxu0 0
    %442 = vmatpush1.bf16.msra.mxu0 0
    %443 = vmatprep.subr.bf16.mxu0 0
    %444 = vmatpush1.bf16.msra.mxu0 0
    %445 = vmatprep.mubr.bf16.mxu0 0
    %446 = vmatmul.mubr.bf16.gmra.mrb[0].mxu0 %v288
    %v447 = vpop.f32.mrb[0].mxu0
    %v448 = vadd.f32 %v193, %v447
    %v449 = vpop.f32.mrb[0].mxu0
    %v450 = vadd.f32 %v197, %v449
    %v451 = vpop.f32.mrb[0].mxu0
    %v452 = vpop.f32.mrb[0].mxu0
    %453 = vdwg.mxu0
    %v454 = vmax.f32 %v325, 0.0
    %v455 = vmax.f32 %v327, 0.0
    %v456 = vmax.f32 %v366, 0.0
    %v457 = vmax.f32 %v368, 0.0
    %v458 = vmax.f32 %v407, 0.0
    %v459 = vmax.f32 %v409, 0.0
    %v460 = vmax.f32 %v448, 0.0
    %v461 = vmax.f32 %v450, 0.0
    %v462 = vpack.c.bf16 %v454, %v454
    %v463 = vpack.c.bf16 %v455, %v455
    %v464 = vpack.c.bf16 %v456, %v456
    %v465 = vpack.c.bf16 %v457, %v457
    %v466 = vpack.c.bf16 %v458, %v458
    %v467 = vpack.c.bf16 %v459, %v459
    %v468 = vpack.c.bf16 %v460, %v460
    %v469 = vpack.c.bf16 %v461, %v461
    %v470 = vld [vmem:[#allocation8] sm:$0xff]
    %v471 = vld [vmem:[#allocation8 + $0x8] sm:$0xff]
    %v472 = vld [vmem:[#allocation8 + $0x10] sm:$0xff]
    %v473 = vld [vmem:[#allocation8 + $0x18] sm:$0xff]
    %v474 = vld [vmem:[#allocation8 + $0x20] sm:$0xff]
    %v475 = vld [vmem:[#allocation8 + $0x28] sm:$0xff]
    %v476 = vld [vmem:[#allocation8 + $0x30] sm:$0xff]
    %v477 = vld [vmem:[#allocation8 + $0x38] sm:$0xff]
    %v478 = vld [vmem:[#allocation8 + $0x40] sm:$0xff]
    %v479 = vld [vmem:[#allocation8 + $0x48] sm:$0xff]
    %v480 = vld [vmem:[#allocation8 + $0x50] sm:$0xff]
    %v481 = vld [vmem:[#allocation8 + $0x58] sm:$0xff]
    %v482 = vld [vmem:[#allocation8 + $0x60] sm:$0xff]
    %v483 = vld [vmem:[#allocation8 + $0x68] sm:$0xff]
    %v484 = vld [vmem:[#allocation8 + $0x70] sm:$0xff]
    %v485 = vld [vmem:[#allocation8 + $0x78] sm:$0xff]
    %v486 = vld [vmem:[#allocation8 + $0x80] sm:$0xff]
    %v487 = vld [vmem:[#allocation8 + $0x88] sm:$0xff]
    %v488 = vld [vmem:[#allocation8 + $0x90] sm:$0xff]
    %v489 = vld [vmem:[#allocation8 + $0x98] sm:$0xff]
    %v490 = vld [vmem:[#allocation8 + $0xa0] sm:$0xff]
    %v491 = vld [vmem:[#allocation8 + $0xa8] sm:$0xff]
    %v492 = vld [vmem:[#allocation8 + $0xb0] sm:$0xff]
    %v493 = vld [vmem:[#allocation8 + $0xb8] sm:$0xff]
    %v494 = vld [vmem:[#allocation8 + $0xc0] sm:$0xff]
    %v495 = vld [vmem:[#allocation8 + $0xc8] sm:$0xff]
    %v496 = vld [vmem:[#allocation8 + $0xd0] sm:$0xff]
    %v497 = vld [vmem:[#allocation8 + $0xd8] sm:$0xff]
    %v498 = vld [vmem:[#allocation8 + $0xe0] sm:$0xff]
    %v499 = vld [vmem:[#allocation8 + $0xe8] sm:$0xff]
    %v500 = vld [vmem:[#allocation8 + $0xf0] sm:$0xff]
    %v501 = vld [vmem:[#allocation8 + $0xf8] sm:$0xff]
    %v502 = vld [vmem:[#allocation8 + $0x100] sm:$0xff]
    %v503 = vld [vmem:[#allocation8 + $0x108] sm:$0xff]
    %v504 = vld [vmem:[#allocation8 + $0x110] sm:$0xff]
    %v505 = vld [vmem:[#allocation8 + $0x118] sm:$0xff]
    %v506 = vld [vmem:[#allocation8 + $0x120] sm:$0xff]
    %v507 = vld [vmem:[#allocation8 + $0x128] sm:$0xff]
    %v508 = vld [vmem:[#allocation8 + $0x130] sm:$0xff]
    %v509 = vld [vmem:[#allocation8 + $0x138] sm:$0xff]
    %v510 = vld [vmem:[#allocation8 + $0x140] sm:$0xff]
    %v511 = vld [vmem:[#allocation8 + $0x148] sm:$0xff]
    %v512 = vld [vmem:[#allocation8 + $0x150] sm:$0xff]
    %v513 = vld [vmem:[#allocation8 + $0x158] sm:$0xff]
    %v514 = vld [vmem:[#allocation8 + $0x160] sm:$0xff]
    %v515 = vld [vmem:[#allocation8 + $0x168] sm:$0xff]
    %v516 = vld [vmem:[#allocation8 + $0x170] sm:$0xff]
    %v517 = vld [vmem:[#allocation8 + $0x178] sm:$0xff]
    %v518 = vld [vmem:[#allocation8 + $0x180] sm:$0xff]
    %v519 = vld [vmem:[#allocation8 + $0x188] sm:$0xff]
    %v520 = vld [vmem:[#allocation8 + $0x190] sm:$0xff]
    %v521 = vld [vmem:[#allocation8 + $0x198] sm:$0xff]
    %v522 = vld [vmem:[#allocation8 + $0x1a0] sm:$0xff]
    %v523 = vld [vmem:[#allocation8 + $0x1a8] sm:$0xff]
    %v524 = vld [vmem:[#allocation8 + $0x1b0] sm:$0xff]
    %v525 = vld [vmem:[#allocation8 + $0x1b8] sm:$0xff]
    %v526 = vld [vmem:[#allocation8 + $0x1c0] sm:$0xff]
    %v527 = vld [vmem:[#allocation8 + $0x1c8] sm:$0xff]
    %v528 = vld [vmem:[#allocation8 + $0x1d0] sm:$0xff]
    %v529 = vld [vmem:[#allocation8 + $0x1d8] sm:$0xff]
    %v530 = vld [vmem:[#allocation8 + $0x1e0] sm:$0xff]
    %v531 = vld [vmem:[#allocation8 + $0x1e8] sm:$0xff]
    %v532 = vld [vmem:[#allocation8 + $0x1f0] sm:$0xff]
    %v533 = vld [vmem:[#allocation8 + $0x1f8] sm:$0xff]
    %v534 = vld [vmem:[#allocation8 + $0x200] sm:$0xff]
    %v535 = vld [vmem:[#allocation8 + $0x208] sm:$0xff]
    %v536 = vld [vmem:[#allocation8 + $0x210] sm:$0xff]
    %v537 = vld [vmem:[#allocation8 + $0x218] sm:$0xff]
    %v538 = vld [vmem:[#allocation8 + $0x220] sm:$0xff]
    %v539 = vld [vmem:[#allocation8 + $0x228] sm:$0xff]
    %v540 = vld [vmem:[#allocation8 + $0x230] sm:$0xff]
    %v541 = vld [vmem:[#allocation8 + $0x238] sm:$0xff]
    %v542 = vld [vmem:[#allocation8 + $0x240] sm:$0xff]
    %v543 = vld [vmem:[#allocation8 + $0x248] sm:$0xff]
    %v544 = vld [vmem:[#allocation8 + $0x250] sm:$0xff]
    %v545 = vld [vmem:[#allocation8 + $0x258] sm:$0xff]
    %v546 = vld [vmem:[#allocation8 + $0x260] sm:$0xff]
    %v547 = vld [vmem:[#allocation8 + $0x268] sm:$0xff]
    %v548 = vld [vmem:[#allocation8 + $0x270] sm:$0xff]
    %v549 = vld [vmem:[#allocation8 + $0x278] sm:$0xff]
    %v550 = vld [vmem:[#allocation8 + $0x280] sm:$0xff]
    %v551 = vld [vmem:[#allocation8 + $0x288] sm:$0xff]
    %v552 = vld [vmem:[#allocation8 + $0x290] sm:$0xff]
    %v553 = vld [vmem:[#allocation8 + $0x298] sm:$0xff]
    %v554 = vld [vmem:[#allocation8 + $0x2a0] sm:$0xff]
    %v555 = vld [vmem:[#allocation8 + $0x2a8] sm:$0xff]
    %v556 = vld [vmem:[#allocation8 + $0x2b0] sm:$0xff]
    %v557 = vld [vmem:[#allocation8 + $0x2b8] sm:$0xff]
    %v558 = vld [vmem:[#allocation8 + $0x2c0] sm:$0xff]
    %v559 = vld [vmem:[#allocation8 + $0x2c8] sm:$0xff]
    %v560 = vld [vmem:[#allocation8 + $0x2d0] sm:$0xff]
    %v561 = vld [vmem:[#allocation8 + $0x2d8] sm:$0xff]
    %v562 = vld [vmem:[#allocation8 + $0x2e0] sm:$0xff]
    %v563 = vld [vmem:[#allocation8 + $0x2e8] sm:$0xff]
    %v564 = vld [vmem:[#allocation8 + $0x2f0] sm:$0xff]
    %v565 = vld [vmem:[#allocation8 + $0x2f8] sm:$0xff]
    %v566 = vld [vmem:[#allocation8 + $0x300] sm:$0xff]
    %v567 = vld [vmem:[#allocation8 + $0x308] sm:$0xff]
    %v568 = vld [vmem:[#allocation8 + $0x310] sm:$0xff]
    %v569 = vld [vmem:[#allocation8 + $0x318] sm:$0xff]
    %v570 = vld [vmem:[#allocation8 + $0x320] sm:$0xff]
    %v571 = vld [vmem:[#allocation8 + $0x328] sm:$0xff]
    %v572 = vld [vmem:[#allocation8 + $0x330] sm:$0xff]
    %v573 = vld [vmem:[#allocation8 + $0x338] sm:$0xff]
    %v574 = vld [vmem:[#allocation8 + $0x340] sm:$0xff]
    %v575 = vld [vmem:[#allocation8 + $0x348] sm:$0xff]
    %v576 = vld [vmem:[#allocation8 + $0x350] sm:$0xff]
    %v577 = vld [vmem:[#allocation8 + $0x358] sm:$0xff]
    %v578 = vld [vmem:[#allocation8 + $0x360] sm:$0xff]
    %v579 = vld [vmem:[#allocation8 + $0x368] sm:$0xff]
    %v580 = vld [vmem:[#allocation8 + $0x370] sm:$0xff]
    %v581 = vld [vmem:[#allocation8 + $0x378] sm:$0xff]
    %v582 = vld [vmem:[#allocation8 + $0x380] sm:$0xff]
    %v583 = vld [vmem:[#allocation8 + $0x388] sm:$0xff]
    %v584 = vld [vmem:[#allocation8 + $0x390] sm:$0xff]
    %v585 = vld [vmem:[#allocation8 + $0x398] sm:$0xff]
    %v586 = vld [vmem:[#allocation8 + $0x3a0] sm:$0xff]
    %v587 = vld [vmem:[#allocation8 + $0x3a8] sm:$0xff]
    %v588 = vld [vmem:[#allocation8 + $0x3b0] sm:$0xff]
    %v589 = vld [vmem:[#allocation8 + $0x3b8] sm:$0xff]
    %v590 = vld [vmem:[#allocation8 + $0x3c0] sm:$0xff]
    %v591 = vld [vmem:[#allocation8 + $0x3c8] sm:$0xff]
    %v592 = vld [vmem:[#allocation8 + $0x3d0] sm:$0xff]
    %v593 = vld [vmem:[#allocation8 + $0x3d8] sm:$0xff]
    %v594 = vld [vmem:[#allocation8 + $0x3e0] sm:$0xff]
    %v595 = vld [vmem:[#allocation8 + $0x3e8] sm:$0xff]
    %v596 = vld [vmem:[#allocation8 + $0x3f0] sm:$0xff]
    %v597 = vld [vmem:[#allocation8 + $0x3f8] sm:$0xff]
    %v598 = vld [vmem:[#allocation8 + $0x400] sm:$0xff]
    %v599 = vld [vmem:[#allocation8 + $0x408] sm:$0xff]
    %v600 = vld [vmem:[#allocation8 + $0x410] sm:$0xff]
    %v601 = vld [vmem:[#allocation8 + $0x418] sm:$0xff]
    %v602 = vld [vmem:[#allocation8 + $0x420] sm:$0xff]
    %v603 = vld [vmem:[#allocation8 + $0x428] sm:$0xff]
    %v604 = vld [vmem:[#allocation8 + $0x430] sm:$0xff]
    %v605 = vld [vmem:[#allocation8 + $0x438] sm:$0xff]
    %v606 = vld [vmem:[#allocation8 + $0x440] sm:$0xff]
    %v607 = vld [vmem:[#allocation8 + $0x448] sm:$0xff]
    %v608 = vld [vmem:[#allocation8 + $0x450] sm:$0xff]
    %v609 = vld [vmem:[#allocation8 + $0x458] sm:$0xff]
    %v610 = vld [vmem:[#allocation8 + $0x460] sm:$0xff]
    %v611 = vld [vmem:[#allocation8 + $0x468] sm:$0xff]
    %v612 = vld [vmem:[#allocation8 + $0x470] sm:$0xff]
    %v613 = vld [vmem:[#allocation8 + $0x478] sm:$0xff]
    %v614 = vld [vmem:[#allocation8 + $0x480] sm:$0xff]
    %v615 = vld [vmem:[#allocation8 + $0x488] sm:$0xff]
    %v616 = vld [vmem:[#allocation8 + $0x490] sm:$0xff]
    %v617 = vld [vmem:[#allocation8 + $0x498] sm:$0xff]
    %v618 = vld [vmem:[#allocation8 + $0x4a0] sm:$0xff]
    %v619 = vld [vmem:[#allocation8 + $0x4a8] sm:$0xff]
    %v620 = vld [vmem:[#allocation8 + $0x4b0] sm:$0xff]
    %v621 = vld [vmem:[#allocation8 + $0x4b8] sm:$0xff]
    %v622 = vld [vmem:[#allocation8 + $0x4c0] sm:$0xff]
    %v623 = vld [vmem:[#allocation8 + $0x4c8] sm:$0xff]
    %v624 = vld [vmem:[#allocation8 + $0x4d0] sm:$0xff]
    %v625 = vld [vmem:[#allocation8 + $0x4d8] sm:$0xff]
    %v626 = vld [vmem:[#allocation8 + $0x4e0] sm:$0xff]
    %v627 = vld [vmem:[#allocation8 + $0x4e8] sm:$0xff]
    %v628 = vld [vmem:[#allocation8 + $0x4f0] sm:$0xff]
    %v629 = vld [vmem:[#allocation8 + $0x4f8] sm:$0xff]
    %v630 = vld [vmem:[#allocation8 + $0x500] sm:$0xff]
    %v631 = vld [vmem:[#allocation8 + $0x508] sm:$0xff]
    %v632 = vld [vmem:[#allocation8 + $0x510] sm:$0xff]
    %v633 = vld [vmem:[#allocation8 + $0x518] sm:$0xff]
    %v634 = vld [vmem:[#allocation8 + $0x520] sm:$0xff]
    %v635 = vld [vmem:[#allocation8 + $0x528] sm:$0xff]
    %v636 = vld [vmem:[#allocation8 + $0x530] sm:$0xff]
    %v637 = vld [vmem:[#allocation8 + $0x538] sm:$0xff]
    %v638 = vld [vmem:[#allocation8 + $0x540] sm:$0xff]
    %v639 = vld [vmem:[#allocation8 + $0x548] sm:$0xff]
    %v640 = vld [vmem:[#allocation8 + $0x550] sm:$0xff]
    %v641 = vld [vmem:[#allocation8 + $0x558] sm:$0xff]
    %v642 = vld [vmem:[#allocation8 + $0x560] sm:$0xff]
    %v643 = vld [vmem:[#allocation8 + $0x568] sm:$0xff]
    %v644 = vld [vmem:[#allocation8 + $0x570] sm:$0xff]
    %v645 = vld [vmem:[#allocation8 + $0x578] sm:$0xff]
    %v646 = vld [vmem:[#allocation8 + $0x580] sm:$0xff]
    %v647 = vld [vmem:[#allocation8 + $0x588] sm:$0xff]
    %v648 = vld [vmem:[#allocation8 + $0x590] sm:$0xff]
    %v649 = vld [vmem:[#allocation8 + $0x598] sm:$0xff]
    %v650 = vld [vmem:[#allocation8 + $0x5a0] sm:$0xff]
    %v651 = vld [vmem:[#allocation8 + $0x5a8] sm:$0xff]
    %v652 = vld [vmem:[#allocation8 + $0x5b0] sm:$0xff]
    %v653 = vld [vmem:[#allocation8 + $0x5b8] sm:$0xff]
    %v654 = vld [vmem:[#allocation8 + $0x5c0] sm:$0xff]
    %v655 = vld [vmem:[#allocation8 + $0x5c8] sm:$0xff]
    %v656 = vld [vmem:[#allocation8 + $0x5d0] sm:$0xff]
    %v657 = vld [vmem:[#allocation8 + $0x5d8] sm:$0xff]
    %v658 = vld [vmem:[#allocation8 + $0x5e0] sm:$0xff]
    %v659 = vld [vmem:[#allocation8 + $0x5e8] sm:$0xff]
    %v660 = vld [vmem:[#allocation8 + $0x5f0] sm:$0xff]
    %v661 = vld [vmem:[#allocation8 + $0x5f8] sm:$0xff]
    %v662 = vld [vmem:[#allocation8 + $0x600] sm:$0xff]
    %v663 = vld [vmem:[#allocation8 + $0x608] sm:$0xff]
    %v664 = vld [vmem:[#allocation8 + $0x610] sm:$0xff]
    %v665 = vld [vmem:[#allocation8 + $0x618] sm:$0xff]
    %v666 = vld [vmem:[#allocation8 + $0x620] sm:$0xff]
    %v667 = vld [vmem:[#allocation8 + $0x628] sm:$0xff]
    %v668 = vld [vmem:[#allocation8 + $0x630] sm:$0xff]
    %v669 = vld [vmem:[#allocation8 + $0x638] sm:$0xff]
    %v670 = vld [vmem:[#allocation8 + $0x640] sm:$0xff]
    %v671 = vld [vmem:[#allocation8 + $0x648] sm:$0xff]
    %v672 = vld [vmem:[#allocation8 + $0x650] sm:$0xff]
    %v673 = vld [vmem:[#allocation8 + $0x658] sm:$0xff]
    %v674 = vld [vmem:[#allocation8 + $0x660] sm:$0xff]
    %v675 = vld [vmem:[#allocation8 + $0x668] sm:$0xff]
    %v676 = vld [vmem:[#allocation8 + $0x670] sm:$0xff]
    %v677 = vld [vmem:[#allocation8 + $0x678] sm:$0xff]
    %v678 = vld [vmem:[#allocation8 + $0x680] sm:$0xff]
    %v679 = vld [vmem:[#allocation8 + $0x688] sm:$0xff]
    %v680 = vld [vmem:[#allocation8 + $0x690] sm:$0xff]
    %v681 = vld [vmem:[#allocation8 + $0x698] sm:$0xff]
    %v682 = vld [vmem:[#allocation8 + $0x6a0] sm:$0xff]
    %v683 = vld [vmem:[#allocation8 + $0x6a8] sm:$0xff]
    %v684 = vld [vmem:[#allocation8 + $0x6b0] sm:$0xff]
    %v685 = vld [vmem:[#allocation8 + $0x6b8] sm:$0xff]
    %v686 = vld [vmem:[#allocation8 + $0x6c0] sm:$0xff]
    %v687 = vld [vmem:[#allocation8 + $0x6c8] sm:$0xff]
    %v688 = vld [vmem:[#allocation8 + $0x6d0] sm:$0xff]
    %v689 = vld [vmem:[#allocation8 + $0x6d8] sm:$0xff]
    %v690 = vld [vmem:[#allocation8 + $0x6e0] sm:$0xff]
    %v691 = vld [vmem:[#allocation8 + $0x6e8] sm:$0xff]
    %v692 = vld [vmem:[#allocation8 + $0x6f0] sm:$0xff]
    %v693 = vld [vmem:[#allocation8 + $0x6f8] sm:$0xff]
    %v694 = vld [vmem:[#allocation8 + $0x700] sm:$0xff]
    %v695 = vld [vmem:[#allocation8 + $0x708] sm:$0xff]
    %v696 = vld [vmem:[#allocation8 + $0x710] sm:$0xff]
    %v697 = vld [vmem:[#allocation8 + $0x718] sm:$0xff]
    %v698 = vld [vmem:[#allocation8 + $0x720] sm:$0xff]
    %v699 = vld [vmem:[#allocation8 + $0x728] sm:$0xff]
    %v700 = vld [vmem:[#allocation8 + $0x730] sm:$0xff]
    %v701 = vld [vmem:[#allocation8 + $0x738] sm:$0xff]
    %v702 = vld [vmem:[#allocation8 + $0x740] sm:$0xff]
    %v703 = vld [vmem:[#allocation8 + $0x748] sm:$0xff]
    %v704 = vld [vmem:[#allocation8 + $0x750] sm:$0xff]
    %v705 = vld [vmem:[#allocation8 + $0x758] sm:$0xff]
    %v706 = vld [vmem:[#allocation8 + $0x760] sm:$0xff]
    %v707 = vld [vmem:[#allocation8 + $0x768] sm:$0xff]
    %v708 = vld [vmem:[#allocation8 + $0x770] sm:$0xff]
    %v709 = vld [vmem:[#allocation8 + $0x778] sm:$0xff]
    %v710 = vld [vmem:[#allocation8 + $0x780] sm:$0xff]
    %v711 = vld [vmem:[#allocation8 + $0x788] sm:$0xff]
    %v712 = vld [vmem:[#allocation8 + $0x790] sm:$0xff]
    %v713 = vld [vmem:[#allocation8 + $0x798] sm:$0xff]
    %v714 = vld [vmem:[#allocation8 + $0x7a0] sm:$0xff]
    %v715 = vld [vmem:[#allocation8 + $0x7a8] sm:$0xff]
    %v716 = vld [vmem:[#allocation8 + $0x7b0] sm:$0xff]
    %v717 = vld [vmem:[#allocation8 + $0x7b8] sm:$0xff]
    %v718 = vld [vmem:[#allocation8 + $0x7c0] sm:$0xff]
    %v719 = vld [vmem:[#allocation8 + $0x7c8] sm:$0xff]
    %v720 = vld [vmem:[#allocation8 + $0x7d0] sm:$0xff]
    %v721 = vld [vmem:[#allocation8 + $0x7d8] sm:$0xff]
    %v722 = vld [vmem:[#allocation8 + $0x7e0] sm:$0xff]
    %v723 = vld [vmem:[#allocation8 + $0x7e8] sm:$0xff]
    %v724 = vld [vmem:[#allocation8 + $0x7f0] sm:$0xff]
    %v725 = vld [vmem:[#allocation8 + $0x7f8] sm:$0xff]
    %v726 = vld [vmem:[#allocation8 + $0x800] sm:$0xff]
    %v727 = vld [vmem:[#allocation8 + $0x808] sm:$0xff]
    %v728 = vld [vmem:[#allocation8 + $0x810] sm:$0xff]
    %v729 = vld [vmem:[#allocation8 + $0x818] sm:$0xff]
    %v730 = vld [vmem:[#allocation8 + $0x820] sm:$0xff]
    %v731 = vld [vmem:[#allocation8 + $0x828] sm:$0xff]
    %v732 = vld [vmem:[#allocation8 + $0x830] sm:$0xff]
    %v733 = vld [vmem:[#allocation8 + $0x838] sm:$0xff]
    %v734 = vld [vmem:[#allocation8 + $0x840] sm:$0xff]
    %v735 = vld [vmem:[#allocation8 + $0x848] sm:$0xff]
    %v736 = vld [vmem:[#allocation8 + $0x850] sm:$0xff]
    %v737 = vld [vmem:[#allocation8 + $0x858] sm:$0xff]
    %v738 = vld [vmem:[#allocation8 + $0x860] sm:$0xff]
    %v739 = vld [vmem:[#allocation8 + $0x868] sm:$0xff]
    %v740 = vld [vmem:[#allocation8 + $0x870] sm:$0xff]
    %v741 = vld [vmem:[#allocation8 + $0x878] sm:$0xff]
    %v742 = vld [vmem:[#allocation8 + $0x880] sm:$0xff]
    %v743 = vld [vmem:[#allocation8 + $0x888] sm:$0xff]
    %v744 = vld [vmem:[#allocation8 + $0x890] sm:$0xff]
    %v745 = vld [vmem:[#allocation8 + $0x898] sm:$0xff]
    %v746 = vld [vmem:[#allocation8 + $0x8a0] sm:$0xff]
    %v747 = vld [vmem:[#allocation8 + $0x8a8] sm:$0xff]
    %v748 = vld [vmem:[#allocation8 + $0x8b0] sm:$0xff]
    %v749 = vld [vmem:[#allocation8 + $0x8b8] sm:$0xff]
    %v750 = vld [vmem:[#allocation8 + $0x8c0] sm:$0xff]
    %v751 = vld [vmem:[#allocation8 + $0x8c8] sm:$0xff]
    %v752 = vld [vmem:[#allocation8 + $0x8d0] sm:$0xff]
    %v753 = vld [vmem:[#allocation8 + $0x8d8] sm:$0xff]
    %v754 = vld [vmem:[#allocation8 + $0x8e0] sm:$0xff]
    %v755 = vld [vmem:[#allocation8 + $0x8e8] sm:$0xff]
    %v756 = vld [vmem:[#allocation8 + $0x8f0] sm:$0xff]
    %v757 = vld [vmem:[#allocation8 + $0x8f8] sm:$0xff]
    %v758 = vld [vmem:[#allocation8 + $0x900] sm:$0xff]
    %v759 = vld [vmem:[#allocation8 + $0x908] sm:$0xff]
    %v760 = vld [vmem:[#allocation8 + $0x910] sm:$0xff]
    %v761 = vld [vmem:[#allocation8 + $0x918] sm:$0xff]
    %v762 = vld [vmem:[#allocation8 + $0x920] sm:$0xff]
    %v763 = vld [vmem:[#allocation8 + $0x928] sm:$0xff]
    %v764 = vld [vmem:[#allocation8 + $0x930] sm:$0xff]
    %v765 = vld [vmem:[#allocation8 + $0x938] sm:$0xff]
    %v766 = vld [vmem:[#allocation8 + $0x940] sm:$0xff]
    %v767 = vld [vmem:[#allocation8 + $0x948] sm:$0xff]
    %v768 = vld [vmem:[#allocation8 + $0x950] sm:$0xff]
    %v769 = vld [vmem:[#allocation8 + $0x958] sm:$0xff]
    %v770 = vld [vmem:[#allocation8 + $0x960] sm:$0xff]
    %v771 = vld [vmem:[#allocation8 + $0x968] sm:$0xff]
    %v772 = vld [vmem:[#allocation8 + $0x970] sm:$0xff]
    %v773 = vld [vmem:[#allocation8 + $0x978] sm:$0xff]
    %v774 = vld [vmem:[#allocation8 + $0x980] sm:$0xff]
    %v775 = vld [vmem:[#allocation8 + $0x988] sm:$0xff]
    %v776 = vld [vmem:[#allocation8 + $0x990] sm:$0xff]
    %v777 = vld [vmem:[#allocation8 + $0x998] sm:$0xff]
    %v778 = vld [vmem:[#allocation8 + $0x9a0] sm:$0xff]
    %v779 = vld [vmem:[#allocation8 + $0x9a8] sm:$0xff]
    %v780 = vld [vmem:[#allocation8 + $0x9b0] sm:$0xff]
    %v781 = vld [vmem:[#allocation8 + $0x9b8] sm:$0xff]
    %v782 = vld [vmem:[#allocation8 + $0x9c0] sm:$0xff]
    %v783 = vld [vmem:[#allocation8 + $0x9c8] sm:$0xff]
    %v784 = vld [vmem:[#allocation8 + $0x9d0] sm:$0xff]
    %v785 = vld [vmem:[#allocation8 + $0x9d8] sm:$0xff]
    %v786 = vld [vmem:[#allocation8 + $0x9e0] sm:$0xff]
    %v787 = vld [vmem:[#allocation8 + $0x9e8] sm:$0xff]
    %v788 = vld [vmem:[#allocation8 + $0x9f0] sm:$0xff]
    %v789 = vld [vmem:[#allocation8 + $0x9f8] sm:$0xff]
    %v790 = vld [vmem:[#allocation8 + $0xa00] sm:$0xff]
    %v791 = vld [vmem:[#allocation8 + $0xa08] sm:$0xff]
    %v792 = vld [vmem:[#allocation8 + $0xa10] sm:$0xff]
    %v793 = vld [vmem:[#allocation8 + $0xa18] sm:$0xff]
    %v794 = vld [vmem:[#allocation8 + $0xa20] sm:$0xff]
    %v795 = vld [vmem:[#allocation8 + $0xa28] sm:$0xff]
    %v796 = vld [vmem:[#allocation8 + $0xa30] sm:$0xff]
    %v797 = vld [vmem:[#allocation8 + $0xa38] sm:$0xff]
    %v798 = vld [vmem:[#allocation8 + $0xa40] sm:$0xff]
    %v799 = vld [vmem:[#allocation8 + $0xa48] sm:$0xff]
    %v800 = vld [vmem:[#allocation8 + $0xa50] sm:$0xff]
    %v801 = vld [vmem:[#allocation8 + $0xa58] sm:$0xff]
    %v802 = vld [vmem:[#allocation8 + $0xa60] sm:$0xff]
    %v803 = vld [vmem:[#allocation8 + $0xa68] sm:$0xff]
    %v804 = vld [vmem:[#allocation8 + $0xa70] sm:$0xff]
    %v805 = vld [vmem:[#allocation8 + $0xa78] sm:$0xff]
    %v806 = vld [vmem:[#allocation8 + $0xa80] sm:$0xff]
    %v807 = vld [vmem:[#allocation8 + $0xa88] sm:$0xff]
    %v808 = vld [vmem:[#allocation8 + $0xa90] sm:$0xff]
    %v809 = vld [vmem:[#allocation8 + $0xa98] sm:$0xff]
    %v810 = vld [vmem:[#allocation8 + $0xaa0] sm:$0xff]
    %v811 = vld [vmem:[#allocation8 + $0xaa8] sm:$0xff]
    %v812 = vld [vmem:[#allocation8 + $0xab0] sm:$0xff]
    %v813 = vld [vmem:[#allocation8 + $0xab8] sm:$0xff]
    %v814 = vld [vmem:[#allocation8 + $0xac0] sm:$0xff]
    %v815 = vld [vmem:[#allocation8 + $0xac8] sm:$0xff]
    %v816 = vld [vmem:[#allocation8 + $0xad0] sm:$0xff]
    %v817 = vld [vmem:[#allocation8 + $0xad8] sm:$0xff]
    %v818 = vld [vmem:[#allocation8 + $0xae0] sm:$0xff]
    %v819 = vld [vmem:[#allocation8 + $0xae8] sm:$0xff]
    %v820 = vld [vmem:[#allocation8 + $0xaf0] sm:$0xff]
    %v821 = vld [vmem:[#allocation8 + $0xaf8] sm:$0xff]
    %v822 = vld [vmem:[#allocation8 + $0xb00] sm:$0xff]
    %v823 = vld [vmem:[#allocation8 + $0xb08] sm:$0xff]
    %v824 = vld [vmem:[#allocation8 + $0xb10] sm:$0xff]
    %v825 = vld [vmem:[#allocation8 + $0xb18] sm:$0xff]
    %v826 = vld [vmem:[#allocation8 + $0xb20] sm:$0xff]
    %v827 = vld [vmem:[#allocation8 + $0xb28] sm:$0xff]
    %v828 = vld [vmem:[#allocation8 + $0xb30] sm:$0xff]
    %v829 = vld [vmem:[#allocation8 + $0xb38] sm:$0xff]
    %v830 = vld [vmem:[#allocation8 + $0xb40] sm:$0xff]
    %v831 = vld [vmem:[#allocation8 + $0xb48] sm:$0xff]
    %v832 = vld [vmem:[#allocation8 + $0xb50] sm:$0xff]
    %v833 = vld [vmem:[#allocation8 + $0xb58] sm:$0xff]
    %v834 = vld [vmem:[#allocation8 + $0xb60] sm:$0xff]
    %v835 = vld [vmem:[#allocation8 + $0xb68] sm:$0xff]
    %v836 = vld [vmem:[#allocation8 + $0xb70] sm:$0xff]
    %v837 = vld [vmem:[#allocation8 + $0xb78] sm:$0xff]
    %v838 = vld [vmem:[#allocation8 + $0xb80] sm:$0xff]
    %v839 = vld [vmem:[#allocation8 + $0xb88] sm:$0xff]
    %v840 = vld [vmem:[#allocation8 + $0xb90] sm:$0xff]
    %v841 = vld [vmem:[#allocation8 + $0xb98] sm:$0xff]
    %v842 = vld [vmem:[#allocation8 + $0xba0] sm:$0xff]
    %v843 = vld [vmem:[#allocation8 + $0xba8] sm:$0xff]
    %v844 = vld [vmem:[#allocation8 + $0xbb0] sm:$0xff]
    %v845 = vld [vmem:[#allocation8 + $0xbb8] sm:$0xff]
    %v846 = vld [vmem:[#allocation8 + $0xbc0] sm:$0xff]
    %v847 = vld [vmem:[#allocation8 + $0xbc8] sm:$0xff]
    %v848 = vld [vmem:[#allocation8 + $0xbd0] sm:$0xff]
    %v849 = vld [vmem:[#allocation8 + $0xbd8] sm:$0xff]
    %v850 = vld [vmem:[#allocation8 + $0xbe0] sm:$0xff]
    %v851 = vld [vmem:[#allocation8 + $0xbe8] sm:$0xff]
    %v852 = vld [vmem:[#allocation8 + $0xbf0] sm:$0xff]
    %v853 = vld [vmem:[#allocation8 + $0xbf8] sm:$0xff]
    %v854 = vld [vmem:[#allocation8 + $0xc00] sm:$0xff]
    %v855 = vld [vmem:[#allocation8 + $0xc08] sm:$0xff]
    %v856 = vld [vmem:[#allocation8 + $0xc10] sm:$0xff]
    %v857 = vld [vmem:[#allocation8 + $0xc18] sm:$0xff]
    %v858 = vld [vmem:[#allocation8 + $0xc20] sm:$0xff]
    %v859 = vld [vmem:[#allocation8 + $0xc28] sm:$0xff]
    %v860 = vld [vmem:[#allocation8 + $0xc30] sm:$0xff]
    %v861 = vld [vmem:[#allocation8 + $0xc38] sm:$0xff]
    %v862 = vld [vmem:[#allocation8 + $0xc40] sm:$0xff]
    %v863 = vld [vmem:[#allocation8 + $0xc48] sm:$0xff]
    %v864 = vld [vmem:[#allocation8 + $0xc50] sm:$0xff]
    %v865 = vld [vmem:[#allocation8 + $0xc58] sm:$0xff]
    %v866 = vld [vmem:[#allocation8 + $0xc60] sm:$0xff]
    %v867 = vld [vmem:[#allocation8 + $0xc68] sm:$0xff]
    %v868 = vld [vmem:[#allocation8 + $0xc70] sm:$0xff]
    %v869 = vld [vmem:[#allocation8 + $0xc78] sm:$0xff]
    %v870 = vld [vmem:[#allocation8 + $0xc80] sm:$0xff]
    %v871 = vld [vmem:[#allocation8 + $0xc88] sm:$0xff]
    %v872 = vld [vmem:[#allocation8 + $0xc90] sm:$0xff]
    %v873 = vld [vmem:[#allocation8 + $0xc98] sm:$0xff]
    %v874 = vld [vmem:[#allocation8 + $0xca0] sm:$0xff]
    %v875 = vld [vmem:[#allocation8 + $0xca8] sm:$0xff]
    %v876 = vld [vmem:[#allocation8 + $0xcb0] sm:$0xff]
    %v877 = vld [vmem:[#allocation8 + $0xcb8] sm:$0xff]
    %v878 = vld [vmem:[#allocation8 + $0xcc0] sm:$0xff]
    %v879 = vld [vmem:[#allocation8 + $0xcc8] sm:$0xff]
    %v880 = vld [vmem:[#allocation8 + $0xcd0] sm:$0xff]
    %v881 = vld [vmem:[#allocation8 + $0xcd8] sm:$0xff]
    %v882 = vld [vmem:[#allocation8 + $0xce0] sm:$0xff]
    %v883 = vld [vmem:[#allocation8 + $0xce8] sm:$0xff]
    %v884 = vld [vmem:[#allocation8 + $0xcf0] sm:$0xff]
    %v885 = vld [vmem:[#allocation8 + $0xcf8] sm:$0xff]
    %v886 = vld [vmem:[#allocation8 + $0xd00] sm:$0xff]
    %v887 = vld [vmem:[#allocation8 + $0xd08] sm:$0xff]
    %v888 = vld [vmem:[#allocation8 + $0xd10] sm:$0xff]
    %v889 = vld [vmem:[#allocation8 + $0xd18] sm:$0xff]
    %v890 = vld [vmem:[#allocation8 + $0xd20] sm:$0xff]
    %v891 = vld [vmem:[#allocation8 + $0xd28] sm:$0xff]
    %v892 = vld [vmem:[#allocation8 + $0xd30] sm:$0xff]
    %v893 = vld [vmem:[#allocation8 + $0xd38] sm:$0xff]
    %v894 = vld [vmem:[#allocation8 + $0xd40] sm:$0xff]
    %v895 = vld [vmem:[#allocation8 + $0xd48] sm:$0xff]
    %v896 = vld [vmem:[#allocation8 + $0xd50] sm:$0xff]
    %v897 = vld [vmem:[#allocation8 + $0xd58] sm:$0xff]
    %v898 = vld [vmem:[#allocation8 + $0xd60] sm:$0xff]
    %v899 = vld [vmem:[#allocation8 + $0xd68] sm:$0xff]
    %v900 = vld [vmem:[#allocation8 + $0xd70] sm:$0xff]
    %v901 = vld [vmem:[#allocation8 + $0xd78] sm:$0xff]
    %v902 = vld [vmem:[#allocation8 + $0xd80] sm:$0xff]
    %v903 = vld [vmem:[#allocation8 + $0xd88] sm:$0xff]
    %v904 = vld [vmem:[#allocation8 + $0xd90] sm:$0xff]
    %v905 = vld [vmem:[#allocation8 + $0xd98] sm:$0xff]
    %v906 = vld [vmem:[#allocation8 + $0xda0] sm:$0xff]
    %v907 = vld [vmem:[#allocation8 + $0xda8] sm:$0xff]
    %v908 = vld [vmem:[#allocation8 + $0xdb0] sm:$0xff]
    %v909 = vld [vmem:[#allocation8 + $0xdb8] sm:$0xff]
    %v910 = vld [vmem:[#allocation8 + $0xdc0] sm:$0xff]
    %v911 = vld [vmem:[#allocation8 + $0xdc8] sm:$0xff]
    %v912 = vld [vmem:[#allocation8 + $0xdd0] sm:$0xff]
    %v913 = vld [vmem:[#allocation8 + $0xdd8] sm:$0xff]
    %v914 = vld [vmem:[#allocation8 + $0xde0] sm:$0xff]
    %v915 = vld [vmem:[#allocation8 + $0xde8] sm:$0xff]
    %v916 = vld [vmem:[#allocation8 + $0xdf0] sm:$0xff]
    %v917 = vld [vmem:[#allocation8 + $0xdf8] sm:$0xff]
    %v918 = vld [vmem:[#allocation8 + $0xe00] sm:$0xff]
    %v919 = vld [vmem:[#allocation8 + $0xe08] sm:$0xff]
    %v920 = vld [vmem:[#allocation8 + $0xe10] sm:$0xff]
    %v921 = vld [vmem:[#allocation8 + $0xe18] sm:$0xff]
    %v922 = vld [vmem:[#allocation8 + $0xe20] sm:$0xff]
    %v923 = vld [vmem:[#allocation8 + $0xe28] sm:$0xff]
    %v924 = vld [vmem:[#allocation8 + $0xe30] sm:$0xff]
    %v925 = vld [vmem:[#allocation8 + $0xe38] sm:$0xff]
    %v926 = vld [vmem:[#allocation8 + $0xe40] sm:$0xff]
    %v927 = vld [vmem:[#allocation8 + $0xe48] sm:$0xff]
    %v928 = vld [vmem:[#allocation8 + $0xe50] sm:$0xff]
    %v929 = vld [vmem:[#allocation8 + $0xe58] sm:$0xff]
    %v930 = vld [vmem:[#allocation8 + $0xe60] sm:$0xff]
    %v931 = vld [vmem:[#allocation8 + $0xe68] sm:$0xff]
    %v932 = vld [vmem:[#allocation8 + $0xe70] sm:$0xff]
    %v933 = vld [vmem:[#allocation8 + $0xe78] sm:$0xff]
    %v934 = vld [vmem:[#allocation8 + $0xe80] sm:$0xff]
    %v935 = vld [vmem:[#allocation8 + $0xe88] sm:$0xff]
    %v936 = vld [vmem:[#allocation8 + $0xe90] sm:$0xff]
    %v937 = vld [vmem:[#allocation8 + $0xe98] sm:$0xff]
    %v938 = vld [vmem:[#allocation8 + $0xea0] sm:$0xff]
    %v939 = vld [vmem:[#allocation8 + $0xea8] sm:$0xff]
    %v940 = vld [vmem:[#allocation8 + $0xeb0] sm:$0xff]
    %v941 = vld [vmem:[#allocation8 + $0xeb8] sm:$0xff]
    %v942 = vld [vmem:[#allocation8 + $0xec0] sm:$0xff]
    %v943 = vld [vmem:[#allocation8 + $0xec8] sm:$0xff]
    %v944 = vld [vmem:[#allocation8 + $0xed0] sm:$0xff]
    %v945 = vld [vmem:[#allocation8 + $0xed8] sm:$0xff]
    %v946 = vld [vmem:[#allocation8 + $0xee0] sm:$0xff]
    %v947 = vld [vmem:[#allocation8 + $0xee8] sm:$0xff]
    %v948 = vld [vmem:[#allocation8 + $0xef0] sm:$0xff]
    %v949 = vld [vmem:[#allocation8 + $0xef8] sm:$0xff]
    %v950 = vld [vmem:[#allocation8 + $0xf00] sm:$0xff]
    %v951 = vld [vmem:[#allocation8 + $0xf08] sm:$0xff]
    %v952 = vld [vmem:[#allocation8 + $0xf10] sm:$0xff]
    %v953 = vld [vmem:[#allocation8 + $0xf18] sm:$0xff]
    %v954 = vld [vmem:[#allocation8 + $0xf20] sm:$0xff]
    %v955 = vld [vmem:[#allocation8 + $0xf28] sm:$0xff]
    %v956 = vld [vmem:[#allocation8 + $0xf30] sm:$0xff]
    %v957 = vld [vmem:[#allocation8 + $0xf38] sm:$0xff]
    %v958 = vld [vmem:[#allocation8 + $0xf40] sm:$0xff]
    %v959 = vld [vmem:[#allocation8 + $0xf48] sm:$0xff]
    %v960 = vld [vmem:[#allocation8 + $0xf50] sm:$0xff]
    %v961 = vld [vmem:[#allocation8 + $0xf58] sm:$0xff]
    %v962 = vld [vmem:[#allocation8 + $0xf60] sm:$0xff]
    %v963 = vld [vmem:[#allocation8 + $0xf68] sm:$0xff]
    %v964 = vld [vmem:[#allocation8 + $0xf70] sm:$0xff]
    %v965 = vld [vmem:[#allocation8 + $0xf78] sm:$0xff]
    %v966 = vld [vmem:[#allocation8 + $0xf80] sm:$0xff]
    %v967 = vld [vmem:[#allocation8 + $0xf88] sm:$0xff]
    %v968 = vld [vmem:[#allocation8 + $0xf90] sm:$0xff]
    %v969 = vld [vmem:[#allocation8 + $0xf98] sm:$0xff]
    %v970 = vld [vmem:[#allocation8 + $0xfa0] sm:$0xff]
    %v971 = vld [vmem:[#allocation8 + $0xfa8] sm:$0xff]
    %v972 = vld [vmem:[#allocation8 + $0xfb0] sm:$0xff]
    %v973 = vld [vmem:[#allocation8 + $0xfb8] sm:$0xff]
    %v974 = vld [vmem:[#allocation8 + $0xfc0] sm:$0xff]
    %v975 = vld [vmem:[#allocation8 + $0xfc8] sm:$0xff]
    %v976 = vld [vmem:[#allocation8 + $0xfd0] sm:$0xff]
    %v977 = vld [vmem:[#allocation8 + $0xfd8] sm:$0xff]
    %v978 = vld [vmem:[#allocation8 + $0xfe0] sm:$0xff]
    %v979 = vld [vmem:[#allocation8 + $0xfe8] sm:$0xff]
    %v980 = vld [vmem:[#allocation8 + $0xff0] sm:$0xff]
    %v981 = vld [vmem:[#allocation8 + $0xff8] sm:$0xff]
    %v982 = vld [vmem:[#allocation10] sm:$0xff]
    %v984 = vlaneseq
    %v985 = vshrl.u32 %v984, 7
    %v986 = vsub.s32 0, %v985
    %v987 = vrot.slane %v982, %v986
    %v988 = vlaneseq
    %v989 = vshrl.u32 %v988, 7
    %v990 = vsub.s32 1, %v989
    %v991 = vrot.slane %v982, %v990
    %v992 = vlaneseq
    %v993 = vshrl.u32 %v992, 7
    %v994 = vsub.s32 2, %v993
    %v995 = vrot.slane %v982, %v994
    %v996 = vlaneseq
    %v997 = vshrl.u32 %v996, 7
    %v998 = vsub.s32 3, %v997
    %v999 = vrot.slane %v982, %v998
    %v1000 = vlaneseq
    %v1001 = vshrl.u32 %v1000, 7
    %v1002 = vsub.s32 4, %v1001
    %v1003 = vrot.slane %v982, %v1002
    %v1004 = vlaneseq
    %v1005 = vshrl.u32 %v1004, 7
    %v1006 = vsub.s32 5, %v1005
    %v1007 = vrot.slane %v982, %v1006
    %v1008 = vlaneseq
    %v1009 = vshrl.u32 %v1008, 7
    %v1010 = vsub.s32 6, %v1009
    %v1011 = vrot.slane %v982, %v1010
    %v1012 = vlaneseq
    %v1013 = vshrl.u32 %v1012, 7
    %v1014 = vsub.s32 7, %v1013
    %v1015 = vrot.slane %v982, %v1014
    %v1536 = vunpack.c.l.b16 %v470
    %v1537 = vunpack.c.h.b16 %v470
    %v1538 = vunpack.c.l.b16 %v471
    %v1539 = vunpack.c.h.b16 %v471
    %v1540 = vunpack.c.l.b16 %v472
    %v1541 = vunpack.c.h.b16 %v472
    %v1542 = vunpack.c.l.b16 %v473
    %v1543 = vunpack.c.h.b16 %v473
    %v1544 = vunpack.c.l.b16 %v474
    %v1545 = vunpack.c.h.b16 %v474
    %v1546 = vunpack.c.l.b16 %v475
    %v1547 = vunpack.c.h.b16 %v475
    %v1548 = vunpack.c.l.b16 %v476
    %v1549 = vunpack.c.h.b16 %v476
    %v1550 = vunpack.c.l.b16 %v477
    %v1551 = vunpack.c.h.b16 %v477
    %v1552 = vunpack.c.l.b16 %v478
    %v1553 = vunpack.c.h.b16 %v478
    %v1554 = vunpack.c.l.b16 %v479
    %v1555 = vunpack.c.h.b16 %v479
    %v1556 = vunpack.c.l.b16 %v480
    %v1557 = vunpack.c.h.b16 %v480
    %v1558 = vunpack.c.l.b16 %v481
    %v1559 = vunpack.c.h.b16 %v481
    %v1560 = vunpack.c.l.b16 %v482
    %v1561 = vunpack.c.h.b16 %v482
    %v1562 = vunpack.c.l.b16 %v483
    %v1563 = vunpack.c.h.b16 %v483
    %v1564 = vunpack.c.l.b16 %v484
    %v1565 = vunpack.c.h.b16 %v484
    %v1566 = vunpack.c.l.b16 %v485
    %v1567 = vunpack.c.h.b16 %v485
    %v1568 = vunpack.c.l.b16 %v486
    %v1569 = vunpack.c.h.b16 %v486
    %v1570 = vunpack.c.l.b16 %v487
    %v1571 = vunpack.c.h.b16 %v487
    %v1572 = vunpack.c.l.b16 %v488
    %v1573 = vunpack.c.h.b16 %v488
    %v1574 = vunpack.c.l.b16 %v489
    %v1575 = vunpack.c.h.b16 %v489
    %v1576 = vunpack.c.l.b16 %v490
    %v1577 = vunpack.c.h.b16 %v490
    %v1578 = vunpack.c.l.b16 %v491
    %v1579 = vunpack.c.h.b16 %v491
    %v1580 = vunpack.c.l.b16 %v492
    %v1581 = vunpack.c.h.b16 %v492
    %v1582 = vunpack.c.l.b16 %v493
    %v1583 = vunpack.c.h.b16 %v493
    %v1584 = vunpack.c.l.b16 %v494
    %v1585 = vunpack.c.h.b16 %v494
    %v1586 = vunpack.c.l.b16 %v495
    %v1587 = vunpack.c.h.b16 %v495
    %v1588 = vunpack.c.l.b16 %v496
    %v1589 = vunpack.c.h.b16 %v496
    %v1590 = vunpack.c.l.b16 %v497
    %v1591 = vunpack.c.h.b16 %v497
    %v1592 = vunpack.c.l.b16 %v498
    %v1593 = vunpack.c.h.b16 %v498
    %v1594 = vunpack.c.l.b16 %v499
    %v1595 = vunpack.c.h.b16 %v499
    %v1596 = vunpack.c.l.b16 %v500
    %v1597 = vunpack.c.h.b16 %v500
    %v1598 = vunpack.c.l.b16 %v501
    %v1599 = vunpack.c.h.b16 %v501
    %v1600 = vunpack.c.l.b16 %v502
    %v1601 = vunpack.c.h.b16 %v502
    %v1602 = vunpack.c.l.b16 %v503
    %v1603 = vunpack.c.h.b16 %v503
    %v1604 = vunpack.c.l.b16 %v504
    %v1605 = vunpack.c.h.b16 %v504
    %v1606 = vunpack.c.l.b16 %v505
    %v1607 = vunpack.c.h.b16 %v505
    %v1608 = vunpack.c.l.b16 %v506
    %v1609 = vunpack.c.h.b16 %v506
    %v1610 = vunpack.c.l.b16 %v507
    %v1611 = vunpack.c.h.b16 %v507
    %v1612 = vunpack.c.l.b16 %v508
    %v1613 = vunpack.c.h.b16 %v508
    %v1614 = vunpack.c.l.b16 %v509
    %v1615 = vunpack.c.h.b16 %v509
    %v1616 = vunpack.c.l.b16 %v510
    %v1617 = vunpack.c.h.b16 %v510
    %v1618 = vunpack.c.l.b16 %v511
    %v1619 = vunpack.c.h.b16 %v511
    %v1620 = vunpack.c.l.b16 %v512
    %v1621 = vunpack.c.h.b16 %v512
    %v1622 = vunpack.c.l.b16 %v513
    %v1623 = vunpack.c.h.b16 %v513
    %v1624 = vunpack.c.l.b16 %v514
    %v1625 = vunpack.c.h.b16 %v514
    %v1626 = vunpack.c.l.b16 %v515
    %v1627 = vunpack.c.h.b16 %v515
    %v1628 = vunpack.c.l.b16 %v516
    %v1629 = vunpack.c.h.b16 %v516
    %v1630 = vunpack.c.l.b16 %v517
    %v1631 = vunpack.c.h.b16 %v517
    %v1632 = vunpack.c.l.b16 %v518
    %v1633 = vunpack.c.h.b16 %v518
    %v1634 = vunpack.c.l.b16 %v519
    %v1635 = vunpack.c.h.b16 %v519
    %v1636 = vunpack.c.l.b16 %v520
    %v1637 = vunpack.c.h.b16 %v520
    %v1638 = vunpack.c.l.b16 %v521
    %v1639 = vunpack.c.h.b16 %v521
    %v1640 = vunpack.c.l.b16 %v522
    %v1641 = vunpack.c.h.b16 %v522
    %v1642 = vunpack.c.l.b16 %v523
    %v1643 = vunpack.c.h.b16 %v523
    %v1644 = vunpack.c.l.b16 %v524
    %v1645 = vunpack.c.h.b16 %v524
    %v1646 = vunpack.c.l.b16 %v525
    %v1647 = vunpack.c.h.b16 %v525
    %v1648 = vunpack.c.l.b16 %v526
    %v1649 = vunpack.c.h.b16 %v526
    %v1650 = vunpack.c.l.b16 %v527
    %v1651 = vunpack.c.h.b16 %v527
    %v1652 = vunpack.c.l.b16 %v528
    %v1653 = vunpack.c.h.b16 %v528
    %v1654 = vunpack.c.l.b16 %v529
    %v1655 = vunpack.c.h.b16 %v529
    %v1656 = vunpack.c.l.b16 %v530
    %v1657 = vunpack.c.h.b16 %v530
    %v1658 = vunpack.c.l.b16 %v531
    %v1659 = vunpack.c.h.b16 %v531
    %v1660 = vunpack.c.l.b16 %v532
    %v1661 = vunpack.c.h.b16 %v532
    %v1662 = vunpack.c.l.b16 %v533
    %v1663 = vunpack.c.h.b16 %v533
    %v1664 = vunpack.c.l.b16 %v534
    %v1665 = vunpack.c.h.b16 %v534
    %v1666 = vunpack.c.l.b16 %v535
    %v1667 = vunpack.c.h.b16 %v535
    %v1668 = vunpack.c.l.b16 %v536
    %v1669 = vunpack.c.h.b16 %v536
    %v1670 = vunpack.c.l.b16 %v537
    %v1671 = vunpack.c.h.b16 %v537
    %v1672 = vunpack.c.l.b16 %v538
    %v1673 = vunpack.c.h.b16 %v538
    %v1674 = vunpack.c.l.b16 %v539
    %v1675 = vunpack.c.h.b16 %v539
    %v1676 = vunpack.c.l.b16 %v540
    %v1677 = vunpack.c.h.b16 %v540
    %v1678 = vunpack.c.l.b16 %v541
    %v1679 = vunpack.c.h.b16 %v541
    %v1680 = vunpack.c.l.b16 %v542
    %v1681 = vunpack.c.h.b16 %v542
    %v1682 = vunpack.c.l.b16 %v543
    %v1683 = vunpack.c.h.b16 %v543
    %v1684 = vunpack.c.l.b16 %v544
    %v1685 = vunpack.c.h.b16 %v544
    %v1686 = vunpack.c.l.b16 %v545
    %v1687 = vunpack.c.h.b16 %v545
    %v1688 = vunpack.c.l.b16 %v546
    %v1689 = vunpack.c.h.b16 %v546
    %v1690 = vunpack.c.l.b16 %v547
    %v1691 = vunpack.c.h.b16 %v547
    %v1692 = vunpack.c.l.b16 %v548
    %v1693 = vunpack.c.h.b16 %v548
    %v1694 = vunpack.c.l.b16 %v549
    %v1695 = vunpack.c.h.b16 %v549
    %v1696 = vunpack.c.l.b16 %v550
    %v1697 = vunpack.c.h.b16 %v550
    %v1698 = vunpack.c.l.b16 %v551
    %v1699 = vunpack.c.h.b16 %v551
    %v1700 = vunpack.c.l.b16 %v552
    %v1701 = vunpack.c.h.b16 %v552
    %v1702 = vunpack.c.l.b16 %v553
    %v1703 = vunpack.c.h.b16 %v553
    %v1704 = vunpack.c.l.b16 %v554
    %v1705 = vunpack.c.h.b16 %v554
    %v1706 = vunpack.c.l.b16 %v555
    %v1707 = vunpack.c.h.b16 %v555
    %v1708 = vunpack.c.l.b16 %v556
    %v1709 = vunpack.c.h.b16 %v556
    %v1710 = vunpack.c.l.b16 %v557
    %v1711 = vunpack.c.h.b16 %v557
    %v1712 = vunpack.c.l.b16 %v558
    %v1713 = vunpack.c.h.b16 %v558
    %v1714 = vunpack.c.l.b16 %v559
    %v1715 = vunpack.c.h.b16 %v559
    %v1716 = vunpack.c.l.b16 %v560
    %v1717 = vunpack.c.h.b16 %v560
    %v1718 = vunpack.c.l.b16 %v561
    %v1719 = vunpack.c.h.b16 %v561
    %v1720 = vunpack.c.l.b16 %v562
    %v1721 = vunpack.c.h.b16 %v562
    %v1722 = vunpack.c.l.b16 %v563
    %v1723 = vunpack.c.h.b16 %v563
    %v1724 = vunpack.c.l.b16 %v564
    %v1725 = vunpack.c.h.b16 %v564
    %v1726 = vunpack.c.l.b16 %v565
    %v1727 = vunpack.c.h.b16 %v565
    %v1728 = vunpack.c.l.b16 %v566
    %v1729 = vunpack.c.h.b16 %v566
    %v1730 = vunpack.c.l.b16 %v567
    %v1731 = vunpack.c.h.b16 %v567
    %v1732 = vunpack.c.l.b16 %v568
    %v1733 = vunpack.c.h.b16 %v568
    %v1734 = vunpack.c.l.b16 %v569
    %v1735 = vunpack.c.h.b16 %v569
    %v1736 = vunpack.c.l.b16 %v570
    %v1737 = vunpack.c.h.b16 %v570
    %v1738 = vunpack.c.l.b16 %v571
    %v1739 = vunpack.c.h.b16 %v571
    %v1740 = vunpack.c.l.b16 %v572
    %v1741 = vunpack.c.h.b16 %v572
    %v1742 = vunpack.c.l.b16 %v573
    %v1743 = vunpack.c.h.b16 %v573
    %v1744 = vunpack.c.l.b16 %v574
    %v1745 = vunpack.c.h.b16 %v574
    %v1746 = vunpack.c.l.b16 %v575
    %v1747 = vunpack.c.h.b16 %v575
    %v1748 = vunpack.c.l.b16 %v576
    %v1749 = vunpack.c.h.b16 %v576
    %v1750 = vunpack.c.l.b16 %v577
    %v1751 = vunpack.c.h.b16 %v577
    %v1752 = vunpack.c.l.b16 %v578
    %v1753 = vunpack.c.h.b16 %v578
    %v1754 = vunpack.c.l.b16 %v579
    %v1755 = vunpack.c.h.b16 %v579
    %v1756 = vunpack.c.l.b16 %v580
    %v1757 = vunpack.c.h.b16 %v580
    %v1758 = vunpack.c.l.b16 %v581
    %v1759 = vunpack.c.h.b16 %v581
    %v1760 = vunpack.c.l.b16 %v582
    %v1761 = vunpack.c.h.b16 %v582
    %v1762 = vunpack.c.l.b16 %v583
    %v1763 = vunpack.c.h.b16 %v583
    %v1764 = vunpack.c.l.b16 %v584
    %v1765 = vunpack.c.h.b16 %v584
    %v1766 = vunpack.c.l.b16 %v585
    %v1767 = vunpack.c.h.b16 %v585
    %v1768 = vunpack.c.l.b16 %v586
    %v1769 = vunpack.c.h.b16 %v586
    %v1770 = vunpack.c.l.b16 %v587
    %v1771 = vunpack.c.h.b16 %v587
    %v1772 = vunpack.c.l.b16 %v588
    %v1773 = vunpack.c.h.b16 %v588
    %v1774 = vunpack.c.l.b16 %v589
    %v1775 = vunpack.c.h.b16 %v589
    %v1776 = vunpack.c.l.b16 %v590
    %v1777 = vunpack.c.h.b16 %v590
    %v1778 = vunpack.c.l.b16 %v591
    %v1779 = vunpack.c.h.b16 %v591
    %v1780 = vunpack.c.l.b16 %v592
    %v1781 = vunpack.c.h.b16 %v592
    %v1782 = vunpack.c.l.b16 %v593
    %v1783 = vunpack.c.h.b16 %v593
    %v1784 = vunpack.c.l.b16 %v594
    %v1785 = vunpack.c.h.b16 %v594
    %v1786 = vunpack.c.l.b16 %v595
    %v1787 = vunpack.c.h.b16 %v595
    %v1788 = vunpack.c.l.b16 %v596
    %v1789 = vunpack.c.h.b16 %v596
    %v1790 = vunpack.c.l.b16 %v597
    %v1791 = vunpack.c.h.b16 %v597
    %v1792 = vunpack.c.l.b16 %v598
    %v1793 = vunpack.c.h.b16 %v598
    %v1794 = vunpack.c.l.b16 %v599
    %v1795 = vunpack.c.h.b16 %v599
    %v1796 = vunpack.c.l.b16 %v600
    %v1797 = vunpack.c.h.b16 %v600
    %v1798 = vunpack.c.l.b16 %v601
    %v1799 = vunpack.c.h.b16 %v601
    %v1800 = vunpack.c.l.b16 %v602
    %v1801 = vunpack.c.h.b16 %v602
    %v1802 = vunpack.c.l.b16 %v603
    %v1803 = vunpack.c.h.b16 %v603
    %v1804 = vunpack.c.l.b16 %v604
    %v1805 = vunpack.c.h.b16 %v604
    %v1806 = vunpack.c.l.b16 %v605
    %v1807 = vunpack.c.h.b16 %v605
    %v1808 = vunpack.c.l.b16 %v606
    %v1809 = vunpack.c.h.b16 %v606
    %v1810 = vunpack.c.l.b16 %v607
    %v1811 = vunpack.c.h.b16 %v607
    %v1812 = vunpack.c.l.b16 %v608
    %v1813 = vunpack.c.h.b16 %v608
    %v1814 = vunpack.c.l.b16 %v609
    %v1815 = vunpack.c.h.b16 %v609
    %v1816 = vunpack.c.l.b16 %v610
    %v1817 = vunpack.c.h.b16 %v610
    %v1818 = vunpack.c.l.b16 %v611
    %v1819 = vunpack.c.h.b16 %v611
    %v1820 = vunpack.c.l.b16 %v612
    %v1821 = vunpack.c.h.b16 %v612
    %v1822 = vunpack.c.l.b16 %v613
    %v1823 = vunpack.c.h.b16 %v613
    %v1824 = vunpack.c.l.b16 %v614
    %v1825 = vunpack.c.h.b16 %v614
    %v1826 = vunpack.c.l.b16 %v615
    %v1827 = vunpack.c.h.b16 %v615
    %v1828 = vunpack.c.l.b16 %v616
    %v1829 = vunpack.c.h.b16 %v616
    %v1830 = vunpack.c.l.b16 %v617
    %v1831 = vunpack.c.h.b16 %v617
    %v1832 = vunpack.c.l.b16 %v618
    %v1833 = vunpack.c.h.b16 %v618
    %v1834 = vunpack.c.l.b16 %v619
    %v1835 = vunpack.c.h.b16 %v619
    %v1836 = vunpack.c.l.b16 %v620
    %v1837 = vunpack.c.h.b16 %v620
    %v1838 = vunpack.c.l.b16 %v621
    %v1839 = vunpack.c.h.b16 %v621
    %v1840 = vunpack.c.l.b16 %v622
    %v1841 = vunpack.c.h.b16 %v622
    %v1842 = vunpack.c.l.b16 %v623
    %v1843 = vunpack.c.h.b16 %v623
    %v1844 = vunpack.c.l.b16 %v624
    %v1845 = vunpack.c.h.b16 %v624
    %v1846 = vunpack.c.l.b16 %v625
    %v1847 = vunpack.c.h.b16 %v625
    %v1848 = vunpack.c.l.b16 %v626
    %v1849 = vunpack.c.h.b16 %v626
    %v1850 = vunpack.c.l.b16 %v627
    %v1851 = vunpack.c.h.b16 %v627
    %v1852 = vunpack.c.l.b16 %v628
    %v1853 = vunpack.c.h.b16 %v628
    %v1854 = vunpack.c.l.b16 %v629
    %v1855 = vunpack.c.h.b16 %v629
    %v1856 = vunpack.c.l.b16 %v630
    %v1857 = vunpack.c.h.b16 %v630
    %v1858 = vunpack.c.l.b16 %v631
    %v1859 = vunpack.c.h.b16 %v631
    %v1860 = vunpack.c.l.b16 %v632
    %v1861 = vunpack.c.h.b16 %v632
    %v1862 = vunpack.c.l.b16 %v633
    %v1863 = vunpack.c.h.b16 %v633
    %v1864 = vunpack.c.l.b16 %v634
    %v1865 = vunpack.c.h.b16 %v634
    %v1866 = vunpack.c.l.b16 %v635
    %v1867 = vunpack.c.h.b16 %v635
    %v1868 = vunpack.c.l.b16 %v636
    %v1869 = vunpack.c.h.b16 %v636
    %v1870 = vunpack.c.l.b16 %v637
    %v1871 = vunpack.c.h.b16 %v637
    %v1872 = vunpack.c.l.b16 %v638
    %v1873 = vunpack.c.h.b16 %v638
    %v1874 = vunpack.c.l.b16 %v639
    %v1875 = vunpack.c.h.b16 %v639
    %v1876 = vunpack.c.l.b16 %v640
    %v1877 = vunpack.c.h.b16 %v640
    %v1878 = vunpack.c.l.b16 %v641
    %v1879 = vunpack.c.h.b16 %v641
    %v1880 = vunpack.c.l.b16 %v642
    %v1881 = vunpack.c.h.b16 %v642
    %v1882 = vunpack.c.l.b16 %v643
    %v1883 = vunpack.c.h.b16 %v643
    %v1884 = vunpack.c.l.b16 %v644
    %v1885 = vunpack.c.h.b16 %v644
    %v1886 = vunpack.c.l.b16 %v645
    %v1887 = vunpack.c.h.b16 %v645
    %v1888 = vunpack.c.l.b16 %v646
    %v1889 = vunpack.c.h.b16 %v646
    %v1890 = vunpack.c.l.b16 %v647
    %v1891 = vunpack.c.h.b16 %v647
    %v1892 = vunpack.c.l.b16 %v648
    %v1893 = vunpack.c.h.b16 %v648
    %v1894 = vunpack.c.l.b16 %v649
    %v1895 = vunpack.c.h.b16 %v649
    %v1896 = vunpack.c.l.b16 %v650
    %v1897 = vunpack.c.h.b16 %v650
    %v1898 = vunpack.c.l.b16 %v651
    %v1899 = vunpack.c.h.b16 %v651
    %v1900 = vunpack.c.l.b16 %v652
    %v1901 = vunpack.c.h.b16 %v652
    %v1902 = vunpack.c.l.b16 %v653
    %v1903 = vunpack.c.h.b16 %v653
    %v1904 = vunpack.c.l.b16 %v654
    %v1905 = vunpack.c.h.b16 %v654
    %v1906 = vunpack.c.l.b16 %v655
    %v1907 = vunpack.c.h.b16 %v655
    %v1908 = vunpack.c.l.b16 %v656
    %v1909 = vunpack.c.h.b16 %v656
    %v1910 = vunpack.c.l.b16 %v657
    %v1911 = vunpack.c.h.b16 %v657
    %v1912 = vunpack.c.l.b16 %v658
    %v1913 = vunpack.c.h.b16 %v658
    %v1914 = vunpack.c.l.b16 %v659
    %v1915 = vunpack.c.h.b16 %v659
    %v1916 = vunpack.c.l.b16 %v660
    %v1917 = vunpack.c.h.b16 %v660
    %v1918 = vunpack.c.l.b16 %v661
    %v1919 = vunpack.c.h.b16 %v661
    %v1920 = vunpack.c.l.b16 %v662
    %v1921 = vunpack.c.h.b16 %v662
    %v1922 = vunpack.c.l.b16 %v663
    %v1923 = vunpack.c.h.b16 %v663
    %v1924 = vunpack.c.l.b16 %v664
    %v1925 = vunpack.c.h.b16 %v664
    %v1926 = vunpack.c.l.b16 %v665
    %v1927 = vunpack.c.h.b16 %v665
    %v1928 = vunpack.c.l.b16 %v666
    %v1929 = vunpack.c.h.b16 %v666
    %v1930 = vunpack.c.l.b16 %v667
    %v1931 = vunpack.c.h.b16 %v667
    %v1932 = vunpack.c.l.b16 %v668
    %v1933 = vunpack.c.h.b16 %v668
    %v1934 = vunpack.c.l.b16 %v669
    %v1935 = vunpack.c.h.b16 %v669
    %v1936 = vunpack.c.l.b16 %v670
    %v1937 = vunpack.c.h.b16 %v670
    %v1938 = vunpack.c.l.b16 %v671
    %v1939 = vunpack.c.h.b16 %v671
    %v1940 = vunpack.c.l.b16 %v672
    %v1941 = vunpack.c.h.b16 %v672
    %v1942 = vunpack.c.l.b16 %v673
    %v1943 = vunpack.c.h.b16 %v673
    %v1944 = vunpack.c.l.b16 %v674
    %v1945 = vunpack.c.h.b16 %v674
    %v1946 = vunpack.c.l.b16 %v675
    %v1947 = vunpack.c.h.b16 %v675
    %v1948 = vunpack.c.l.b16 %v676
    %v1949 = vunpack.c.h.b16 %v676
    %v1950 = vunpack.c.l.b16 %v677
    %v1951 = vunpack.c.h.b16 %v677
    %v1952 = vunpack.c.l.b16 %v678
    %v1953 = vunpack.c.h.b16 %v678
    %v1954 = vunpack.c.l.b16 %v679
    %v1955 = vunpack.c.h.b16 %v679
    %v1956 = vunpack.c.l.b16 %v680
    %v1957 = vunpack.c.h.b16 %v680
    %v1958 = vunpack.c.l.b16 %v681
    %v1959 = vunpack.c.h.b16 %v681
    %v1960 = vunpack.c.l.b16 %v682
    %v1961 = vunpack.c.h.b16 %v682
    %v1962 = vunpack.c.l.b16 %v683
    %v1963 = vunpack.c.h.b16 %v683
    %v1964 = vunpack.c.l.b16 %v684
    %v1965 = vunpack.c.h.b16 %v684
    %v1966 = vunpack.c.l.b16 %v685
    %v1967 = vunpack.c.h.b16 %v685
    %v1968 = vunpack.c.l.b16 %v686
    %v1969 = vunpack.c.h.b16 %v686
    %v1970 = vunpack.c.l.b16 %v687
    %v1971 = vunpack.c.h.b16 %v687
    %v1972 = vunpack.c.l.b16 %v688
    %v1973 = vunpack.c.h.b16 %v688
    %v1974 = vunpack.c.l.b16 %v689
    %v1975 = vunpack.c.h.b16 %v689
    %v1976 = vunpack.c.l.b16 %v690
    %v1977 = vunpack.c.h.b16 %v690
    %v1978 = vunpack.c.l.b16 %v691
    %v1979 = vunpack.c.h.b16 %v691
    %v1980 = vunpack.c.l.b16 %v692
    %v1981 = vunpack.c.h.b16 %v692
    %v1982 = vunpack.c.l.b16 %v693
    %v1983 = vunpack.c.h.b16 %v693
    %v1984 = vunpack.c.l.b16 %v694
    %v1985 = vunpack.c.h.b16 %v694
    %v1986 = vunpack.c.l.b16 %v695
    %v1987 = vunpack.c.h.b16 %v695
    %v1988 = vunpack.c.l.b16 %v696
    %v1989 = vunpack.c.h.b16 %v696
    %v1990 = vunpack.c.l.b16 %v697
    %v1991 = vunpack.c.h.b16 %v697
    %v1992 = vunpack.c.l.b16 %v698
    %v1993 = vunpack.c.h.b16 %v698
    %v1994 = vunpack.c.l.b16 %v699
    %v1995 = vunpack.c.h.b16 %v699
    %v1996 = vunpack.c.l.b16 %v700
    %v1997 = vunpack.c.h.b16 %v700
    %v1998 = vunpack.c.l.b16 %v701
    %v1999 = vunpack.c.h.b16 %v701
    %v2000 = vunpack.c.l.b16 %v702
    %v2001 = vunpack.c.h.b16 %v702
    %v2002 = vunpack.c.l.b16 %v703
    %v2003 = vunpack.c.h.b16 %v703
    %v2004 = vunpack.c.l.b16 %v704
    %v2005 = vunpack.c.h.b16 %v704
    %v2006 = vunpack.c.l.b16 %v705
    %v2007 = vunpack.c.h.b16 %v705
    %v2008 = vunpack.c.l.b16 %v706
    %v2009 = vunpack.c.h.b16 %v706
    %v2010 = vunpack.c.l.b16 %v707
    %v2011 = vunpack.c.h.b16 %v707
    %v2012 = vunpack.c.l.b16 %v708
    %v2013 = vunpack.c.h.b16 %v708
    %v2014 = vunpack.c.l.b16 %v709
    %v2015 = vunpack.c.h.b16 %v709
    %v2016 = vunpack.c.l.b16 %v710
    %v2017 = vunpack.c.h.b16 %v710
    %v2018 = vunpack.c.l.b16 %v711
    %v2019 = vunpack.c.h.b16 %v711
    %v2020 = vunpack.c.l.b16 %v712
    %v2021 = vunpack.c.h.b16 %v712
    %v2022 = vunpack.c.l.b16 %v713
    %v2023 = vunpack.c.h.b16 %v713
    %v2024 = vunpack.c.l.b16 %v714
    %v2025 = vunpack.c.h.b16 %v714
    %v2026 = vunpack.c.l.b16 %v715
    %v2027 = vunpack.c.h.b16 %v715
    %v2028 = vunpack.c.l.b16 %v716
    %v2029 = vunpack.c.h.b16 %v716
    %v2030 = vunpack.c.l.b16 %v717
    %v2031 = vunpack.c.h.b16 %v717
    %v2032 = vunpack.c.l.b16 %v718
    %v2033 = vunpack.c.h.b16 %v718
    %v2034 = vunpack.c.l.b16 %v719
    %v2035 = vunpack.c.h.b16 %v719
    %v2036 = vunpack.c.l.b16 %v720
    %v2037 = vunpack.c.h.b16 %v720
    %v2038 = vunpack.c.l.b16 %v721
    %v2039 = vunpack.c.h.b16 %v721
    %v2040 = vunpack.c.l.b16 %v722
    %v2041 = vunpack.c.h.b16 %v722
    %v2042 = vunpack.c.l.b16 %v723
    %v2043 = vunpack.c.h.b16 %v723
    %v2044 = vunpack.c.l.b16 %v724
    %v2045 = vunpack.c.h.b16 %v724
    %v2046 = vunpack.c.l.b16 %v725
    %v2047 = vunpack.c.h.b16 %v725
    %v2048 = vunpack.c.l.b16 %v726
    %v2049 = vunpack.c.h.b16 %v726
    %v2050 = vunpack.c.l.b16 %v727
    %v2051 = vunpack.c.h.b16 %v727
    %v2052 = vunpack.c.l.b16 %v728
    %v2053 = vunpack.c.h.b16 %v728
    %v2054 = vunpack.c.l.b16 %v729
    %v2055 = vunpack.c.h.b16 %v729
    %v2056 = vunpack.c.l.b16 %v730
    %v2057 = vunpack.c.h.b16 %v730
    %v2058 = vunpack.c.l.b16 %v731
    %v2059 = vunpack.c.h.b16 %v731
    %v2060 = vunpack.c.l.b16 %v732
    %v2061 = vunpack.c.h.b16 %v732
    %v2062 = vunpack.c.l.b16 %v733
    %v2063 = vunpack.c.h.b16 %v733
    %v2064 = vunpack.c.l.b16 %v734
    %v2065 = vunpack.c.h.b16 %v734
    %v2066 = vunpack.c.l.b16 %v735
    %v2067 = vunpack.c.h.b16 %v735
    %v2068 = vunpack.c.l.b16 %v736
    %v2069 = vunpack.c.h.b16 %v736
    %v2070 = vunpack.c.l.b16 %v737
    %v2071 = vunpack.c.h.b16 %v737
    %v2072 = vunpack.c.l.b16 %v738
    %v2073 = vunpack.c.h.b16 %v738
    %v2074 = vunpack.c.l.b16 %v739
    %v2075 = vunpack.c.h.b16 %v739
    %v2076 = vunpack.c.l.b16 %v740
    %v2077 = vunpack.c.h.b16 %v740
    %v2078 = vunpack.c.l.b16 %v741
    %v2079 = vunpack.c.h.b16 %v741
    %v2080 = vunpack.c.l.b16 %v742
    %v2081 = vunpack.c.h.b16 %v742
    %v2082 = vunpack.c.l.b16 %v743
    %v2083 = vunpack.c.h.b16 %v743
    %v2084 = vunpack.c.l.b16 %v744
    %v2085 = vunpack.c.h.b16 %v744
    %v2086 = vunpack.c.l.b16 %v745
    %v2087 = vunpack.c.h.b16 %v745
    %v2088 = vunpack.c.l.b16 %v746
    %v2089 = vunpack.c.h.b16 %v746
    %v2090 = vunpack.c.l.b16 %v747
    %v2091 = vunpack.c.h.b16 %v747
    %v2092 = vunpack.c.l.b16 %v748
    %v2093 = vunpack.c.h.b16 %v748
    %v2094 = vunpack.c.l.b16 %v749
    %v2095 = vunpack.c.h.b16 %v749
    %v2096 = vunpack.c.l.b16 %v750
    %v2097 = vunpack.c.h.b16 %v750
    %v2098 = vunpack.c.l.b16 %v751
    %v2099 = vunpack.c.h.b16 %v751
    %v2100 = vunpack.c.l.b16 %v752
    %v2101 = vunpack.c.h.b16 %v752
    %v2102 = vunpack.c.l.b16 %v753
    %v2103 = vunpack.c.h.b16 %v753
    %v2104 = vunpack.c.l.b16 %v754
    %v2105 = vunpack.c.h.b16 %v754
    %v2106 = vunpack.c.l.b16 %v755
    %v2107 = vunpack.c.h.b16 %v755
    %v2108 = vunpack.c.l.b16 %v756
    %v2109 = vunpack.c.h.b16 %v756
    %v2110 = vunpack.c.l.b16 %v757
    %v2111 = vunpack.c.h.b16 %v757
    %v2112 = vunpack.c.l.b16 %v758
    %v2113 = vunpack.c.h.b16 %v758
    %v2114 = vunpack.c.l.b16 %v759
    %v2115 = vunpack.c.h.b16 %v759
    %v2116 = vunpack.c.l.b16 %v760
    %v2117 = vunpack.c.h.b16 %v760
    %v2118 = vunpack.c.l.b16 %v761
    %v2119 = vunpack.c.h.b16 %v761
    %v2120 = vunpack.c.l.b16 %v762
    %v2121 = vunpack.c.h.b16 %v762
    %v2122 = vunpack.c.l.b16 %v763
    %v2123 = vunpack.c.h.b16 %v763
    %v2124 = vunpack.c.l.b16 %v764
    %v2125 = vunpack.c.h.b16 %v764
    %v2126 = vunpack.c.l.b16 %v765
    %v2127 = vunpack.c.h.b16 %v765
    %v2128 = vunpack.c.l.b16 %v766
    %v2129 = vunpack.c.h.b16 %v766
    %v2130 = vunpack.c.l.b16 %v767
    %v2131 = vunpack.c.h.b16 %v767
    %v2132 = vunpack.c.l.b16 %v768
    %v2133 = vunpack.c.h.b16 %v768
    %v2134 = vunpack.c.l.b16 %v769
    %v2135 = vunpack.c.h.b16 %v769
    %v2136 = vunpack.c.l.b16 %v770
    %v2137 = vunpack.c.h.b16 %v770
    %v2138 = vunpack.c.l.b16 %v771
    %v2139 = vunpack.c.h.b16 %v771
    %v2140 = vunpack.c.l.b16 %v772
    %v2141 = vunpack.c.h.b16 %v772
    %v2142 = vunpack.c.l.b16 %v773
    %v2143 = vunpack.c.h.b16 %v773
    %v2144 = vunpack.c.l.b16 %v774
    %v2145 = vunpack.c.h.b16 %v774
    %v2146 = vunpack.c.l.b16 %v775
    %v2147 = vunpack.c.h.b16 %v775
    %v2148 = vunpack.c.l.b16 %v776
    %v2149 = vunpack.c.h.b16 %v776
    %v2150 = vunpack.c.l.b16 %v777
    %v2151 = vunpack.c.h.b16 %v777
    %v2152 = vunpack.c.l.b16 %v778
    %v2153 = vunpack.c.h.b16 %v778
    %v2154 = vunpack.c.l.b16 %v779
    %v2155 = vunpack.c.h.b16 %v779
    %v2156 = vunpack.c.l.b16 %v780
    %v2157 = vunpack.c.h.b16 %v780
    %v2158 = vunpack.c.l.b16 %v781
    %v2159 = vunpack.c.h.b16 %v781
    %v2160 = vunpack.c.l.b16 %v782
    %v2161 = vunpack.c.h.b16 %v782
    %v2162 = vunpack.c.l.b16 %v783
    %v2163 = vunpack.c.h.b16 %v783
    %v2164 = vunpack.c.l.b16 %v784
    %v2165 = vunpack.c.h.b16 %v784
    %v2166 = vunpack.c.l.b16 %v785
    %v2167 = vunpack.c.h.b16 %v785
    %v2168 = vunpack.c.l.b16 %v786
    %v2169 = vunpack.c.h.b16 %v786
    %v2170 = vunpack.c.l.b16 %v787
    %v2171 = vunpack.c.h.b16 %v787
    %v2172 = vunpack.c.l.b16 %v788
    %v2173 = vunpack.c.h.b16 %v788
    %v2174 = vunpack.c.l.b16 %v789
    %v2175 = vunpack.c.h.b16 %v789
    %v2176 = vunpack.c.l.b16 %v790
    %v2177 = vunpack.c.h.b16 %v790
    %v2178 = vunpack.c.l.b16 %v791
    %v2179 = vunpack.c.h.b16 %v791
    %v2180 = vunpack.c.l.b16 %v792
    %v2181 = vunpack.c.h.b16 %v792
    %v2182 = vunpack.c.l.b16 %v793
    %v2183 = vunpack.c.h.b16 %v793
    %v2184 = vunpack.c.l.b16 %v794
    %v2185 = vunpack.c.h.b16 %v794
    %v2186 = vunpack.c.l.b16 %v795
    %v2187 = vunpack.c.h.b16 %v795
    %v2188 = vunpack.c.l.b16 %v796
    %v2189 = vunpack.c.h.b16 %v796
    %v2190 = vunpack.c.l.b16 %v797
    %v2191 = vunpack.c.h.b16 %v797
    %v2192 = vunpack.c.l.b16 %v798
    %v2193 = vunpack.c.h.b16 %v798
    %v2194 = vunpack.c.l.b16 %v799
    %v2195 = vunpack.c.h.b16 %v799
    %v2196 = vunpack.c.l.b16 %v800
    %v2197 = vunpack.c.h.b16 %v800
    %v2198 = vunpack.c.l.b16 %v801
    %v2199 = vunpack.c.h.b16 %v801
    %v2200 = vunpack.c.l.b16 %v802
    %v2201 = vunpack.c.h.b16 %v802
    %v2202 = vunpack.c.l.b16 %v803
    %v2203 = vunpack.c.h.b16 %v803
    %v2204 = vunpack.c.l.b16 %v804
    %v2205 = vunpack.c.h.b16 %v804
    %v2206 = vunpack.c.l.b16 %v805
    %v2207 = vunpack.c.h.b16 %v805
    %v2208 = vunpack.c.l.b16 %v806
    %v2209 = vunpack.c.h.b16 %v806
    %v2210 = vunpack.c.l.b16 %v807
    %v2211 = vunpack.c.h.b16 %v807
    %v2212 = vunpack.c.l.b16 %v808
    %v2213 = vunpack.c.h.b16 %v808
    %v2214 = vunpack.c.l.b16 %v809
    %v2215 = vunpack.c.h.b16 %v809
    %v2216 = vunpack.c.l.b16 %v810
    %v2217 = vunpack.c.h.b16 %v810
    %v2218 = vunpack.c.l.b16 %v811
    %v2219 = vunpack.c.h.b16 %v811
    %v2220 = vunpack.c.l.b16 %v812
    %v2221 = vunpack.c.h.b16 %v812
    %v2222 = vunpack.c.l.b16 %v813
    %v2223 = vunpack.c.h.b16 %v813
    %v2224 = vunpack.c.l.b16 %v814
    %v2225 = vunpack.c.h.b16 %v814
    %v2226 = vunpack.c.l.b16 %v815
    %v2227 = vunpack.c.h.b16 %v815
    %v2228 = vunpack.c.l.b16 %v816
    %v2229 = vunpack.c.h.b16 %v816
    %v2230 = vunpack.c.l.b16 %v817
    %v2231 = vunpack.c.h.b16 %v817
    %v2232 = vunpack.c.l.b16 %v818
    %v2233 = vunpack.c.h.b16 %v818
    %v2234 = vunpack.c.l.b16 %v819
    %v2235 = vunpack.c.h.b16 %v819
    %v2236 = vunpack.c.l.b16 %v820
    %v2237 = vunpack.c.h.b16 %v820
    %v2238 = vunpack.c.l.b16 %v821
    %v2239 = vunpack.c.h.b16 %v821
    %v2240 = vunpack.c.l.b16 %v822
    %v2241 = vunpack.c.h.b16 %v822
    %v2242 = vunpack.c.l.b16 %v823
    %v2243 = vunpack.c.h.b16 %v823
    %v2244 = vunpack.c.l.b16 %v824
    %v2245 = vunpack.c.h.b16 %v824
    %v2246 = vunpack.c.l.b16 %v825
    %v2247 = vunpack.c.h.b16 %v825
    %v2248 = vunpack.c.l.b16 %v826
    %v2249 = vunpack.c.h.b16 %v826
    %v2250 = vunpack.c.l.b16 %v827
    %v2251 = vunpack.c.h.b16 %v827
    %v2252 = vunpack.c.l.b16 %v828
    %v2253 = vunpack.c.h.b16 %v828
    %v2254 = vunpack.c.l.b16 %v829
    %v2255 = vunpack.c.h.b16 %v829
    %v2256 = vunpack.c.l.b16 %v830
    %v2257 = vunpack.c.h.b16 %v830
    %v2258 = vunpack.c.l.b16 %v831
    %v2259 = vunpack.c.h.b16 %v831
    %v2260 = vunpack.c.l.b16 %v832
    %v2261 = vunpack.c.h.b16 %v832
    %v2262 = vunpack.c.l.b16 %v833
    %v2263 = vunpack.c.h.b16 %v833
    %v2264 = vunpack.c.l.b16 %v834
    %v2265 = vunpack.c.h.b16 %v834
    %v2266 = vunpack.c.l.b16 %v835
    %v2267 = vunpack.c.h.b16 %v835
    %v2268 = vunpack.c.l.b16 %v836
    %v2269 = vunpack.c.h.b16 %v836
    %v2270 = vunpack.c.l.b16 %v837
    %v2271 = vunpack.c.h.b16 %v837
    %v2272 = vunpack.c.l.b16 %v838
    %v2273 = vunpack.c.h.b16 %v838
    %v2274 = vunpack.c.l.b16 %v839
    %v2275 = vunpack.c.h.b16 %v839
    %v2276 = vunpack.c.l.b16 %v840
    %v2277 = vunpack.c.h.b16 %v840
    %v2278 = vunpack.c.l.b16 %v841
    %v2279 = vunpack.c.h.b16 %v841
    %v2280 = vunpack.c.l.b16 %v842
    %v2281 = vunpack.c.h.b16 %v842
    %v2282 = vunpack.c.l.b16 %v843
    %v2283 = vunpack.c.h.b16 %v843
    %v2284 = vunpack.c.l.b16 %v844
    %v2285 = vunpack.c.h.b16 %v844
    %v2286 = vunpack.c.l.b16 %v845
    %v2287 = vunpack.c.h.b16 %v845
    %v2288 = vunpack.c.l.b16 %v846
    %v2289 = vunpack.c.h.b16 %v846
    %v2290 = vunpack.c.l.b16 %v847
    %v2291 = vunpack.c.h.b16 %v847
    %v2292 = vunpack.c.l.b16 %v848
    %v2293 = vunpack.c.h.b16 %v848
    %v2294 = vunpack.c.l.b16 %v849
    %v2295 = vunpack.c.h.b16 %v849
    %v2296 = vunpack.c.l.b16 %v850
    %v2297 = vunpack.c.h.b16 %v850
    %v2298 = vunpack.c.l.b16 %v851
    %v2299 = vunpack.c.h.b16 %v851
    %v2300 = vunpack.c.l.b16 %v852
    %v2301 = vunpack.c.h.b16 %v852
    %v2302 = vunpack.c.l.b16 %v853
    %v2303 = vunpack.c.h.b16 %v853
    %v2304 = vunpack.c.l.b16 %v854
    %v2305 = vunpack.c.h.b16 %v854
    %v2306 = vunpack.c.l.b16 %v855
    %v2307 = vunpack.c.h.b16 %v855
    %v2308 = vunpack.c.l.b16 %v856
    %v2309 = vunpack.c.h.b16 %v856
    %v2310 = vunpack.c.l.b16 %v857
    %v2311 = vunpack.c.h.b16 %v857
    %v2312 = vunpack.c.l.b16 %v858
    %v2313 = vunpack.c.h.b16 %v858
    %v2314 = vunpack.c.l.b16 %v859
    %v2315 = vunpack.c.h.b16 %v859
    %v2316 = vunpack.c.l.b16 %v860
    %v2317 = vunpack.c.h.b16 %v860
    %v2318 = vunpack.c.l.b16 %v861
    %v2319 = vunpack.c.h.b16 %v861
    %v2320 = vunpack.c.l.b16 %v862
    %v2321 = vunpack.c.h.b16 %v862
    %v2322 = vunpack.c.l.b16 %v863
    %v2323 = vunpack.c.h.b16 %v863
    %v2324 = vunpack.c.l.b16 %v864
    %v2325 = vunpack.c.h.b16 %v864
    %v2326 = vunpack.c.l.b16 %v865
    %v2327 = vunpack.c.h.b16 %v865
    %v2328 = vunpack.c.l.b16 %v866
    %v2329 = vunpack.c.h.b16 %v866
    %v2330 = vunpack.c.l.b16 %v867
    %v2331 = vunpack.c.h.b16 %v867
    %v2332 = vunpack.c.l.b16 %v868
    %v2333 = vunpack.c.h.b16 %v868
    %v2334 = vunpack.c.l.b16 %v869
    %v2335 = vunpack.c.h.b16 %v869
    %v2336 = vunpack.c.l.b16 %v870
    %v2337 = vunpack.c.h.b16 %v870
    %v2338 = vunpack.c.l.b16 %v871
    %v2339 = vunpack.c.h.b16 %v871
    %v2340 = vunpack.c.l.b16 %v872
    %v2341 = vunpack.c.h.b16 %v872
    %v2342 = vunpack.c.l.b16 %v873
    %v2343 = vunpack.c.h.b16 %v873
    %v2344 = vunpack.c.l.b16 %v874
    %v2345 = vunpack.c.h.b16 %v874
    %v2346 = vunpack.c.l.b16 %v875
    %v2347 = vunpack.c.h.b16 %v875
    %v2348 = vunpack.c.l.b16 %v876
    %v2349 = vunpack.c.h.b16 %v876
    %v2350 = vunpack.c.l.b16 %v877
    %v2351 = vunpack.c.h.b16 %v877
    %v2352 = vunpack.c.l.b16 %v878
    %v2353 = vunpack.c.h.b16 %v878
    %v2354 = vunpack.c.l.b16 %v879
    %v2355 = vunpack.c.h.b16 %v879
    %v2356 = vunpack.c.l.b16 %v880
    %v2357 = vunpack.c.h.b16 %v880
    %v2358 = vunpack.c.l.b16 %v881
    %v2359 = vunpack.c.h.b16 %v881
    %v2360 = vunpack.c.l.b16 %v882
    %v2361 = vunpack.c.h.b16 %v882
    %v2362 = vunpack.c.l.b16 %v883
    %v2363 = vunpack.c.h.b16 %v883
    %v2364 = vunpack.c.l.b16 %v884
    %v2365 = vunpack.c.h.b16 %v884
    %v2366 = vunpack.c.l.b16 %v885
    %v2367 = vunpack.c.h.b16 %v885
    %v2368 = vunpack.c.l.b16 %v886
    %v2369 = vunpack.c.h.b16 %v886
    %v2370 = vunpack.c.l.b16 %v887
    %v2371 = vunpack.c.h.b16 %v887
    %v2372 = vunpack.c.l.b16 %v888
    %v2373 = vunpack.c.h.b16 %v888
    %v2374 = vunpack.c.l.b16 %v889
    %v2375 = vunpack.c.h.b16 %v889
    %v2376 = vunpack.c.l.b16 %v890
    %v2377 = vunpack.c.h.b16 %v890
    %v2378 = vunpack.c.l.b16 %v891
    %v2379 = vunpack.c.h.b16 %v891
    %v2380 = vunpack.c.l.b16 %v892
    %v2381 = vunpack.c.h.b16 %v892
    %v2382 = vunpack.c.l.b16 %v893
    %v2383 = vunpack.c.h.b16 %v893
    %v2384 = vunpack.c.l.b16 %v894
    %v2385 = vunpack.c.h.b16 %v894
    %v2386 = vunpack.c.l.b16 %v895
    %v2387 = vunpack.c.h.b16 %v895
    %v2388 = vunpack.c.l.b16 %v896
    %v2389 = vunpack.c.h.b16 %v896
    %v2390 = vunpack.c.l.b16 %v897
    %v2391 = vunpack.c.h.b16 %v897
    %v2392 = vunpack.c.l.b16 %v898
    %v2393 = vunpack.c.h.b16 %v898
    %v2394 = vunpack.c.l.b16 %v899
    %v2395 = vunpack.c.h.b16 %v899
    %v2396 = vunpack.c.l.b16 %v900
    %v2397 = vunpack.c.h.b16 %v900
    %v2398 = vunpack.c.l.b16 %v901
    %v2399 = vunpack.c.h.b16 %v901
    %v2400 = vunpack.c.l.b16 %v902
    %v2401 = vunpack.c.h.b16 %v902
    %v2402 = vunpack.c.l.b16 %v903
    %v2403 = vunpack.c.h.b16 %v903
    %v2404 = vunpack.c.l.b16 %v904
    %v2405 = vunpack.c.h.b16 %v904
    %v2406 = vunpack.c.l.b16 %v905
    %v2407 = vunpack.c.h.b16 %v905
    %v2408 = vunpack.c.l.b16 %v906
    %v2409 = vunpack.c.h.b16 %v906
    %v2410 = vunpack.c.l.b16 %v907
    %v2411 = vunpack.c.h.b16 %v907
    %v2412 = vunpack.c.l.b16 %v908
    %v2413 = vunpack.c.h.b16 %v908
    %v2414 = vunpack.c.l.b16 %v909
    %v2415 = vunpack.c.h.b16 %v909
    %v2416 = vunpack.c.l.b16 %v910
    %v2417 = vunpack.c.h.b16 %v910
    %v2418 = vunpack.c.l.b16 %v911
    %v2419 = vunpack.c.h.b16 %v911
    %v2420 = vunpack.c.l.b16 %v912
    %v2421 = vunpack.c.h.b16 %v912
    %v2422 = vunpack.c.l.b16 %v913
    %v2423 = vunpack.c.h.b16 %v913
    %v2424 = vunpack.c.l.b16 %v914
    %v2425 = vunpack.c.h.b16 %v914
    %v2426 = vunpack.c.l.b16 %v915
    %v2427 = vunpack.c.h.b16 %v915
    %v2428 = vunpack.c.l.b16 %v916
    %v2429 = vunpack.c.h.b16 %v916
    %v2430 = vunpack.c.l.b16 %v917
    %v2431 = vunpack.c.h.b16 %v917
    %v2432 = vunpack.c.l.b16 %v918
    %v2433 = vunpack.c.h.b16 %v918
    %v2434 = vunpack.c.l.b16 %v919
    %v2435 = vunpack.c.h.b16 %v919
    %v2436 = vunpack.c.l.b16 %v920
    %v2437 = vunpack.c.h.b16 %v920
    %v2438 = vunpack.c.l.b16 %v921
    %v2439 = vunpack.c.h.b16 %v921
    %v2440 = vunpack.c.l.b16 %v922
    %v2441 = vunpack.c.h.b16 %v922
    %v2442 = vunpack.c.l.b16 %v923
    %v2443 = vunpack.c.h.b16 %v923
    %v2444 = vunpack.c.l.b16 %v924
    %v2445 = vunpack.c.h.b16 %v924
    %v2446 = vunpack.c.l.b16 %v925
    %v2447 = vunpack.c.h.b16 %v925
    %v2448 = vunpack.c.l.b16 %v926
    %v2449 = vunpack.c.h.b16 %v926
    %v2450 = vunpack.c.l.b16 %v927
    %v2451 = vunpack.c.h.b16 %v927
    %v2452 = vunpack.c.l.b16 %v928
    %v2453 = vunpack.c.h.b16 %v928
    %v2454 = vunpack.c.l.b16 %v929
    %v2455 = vunpack.c.h.b16 %v929
    %v2456 = vunpack.c.l.b16 %v930
    %v2457 = vunpack.c.h.b16 %v930
    %v2458 = vunpack.c.l.b16 %v931
    %v2459 = vunpack.c.h.b16 %v931
    %v2460 = vunpack.c.l.b16 %v932
    %v2461 = vunpack.c.h.b16 %v932
    %v2462 = vunpack.c.l.b16 %v933
    %v2463 = vunpack.c.h.b16 %v933
    %v2464 = vunpack.c.l.b16 %v934
    %v2465 = vunpack.c.h.b16 %v934
    %v2466 = vunpack.c.l.b16 %v935
    %v2467 = vunpack.c.h.b16 %v935
    %v2468 = vunpack.c.l.b16 %v936
    %v2469 = vunpack.c.h.b16 %v936
    %v2470 = vunpack.c.l.b16 %v937
    %v2471 = vunpack.c.h.b16 %v937
    %v2472 = vunpack.c.l.b16 %v938
    %v2473 = vunpack.c.h.b16 %v938
    %v2474 = vunpack.c.l.b16 %v939
    %v2475 = vunpack.c.h.b16 %v939
    %v2476 = vunpack.c.l.b16 %v940
    %v2477 = vunpack.c.h.b16 %v940
    %v2478 = vunpack.c.l.b16 %v941
    %v2479 = vunpack.c.h.b16 %v941
    %v2480 = vunpack.c.l.b16 %v942
    %v2481 = vunpack.c.h.b16 %v942
    %v2482 = vunpack.c.l.b16 %v943
    %v2483 = vunpack.c.h.b16 %v943
    %v2484 = vunpack.c.l.b16 %v944
    %v2485 = vunpack.c.h.b16 %v944
    %v2486 = vunpack.c.l.b16 %v945
    %v2487 = vunpack.c.h.b16 %v945
    %v2488 = vunpack.c.l.b16 %v946
    %v2489 = vunpack.c.h.b16 %v946
    %v2490 = vunpack.c.l.b16 %v947
    %v2491 = vunpack.c.h.b16 %v947
    %v2492 = vunpack.c.l.b16 %v948
    %v2493 = vunpack.c.h.b16 %v948
    %v2494 = vunpack.c.l.b16 %v949
    %v2495 = vunpack.c.h.b16 %v949
    %v2496 = vunpack.c.l.b16 %v950
    %v2497 = vunpack.c.h.b16 %v950
    %v2498 = vunpack.c.l.b16 %v951
    %v2499 = vunpack.c.h.b16 %v951
    %v2500 = vunpack.c.l.b16 %v952
    %v2501 = vunpack.c.h.b16 %v952
    %v2502 = vunpack.c.l.b16 %v953
    %v2503 = vunpack.c.h.b16 %v953
    %v2504 = vunpack.c.l.b16 %v954
    %v2505 = vunpack.c.h.b16 %v954
    %v2506 = vunpack.c.l.b16 %v955
    %v2507 = vunpack.c.h.b16 %v955
    %v2508 = vunpack.c.l.b16 %v956
    %v2509 = vunpack.c.h.b16 %v956
    %v2510 = vunpack.c.l.b16 %v957
    %v2511 = vunpack.c.h.b16 %v957
    %v2512 = vunpack.c.l.b16 %v958
    %v2513 = vunpack.c.h.b16 %v958
    %v2514 = vunpack.c.l.b16 %v959
    %v2515 = vunpack.c.h.b16 %v959
    %v2516 = vunpack.c.l.b16 %v960
    %v2517 = vunpack.c.h.b16 %v960
    %v2518 = vunpack.c.l.b16 %v961
    %v2519 = vunpack.c.h.b16 %v961
    %v2520 = vunpack.c.l.b16 %v962
    %v2521 = vunpack.c.h.b16 %v962
    %v2522 = vunpack.c.l.b16 %v963
    %v2523 = vunpack.c.h.b16 %v963
    %v2524 = vunpack.c.l.b16 %v964
    %v2525 = vunpack.c.h.b16 %v964
    %v2526 = vunpack.c.l.b16 %v965
    %v2527 = vunpack.c.h.b16 %v965
    %v2528 = vunpack.c.l.b16 %v966
    %v2529 = vunpack.c.h.b16 %v966
    %v2530 = vunpack.c.l.b16 %v967
    %v2531 = vunpack.c.h.b16 %v967
    %v2532 = vunpack.c.l.b16 %v968
    %v2533 = vunpack.c.h.b16 %v968
    %v2534 = vunpack.c.l.b16 %v969
    %v2535 = vunpack.c.h.b16 %v969
    %v2536 = vunpack.c.l.b16 %v970
    %v2537 = vunpack.c.h.b16 %v970
    %v2538 = vunpack.c.l.b16 %v971
    %v2539 = vunpack.c.h.b16 %v971
    %v2540 = vunpack.c.l.b16 %v972
    %v2541 = vunpack.c.h.b16 %v972
    %v2542 = vunpack.c.l.b16 %v973
    %v2543 = vunpack.c.h.b16 %v973
    %v2544 = vunpack.c.l.b16 %v974
    %v2545 = vunpack.c.h.b16 %v974
    %v2546 = vunpack.c.l.b16 %v975
    %v2547 = vunpack.c.h.b16 %v975
    %v2548 = vunpack.c.l.b16 %v976
    %v2549 = vunpack.c.h.b16 %v976
    %v2550 = vunpack.c.l.b16 %v977
    %v2551 = vunpack.c.h.b16 %v977
    %v2552 = vunpack.c.l.b16 %v978
    %v2553 = vunpack.c.h.b16 %v978
    %v2554 = vunpack.c.l.b16 %v979
    %v2555 = vunpack.c.h.b16 %v979
    %v2556 = vunpack.c.l.b16 %v980
    %v2557 = vunpack.c.h.b16 %v980
    %v2558 = vunpack.c.l.b16 %v981
    %v2559 = vunpack.c.h.b16 %v981
    %v2560 = vpack.c.b16 %v1544, %v1536
    %v2561 = vpack.c.b16 %v1545, %v1537
    %v2562 = vpack.c.b16 %v1546, %v1538
    %v2563 = vpack.c.b16 %v1547, %v1539
    %v2564 = vpack.c.b16 %v1548, %v1540
    %v2565 = vpack.c.b16 %v1549, %v1541
    %v2566 = vpack.c.b16 %v1550, %v1542
    %v2567 = vpack.c.b16 %v1551, %v1543
    %v2568 = vpack.c.b16 %v1560, %v1552
    %v2569 = vpack.c.b16 %v1561, %v1553
    %v2570 = vpack.c.b16 %v1562, %v1554
    %v2571 = vpack.c.b16 %v1563, %v1555
    %v2572 = vpack.c.b16 %v1564, %v1556
    %v2573 = vpack.c.b16 %v1565, %v1557
    %v2574 = vpack.c.b16 %v1566, %v1558
    %v2575 = vpack.c.b16 %v1567, %v1559
    %v2576 = vpack.c.b16 %v1576, %v1568
    %v2577 = vpack.c.b16 %v1577, %v1569
    %v2578 = vpack.c.b16 %v1578, %v1570
    %v2579 = vpack.c.b16 %v1579, %v1571
    %v2580 = vpack.c.b16 %v1580, %v1572
    %v2581 = vpack.c.b16 %v1581, %v1573
    %v2582 = vpack.c.b16 %v1582, %v1574
    %v2583 = vpack.c.b16 %v1583, %v1575
    %v2584 = vpack.c.b16 %v1592, %v1584
    %v2585 = vpack.c.b16 %v1593, %v1585
    %v2586 = vpack.c.b16 %v1594, %v1586
    %v2587 = vpack.c.b16 %v1595, %v1587
    %v2588 = vpack.c.b16 %v1596, %v1588
    %v2589 = vpack.c.b16 %v1597, %v1589
    %v2590 = vpack.c.b16 %v1598, %v1590
    %v2591 = vpack.c.b16 %v1599, %v1591
    %v2592 = vpack.c.b16 %v1608, %v1600
    %v2593 = vpack.c.b16 %v1609, %v1601
    %v2594 = vpack.c.b16 %v1610, %v1602
    %v2595 = vpack.c.b16 %v1611, %v1603
    %v2596 = vpack.c.b16 %v1612, %v1604
    %v2597 = vpack.c.b16 %v1613, %v1605
    %v2598 = vpack.c.b16 %v1614, %v1606
    %v2599 = vpack.c.b16 %v1615, %v1607
    %v2600 = vpack.c.b16 %v1624, %v1616
    %v2601 = vpack.c.b16 %v1625, %v1617
    %v2602 = vpack.c.b16 %v1626, %v1618
    %v2603 = vpack.c.b16 %v1627, %v1619
    %v2604 = vpack.c.b16 %v1628, %v1620
    %v2605 = vpack.c.b16 %v1629, %v1621
    %v2606 = vpack.c.b16 %v1630, %v1622
    %v2607 = vpack.c.b16 %v1631, %v1623
    %v2608 = vpack.c.b16 %v1640, %v1632
    %v2609 = vpack.c.b16 %v1641, %v1633
    %v2610 = vpack.c.b16 %v1642, %v1634
    %v2611 = vpack.c.b16 %v1643, %v1635
    %v2612 = vpack.c.b16 %v1644, %v1636
    %v2613 = vpack.c.b16 %v1645, %v1637
    %v2614 = vpack.c.b16 %v1646, %v1638
    %v2615 = vpack.c.b16 %v1647, %v1639
    %v2616 = vpack.c.b16 %v1656, %v1648
    %v2617 = vpack.c.b16 %v1657, %v1649
    %v2618 = vpack.c.b16 %v1658, %v1650
    %v2619 = vpack.c.b16 %v1659, %v1651
    %v2620 = vpack.c.b16 %v1660, %v1652
    %v2621 = vpack.c.b16 %v1661, %v1653
    %v2622 = vpack.c.b16 %v1662, %v1654
    %v2623 = vpack.c.b16 %v1663, %v1655
    %v2624 = vpack.c.b16 %v1672, %v1664
    %v2625 = vpack.c.b16 %v1673, %v1665
    %v2626 = vpack.c.b16 %v1674, %v1666
    %v2627 = vpack.c.b16 %v1675, %v1667
    %v2628 = vpack.c.b16 %v1676, %v1668
    %v2629 = vpack.c.b16 %v1677, %v1669
    %v2630 = vpack.c.b16 %v1678, %v1670
    %v2631 = vpack.c.b16 %v1679, %v1671
    %v2632 = vpack.c.b16 %v1688, %v1680
    %v2633 = vpack.c.b16 %v1689, %v1681
    %v2634 = vpack.c.b16 %v1690, %v1682
    %v2635 = vpack.c.b16 %v1691, %v1683
    %v2636 = vpack.c.b16 %v1692, %v1684
    %v2637 = vpack.c.b16 %v1693, %v1685
    %v2638 = vpack.c.b16 %v1694, %v1686
    %v2639 = vpack.c.b16 %v1695, %v1687
    %v2640 = vpack.c.b16 %v1704, %v1696
    %v2641 = vpack.c.b16 %v1705, %v1697
    %v2642 = vpack.c.b16 %v1706, %v1698
    %v2643 = vpack.c.b16 %v1707, %v1699
    %v2644 = vpack.c.b16 %v1708, %v1700
    %v2645 = vpack.c.b16 %v1709, %v1701
    %v2646 = vpack.c.b16 %v1710, %v1702
    %v2647 = vpack.c.b16 %v1711, %v1703
    %v2648 = vpack.c.b16 %v1720, %v1712
    %v2649 = vpack.c.b16 %v1721, %v1713
    %v2650 = vpack.c.b16 %v1722, %v1714
    %v2651 = vpack.c.b16 %v1723, %v1715
    %v2652 = vpack.c.b16 %v1724, %v1716
    %v2653 = vpack.c.b16 %v1725, %v1717
    %v2654 = vpack.c.b16 %v1726, %v1718
    %v2655 = vpack.c.b16 %v1727, %v1719
    %v2656 = vpack.c.b16 %v1736, %v1728
    %v2657 = vpack.c.b16 %v1737, %v1729
    %v2658 = vpack.c.b16 %v1738, %v1730
    %v2659 = vpack.c.b16 %v1739, %v1731
    %v2660 = vpack.c.b16 %v1740, %v1732
    %v2661 = vpack.c.b16 %v1741, %v1733
    %v2662 = vpack.c.b16 %v1742, %v1734
    %v2663 = vpack.c.b16 %v1743, %v1735
    %v2664 = vpack.c.b16 %v1752, %v1744
    %v2665 = vpack.c.b16 %v1753, %v1745
    %v2666 = vpack.c.b16 %v1754, %v1746
    %v2667 = vpack.c.b16 %v1755, %v1747
    %v2668 = vpack.c.b16 %v1756, %v1748
    %v2669 = vpack.c.b16 %v1757, %v1749
    %v2670 = vpack.c.b16 %v1758, %v1750
    %v2671 = vpack.c.b16 %v1759, %v1751
    %v2672 = vpack.c.b16 %v1768, %v1760
    %v2673 = vpack.c.b16 %v1769, %v1761
    %v2674 = vpack.c.b16 %v1770, %v1762
    %v2675 = vpack.c.b16 %v1771, %v1763
    %v2676 = vpack.c.b16 %v1772, %v1764
    %v2677 = vpack.c.b16 %v1773, %v1765
    %v2678 = vpack.c.b16 %v1774, %v1766
    %v2679 = vpack.c.b16 %v1775, %v1767
    %v2680 = vpack.c.b16 %v1784, %v1776
    %v2681 = vpack.c.b16 %v1785, %v1777
    %v2682 = vpack.c.b16 %v1786, %v1778
    %v2683 = vpack.c.b16 %v1787, %v1779
    %v2684 = vpack.c.b16 %v1788, %v1780
    %v2685 = vpack.c.b16 %v1789, %v1781
    %v2686 = vpack.c.b16 %v1790, %v1782
    %v2687 = vpack.c.b16 %v1791, %v1783
    %v2688 = vpack.c.b16 %v1800, %v1792
    %v2689 = vpack.c.b16 %v1801, %v1793
    %v2690 = vpack.c.b16 %v1802, %v1794
    %v2691 = vpack.c.b16 %v1803, %v1795
    %v2692 = vpack.c.b16 %v1804, %v1796
    %v2693 = vpack.c.b16 %v1805, %v1797
    %v2694 = vpack.c.b16 %v1806, %v1798
    %v2695 = vpack.c.b16 %v1807, %v1799
    %v2696 = vpack.c.b16 %v1816, %v1808
    %v2697 = vpack.c.b16 %v1817, %v1809
    %v2698 = vpack.c.b16 %v1818, %v1810
    %v2699 = vpack.c.b16 %v1819, %v1811
    %v2700 = vpack.c.b16 %v1820, %v1812
    %v2701 = vpack.c.b16 %v1821, %v1813
    %v2702 = vpack.c.b16 %v1822, %v1814
    %v2703 = vpack.c.b16 %v1823, %v1815
    %v2704 = vpack.c.b16 %v1832, %v1824
    %v2705 = vpack.c.b16 %v1833, %v1825
    %v2706 = vpack.c.b16 %v1834, %v1826
    %v2707 = vpack.c.b16 %v1835, %v1827
    %v2708 = vpack.c.b16 %v1836, %v1828
    %v2709 = vpack.c.b16 %v1837, %v1829
    %v2710 = vpack.c.b16 %v1838, %v1830
    %v2711 = vpack.c.b16 %v1839, %v1831
    %v2712 = vpack.c.b16 %v1848, %v1840
    %v2713 = vpack.c.b16 %v1849, %v1841
    %v2714 = vpack.c.b16 %v1850, %v1842
    %v2715 = vpack.c.b16 %v1851, %v1843
    %v2716 = vpack.c.b16 %v1852, %v1844
    %v2717 = vpack.c.b16 %v1853, %v1845
    %v2718 = vpack.c.b16 %v1854, %v1846
    %v2719 = vpack.c.b16 %v1855, %v1847
    %v2720 = vpack.c.b16 %v1864, %v1856
    %v2721 = vpack.c.b16 %v1865, %v1857
    %v2722 = vpack.c.b16 %v1866, %v1858
    %v2723 = vpack.c.b16 %v1867, %v1859
    %v2724 = vpack.c.b16 %v1868, %v1860
    %v2725 = vpack.c.b16 %v1869, %v1861
    %v2726 = vpack.c.b16 %v1870, %v1862
    %v2727 = vpack.c.b16 %v1871, %v1863
    %v2728 = vpack.c.b16 %v1880, %v1872
    %v2729 = vpack.c.b16 %v1881, %v1873
    %v2730 = vpack.c.b16 %v1882, %v1874
    %v2731 = vpack.c.b16 %v1883, %v1875
    %v2732 = vpack.c.b16 %v1884, %v1876
    %v2733 = vpack.c.b16 %v1885, %v1877
    %v2734 = vpack.c.b16 %v1886, %v1878
    %v2735 = vpack.c.b16 %v1887, %v1879
    %v2736 = vpack.c.b16 %v1896, %v1888
    %v2737 = vpack.c.b16 %v1897, %v1889
    %v2738 = vpack.c.b16 %v1898, %v1890
    %v2739 = vpack.c.b16 %v1899, %v1891
    %v2740 = vpack.c.b16 %v1900, %v1892
    %v2741 = vpack.c.b16 %v1901, %v1893
    %v2742 = vpack.c.b16 %v1902, %v1894
    %v2743 = vpack.c.b16 %v1903, %v1895
    %v2744 = vpack.c.b16 %v1912, %v1904
    %v2745 = vpack.c.b16 %v1913, %v1905
    %v2746 = vpack.c.b16 %v1914, %v1906
    %v2747 = vpack.c.b16 %v1915, %v1907
    %v2748 = vpack.c.b16 %v1916, %v1908
    %v2749 = vpack.c.b16 %v1917, %v1909
    %v2750 = vpack.c.b16 %v1918, %v1910
    %v2751 = vpack.c.b16 %v1919, %v1911
    %v2752 = vpack.c.b16 %v1928, %v1920
    %v2753 = vpack.c.b16 %v1929, %v1921
    %v2754 = vpack.c.b16 %v1930, %v1922
    %v2755 = vpack.c.b16 %v1931, %v1923
    %v2756 = vpack.c.b16 %v1932, %v1924
    %v2757 = vpack.c.b16 %v1933, %v1925
    %v2758 = vpack.c.b16 %v1934, %v1926
    %v2759 = vpack.c.b16 %v1935, %v1927
    %v2760 = vpack.c.b16 %v1944, %v1936
    %v2761 = vpack.c.b16 %v1945, %v1937
    %v2762 = vpack.c.b16 %v1946, %v1938
    %v2763 = vpack.c.b16 %v1947, %v1939
    %v2764 = vpack.c.b16 %v1948, %v1940
    %v2765 = vpack.c.b16 %v1949, %v1941
    %v2766 = vpack.c.b16 %v1950, %v1942
    %v2767 = vpack.c.b16 %v1951, %v1943
    %v2768 = vpack.c.b16 %v1960, %v1952
    %v2769 = vpack.c.b16 %v1961, %v1953
    %v2770 = vpack.c.b16 %v1962, %v1954
    %v2771 = vpack.c.b16 %v1963, %v1955
    %v2772 = vpack.c.b16 %v1964, %v1956
    %v2773 = vpack.c.b16 %v1965, %v1957
    %v2774 = vpack.c.b16 %v1966, %v1958
    %v2775 = vpack.c.b16 %v1967, %v1959
    %v2776 = vpack.c.b16 %v1976, %v1968
    %v2777 = vpack.c.b16 %v1977, %v1969
    %v2778 = vpack.c.b16 %v1978, %v1970
    %v2779 = vpack.c.b16 %v1979, %v1971
    %v2780 = vpack.c.b16 %v1980, %v1972
    %v2781 = vpack.c.b16 %v1981, %v1973
    %v2782 = vpack.c.b16 %v1982, %v1974
    %v2783 = vpack.c.b16 %v1983, %v1975
    %v2784 = vpack.c.b16 %v1992, %v1984
    %v2785 = vpack.c.b16 %v1993, %v1985
    %v2786 = vpack.c.b16 %v1994, %v1986
    %v2787 = vpack.c.b16 %v1995, %v1987
    %v2788 = vpack.c.b16 %v1996, %v1988
    %v2789 = vpack.c.b16 %v1997, %v1989
    %v2790 = vpack.c.b16 %v1998, %v1990
    %v2791 = vpack.c.b16 %v1999, %v1991
    %v2792 = vpack.c.b16 %v2008, %v2000
    %v2793 = vpack.c.b16 %v2009, %v2001
    %v2794 = vpack.c.b16 %v2010, %v2002
    %v2795 = vpack.c.b16 %v2011, %v2003
    %v2796 = vpack.c.b16 %v2012, %v2004
    %v2797 = vpack.c.b16 %v2013, %v2005
    %v2798 = vpack.c.b16 %v2014, %v2006
    %v2799 = vpack.c.b16 %v2015, %v2007
    %v2800 = vpack.c.b16 %v2024, %v2016
    %v2801 = vpack.c.b16 %v2025, %v2017
    %v2802 = vpack.c.b16 %v2026, %v2018
    %v2803 = vpack.c.b16 %v2027, %v2019
    %v2804 = vpack.c.b16 %v2028, %v2020
    %v2805 = vpack.c.b16 %v2029, %v2021
    %v2806 = vpack.c.b16 %v2030, %v2022
    %v2807 = vpack.c.b16 %v2031, %v2023
    %v2808 = vpack.c.b16 %v2040, %v2032
    %v2809 = vpack.c.b16 %v2041, %v2033
    %v2810 = vpack.c.b16 %v2042, %v2034
    %v2811 = vpack.c.b16 %v2043, %v2035
    %v2812 = vpack.c.b16 %v2044, %v2036
    %v2813 = vpack.c.b16 %v2045, %v2037
    %v2814 = vpack.c.b16 %v2046, %v2038
    %v2815 = vpack.c.b16 %v2047, %v2039
    %v2816 = vpack.c.b16 %v2056, %v2048
    %v2817 = vpack.c.b16 %v2057, %v2049
    %v2818 = vpack.c.b16 %v2058, %v2050
    %v2819 = vpack.c.b16 %v2059, %v2051
    %v2820 = vpack.c.b16 %v2060, %v2052
    %v2821 = vpack.c.b16 %v2061, %v2053
    %v2822 = vpack.c.b16 %v2062, %v2054
    %v2823 = vpack.c.b16 %v2063, %v2055
    %v2824 = vpack.c.b16 %v2072, %v2064
    %v2825 = vpack.c.b16 %v2073, %v2065
    %v2826 = vpack.c.b16 %v2074, %v2066
    %v2827 = vpack.c.b16 %v2075, %v2067
    %v2828 = vpack.c.b16 %v2076, %v2068
    %v2829 = vpack.c.b16 %v2077, %v2069
    %v2830 = vpack.c.b16 %v2078, %v2070
    %v2831 = vpack.c.b16 %v2079, %v2071
    %v2832 = vpack.c.b16 %v2088, %v2080
    %v2833 = vpack.c.b16 %v2089, %v2081
    %v2834 = vpack.c.b16 %v2090, %v2082
    %v2835 = vpack.c.b16 %v2091, %v2083
    %v2836 = vpack.c.b16 %v2092, %v2084
    %v2837 = vpack.c.b16 %v2093, %v2085
    %v2838 = vpack.c.b16 %v2094, %v2086
    %v2839 = vpack.c.b16 %v2095, %v2087
    %v2840 = vpack.c.b16 %v2104, %v2096
    %v2841 = vpack.c.b16 %v2105, %v2097
    %v2842 = vpack.c.b16 %v2106, %v2098
    %v2843 = vpack.c.b16 %v2107, %v2099
    %v2844 = vpack.c.b16 %v2108, %v2100
    %v2845 = vpack.c.b16 %v2109, %v2101
    %v2846 = vpack.c.b16 %v2110, %v2102
    %v2847 = vpack.c.b16 %v2111, %v2103
    %v2848 = vpack.c.b16 %v2120, %v2112
    %v2849 = vpack.c.b16 %v2121, %v2113
    %v2850 = vpack.c.b16 %v2122, %v2114
    %v2851 = vpack.c.b16 %v2123, %v2115
    %v2852 = vpack.c.b16 %v2124, %v2116
    %v2853 = vpack.c.b16 %v2125, %v2117
    %v2854 = vpack.c.b16 %v2126, %v2118
    %v2855 = vpack.c.b16 %v2127, %v2119
    %v2856 = vpack.c.b16 %v2136, %v2128
    %v2857 = vpack.c.b16 %v2137, %v2129
    %v2858 = vpack.c.b16 %v2138, %v2130
    %v2859 = vpack.c.b16 %v2139, %v2131
    %v2860 = vpack.c.b16 %v2140, %v2132
    %v2861 = vpack.c.b16 %v2141, %v2133
    %v2862 = vpack.c.b16 %v2142, %v2134
    %v2863 = vpack.c.b16 %v2143, %v2135
    %v2864 = vpack.c.b16 %v2152, %v2144
    %v2865 = vpack.c.b16 %v2153, %v2145
    %v2866 = vpack.c.b16 %v2154, %v2146
    %v2867 = vpack.c.b16 %v2155, %v2147
    %v2868 = vpack.c.b16 %v2156, %v2148
    %v2869 = vpack.c.b16 %v2157, %v2149
    %v2870 = vpack.c.b16 %v2158, %v2150
    %v2871 = vpack.c.b16 %v2159, %v2151
    %v2872 = vpack.c.b16 %v2168, %v2160
    %v2873 = vpack.c.b16 %v2169, %v2161
    %v2874 = vpack.c.b16 %v2170, %v2162
    %v2875 = vpack.c.b16 %v2171, %v2163
    %v2876 = vpack.c.b16 %v2172, %v2164
    %v2877 = vpack.c.b16 %v2173, %v2165
    %v2878 = vpack.c.b16 %v2174, %v2166
    %v2879 = vpack.c.b16 %v2175, %v2167
    %v2880 = vpack.c.b16 %v2184, %v2176
    %v2881 = vpack.c.b16 %v2185, %v2177
    %v2882 = vpack.c.b16 %v2186, %v2178
    %v2883 = vpack.c.b16 %v2187, %v2179
    %v2884 = vpack.c.b16 %v2188, %v2180
    %v2885 = vpack.c.b16 %v2189, %v2181
    %v2886 = vpack.c.b16 %v2190, %v2182
    %v2887 = vpack.c.b16 %v2191, %v2183
    %v2888 = vpack.c.b16 %v2200, %v2192
    %v2889 = vpack.c.b16 %v2201, %v2193
    %v2890 = vpack.c.b16 %v2202, %v2194
    %v2891 = vpack.c.b16 %v2203, %v2195
    %v2892 = vpack.c.b16 %v2204, %v2196
    %v2893 = vpack.c.b16 %v2205, %v2197
    %v2894 = vpack.c.b16 %v2206, %v2198
    %v2895 = vpack.c.b16 %v2207, %v2199
    %v2896 = vpack.c.b16 %v2216, %v2208
    %v2897 = vpack.c.b16 %v2217, %v2209
    %v2898 = vpack.c.b16 %v2218, %v2210
    %v2899 = vpack.c.b16 %v2219, %v2211
    %v2900 = vpack.c.b16 %v2220, %v2212
    %v2901 = vpack.c.b16 %v2221, %v2213
    %v2902 = vpack.c.b16 %v2222, %v2214
    %v2903 = vpack.c.b16 %v2223, %v2215
    %v2904 = vpack.c.b16 %v2232, %v2224
    %v2905 = vpack.c.b16 %v2233, %v2225
    %v2906 = vpack.c.b16 %v2234, %v2226
    %v2907 = vpack.c.b16 %v2235, %v2227
    %v2908 = vpack.c.b16 %v2236, %v2228
    %v2909 = vpack.c.b16 %v2237, %v2229
    %v2910 = vpack.c.b16 %v2238, %v2230
    %v2911 = vpack.c.b16 %v2239, %v2231
    %v2912 = vpack.c.b16 %v2248, %v2240
    %v2913 = vpack.c.b16 %v2249, %v2241
    %v2914 = vpack.c.b16 %v2250, %v2242
    %v2915 = vpack.c.b16 %v2251, %v2243
    %v2916 = vpack.c.b16 %v2252, %v2244
    %v2917 = vpack.c.b16 %v2253, %v2245
    %v2918 = vpack.c.b16 %v2254, %v2246
    %v2919 = vpack.c.b16 %v2255, %v2247
    %v2920 = vpack.c.b16 %v2264, %v2256
    %v2921 = vpack.c.b16 %v2265, %v2257
    %v2922 = vpack.c.b16 %v2266, %v2258
    %v2923 = vpack.c.b16 %v2267, %v2259
    %v2924 = vpack.c.b16 %v2268, %v2260
    %v2925 = vpack.c.b16 %v2269, %v2261
    %v2926 = vpack.c.b16 %v2270, %v2262
    %v2927 = vpack.c.b16 %v2271, %v2263
    %v2928 = vpack.c.b16 %v2280, %v2272
    %v2929 = vpack.c.b16 %v2281, %v2273
    %v2930 = vpack.c.b16 %v2282, %v2274
    %v2931 = vpack.c.b16 %v2283, %v2275
    %v2932 = vpack.c.b16 %v2284, %v2276
    %v2933 = vpack.c.b16 %v2285, %v2277
    %v2934 = vpack.c.b16 %v2286, %v2278
    %v2935 = vpack.c.b16 %v2287, %v2279
    %v2936 = vpack.c.b16 %v2296, %v2288
    %v2937 = vpack.c.b16 %v2297, %v2289
    %v2938 = vpack.c.b16 %v2298, %v2290
    %v2939 = vpack.c.b16 %v2299, %v2291
    %v2940 = vpack.c.b16 %v2300, %v2292
    %v2941 = vpack.c.b16 %v2301, %v2293
    %v2942 = vpack.c.b16 %v2302, %v2294
    %v2943 = vpack.c.b16 %v2303, %v2295
    %v2944 = vpack.c.b16 %v2312, %v2304
    %v2945 = vpack.c.b16 %v2313, %v2305
    %v2946 = vpack.c.b16 %v2314, %v2306
    %v2947 = vpack.c.b16 %v2315, %v2307
    %v2948 = vpack.c.b16 %v2316, %v2308
    %v2949 = vpack.c.b16 %v2317, %v2309
    %v2950 = vpack.c.b16 %v2318, %v2310
    %v2951 = vpack.c.b16 %v2319, %v2311
    %v2952 = vpack.c.b16 %v2328, %v2320
    %v2953 = vpack.c.b16 %v2329, %v2321
    %v2954 = vpack.c.b16 %v2330, %v2322
    %v2955 = vpack.c.b16 %v2331, %v2323
    %v2956 = vpack.c.b16 %v2332, %v2324
    %v2957 = vpack.c.b16 %v2333, %v2325
    %v2958 = vpack.c.b16 %v2334, %v2326
    %v2959 = vpack.c.b16 %v2335, %v2327
    %v2960 = vpack.c.b16 %v2344, %v2336
    %v2961 = vpack.c.b16 %v2345, %v2337
    %v2962 = vpack.c.b16 %v2346, %v2338
    %v2963 = vpack.c.b16 %v2347, %v2339
    %v2964 = vpack.c.b16 %v2348, %v2340
    %v2965 = vpack.c.b16 %v2349, %v2341
    %v2966 = vpack.c.b16 %v2350, %v2342
    %v2967 = vpack.c.b16 %v2351, %v2343
    %v2968 = vpack.c.b16 %v2360, %v2352
    %v2969 = vpack.c.b16 %v2361, %v2353
    %v2970 = vpack.c.b16 %v2362, %v2354
    %v2971 = vpack.c.b16 %v2363, %v2355
    %v2972 = vpack.c.b16 %v2364, %v2356
    %v2973 = vpack.c.b16 %v2365, %v2357
    %v2974 = vpack.c.b16 %v2366, %v2358
    %v2975 = vpack.c.b16 %v2367, %v2359
    %v2976 = vpack.c.b16 %v2376, %v2368
    %v2977 = vpack.c.b16 %v2377, %v2369
    %v2978 = vpack.c.b16 %v2378, %v2370
    %v2979 = vpack.c.b16 %v2379, %v2371
    %v2980 = vpack.c.b16 %v2380, %v2372
    %v2981 = vpack.c.b16 %v2381, %v2373
    %v2982 = vpack.c.b16 %v2382, %v2374
    %v2983 = vpack.c.b16 %v2383, %v2375
    %v2984 = vpack.c.b16 %v2392, %v2384
    %v2985 = vpack.c.b16 %v2393, %v2385
    %v2986 = vpack.c.b16 %v2394, %v2386
    %v2987 = vpack.c.b16 %v2395, %v2387
    %v2988 = vpack.c.b16 %v2396, %v2388
    %v2989 = vpack.c.b16 %v2397, %v2389
    %v2990 = vpack.c.b16 %v2398, %v2390
    %v2991 = vpack.c.b16 %v2399, %v2391
    %v2992 = vpack.c.b16 %v2408, %v2400
    %v2993 = vpack.c.b16 %v2409, %v2401
    %v2994 = vpack.c.b16 %v2410, %v2402
    %v2995 = vpack.c.b16 %v2411, %v2403
    %v2996 = vpack.c.b16 %v2412, %v2404
    %v2997 = vpack.c.b16 %v2413, %v2405
    %v2998 = vpack.c.b16 %v2414, %v2406
    %v2999 = vpack.c.b16 %v2415, %v2407
    %v3000 = vpack.c.b16 %v2424, %v2416
    %v3001 = vpack.c.b16 %v2425, %v2417
    %v3002 = vpack.c.b16 %v2426, %v2418
    %v3003 = vpack.c.b16 %v2427, %v2419
    %v3004 = vpack.c.b16 %v2428, %v2420
    %v3005 = vpack.c.b16 %v2429, %v2421
    %v3006 = vpack.c.b16 %v2430, %v2422
    %v3007 = vpack.c.b16 %v2431, %v2423
    %v3008 = vpack.c.b16 %v2440, %v2432
    %v3009 = vpack.c.b16 %v2441, %v2433
    %v3010 = vpack.c.b16 %v2442, %v2434
    %v3011 = vpack.c.b16 %v2443, %v2435
    %v3012 = vpack.c.b16 %v2444, %v2436
    %v3013 = vpack.c.b16 %v2445, %v2437
    %v3014 = vpack.c.b16 %v2446, %v2438
    %v3015 = vpack.c.b16 %v2447, %v2439
    %v3016 = vpack.c.b16 %v2456, %v2448
    %v3017 = vpack.c.b16 %v2457, %v2449
    %v3018 = vpack.c.b16 %v2458, %v2450
    %v3019 = vpack.c.b16 %v2459, %v2451
    %v3020 = vpack.c.b16 %v2460, %v2452
    %v3021 = vpack.c.b16 %v2461, %v2453
    %v3022 = vpack.c.b16 %v2462, %v2454
    %v3023 = vpack.c.b16 %v2463, %v2455
    %v3024 = vpack.c.b16 %v2472, %v2464
    %v3025 = vpack.c.b16 %v2473, %v2465
    %v3026 = vpack.c.b16 %v2474, %v2466
    %v3027 = vpack.c.b16 %v2475, %v2467
    %v3028 = vpack.c.b16 %v2476, %v2468
    %v3029 = vpack.c.b16 %v2477, %v2469
    %v3030 = vpack.c.b16 %v2478, %v2470
    %v3031 = vpack.c.b16 %v2479, %v2471
    %v3032 = vpack.c.b16 %v2488, %v2480
    %v3033 = vpack.c.b16 %v2489, %v2481
    %v3034 = vpack.c.b16 %v2490, %v2482
    %v3035 = vpack.c.b16 %v2491, %v2483
    %v3036 = vpack.c.b16 %v2492, %v2484
    %v3037 = vpack.c.b16 %v2493, %v2485
    %v3038 = vpack.c.b16 %v2494, %v2486
    %v3039 = vpack.c.b16 %v2495, %v2487
    %v3040 = vpack.c.b16 %v2504, %v2496
    %v3041 = vpack.c.b16 %v2505, %v2497
    %v3042 = vpack.c.b16 %v2506, %v2498
    %v3043 = vpack.c.b16 %v2507, %v2499
    %v3044 = vpack.c.b16 %v2508, %v2500
    %v3045 = vpack.c.b16 %v2509, %v2501
    %v3046 = vpack.c.b16 %v2510, %v2502
    %v3047 = vpack.c.b16 %v2511, %v2503
    %v3048 = vpack.c.b16 %v2520, %v2512
    %v3049 = vpack.c.b16 %v2521, %v2513
    %v3050 = vpack.c.b16 %v2522, %v2514
    %v3051 = vpack.c.b16 %v2523, %v2515
    %v3052 = vpack.c.b16 %v2524, %v2516
    %v3053 = vpack.c.b16 %v2525, %v2517
    %v3054 = vpack.c.b16 %v2526, %v2518
    %v3055 = vpack.c.b16 %v2527, %v2519
    %v3056 = vpack.c.b16 %v2536, %v2528
    %v3057 = vpack.c.b16 %v2537, %v2529
    %v3058 = vpack.c.b16 %v2538, %v2530
    %v3059 = vpack.c.b16 %v2539, %v2531
    %v3060 = vpack.c.b16 %v2540, %v2532
    %v3061 = vpack.c.b16 %v2541, %v2533
    %v3062 = vpack.c.b16 %v2542, %v2534
    %v3063 = vpack.c.b16 %v2543, %v2535
    %v3064 = vpack.c.b16 %v2552, %v2544
    %v3065 = vpack.c.b16 %v2553, %v2545
    %v3066 = vpack.c.b16 %v2554, %v2546
    %v3067 = vpack.c.b16 %v2555, %v2547
    %v3068 = vpack.c.b16 %v2556, %v2548
    %v3069 = vpack.c.b16 %v2557, %v2549
    %v3070 = vpack.c.b16 %v2558, %v2550
    %v3071 = vpack.c.b16 %v2559, %v2551
    %3584 = vmatprep.subr.bf16.mxu0 %v2561
    %3585 = vmatpush1.bf16.msra.mxu0 %v2560
    %3586 = vmatprep.subr.bf16.mxu0 %v2569
    %3587 = vmatpush1.bf16.msra.mxu0 %v2568
    %3588 = vmatprep.subr.bf16.mxu0 %v2577
    %3589 = vmatpush1.bf16.msra.mxu0 %v2576
    %3590 = vmatprep.subr.bf16.mxu0 %v2585
    %3591 = vmatpush1.bf16.msra.mxu0 %v2584
    %3592 = vmatprep.subr.bf16.mxu0 %v2593
    %3593 = vmatpush1.bf16.msra.mxu0 %v2592
    %3594 = vmatprep.subr.bf16.mxu0 %v2601
    %3595 = vmatpush1.bf16.msra.mxu0 %v2600
    %3596 = vmatprep.subr.bf16.mxu0 %v2609
    %3597 = vmatpush1.bf16.msra.mxu0 %v2608
    %3598 = vmatprep.subr.bf16.mxu0 %v2617
    %3599 = vmatpush1.bf16.msra.mxu0 %v2616
    %3600 = vmatprep.subr.bf16.mxu0 %v2625
    %3601 = vmatpush1.bf16.msra.mxu0 %v2624
    %3602 = vmatprep.subr.bf16.mxu0 %v2633
    %3603 = vmatpush1.bf16.msra.mxu0 %v2632
    %3604 = vmatprep.subr.bf16.mxu0 %v2641
    %3605 = vmatpush1.bf16.msra.mxu0 %v2640
    %3606 = vmatprep.subr.bf16.mxu0 %v2649
    %3607 = vmatpush1.bf16.msra.mxu0 %v2648
    %3608 = vmatprep.subr.bf16.mxu0 %v2657
    %3609 = vmatpush1.bf16.msra.mxu0 %v2656
    %3610 = vmatprep.subr.bf16.mxu0 %v2665
    %3611 = vmatpush1.bf16.msra.mxu0 %v2664
    %3612 = vmatprep.subr.bf16.mxu0 %v2673
    %3613 = vmatpush1.bf16.msra.mxu0 %v2672
    %3614 = vmatprep.subr.bf16.mxu0 %v2681
    %3615 = vmatpush1.bf16.msra.mxu0 %v2680
    %3616 = vmatprep.mubr.bf16.mxu0 %v463
    %3617 = vmatmul.mubr.bf16.gmra.mrb[0].mxu0 %v462
    %v3618 = vpop.f32.mrb[0].mxu0
    %v3619 = vadd.f32 %v987, %v3618
    %v3620 = vpop.f32.mrb[0].mxu0
    %v3621 = vadd.f32 %v991, %v3620
    %v3622 = vpop.f32.mrb[0].mxu0
    %v3623 = vpop.f32.mrb[0].mxu0
    %3624 = vdwg.mxu0
    %3625 = vmatprep.subr.bf16.mxu0 %v2689
    %3626 = vmatpush1.bf16.msra.mxu0 %v2688
    %3627 = vmatprep.subr.bf16.mxu0 %v2697
    %3628 = vmatpush1.bf16.msra.mxu0 %v2696
    %3629 = vmatprep.subr.bf16.mxu0 %v2705
    %3630 = vmatpush1.bf16.msra.mxu0 %v2704
    %3631 = vmatprep.subr.bf16.mxu0 %v2713
    %3632 = vmatpush1.bf16.msra.mxu0 %v2712
    %3633 = vmatprep.subr.bf16.mxu0 %v2721
    %3634 = vmatpush1.bf16.msra.mxu0 %v2720
    %3635 = vmatprep.subr.bf16.mxu0 %v2729
    %3636 = vmatpush1.bf16.msra.mxu0 %v2728
    %3637 = vmatprep.subr.bf16.mxu0 %v2737
    %3638 = vmatpush1.bf16.msra.mxu0 %v2736
    %3639 = vmatprep.subr.bf16.mxu0 %v2745
    %3640 = vmatpush1.bf16.msra.mxu0 %v2744
    %3641 = vmatprep.subr.bf16.mxu0 %v2753
    %3642 = vmatpush1.bf16.msra.mxu0 %v2752
    %3643 = vmatprep.subr.bf16.mxu0 %v2761
    %3644 = vmatpush1.bf16.msra.mxu0 %v2760
    %3645 = vmatprep.subr.bf16.mxu0 %v2769
    %3646 = vmatpush1.bf16.msra.mxu0 %v2768
    %3647 = vmatprep.subr.bf16.mxu0 %v2777
    %3648 = vmatpush1.bf16.msra.mxu0 %v2776
    %3649 = vmatprep.subr.bf16.mxu0 %v2785
    %3650 = vmatpush1.bf16.msra.mxu0 %v2784
    %3651 = vmatprep.subr.bf16.mxu0 %v2793
    %3652 = vmatpush1.bf16.msra.mxu0 %v2792
    %3653 = vmatprep.subr.bf16.mxu0 %v2801
    %3654 = vmatpush1.bf16.msra.mxu0 %v2800
    %3655 = vmatprep.subr.bf16.mxu0 %v2809
    %3656 = vmatpush1.bf16.msra.mxu0 %v2808
    %3657 = vmatprep.mubr.bf16.mxu0 %v465
    %3658 = vmatmul.mubr.bf16.gmra.mrb[0].mxu0 %v464
    %v3659 = vpop.f32.mrb[0].mxu0
    %v3660 = vadd.f32 %v3619, %v3659
    %v3661 = vpop.f32.mrb[0].mxu0
    %v3662 = vadd.f32 %v3621, %v3661
    %v3663 = vpop.f32.mrb[0].mxu0
    %v3664 = vpop.f32.mrb[0].mxu0
    %3665 = vdwg.mxu0
    %3666 = vmatprep.subr.bf16.mxu0 %v2817
    %3667 = vmatpush1.bf16.msra.mxu0 %v2816
    %3668 = vmatprep.subr.bf16.mxu0 %v2825
    %3669 = vmatpush1.bf16.msra.mxu0 %v2824
    %3670 = vmatprep.subr.bf16.mxu0 %v2833
    %3671 = vmatpush1.bf16.msra.mxu0 %v2832
    %3672 = vmatprep.subr.bf16.mxu0 %v2841
    %3673 = vmatpush1.bf16.msra.mxu0 %v2840
    %3674 = vmatprep.subr.bf16.mxu0 %v2849
    %3675 = vmatpush1.bf16.msra.mxu0 %v2848
    %3676 = vmatprep.subr.bf16.mxu0 %v2857
    %3677 = vmatpush1.bf16.msra.mxu0 %v2856
    %3678 = vmatprep.subr.bf16.mxu0 %v2865
    %3679 = vmatpush1.bf16.msra.mxu0 %v2864
    %3680 = vmatprep.subr.bf16.mxu0 %v2873
    %3681 = vmatpush1.bf16.msra.mxu0 %v2872
    %3682 = vmatprep.subr.bf16.mxu0 %v2881
    %3683 = vmatpush1.bf16.msra.mxu0 %v2880
    %3684 = vmatprep.subr.bf16.mxu0 %v2889
    %3685 = vmatpush1.bf16.msra.mxu0 %v2888
    %3686 = vmatprep.subr.bf16.mxu0 %v2897
    %3687 = vmatpush1.bf16.msra.mxu0 %v2896
    %3688 = vmatprep.subr.bf16.mxu0 %v2905
    %3689 = vmatpush1.bf16.msra.mxu0 %v2904
    %3690 = vmatprep.subr.bf16.mxu0 %v2913
    %3691 = vmatpush1.bf16.msra.mxu0 %v2912
    %3692 = vmatprep.subr.bf16.mxu0 %v2921
    %3693 = vmatpush1.bf16.msra.mxu0 %v2920
    %3694 = vmatprep.subr.bf16.mxu0 %v2929
    %3695 = vmatpush1.bf16.msra.mxu0 %v2928
    %3696 = vmatprep.subr.bf16.mxu0 %v2937
    %3697 = vmatpush1.bf16.msra.mxu0 %v2936
    %3698 = vmatprep.mubr.bf16.mxu0 %v467
    %3699 = vmatmul.mubr.bf16.gmra.mrb[0].mxu0 %v466
    %v3700 = vpop.f32.mrb[0].mxu0
    %v3701 = vadd.f32 %v3660, %v3700
    %v3702 = vpop.f32.mrb[0].mxu0
    %v3703 = vadd.f32 %v3662, %v3702
    %v3704 = vpop.f32.mrb[0].mxu0
    %v3705 = vpop.f32.mrb[0].mxu0
    %3706 = vdwg.mxu0
    %3707 = vmatprep.subr.bf16.mxu0 %v2945
    %3708 = vmatpush1.bf16.msra.mxu0 %v2944
    %3709 = vmatprep.subr.bf16.mxu0 %v2953
    %3710 = vmatpush1.bf16.msra.mxu0 %v2952
    %3711 = vmatprep.subr.bf16.mxu0 %v2961
    %3712 = vmatpush1.bf16.msra.mxu0 %v2960
    %3713 = vmatprep.subr.bf16.mxu0 %v2969
    %3714 = vmatpush1.bf16.msra.mxu0 %v2968
    %3715 = vmatprep.subr.bf16.mxu0 %v2977
    %3716 = vmatpush1.bf16.msra.mxu0 %v2976
    %3717 = vmatprep.subr.bf16.mxu0 %v2985
    %3718 = vmatpush1.bf16.msra.mxu0 %v2984
    %3719 = vmatprep.subr.bf16.mxu0 %v2993
    %3720 = vmatpush1.bf16.msra.mxu0 %v2992
    %3721 = vmatprep.subr.bf16.mxu0 %v3001
    %3722 = vmatpush1.bf16.msra.mxu0 %v3000
    %3723 = vmatprep.subr.bf16.mxu0 %v3009
    %3724 = vmatpush1.bf16.msra.mxu0 %v3008
    %3725 = vmatprep.subr.bf16.mxu0 %v3017
    %3726 = vmatpush1.bf16.msra.mxu0 %v3016
    %3727 = vmatprep.subr.bf16.mxu0 %v3025
    %3728 = vmatpush1.bf16.msra.mxu0 %v3024
    %3729 = vmatprep.subr.bf16.mxu0 %v3033
    %3730 = vmatpush1.bf16.msra.mxu0 %v3032
    %3731 = vmatprep.subr.bf16.mxu0 %v3041
    %3732 = vmatpush1.bf16.msra.mxu0 %v3040
    %3733 = vmatprep.subr.bf16.mxu0 %v3049
    %3734 = vmatpush1.bf16.msra.mxu0 %v3048
    %3735 = vmatprep.subr.bf16.mxu0 %v3057
    %3736 = vmatpush1.bf16.msra.mxu0 %v3056
    %3737 = vmatprep.subr.bf16.mxu0 %v3065
    %3738 = vmatpush1.bf16.msra.mxu0 %v3064
    %3739 = vmatprep.mubr.bf16.mxu0 %v469
    %3740 = vmatmul.mubr.bf16.gmra.mrb[0].mxu0 %v468
    %v3741 = vpop.f32.mrb[0].mxu0
    %v3742 = vadd.f32 %v3701, %v3741
    %v3743 = vpop.f32.mrb[0].mxu0
    %v3744 = vadd.f32 %v3703, %v3743
    %v3745 = vpop.f32.mrb[0].mxu0
    %v3746 = vpop.f32.mrb[0].mxu0
    %3747 = vdwg.mxu0
    %3748 = vmatprep.subr.bf16.mxu0 %v2563
    %3749 = vmatpush1.bf16.msra.mxu0 %v2562
    %3750 = vmatprep.subr.bf16.mxu0 %v2571
    %3751 = vmatpush1.bf16.msra.mxu0 %v2570
    %3752 = vmatprep.subr.bf16.mxu0 %v2579
    %3753 = vmatpush1.bf16.msra.mxu0 %v2578
    %3754 = vmatprep.subr.bf16.mxu0 %v2587
    %3755 = vmatpush1.bf16.msra.mxu0 %v2586
    %3756 = vmatprep.subr.bf16.mxu0 %v2595
    %3757 = vmatpush1.bf16.msra.mxu0 %v2594
    %3758 = vmatprep.subr.bf16.mxu0 %v2603
    %3759 = vmatpush1.bf16.msra.mxu0 %v2602
    %3760 = vmatprep.subr.bf16.mxu0 %v2611
    %3761 = vmatpush1.bf16.msra.mxu0 %v2610
    %3762 = vmatprep.subr.bf16.mxu0 %v2619
    %3763 = vmatpush1.bf16.msra.mxu0 %v2618
    %3764 = vmatprep.subr.bf16.mxu0 %v2627
    %3765 = vmatpush1.bf16.msra.mxu0 %v2626
    %3766 = vmatprep.subr.bf16.mxu0 %v2635
    %3767 = vmatpush1.bf16.msra.mxu0 %v2634
    %3768 = vmatprep.subr.bf16.mxu0 %v2643
    %3769 = vmatpush1.bf16.msra.mxu0 %v2642
    %3770 = vmatprep.subr.bf16.mxu0 %v2651
    %3771 = vmatpush1.bf16.msra.mxu0 %v2650
    %3772 = vmatprep.subr.bf16.mxu0 %v2659
    %3773 = vmatpush1.bf16.msra.mxu0 %v2658
    %3774 = vmatprep.subr.bf16.mxu0 %v2667
    %3775 = vmatpush1.bf16.msra.mxu0 %v2666
    %3776 = vmatprep.subr.bf16.mxu0 %v2675
    %3777 = vmatpush1.bf16.msra.mxu0 %v2674
    %3778 = vmatprep.subr.bf16.mxu0 %v2683
    %3779 = vmatpush1.bf16.msra.mxu0 %v2682
    %3780 = vmatprep.mubr.bf16.mxu0 %v463
    %3781 = vmatmul.mubr.bf16.gmra.mrb[0].mxu0 %v462
    %v3782 = vpop.f32.mrb[0].mxu0
    %v3783 = vadd.f32 %v995, %v3782
    %v3784 = vpop.f32.mrb[0].mxu0
    %v3785 = vadd.f32 %v999, %v3784
    %v3786 = vpop.f32.mrb[0].mxu0
    %v3787 = vpop.f32.mrb[0].mxu0
    %3788 = vdwg.mxu0
    %3789 = vmatprep.subr.bf16.mxu0 %v2691
    %3790 = vmatpush1.bf16.msra.mxu0 %v2690
    %3791 = vmatprep.subr.bf16.mxu0 %v2699
    %3792 = vmatpush1.bf16.msra.mxu0 %v2698
    %3793 = vmatprep.subr.bf16.mxu0 %v2707
    %3794 = vmatpush1.bf16.msra.mxu0 %v2706
    %3795 = vmatprep.subr.bf16.mxu0 %v2715
    %3796 = vmatpush1.bf16.msra.mxu0 %v2714
    %3797 = vmatprep.subr.bf16.mxu0 %v2723
    %3798 = vmatpush1.bf16.msra.mxu0 %v2722
    %3799 = vmatprep.subr.bf16.mxu0 %v2731
    %3800 = vmatpush1.bf16.msra.mxu0 %v2730
    %3801 = vmatprep.subr.bf16.mxu0 %v2739
    %3802 = vmatpush1.bf16.msra.mxu0 %v2738
    %3803 = vmatprep.subr.bf16.mxu0 %v2747
    %3804 = vmatpush1.bf16.msra.mxu0 %v2746
    %3805 = vmatprep.subr.bf16.mxu0 %v2755
    %3806 = vmatpush1.bf16.msra.mxu0 %v2754
    %3807 = vmatprep.subr.bf16.mxu0 %v2763
    %3808 = vmatpush1.bf16.msra.mxu0 %v2762
    %3809 = vmatprep.subr.bf16.mxu0 %v2771
    %3810 = vmatpush1.bf16.msra.mxu0 %v2770
    %3811 = vmatprep.subr.bf16.mxu0 %v2779
    %3812 = vmatpush1.bf16.msra.mxu0 %v2778
    %3813 = vmatprep.subr.bf16.mxu0 %v2787
    %3814 = vmatpush1.bf16.msra.mxu0 %v2786
    %3815 = vmatprep.subr.bf16.mxu0 %v2795
    %3816 = vmatpush1.bf16.msra.mxu0 %v2794
    %3817 = vmatprep.subr.bf16.mxu0 %v2803
    %3818 = vmatpush1.bf16.msra.mxu0 %v2802
    %3819 = vmatprep.subr.bf16.mxu0 %v2811
    %3820 = vmatpush1.bf16.msra.mxu0 %v2810
    %3821 = vmatprep.mubr.bf16.mxu0 %v465
    %3822 = vmatmul.mubr.bf16.gmra.mrb[0].mxu0 %v464
    %v3823 = vpop.f32.mrb[0].mxu0
    %v3824 = vadd.f32 %v3783, %v3823
    %v3825 = vpop.f32.mrb[0].mxu0
    %v3826 = vadd.f32 %v3785, %v3825
    %v3827 = vpop.f32.mrb[0].mxu0
    %v3828 = vpop.f32.mrb[0].mxu0
    %3829 = vdwg.mxu0
    %3830 = vmatprep.subr.bf16.mxu0 %v2819
    %3831 = vmatpush1.bf16.msra.mxu0 %v2818
    %3832 = vmatprep.subr.bf16.mxu0 %v2827
    %3833 = vmatpush1.bf16.msra.mxu0 %v2826
    %3834 = vmatprep.subr.bf16.mxu0 %v2835
    %3835 = vmatpush1.bf16.msra.mxu0 %v2834
    %3836 = vmatprep.subr.bf16.mxu0 %v2843
    %3837 = vmatpush1.bf16.msra.mxu0 %v2842
    %3838 = vmatprep.subr.bf16.mxu0 %v2851
    %3839 = vmatpush1.bf16.msra.mxu0 %v2850
    %3840 = vmatprep.subr.bf16.mxu0 %v2859
    %3841 = vmatpush1.bf16.msra.mxu0 %v2858
    %3842 = vmatprep.subr.bf16.mxu0 %v2867
    %3843 = vmatpush1.bf16.msra.mxu0 %v2866
    %3844 = vmatprep.subr.bf16.mxu0 %v2875
    %3845 = vmatpush1.bf16.msra.mxu0 %v2874
    %3846 = vmatprep.subr.bf16.mxu0 %v2883
    %3847 = vmatpush1.bf16.msra.mxu0 %v2882
    %3848 = vmatprep.subr.bf16.mxu0 %v2891
    %3849 = vmatpush1.bf16.msra.mxu0 %v2890
    %3850 = vmatprep.subr.bf16.mxu0 %v2899
    %3851 = vmatpush1.bf16.msra.mxu0 %v2898
    %3852 = vmatprep.subr.bf16.mxu0 %v2907
    %3853 = vmatpush1.bf16.msra.mxu0 %v2906
    %3854 = vmatprep.subr.bf16.mxu0 %v2915
    %3855 = vmatpush1.bf16.msra.mxu0 %v2914
    %3856 = vmatprep.subr.bf16.mxu0 %v2923
    %3857 = vmatpush1.bf16.msra.mxu0 %v2922
    %3858 = vmatprep.subr.bf16.mxu0 %v2931
    %3859 = vmatpush1.bf16.msra.mxu0 %v2930
    %3860 = vmatprep.subr.bf16.mxu0 %v2939
    %3861 = vmatpush1.bf16.msra.mxu0 %v2938
    %3862 = vmatprep.mubr.bf16.mxu0 %v467
    %3863 = vmatmul.mubr.bf16.gmra.mrb[0].mxu0 %v466
    %v3864 = vpop.f32.mrb[0].mxu0
    %v3865 = vadd.f32 %v3824, %v3864
    %v3866 = vpop.f32.mrb[0].mxu0
    %v3867 = vadd.f32 %v3826, %v3866
    %v3868 = vpop.f32.mrb[0].mxu0
    %v3869 = vpop.f32.mrb[0].mxu0
    %3870 = vdwg.mxu0
    %3871 = vmatprep.subr.bf16.mxu0 %v2947
    %3872 = vmatpush1.bf16.msra.mxu0 %v2946
    %3873 = vmatprep.subr.bf16.mxu0 %v2955
    %3874 = vmatpush1.bf16.msra.mxu0 %v2954
    %3875 = vmatprep.subr.bf16.mxu0 %v2963
    %3876 = vmatpush1.bf16.msra.mxu0 %v2962
    %3877 = vmatprep.subr.bf16.mxu0 %v2971
    %3878 = vmatpush1.bf16.msra.mxu0 %v2970
    %3879 = vmatprep.subr.bf16.mxu0 %v2979
    %3880 = vmatpush1.bf16.msra.mxu0 %v2978
    %3881 = vmatprep.subr.bf16.mxu0 %v2987
    %3882 = vmatpush1.bf16.msra.mxu0 %v2986
    %3883 = vmatprep.subr.bf16.mxu0 %v2995
    %3884 = vmatpush1.bf16.msra.mxu0 %v2994
    %3885 = vmatprep.subr.bf16.mxu0 %v3003
    %3886 = vmatpush1.bf16.msra.mxu0 %v3002
    %3887 = vmatprep.subr.bf16.mxu0 %v3011
    %3888 = vmatpush1.bf16.msra.mxu0 %v3010
    %3889 = vmatprep.subr.bf16.mxu0 %v3019
    %3890 = vmatpush1.bf16.msra.mxu0 %v3018
    %3891 = vmatprep.subr.bf16.mxu0 %v3027
    %3892 = vmatpush1.bf16.msra.mxu0 %v3026
    %3893 = vmatprep.subr.bf16.mxu0 %v3035
    %3894 = vmatpush1.bf16.msra.mxu0 %v3034
    %3895 = vmatprep.subr.bf16.mxu0 %v3043
    %3896 = vmatpush1.bf16.msra.mxu0 %v3042
    %3897 = vmatprep.subr.bf16.mxu0 %v3051
    %3898 = vmatpush1.bf16.msra.mxu0 %v3050
    %3899 = vmatprep.subr.bf16.mxu0 %v3059
    %3900 = vmatpush1.bf16.msra.mxu0 %v3058
    %3901 = vmatprep.subr.bf16.mxu0 %v3067
    %3902 = vmatpush1.bf16.msra.mxu0 %v3066
    %3903 = vmatprep.mubr.bf16.mxu0 %v469
    %3904 = vmatmul.mubr.bf16.gmra.mrb[0].mxu0 %v468
    %v3905 = vpop.f32.mrb[0].mxu0
    %v3906 = vadd.f32 %v3865, %v3905
    %v3907 = vpop.f32.mrb[0].mxu0
    %v3908 = vadd.f32 %v3867, %v3907
    %v3909 = vpop.f32.mrb[0].mxu0
    %v3910 = vpop.f32.mrb[0].mxu0
    %3911 = vdwg.mxu0
    %3912 = vmatprep.subr.bf16.mxu0 %v2565
    %3913 = vmatpush1.bf16.msra.mxu0 %v2564
    %3914 = vmatprep.subr.bf16.mxu0 %v2573
    %3915 = vmatpush1.bf16.msra.mxu0 %v2572
    %3916 = vmatprep.subr.bf16.mxu0 %v2581
    %3917 = vmatpush1.bf16.msra.mxu0 %v2580
    %3918 = vmatprep.subr.bf16.mxu0 %v2589
    %3919 = vmatpush1.bf16.msra.mxu0 %v2588
    %3920 = vmatprep.subr.bf16.mxu0 %v2597
    %3921 = vmatpush1.bf16.msra.mxu0 %v2596
    %3922 = vmatprep.subr.bf16.mxu0 %v2605
    %3923 = vmatpush1.bf16.msra.mxu0 %v2604
    %3924 = vmatprep.subr.bf16.mxu0 %v2613
    %3925 = vmatpush1.bf16.msra.mxu0 %v2612
    %3926 = vmatprep.subr.bf16.mxu0 %v2621
    %3927 = vmatpush1.bf16.msra.mxu0 %v2620
    %3928 = vmatprep.subr.bf16.mxu0 %v2629
    %3929 = vmatpush1.bf16.msra.mxu0 %v2628
    %3930 = vmatprep.subr.bf16.mxu0 %v2637
    %3931 = vmatpush1.bf16.msra.mxu0 %v2636
    %3932 = vmatprep.subr.bf16.mxu0 %v2645
    %3933 = vmatpush1.bf16.msra.mxu0 %v2644
    %3934 = vmatprep.subr.bf16.mxu0 %v2653
    %3935 = vmatpush1.bf16.msra.mxu0 %v2652
    %3936 = vmatprep.subr.bf16.mxu0 %v2661
    %3937 = vmatpush1.bf16.msra.mxu0 %v2660
    %3938 = vmatprep.subr.bf16.mxu0 %v2669
    %3939 = vmatpush1.bf16.msra.mxu0 %v2668
    %3940 = vmatprep.subr.bf16.mxu0 %v2677
    %3941 = vmatpush1.bf16.msra.mxu0 %v2676
    %3942 = vmatprep.subr.bf16.mxu0 %v2685
    %3943 = vmatpush1.bf16.msra.mxu0 %v2684
    %3944 = vmatprep.mubr.bf16.mxu0 %v463
    %3945 = vmatmul.mubr.bf16.gmra.mrb[0].mxu0 %v462
    %v3946 = vpop.f32.mrb[0].mxu0
    %v3947 = vadd.f32 %v1003, %v3946
    %v3948 = vpop.f32.mrb[0].mxu0
    %v3949 = vadd.f32 %v1007, %v3948
    %v3950 = vpop.f32.mrb[0].mxu0
    %v3951 = vpop.f32.mrb[0].mxu0
    %3952 = vdwg.mxu0
    %3953 = vmatprep.subr.bf16.mxu0 %v2693
    %3954 = vmatpush1.bf16.msra.mxu0 %v2692
    %3955 = vmatprep.subr.bf16.mxu0 %v2701
    %3956 = vmatpush1.bf16.msra.mxu0 %v2700
    %3957 = vmatprep.subr.bf16.mxu0 %v2709
    %3958 = vmatpush1.bf16.msra.mxu0 %v2708
    %3959 = vmatprep.subr.bf16.mxu0 %v2717
    %3960 = vmatpush1.bf16.msra.mxu0 %v2716
    %3961 = vmatprep.subr.bf16.mxu0 %v2725
    %3962 = vmatpush1.bf16.msra.mxu0 %v2724
    %3963 = vmatprep.subr.bf16.mxu0 %v2733
    %3964 = vmatpush1.bf16.msra.mxu0 %v2732
    %3965 = vmatprep.subr.bf16.mxu0 %v2741
    %3966 = vmatpush1.bf16.msra.mxu0 %v2740
    %3967 = vmatprep.subr.bf16.mxu0 %v2749
    %3968 = vmatpush1.bf16.msra.mxu0 %v2748
    %3969 = vmatprep.subr.bf16.mxu0 %v2757
    %3970 = vmatpush1.bf16.msra.mxu0 %v2756
    %3971 = vmatprep.subr.bf16.mxu0 %v2765
    %3972 = vmatpush1.bf16.msra.mxu0 %v2764
    %3973 = vmatprep.subr.bf16.mxu0 %v2773
    %3974 = vmatpush1.bf16.msra.mxu0 %v2772
    %3975 = vmatprep.subr.bf16.mxu0 %v2781
    %3976 = vmatpush1.bf16.msra.mxu0 %v2780
    %3977 = vmatprep.subr.bf16.mxu0 %v2789
    %3978 = vmatpush1.bf16.msra.mxu0 %v2788
    %3979 = vmatprep.subr.bf16.mxu0 %v2797
    %3980 = vmatpush1.bf16.msra.mxu0 %v2796
    %3981 = vmatprep.subr.bf16.mxu0 %v2805
    %3982 = vmatpush1.bf16.msra.mxu0 %v2804
    %3983 = vmatprep.subr.bf16.mxu0 %v2813
    %3984 = vmatpush1.bf16.msra.mxu0 %v2812
    %3985 = vmatprep.mubr.bf16.mxu0 %v465
    %3986 = vmatmul.mubr.bf16.gmra.mrb[0].mxu0 %v464
    %v3987 = vpop.f32.mrb[0].mxu0
    %v3988 = vadd.f32 %v3947, %v3987
    %v3989 = vpop.f32.mrb[0].mxu0
    %v3990 = vadd.f32 %v3949, %v3989
    %v3991 = vpop.f32.mrb[0].mxu0
    %v3992 = vpop.f32.mrb[0].mxu0
    %3993 = vdwg.mxu0
    %3994 = vmatprep.subr.bf16.mxu0 %v2821
    %3995 = vmatpush1.bf16.msra.mxu0 %v2820
    %3996 = vmatprep.subr.bf16.mxu0 %v2829
    %3997 = vmatpush1.bf16.msra.mxu0 %v2828
    %3998 = vmatprep.subr.bf16.mxu0 %v2837
    %3999 = vmatpush1.bf16.msra.mxu0 %v2836
    %4000 = vmatprep.subr.bf16.mxu0 %v2845
    %4001 = vmatpush1.bf16.msra.mxu0 %v2844
    %4002 = vmatprep.subr.bf16.mxu0 %v2853
    %4003 = vmatpush1.bf16.msra.mxu0 %v2852
    %4004 = vmatprep.subr.bf16.mxu0 %v2861
    %4005 = vmatpush1.bf16.msra.mxu0 %v2860
    %4006 = vmatprep.subr.bf16.mxu0 %v2869
    %4007 = vmatpush1.bf16.msra.mxu0 %v2868
    %4008 = vmatprep.subr.bf16.mxu0 %v2877
    %4009 = vmatpush1.bf16.msra.mxu0 %v2876
    %4010 = vmatprep.subr.bf16.mxu0 %v2885
    %4011 = vmatpush1.bf16.msra.mxu0 %v2884
    %4012 = vmatprep.subr.bf16.mxu0 %v2893
    %4013 = vmatpush1.bf16.msra.mxu0 %v2892
    %4014 = vmatprep.subr.bf16.mxu0 %v2901
    %4015 = vmatpush1.bf16.msra.mxu0 %v2900
    %4016 = vmatprep.subr.bf16.mxu0 %v2909
    %4017 = vmatpush1.bf16.msra.mxu0 %v2908
    %4018 = vmatprep.subr.bf16.mxu0 %v2917
    %4019 = vmatpush1.bf16.msra.mxu0 %v2916
    %4020 = vmatprep.subr.bf16.mxu0 %v2925
    %4021 = vmatpush1.bf16.msra.mxu0 %v2924
    %4022 = vmatprep.subr.bf16.mxu0 %v2933
    %4023 = vmatpush1.bf16.msra.mxu0 %v2932
    %4024 = vmatprep.subr.bf16.mxu0 %v2941
    %4025 = vmatpush1.bf16.msra.mxu0 %v2940
    %4026 = vmatprep.mubr.bf16.mxu0 %v467
    %4027 = vmatmul.mubr.bf16.gmra.mrb[0].mxu0 %v466
    %v4028 = vpop.f32.mrb[0].mxu0
    %v4029 = vadd.f32 %v3988, %v4028
    %v4030 = vpop.f32.mrb[0].mxu0
    %v4031 = vadd.f32 %v3990, %v4030
    %v4032 = vpop.f32.mrb[0].mxu0
    %v4033 = vpop.f32.mrb[0].mxu0
    %4034 = vdwg.mxu0
    %4035 = vmatprep.subr.bf16.mxu0 %v2949
    %4036 = vmatpush1.bf16.msra.mxu0 %v2948
    %4037 = vmatprep.subr.bf16.mxu0 %v2957
    %4038 = vmatpush1.bf16.msra.mxu0 %v2956
    %4039 = vmatprep.subr.bf16.mxu0 %v2965
    %4040 = vmatpush1.bf16.msra.mxu0 %v2964
    %4041 = vmatprep.subr.bf16.mxu0 %v2973
    %4042 = vmatpush1.bf16.msra.mxu0 %v2972
    %4043 = vmatprep.subr.bf16.mxu0 %v2981
    %4044 = vmatpush1.bf16.msra.mxu0 %v2980
    %4045 = vmatprep.subr.bf16.mxu0 %v2989
    %4046 = vmatpush1.bf16.msra.mxu0 %v2988
    %4047 = vmatprep.subr.bf16.mxu0 %v2997
    %4048 = vmatpush1.bf16.msra.mxu0 %v2996
    %4049 = vmatprep.subr.bf16.mxu0 %v3005
    %4050 = vmatpush1.bf16.msra.mxu0 %v3004
    %4051 = vmatprep.subr.bf16.mxu0 %v3013
    %4052 = vmatpush1.bf16.msra.mxu0 %v3012
    %4053 = vmatprep.subr.bf16.mxu0 %v3021
    %4054 = vmatpush1.bf16.msra.mxu0 %v3020
    %4055 = vmatprep.subr.bf16.mxu0 %v3029
    %4056 = vmatpush1.bf16.msra.mxu0 %v3028
    %4057 = vmatprep.subr.bf16.mxu0 %v3037
    %4058 = vmatpush1.bf16.msra.mxu0 %v3036
    %4059 = vmatprep.subr.bf16.mxu0 %v3045
    %4060 = vmatpush1.bf16.msra.mxu0 %v3044
    %4061 = vmatprep.subr.bf16.mxu0 %v3053
    %4062 = vmatpush1.bf16.msra.mxu0 %v3052
    %4063 = vmatprep.subr.bf16.mxu0 %v3061
    %4064 = vmatpush1.bf16.msra.mxu0 %v3060
    %4065 = vmatprep.subr.bf16.mxu0 %v3069
    %4066 = vmatpush1.bf16.msra.mxu0 %v3068
    %4067 = vmatprep.mubr.bf16.mxu0 %v469
    %4068 = vmatmul.mubr.bf16.gmra.mrb[0].mxu0 %v468
    %v4069 = vpop.f32.mrb[0].mxu0
    %v4070 = vadd.f32 %v4029, %v4069
    %v4071 = vpop.f32.mrb[0].mxu0
    %v4072 = vadd.f32 %v4031, %v4071
    %v4073 = vpop.f32.mrb[0].mxu0
    %v4074 = vpop.f32.mrb[0].mxu0
    %4075 = vdwg.mxu0
    %4076 = vmatprep.subr.bf16.mxu0 %v2567
    %4077 = vmatpush1.bf16.msra.mxu0 %v2566
    %4078 = vmatprep.subr.bf16.mxu0 %v2575
    %4079 = vmatpush1.bf16.msra.mxu0 %v2574
    %4080 = vmatprep.subr.bf16.mxu0 %v2583
    %4081 = vmatpush1.bf16.msra.mxu0 %v2582
    %4082 = vmatprep.subr.bf16.mxu0 %v2591
    %4083 = vmatpush1.bf16.msra.mxu0 %v2590
    %4084 = vmatprep.subr.bf16.mxu0 %v2599
    %4085 = vmatpush1.bf16.msra.mxu0 %v2598
    %4086 = vmatprep.subr.bf16.mxu0 %v2607
    %4087 = vmatpush1.bf16.msra.mxu0 %v2606
    %4088 = vmatprep.subr.bf16.mxu0 %v2615
    %4089 = vmatpush1.bf16.msra.mxu0 %v2614
    %4090 = vmatprep.subr.bf16.mxu0 %v2623
    %4091 = vmatpush1.bf16.msra.mxu0 %v2622
    %4092 = vmatprep.subr.bf16.mxu0 %v2631
    %4093 = vmatpush1.bf16.msra.mxu0 %v2630
    %4094 = vmatprep.subr.bf16.mxu0 %v2639
    %4095 = vmatpush1.bf16.msra.mxu0 %v2638
    %4096 = vmatprep.subr.bf16.mxu0 %v2647
    %4097 = vmatpush1.bf16.msra.mxu0 %v2646
    %4098 = vmatprep.subr.bf16.mxu0 %v2655
    %4099 = vmatpush1.bf16.msra.mxu0 %v2654
    %4100 = vmatprep.subr.bf16.mxu0 %v2663
    %4101 = vmatpush1.bf16.msra.mxu0 %v2662
    %4102 = vmatprep.subr.bf16.mxu0 %v2671
    %4103 = vmatpush1.bf16.msra.mxu0 %v2670
    %4104 = vmatprep.subr.bf16.mxu0 %v2679
    %4105 = vmatpush1.bf16.msra.mxu0 %v2678
    %4106 = vmatprep.subr.bf16.mxu0 %v2687
    %4107 = vmatpush1.bf16.msra.mxu0 %v2686
    %4108 = vmatprep.mubr.bf16.mxu0 %v463
    %4109 = vmatmul.mubr.bf16.gmra.mrb[0].mxu0 %v462
    %v4110 = vpop.f32.mrb[0].mxu0
    %v4111 = vadd.f32 %v1011, %v4110
    %v4112 = vpop.f32.mrb[0].mxu0
    %v4113 = vadd.f32 %v1015, %v4112
    %v4114 = vpop.f32.mrb[0].mxu0
    %v4115 = vpop.f32.mrb[0].mxu0
    %4116 = vdwg.mxu0
    %4117 = vmatprep.subr.bf16.mxu0 %v2695
    %4118 = vmatpush1.bf16.msra.mxu0 %v2694
    %4119 = vmatprep.subr.bf16.mxu0 %v2703
    %4120 = vmatpush1.bf16.msra.mxu0 %v2702
    %4121 = vmatprep.subr.bf16.mxu0 %v2711
    %4122 = vmatpush1.bf16.msra.mxu0 %v2710
    %4123 = vmatprep.subr.bf16.mxu0 %v2719
    %4124 = vmatpush1.bf16.msra.mxu0 %v2718
    %4125 = vmatprep.subr.bf16.mxu0 %v2727
    %4126 = vmatpush1.bf16.msra.mxu0 %v2726
    %4127 = vmatprep.subr.bf16.mxu0 %v2735
    %4128 = vmatpush1.bf16.msra.mxu0 %v2734
    %4129 = vmatprep.subr.bf16.mxu0 %v2743
    %4130 = vmatpush1.bf16.msra.mxu0 %v2742
    %4131 = vmatprep.subr.bf16.mxu0 %v2751
    %4132 = vmatpush1.bf16.msra.mxu0 %v2750
    %4133 = vmatprep.subr.bf16.mxu0 %v2759
    %4134 = vmatpush1.bf16.msra.mxu0 %v2758
    %4135 = vmatprep.subr.bf16.mxu0 %v2767
    %4136 = vmatpush1.bf16.msra.mxu0 %v2766
    %4137 = vmatprep.subr.bf16.mxu0 %v2775
    %4138 = vmatpush1.bf16.msra.mxu0 %v2774
    %4139 = vmatprep.subr.bf16.mxu0 %v2783
    %4140 = vmatpush1.bf16.msra.mxu0 %v2782
    %4141 = vmatprep.subr.bf16.mxu0 %v2791
    %4142 = vmatpush1.bf16.msra.mxu0 %v2790
    %4143 = vmatprep.subr.bf16.mxu0 %v2799
    %4144 = vmatpush1.bf16.msra.mxu0 %v2798
    %4145 = vmatprep.subr.bf16.mxu0 %v2807
    %4146 = vmatpush1.bf16.msra.mxu0 %v2806
    %4147 = vmatprep.subr.bf16.mxu0 %v2815
    %4148 = vmatpush1.bf16.msra.mxu0 %v2814
    %4149 = vmatprep.mubr.bf16.mxu0 %v465
    %4150 = vmatmul.mubr.bf16.gmra.mrb[0].mxu0 %v464
    %v4151 = vpop.f32.mrb[0].mxu0
    %v4152 = vadd.f32 %v4111, %v4151
    %v4153 = vpop.f32.mrb[0].mxu0
    %v4154 = vadd.f32 %v4113, %v4153
    %v4155 = vpop.f32.mrb[0].mxu0
    %v4156 = vpop.f32.mrb[0].mxu0
    %4157 = vdwg.mxu0
    %4158 = vmatprep.subr.bf16.mxu0 %v2823
    %4159 = vmatpush1.bf16.msra.mxu0 %v2822
    %4160 = vmatprep.subr.bf16.mxu0 %v2831
    %4161 = vmatpush1.bf16.msra.mxu0 %v2830
    %4162 = vmatprep.subr.bf16.mxu0 %v2839
    %4163 = vmatpush1.bf16.msra.mxu0 %v2838
    %4164 = vmatprep.subr.bf16.mxu0 %v2847
    %4165 = vmatpush1.bf16.msra.mxu0 %v2846
    %4166 = vmatprep.subr.bf16.mxu0 %v2855
    %4167 = vmatpush1.bf16.msra.mxu0 %v2854
    %4168 = vmatprep.subr.bf16.mxu0 %v2863
    %4169 = vmatpush1.bf16.msra.mxu0 %v2862
    %4170 = vmatprep.subr.bf16.mxu0 %v2871
    %4171 = vmatpush1.bf16.msra.mxu0 %v2870
    %4172 = vmatprep.subr.bf16.mxu0 %v2879
    %4173 = vmatpush1.bf16.msra.mxu0 %v2878
    %4174 = vmatprep.subr.bf16.mxu0 %v2887
    %4175 = vmatpush1.bf16.msra.mxu0 %v2886
    %4176 = vmatprep.subr.bf16.mxu0 %v2895
    %4177 = vmatpush1.bf16.msra.mxu0 %v2894
    %4178 = vmatprep.subr.bf16.mxu0 %v2903
    %4179 = vmatpush1.bf16.msra.mxu0 %v2902
    %4180 = vmatprep.subr.bf16.mxu0 %v2911
    %4181 = vmatpush1.bf16.msra.mxu0 %v2910
    %4182 = vmatprep.subr.bf16.mxu0 %v2919
    %4183 = vmatpush1.bf16.msra.mxu0 %v2918
    %4184 = vmatprep.subr.bf16.mxu0 %v2927
    %4185 = vmatpush1.bf16.msra.mxu0 %v2926
    %4186 = vmatprep.subr.bf16.mxu0 %v2935
    %4187 = vmatpush1.bf16.msra.mxu0 %v2934
    %4188 = vmatprep.subr.bf16.mxu0 %v2943
    %4189 = vmatpush1.bf16.msra.mxu0 %v2942
    %4190 = vmatprep.mubr.bf16.mxu0 %v467
    %4191 = vmatmul.mubr.bf16.gmra.mrb[0].mxu0 %v466
    %v4192 = vpop.f32.mrb[0].mxu0
    %v4193 = vadd.f32 %v4152, %v4192
    %v4194 = vpop.f32.mrb[0].mxu0
    %v4195 = vadd.f32 %v4154, %v4194
    %v4196 = vpop.f32.mrb[0].mxu0
    %v4197 = vpop.f32.mrb[0].mxu0
    %4198 = vdwg.mxu0
    %4199 = vmatprep.subr.bf16.mxu0 %v2951
    %4200 = vmatpush1.bf16.msra.mxu0 %v2950
    %4201 = vmatprep.subr.bf16.mxu0 %v2959
    %4202 = vmatpush1.bf16.msra.mxu0 %v2958
    %4203 = vmatprep.subr.bf16.mxu0 %v2967
    %4204 = vmatpush1.bf16.msra.mxu0 %v2966
    %4205 = vmatprep.subr.bf16.mxu0 %v2975
    %4206 = vmatpush1.bf16.msra.mxu0 %v2974
    %4207 = vmatprep.subr.bf16.mxu0 %v2983
    %4208 = vmatpush1.bf16.msra.mxu0 %v2982
    %4209 = vmatprep.subr.bf16.mxu0 %v2991
    %4210 = vmatpush1.bf16.msra.mxu0 %v2990
    %4211 = vmatprep.subr.bf16.mxu0 %v2999
    %4212 = vmatpush1.bf16.msra.mxu0 %v2998
    %4213 = vmatprep.subr.bf16.mxu0 %v3007
    %4214 = vmatpush1.bf16.msra.mxu0 %v3006
    %4215 = vmatprep.subr.bf16.mxu0 %v3015
    %4216 = vmatpush1.bf16.msra.mxu0 %v3014
    %4217 = vmatprep.subr.bf16.mxu0 %v3023
    %4218 = vmatpush1.bf16.msra.mxu0 %v3022
    %4219 = vmatprep.subr.bf16.mxu0 %v3031
    %4220 = vmatpush1.bf16.msra.mxu0 %v3030
    %4221 = vmatprep.subr.bf16.mxu0 %v3039
    %4222 = vmatpush1.bf16.msra.mxu0 %v3038
    %4223 = vmatprep.subr.bf16.mxu0 %v3047
    %4224 = vmatpush1.bf16.msra.mxu0 %v3046
    %4225 = vmatprep.subr.bf16.mxu0 %v3055
    %4226 = vmatpush1.bf16.msra.mxu0 %v3054
    %4227 = vmatprep.subr.bf16.mxu0 %v3063
    %4228 = vmatpush1.bf16.msra.mxu0 %v3062
    %4229 = vmatprep.subr.bf16.mxu0 %v3071
    %4230 = vmatpush1.bf16.msra.mxu0 %v3070
    %4231 = vmatprep.mubr.bf16.mxu0 %v469
    %4232 = vmatmul.mubr.bf16.gmra.mrb[0].mxu0 %v468
    %v4233 = vpop.f32.mrb[0].mxu0
    %v4234 = vadd.f32 %v4193, %v4233
    %v4235 = vpop.f32.mrb[0].mxu0
    %v4236 = vadd.f32 %v4195, %v4235
    %v4237 = vpop.f32.mrb[0].mxu0
    %v4238 = vpop.f32.mrb[0].mxu0
    %4239 = vdwg.mxu0
    %v4240 = vmax.f32 %v3742, 0.0
    %v4241 = vmax.f32 %v3744, 0.0
    %v4242 = vmax.f32 %v3906, 0.0
    %v4243 = vmax.f32 %v3908, 0.0
    %v4244 = vmax.f32 %v4070, 0.0
    %v4245 = vmax.f32 %v4072, 0.0
    %v4246 = vmax.f32 %v4234, 0.0
    %v4247 = vmax.f32 %v4236, 0.0
    %v4248 = vpack.c.bf16 %v4240, %v4240
    %v4249 = vpack.c.bf16 %v4241, %v4241
    %v4250 = vpack.c.bf16 %v4242, %v4242
    %v4251 = vpack.c.bf16 %v4243, %v4243
    %v4252 = vpack.c.bf16 %v4244, %v4244
    %v4253 = vpack.c.bf16 %v4245, %v4245
    %v4254 = vpack.c.bf16 %v4246, %v4246
    %v4255 = vpack.c.bf16 %v4247, %v4247
    %v4256 = vld [vmem:[#allocation11] sm:$0xff]
    %v4257 = vld [vmem:[#allocation11 + $0x8] sm:$0xff]
    %v4258 = vld [vmem:[#allocation11 + $0x10] sm:$0xff]
    %v4259 = vld [vmem:[#allocation11 + $0x18] sm:$0xff]
    %v4260 = vld [vmem:[#allocation11 + $0x20] sm:$0xff]
    %v4261 = vld [vmem:[#allocation11 + $0x28] sm:$0xff]
    %v4262 = vld [vmem:[#allocation11 + $0x30] sm:$0xff]
    %v4263 = vld [vmem:[#allocation11 + $0x38] sm:$0xff]
    %v4264 = vld [vmem:[#allocation11 + $0x40] sm:$0xff]
    %v4265 = vld [vmem:[#allocation11 + $0x48] sm:$0xff]
    %v4266 = vld [vmem:[#allocation11 + $0x50] sm:$0xff]
    %v4267 = vld [vmem:[#allocation11 + $0x58] sm:$0xff]
    %v4268 = vld [vmem:[#allocation11 + $0x60] sm:$0xff]
    %v4269 = vld [vmem:[#allocation11 + $0x68] sm:$0xff]
    %v4270 = vld [vmem:[#allocation11 + $0x70] sm:$0xff]
    %v4271 = vld [vmem:[#allocation11 + $0x78] sm:$0xff]
    %v4272 = vld [vmem:[#allocation11 + $0x80] sm:$0xff]
    %v4273 = vld [vmem:[#allocation11 + $0x88] sm:$0xff]
    %v4274 = vld [vmem:[#allocation11 + $0x90] sm:$0xff]
    %v4275 = vld [vmem:[#allocation11 + $0x98] sm:$0xff]
    %v4276 = vld [vmem:[#allocation11 + $0xa0] sm:$0xff]
    %v4277 = vld [vmem:[#allocation11 + $0xa8] sm:$0xff]
    %v4278 = vld [vmem:[#allocation11 + $0xb0] sm:$0xff]
    %v4279 = vld [vmem:[#allocation11 + $0xb8] sm:$0xff]
    %v4280 = vld [vmem:[#allocation11 + $0xc0] sm:$0xff]
    %v4281 = vld [vmem:[#allocation11 + $0xc8] sm:$0xff]
    %v4282 = vld [vmem:[#allocation11 + $0xd0] sm:$0xff]
    %v4283 = vld [vmem:[#allocation11 + $0xd8] sm:$0xff]
    %v4284 = vld [vmem:[#allocation11 + $0xe0] sm:$0xff]
    %v4285 = vld [vmem:[#allocation11 + $0xe8] sm:$0xff]
    %v4286 = vld [vmem:[#allocation11 + $0xf0] sm:$0xff]
    %v4287 = vld [vmem:[#allocation11 + $0xf8] sm:$0xff]
    %v4288 = vld [vmem:[#allocation11 + $0x100] sm:$0xff]
    %v4289 = vld [vmem:[#allocation11 + $0x108] sm:$0xff]
    %v4290 = vld [vmem:[#allocation11 + $0x110] sm:$0xff]
    %v4291 = vld [vmem:[#allocation11 + $0x118] sm:$0xff]
    %v4292 = vld [vmem:[#allocation11 + $0x120] sm:$0xff]
    %v4293 = vld [vmem:[#allocation11 + $0x128] sm:$0xff]
    %v4294 = vld [vmem:[#allocation11 + $0x130] sm:$0xff]
    %v4295 = vld [vmem:[#allocation11 + $0x138] sm:$0xff]
    %v4296 = vld [vmem:[#allocation11 + $0x140] sm:$0xff]
    %v4297 = vld [vmem:[#allocation11 + $0x148] sm:$0xff]
    %v4298 = vld [vmem:[#allocation11 + $0x150] sm:$0xff]
    %v4299 = vld [vmem:[#allocation11 + $0x158] sm:$0xff]
    %v4300 = vld [vmem:[#allocation11 + $0x160] sm:$0xff]
    %v4301 = vld [vmem:[#allocation11 + $0x168] sm:$0xff]
    %v4302 = vld [vmem:[#allocation11 + $0x170] sm:$0xff]
    %v4303 = vld [vmem:[#allocation11 + $0x178] sm:$0xff]
    %v4304 = vld [vmem:[#allocation11 + $0x180] sm:$0xff]
    %v4305 = vld [vmem:[#allocation11 + $0x188] sm:$0xff]
    %v4306 = vld [vmem:[#allocation11 + $0x190] sm:$0xff]
    %v4307 = vld [vmem:[#allocation11 + $0x198] sm:$0xff]
    %v4308 = vld [vmem:[#allocation11 + $0x1a0] sm:$0xff]
    %v4309 = vld [vmem:[#allocation11 + $0x1a8] sm:$0xff]
    %v4310 = vld [vmem:[#allocation11 + $0x1b0] sm:$0xff]
    %v4311 = vld [vmem:[#allocation11 + $0x1b8] sm:$0xff]
    %v4312 = vld [vmem:[#allocation11 + $0x1c0] sm:$0xff]
    %v4313 = vld [vmem:[#allocation11 + $0x1c8] sm:$0xff]
    %v4314 = vld [vmem:[#allocation11 + $0x1d0] sm:$0xff]
    %v4315 = vld [vmem:[#allocation11 + $0x1d8] sm:$0xff]
    %v4316 = vld [vmem:[#allocation11 + $0x1e0] sm:$0xff]
    %v4317 = vld [vmem:[#allocation11 + $0x1e8] sm:$0xff]
    %v4318 = vld [vmem:[#allocation11 + $0x1f0] sm:$0xff]
    %v4319 = vld [vmem:[#allocation11 + $0x1f8] sm:$0xff]
    %v4320 = vld [vmem:[#allocation11 + $0x200] sm:$0xff]
    %v4321 = vld [vmem:[#allocation11 + $0x208] sm:$0xff]
    %v4322 = vld [vmem:[#allocation11 + $0x210] sm:$0xff]
    %v4323 = vld [vmem:[#allocation11 + $0x218] sm:$0xff]
    %v4324 = vld [vmem:[#allocation11 + $0x220] sm:$0xff]
    %v4325 = vld [vmem:[#allocation11 + $0x228] sm:$0xff]
    %v4326 = vld [vmem:[#allocation11 + $0x230] sm:$0xff]
    %v4327 = vld [vmem:[#allocation11 + $0x238] sm:$0xff]
    %v4328 = vld [vmem:[#allocation11 + $0x240] sm:$0xff]
    %v4329 = vld [vmem:[#allocation11 + $0x248] sm:$0xff]
    %v4330 = vld [vmem:[#allocation11 + $0x250] sm:$0xff]
    %v4331 = vld [vmem:[#allocation11 + $0x258] sm:$0xff]
    %v4332 = vld [vmem:[#allocation11 + $0x260] sm:$0xff]
    %v4333 = vld [vmem:[#allocation11 + $0x268] sm:$0xff]
    %v4334 = vld [vmem:[#allocation11 + $0x270] sm:$0xff]
    %v4335 = vld [vmem:[#allocation11 + $0x278] sm:$0xff]
    %v4336 = vld [vmem:[#allocation11 + $0x280] sm:$0xff]
    %v4337 = vld [vmem:[#allocation11 + $0x288] sm:$0xff]
    %v4338 = vld [vmem:[#allocation11 + $0x290] sm:$0xff]
    %v4339 = vld [vmem:[#allocation11 + $0x298] sm:$0xff]
    %v4340 = vld [vmem:[#allocation11 + $0x2a0] sm:$0xff]
    %v4341 = vld [vmem:[#allocation11 + $0x2a8] sm:$0xff]
    %v4342 = vld [vmem:[#allocation11 + $0x2b0] sm:$0xff]
    %v4343 = vld [vmem:[#allocation11 + $0x2b8] sm:$0xff]
    %v4344 = vld [vmem:[#allocation11 + $0x2c0] sm:$0xff]
    %v4345 = vld [vmem:[#allocation11 + $0x2c8] sm:$0xff]
    %v4346 = vld [vmem:[#allocation11 + $0x2d0] sm:$0xff]
    %v4347 = vld [vmem:[#allocation11 + $0x2d8] sm:$0xff]
    %v4348 = vld [vmem:[#allocation11 + $0x2e0] sm:$0xff]
    %v4349 = vld [vmem:[#allocation11 + $0x2e8] sm:$0xff]
    %v4350 = vld [vmem:[#allocation11 + $0x2f0] sm:$0xff]
    %v4351 = vld [vmem:[#allocation11 + $0x2f8] sm:$0xff]
    %v4352 = vld [vmem:[#allocation11 + $0x300] sm:$0xff]
    %v4353 = vld [vmem:[#allocation11 + $0x308] sm:$0xff]
    %v4354 = vld [vmem:[#allocation11 + $0x310] sm:$0xff]
    %v4355 = vld [vmem:[#allocation11 + $0x318] sm:$0xff]
    %v4356 = vld [vmem:[#allocation11 + $0x320] sm:$0xff]
    %v4357 = vld [vmem:[#allocation11 + $0x328] sm:$0xff]
    %v4358 = vld [vmem:[#allocation11 + $0x330] sm:$0xff]
    %v4359 = vld [vmem:[#allocation11 + $0x338] sm:$0xff]
    %v4360 = vld [vmem:[#allocation11 + $0x340] sm:$0xff]
    %v4361 = vld [vmem:[#allocation11 + $0x348] sm:$0xff]
    %v4362 = vld [vmem:[#allocation11 + $0x350] sm:$0xff]
    %v4363 = vld [vmem:[#allocation11 + $0x358] sm:$0xff]
    %v4364 = vld [vmem:[#allocation11 + $0x360] sm:$0xff]
    %v4365 = vld [vmem:[#allocation11 + $0x368] sm:$0xff]
    %v4366 = vld [vmem:[#allocation11 + $0x370] sm:$0xff]
    %v4367 = vld [vmem:[#allocation11 + $0x378] sm:$0xff]
    %v4368 = vld [vmem:[#allocation11 + $0x380] sm:$0xff]
    %v4369 = vld [vmem:[#allocation11 + $0x388] sm:$0xff]
    %v4370 = vld [vmem:[#allocation11 + $0x390] sm:$0xff]
    %v4371 = vld [vmem:[#allocation11 + $0x398] sm:$0xff]
    %v4372 = vld [vmem:[#allocation11 + $0x3a0] sm:$0xff]
    %v4373 = vld [vmem:[#allocation11 + $0x3a8] sm:$0xff]
    %v4374 = vld [vmem:[#allocation11 + $0x3b0] sm:$0xff]
    %v4375 = vld [vmem:[#allocation11 + $0x3b8] sm:$0xff]
    %v4376 = vld [vmem:[#allocation11 + $0x3c0] sm:$0xff]
    %v4377 = vld [vmem:[#allocation11 + $0x3c8] sm:$0xff]
    %v4378 = vld [vmem:[#allocation11 + $0x3d0] sm:$0xff]
    %v4379 = vld [vmem:[#allocation11 + $0x3d8] sm:$0xff]
    %v4380 = vld [vmem:[#allocation11 + $0x3e0] sm:$0xff]
    %v4381 = vld [vmem:[#allocation11 + $0x3e8] sm:$0xff]
    %v4382 = vld [vmem:[#allocation11 + $0x3f0] sm:$0xff]
    %v4383 = vld [vmem:[#allocation11 + $0x3f8] sm:$0xff]
    %v4384 = vld [vmem:[#allocation11 + $0x400] sm:$0xff]
    %v4385 = vld [vmem:[#allocation11 + $0x408] sm:$0xff]
    %v4386 = vld [vmem:[#allocation11 + $0x410] sm:$0xff]
    %v4387 = vld [vmem:[#allocation11 + $0x418] sm:$0xff]
    %v4388 = vld [vmem:[#allocation11 + $0x420] sm:$0xff]
    %v4389 = vld [vmem:[#allocation11 + $0x428] sm:$0xff]
    %v4390 = vld [vmem:[#allocation11 + $0x430] sm:$0xff]
    %v4391 = vld [vmem:[#allocation11 + $0x438] sm:$0xff]
    %v4392 = vld [vmem:[#allocation11 + $0x440] sm:$0xff]
    %v4393 = vld [vmem:[#allocation11 + $0x448] sm:$0xff]
    %v4394 = vld [vmem:[#allocation11 + $0x450] sm:$0xff]
    %v4395 = vld [vmem:[#allocation11 + $0x458] sm:$0xff]
    %v4396 = vld [vmem:[#allocation11 + $0x460] sm:$0xff]
    %v4397 = vld [vmem:[#allocation11 + $0x468] sm:$0xff]
    %v4398 = vld [vmem:[#allocation11 + $0x470] sm:$0xff]
    %v4399 = vld [vmem:[#allocation11 + $0x478] sm:$0xff]
    %v4400 = vld [vmem:[#allocation11 + $0x480] sm:$0xff]
    %v4401 = vld [vmem:[#allocation11 + $0x488] sm:$0xff]
    %v4402 = vld [vmem:[#allocation11 + $0x490] sm:$0xff]
    %v4403 = vld [vmem:[#allocation11 + $0x498] sm:$0xff]
    %v4404 = vld [vmem:[#allocation11 + $0x4a0] sm:$0xff]
    %v4405 = vld [vmem:[#allocation11 + $0x4a8] sm:$0xff]
    %v4406 = vld [vmem:[#allocation11 + $0x4b0] sm:$0xff]
    %v4407 = vld [vmem:[#allocation11 + $0x4b8] sm:$0xff]
    %v4408 = vld [vmem:[#allocation11 + $0x4c0] sm:$0xff]
    %v4409 = vld [vmem:[#allocation11 + $0x4c8] sm:$0xff]
    %v4410 = vld [vmem:[#allocation11 + $0x4d0] sm:$0xff]
    %v4411 = vld [vmem:[#allocation11 + $0x4d8] sm:$0xff]
    %v4412 = vld [vmem:[#allocation11 + $0x4e0] sm:$0xff]
    %v4413 = vld [vmem:[#allocation11 + $0x4e8] sm:$0xff]
    %v4414 = vld [vmem:[#allocation11 + $0x4f0] sm:$0xff]
    %v4415 = vld [vmem:[#allocation11 + $0x4f8] sm:$0xff]
    %v4416 = vld [vmem:[#allocation11 + $0x500] sm:$0xff]
    %v4417 = vld [vmem:[#allocation11 + $0x508] sm:$0xff]
    %v4418 = vld [vmem:[#allocation11 + $0x510] sm:$0xff]
    %v4419 = vld [vmem:[#allocation11 + $0x518] sm:$0xff]
    %v4420 = vld [vmem:[#allocation11 + $0x520] sm:$0xff]
    %v4421 = vld [vmem:[#allocation11 + $0x528] sm:$0xff]
    %v4422 = vld [vmem:[#allocation11 + $0x530] sm:$0xff]
    %v4423 = vld [vmem:[#allocation11 + $0x538] sm:$0xff]
    %v4424 = vld [vmem:[#allocation11 + $0x540] sm:$0xff]
    %v4425 = vld [vmem:[#allocation11 + $0x548] sm:$0xff]
    %v4426 = vld [vmem:[#allocation11 + $0x550] sm:$0xff]
    %v4427 = vld [vmem:[#allocation11 + $0x558] sm:$0xff]
    %v4428 = vld [vmem:[#allocation11 + $0x560] sm:$0xff]
    %v4429 = vld [vmem:[#allocation11 + $0x568] sm:$0xff]
    %v4430 = vld [vmem:[#allocation11 + $0x570] sm:$0xff]
    %v4431 = vld [vmem:[#allocation11 + $0x578] sm:$0xff]
    %v4432 = vld [vmem:[#allocation11 + $0x580] sm:$0xff]
    %v4433 = vld [vmem:[#allocation11 + $0x588] sm:$0xff]
    %v4434 = vld [vmem:[#allocation11 + $0x590] sm:$0xff]
    %v4435 = vld [vmem:[#allocation11 + $0x598] sm:$0xff]
    %v4436 = vld [vmem:[#allocation11 + $0x5a0] sm:$0xff]
    %v4437 = vld [vmem:[#allocation11 + $0x5a8] sm:$0xff]
    %v4438 = vld [vmem:[#allocation11 + $0x5b0] sm:$0xff]
    %v4439 = vld [vmem:[#allocation11 + $0x5b8] sm:$0xff]
    %v4440 = vld [vmem:[#allocation11 + $0x5c0] sm:$0xff]
    %v4441 = vld [vmem:[#allocation11 + $0x5c8] sm:$0xff]
    %v4442 = vld [vmem:[#allocation11 + $0x5d0] sm:$0xff]
    %v4443 = vld [vmem:[#allocation11 + $0x5d8] sm:$0xff]
    %v4444 = vld [vmem:[#allocation11 + $0x5e0] sm:$0xff]
    %v4445 = vld [vmem:[#allocation11 + $0x5e8] sm:$0xff]
    %v4446 = vld [vmem:[#allocation11 + $0x5f0] sm:$0xff]
    %v4447 = vld [vmem:[#allocation11 + $0x5f8] sm:$0xff]
    %v4448 = vld [vmem:[#allocation11 + $0x600] sm:$0xff]
    %v4449 = vld [vmem:[#allocation11 + $0x608] sm:$0xff]
    %v4450 = vld [vmem:[#allocation11 + $0x610] sm:$0xff]
    %v4451 = vld [vmem:[#allocation11 + $0x618] sm:$0xff]
    %v4452 = vld [vmem:[#allocation11 + $0x620] sm:$0xff]
    %v4453 = vld [vmem:[#allocation11 + $0x628] sm:$0xff]
    %v4454 = vld [vmem:[#allocation11 + $0x630] sm:$0xff]
    %v4455 = vld [vmem:[#allocation11 + $0x638] sm:$0xff]
    %v4456 = vld [vmem:[#allocation11 + $0x640] sm:$0xff]
    %v4457 = vld [vmem:[#allocation11 + $0x648] sm:$0xff]
    %v4458 = vld [vmem:[#allocation11 + $0x650] sm:$0xff]
    %v4459 = vld [vmem:[#allocation11 + $0x658] sm:$0xff]
    %v4460 = vld [vmem:[#allocation11 + $0x660] sm:$0xff]
    %v4461 = vld [vmem:[#allocation11 + $0x668] sm:$0xff]
    %v4462 = vld [vmem:[#allocation11 + $0x670] sm:$0xff]
    %v4463 = vld [vmem:[#allocation11 + $0x678] sm:$0xff]
    %v4464 = vld [vmem:[#allocation11 + $0x680] sm:$0xff]
    %v4465 = vld [vmem:[#allocation11 + $0x688] sm:$0xff]
    %v4466 = vld [vmem:[#allocation11 + $0x690] sm:$0xff]
    %v4467 = vld [vmem:[#allocation11 + $0x698] sm:$0xff]
    %v4468 = vld [vmem:[#allocation11 + $0x6a0] sm:$0xff]
    %v4469 = vld [vmem:[#allocation11 + $0x6a8] sm:$0xff]
    %v4470 = vld [vmem:[#allocation11 + $0x6b0] sm:$0xff]
    %v4471 = vld [vmem:[#allocation11 + $0x6b8] sm:$0xff]
    %v4472 = vld [vmem:[#allocation11 + $0x6c0] sm:$0xff]
    %v4473 = vld [vmem:[#allocation11 + $0x6c8] sm:$0xff]
    %v4474 = vld [vmem:[#allocation11 + $0x6d0] sm:$0xff]
    %v4475 = vld [vmem:[#allocation11 + $0x6d8] sm:$0xff]
    %v4476 = vld [vmem:[#allocation11 + $0x6e0] sm:$0xff]
    %v4477 = vld [vmem:[#allocation11 + $0x6e8] sm:$0xff]
    %v4478 = vld [vmem:[#allocation11 + $0x6f0] sm:$0xff]
    %v4479 = vld [vmem:[#allocation11 + $0x6f8] sm:$0xff]
    %v4480 = vld [vmem:[#allocation11 + $0x700] sm:$0xff]
    %v4481 = vld [vmem:[#allocation11 + $0x708] sm:$0xff]
    %v4482 = vld [vmem:[#allocation11 + $0x710] sm:$0xff]
    %v4483 = vld [vmem:[#allocation11 + $0x718] sm:$0xff]
    %v4484 = vld [vmem:[#allocation11 + $0x720] sm:$0xff]
    %v4485 = vld [vmem:[#allocation11 + $0x728] sm:$0xff]
    %v4486 = vld [vmem:[#allocation11 + $0x730] sm:$0xff]
    %v4487 = vld [vmem:[#allocation11 + $0x738] sm:$0xff]
    %v4488 = vld [vmem:[#allocation11 + $0x740] sm:$0xff]
    %v4489 = vld [vmem:[#allocation11 + $0x748] sm:$0xff]
    %v4490 = vld [vmem:[#allocation11 + $0x750] sm:$0xff]
    %v4491 = vld [vmem:[#allocation11 + $0x758] sm:$0xff]
    %v4492 = vld [vmem:[#allocation11 + $0x760] sm:$0xff]
    %v4493 = vld [vmem:[#allocation11 + $0x768] sm:$0xff]
    %v4494 = vld [vmem:[#allocation11 + $0x770] sm:$0xff]
    %v4495 = vld [vmem:[#allocation11 + $0x778] sm:$0xff]
    %v4496 = vld [vmem:[#allocation11 + $0x780] sm:$0xff]
    %v4497 = vld [vmem:[#allocation11 + $0x788] sm:$0xff]
    %v4498 = vld [vmem:[#allocation11 + $0x790] sm:$0xff]
    %v4499 = vld [vmem:[#allocation11 + $0x798] sm:$0xff]
    %v4500 = vld [vmem:[#allocation11 + $0x7a0] sm:$0xff]
    %v4501 = vld [vmem:[#allocation11 + $0x7a8] sm:$0xff]
    %v4502 = vld [vmem:[#allocation11 + $0x7b0] sm:$0xff]
    %v4503 = vld [vmem:[#allocation11 + $0x7b8] sm:$0xff]
    %v4504 = vld [vmem:[#allocation11 + $0x7c0] sm:$0xff]
    %v4505 = vld [vmem:[#allocation11 + $0x7c8] sm:$0xff]
    %v4506 = vld [vmem:[#allocation11 + $0x7d0] sm:$0xff]
    %v4507 = vld [vmem:[#allocation11 + $0x7d8] sm:$0xff]
    %v4508 = vld [vmem:[#allocation11 + $0x7e0] sm:$0xff]
    %v4509 = vld [vmem:[#allocation11 + $0x7e8] sm:$0xff]
    %v4510 = vld [vmem:[#allocation11 + $0x7f0] sm:$0xff]
    %v4511 = vld [vmem:[#allocation11 + $0x7f8] sm:$0xff]
    %v4512 = vld [vmem:[#allocation11 + $0x800] sm:$0xff]
    %v4513 = vld [vmem:[#allocation11 + $0x808] sm:$0xff]
    %v4514 = vld [vmem:[#allocation11 + $0x810] sm:$0xff]
    %v4515 = vld [vmem:[#allocation11 + $0x818] sm:$0xff]
    %v4516 = vld [vmem:[#allocation11 + $0x820] sm:$0xff]
    %v4517 = vld [vmem:[#allocation11 + $0x828] sm:$0xff]
    %v4518 = vld [vmem:[#allocation11 + $0x830] sm:$0xff]
    %v4519 = vld [vmem:[#allocation11 + $0x838] sm:$0xff]
    %v4520 = vld [vmem:[#allocation11 + $0x840] sm:$0xff]
    %v4521 = vld [vmem:[#allocation11 + $0x848] sm:$0xff]
    %v4522 = vld [vmem:[#allocation11 + $0x850] sm:$0xff]
    %v4523 = vld [vmem:[#allocation11 + $0x858] sm:$0xff]
    %v4524 = vld [vmem:[#allocation11 + $0x860] sm:$0xff]
    %v4525 = vld [vmem:[#allocation11 + $0x868] sm:$0xff]
    %v4526 = vld [vmem:[#allocation11 + $0x870] sm:$0xff]
    %v4527 = vld [vmem:[#allocation11 + $0x878] sm:$0xff]
    %v4528 = vld [vmem:[#allocation11 + $0x880] sm:$0xff]
    %v4529 = vld [vmem:[#allocation11 + $0x888] sm:$0xff]
    %v4530 = vld [vmem:[#allocation11 + $0x890] sm:$0xff]
    %v4531 = vld [vmem:[#allocation11 + $0x898] sm:$0xff]
    %v4532 = vld [vmem:[#allocation11 + $0x8a0] sm:$0xff]
    %v4533 = vld [vmem:[#allocation11 + $0x8a8] sm:$0xff]
    %v4534 = vld [vmem:[#allocation11 + $0x8b0] sm:$0xff]
    %v4535 = vld [vmem:[#allocation11 + $0x8b8] sm:$0xff]
    %v4536 = vld [vmem:[#allocation11 + $0x8c0] sm:$0xff]
    %v4537 = vld [vmem:[#allocation11 + $0x8c8] sm:$0xff]
    %v4538 = vld [vmem:[#allocation11 + $0x8d0] sm:$0xff]
    %v4539 = vld [vmem:[#allocation11 + $0x8d8] sm:$0xff]
    %v4540 = vld [vmem:[#allocation11 + $0x8e0] sm:$0xff]
    %v4541 = vld [vmem:[#allocation11 + $0x8e8] sm:$0xff]
    %v4542 = vld [vmem:[#allocation11 + $0x8f0] sm:$0xff]
    %v4543 = vld [vmem:[#allocation11 + $0x8f8] sm:$0xff]
    %v4544 = vld [vmem:[#allocation11 + $0x900] sm:$0xff]
    %v4545 = vld [vmem:[#allocation11 + $0x908] sm:$0xff]
    %v4546 = vld [vmem:[#allocation11 + $0x910] sm:$0xff]
    %v4547 = vld [vmem:[#allocation11 + $0x918] sm:$0xff]
    %v4548 = vld [vmem:[#allocation11 + $0x920] sm:$0xff]
    %v4549 = vld [vmem:[#allocation11 + $0x928] sm:$0xff]
    %v4550 = vld [vmem:[#allocation11 + $0x930] sm:$0xff]
    %v4551 = vld [vmem:[#allocation11 + $0x938] sm:$0xff]
    %v4552 = vld [vmem:[#allocation11 + $0x940] sm:$0xff]
    %v4553 = vld [vmem:[#allocation11 + $0x948] sm:$0xff]
    %v4554 = vld [vmem:[#allocation11 + $0x950] sm:$0xff]
    %v4555 = vld [vmem:[#allocation11 + $0x958] sm:$0xff]
    %v4556 = vld [vmem:[#allocation11 + $0x960] sm:$0xff]
    %v4557 = vld [vmem:[#allocation11 + $0x968] sm:$0xff]
    %v4558 = vld [vmem:[#allocation11 + $0x970] sm:$0xff]
    %v4559 = vld [vmem:[#allocation11 + $0x978] sm:$0xff]
    %v4560 = vld [vmem:[#allocation11 + $0x980] sm:$0xff]
    %v4561 = vld [vmem:[#allocation11 + $0x988] sm:$0xff]
    %v4562 = vld [vmem:[#allocation11 + $0x990] sm:$0xff]
    %v4563 = vld [vmem:[#allocation11 + $0x998] sm:$0xff]
    %v4564 = vld [vmem:[#allocation11 + $0x9a0] sm:$0xff]
    %v4565 = vld [vmem:[#allocation11 + $0x9a8] sm:$0xff]
    %v4566 = vld [vmem:[#allocation11 + $0x9b0] sm:$0xff]
    %v4567 = vld [vmem:[#allocation11 + $0x9b8] sm:$0xff]
    %v4568 = vld [vmem:[#allocation11 + $0x9c0] sm:$0xff]
    %v4569 = vld [vmem:[#allocation11 + $0x9c8] sm:$0xff]
    %v4570 = vld [vmem:[#allocation11 + $0x9d0] sm:$0xff]
    %v4571 = vld [vmem:[#allocation11 + $0x9d8] sm:$0xff]
    %v4572 = vld [vmem:[#allocation11 + $0x9e0] sm:$0xff]
    %v4573 = vld [vmem:[#allocation11 + $0x9e8] sm:$0xff]
    %v4574 = vld [vmem:[#allocation11 + $0x9f0] sm:$0xff]
    %v4575 = vld [vmem:[#allocation11 + $0x9f8] sm:$0xff]
    %v4576 = vld [vmem:[#allocation11 + $0xa00] sm:$0xff]
    %v4577 = vld [vmem:[#allocation11 + $0xa08] sm:$0xff]
    %v4578 = vld [vmem:[#allocation11 + $0xa10] sm:$0xff]
    %v4579 = vld [vmem:[#allocation11 + $0xa18] sm:$0xff]
    %v4580 = vld [vmem:[#allocation11 + $0xa20] sm:$0xff]
    %v4581 = vld [vmem:[#allocation11 + $0xa28] sm:$0xff]
    %v4582 = vld [vmem:[#allocation11 + $0xa30] sm:$0xff]
    %v4583 = vld [vmem:[#allocation11 + $0xa38] sm:$0xff]
    %v4584 = vld [vmem:[#allocation11 + $0xa40] sm:$0xff]
    %v4585 = vld [vmem:[#allocation11 + $0xa48] sm:$0xff]
    %v4586 = vld [vmem:[#allocation11 + $0xa50] sm:$0xff]
    %v4587 = vld [vmem:[#allocation11 + $0xa58] sm:$0xff]
    %v4588 = vld [vmem:[#allocation11 + $0xa60] sm:$0xff]
    %v4589 = vld [vmem:[#allocation11 + $0xa68] sm:$0xff]
    %v4590 = vld [vmem:[#allocation11 + $0xa70] sm:$0xff]
    %v4591 = vld [vmem:[#allocation11 + $0xa78] sm:$0xff]
    %v4592 = vld [vmem:[#allocation11 + $0xa80] sm:$0xff]
    %v4593 = vld [vmem:[#allocation11 + $0xa88] sm:$0xff]
    %v4594 = vld [vmem:[#allocation11 + $0xa90] sm:$0xff]
    %v4595 = vld [vmem:[#allocation11 + $0xa98] sm:$0xff]
    %v4596 = vld [vmem:[#allocation11 + $0xaa0] sm:$0xff]
    %v4597 = vld [vmem:[#allocation11 + $0xaa8] sm:$0xff]
    %v4598 = vld [vmem:[#allocation11 + $0xab0] sm:$0xff]
    %v4599 = vld [vmem:[#allocation11 + $0xab8] sm:$0xff]
    %v4600 = vld [vmem:[#allocation11 + $0xac0] sm:$0xff]
    %v4601 = vld [vmem:[#allocation11 + $0xac8] sm:$0xff]
    %v4602 = vld [vmem:[#allocation11 + $0xad0] sm:$0xff]
    %v4603 = vld [vmem:[#allocation11 + $0xad8] sm:$0xff]
    %v4604 = vld [vmem:[#allocation11 + $0xae0] sm:$0xff]
    %v4605 = vld [vmem:[#allocation11 + $0xae8] sm:$0xff]
    %v4606 = vld [vmem:[#allocation11 + $0xaf0] sm:$0xff]
    %v4607 = vld [vmem:[#allocation11 + $0xaf8] sm:$0xff]
    %v4608 = vld [vmem:[#allocation11 + $0xb00] sm:$0xff]
    %v4609 = vld [vmem:[#allocation11 + $0xb08] sm:$0xff]
    %v4610 = vld [vmem:[#allocation11 + $0xb10] sm:$0xff]
    %v4611 = vld [vmem:[#allocation11 + $0xb18] sm:$0xff]
    %v4612 = vld [vmem:[#allocation11 + $0xb20] sm:$0xff]
    %v4613 = vld [vmem:[#allocation11 + $0xb28] sm:$0xff]
    %v4614 = vld [vmem:[#allocation11 + $0xb30] sm:$0xff]
    %v4615 = vld [vmem:[#allocation11 + $0xb38] sm:$0xff]
    %v4616 = vld [vmem:[#allocation11 + $0xb40] sm:$0xff]
    %v4617 = vld [vmem:[#allocation11 + $0xb48] sm:$0xff]
    %v4618 = vld [vmem:[#allocation11 + $0xb50] sm:$0xff]
    %v4619 = vld [vmem:[#allocation11 + $0xb58] sm:$0xff]
    %v4620 = vld [vmem:[#allocation11 + $0xb60] sm:$0xff]
    %v4621 = vld [vmem:[#allocation11 + $0xb68] sm:$0xff]
    %v4622 = vld [vmem:[#allocation11 + $0xb70] sm:$0xff]
    %v4623 = vld [vmem:[#allocation11 + $0xb78] sm:$0xff]
    %v4624 = vld [vmem:[#allocation11 + $0xb80] sm:$0xff]
    %v4625 = vld [vmem:[#allocation11 + $0xb88] sm:$0xff]
    %v4626 = vld [vmem:[#allocation11 + $0xb90] sm:$0xff]
    %v4627 = vld [vmem:[#allocation11 + $0xb98] sm:$0xff]
    %v4628 = vld [vmem:[#allocation11 + $0xba0] sm:$0xff]
    %v4629 = vld [vmem:[#allocation11 + $0xba8] sm:$0xff]
    %v4630 = vld [vmem:[#allocation11 + $0xbb0] sm:$0xff]
    %v4631 = vld [vmem:[#allocation11 + $0xbb8] sm:$0xff]
    %v4632 = vld [vmem:[#allocation11 + $0xbc0] sm:$0xff]
    %v4633 = vld [vmem:[#allocation11 + $0xbc8] sm:$0xff]
    %v4634 = vld [vmem:[#allocation11 + $0xbd0] sm:$0xff]
    %v4635 = vld [vmem:[#allocation11 + $0xbd8] sm:$0xff]
    %v4636 = vld [vmem:[#allocation11 + $0xbe0] sm:$0xff]
    %v4637 = vld [vmem:[#allocation11 + $0xbe8] sm:$0xff]
    %v4638 = vld [vmem:[#allocation11 + $0xbf0] sm:$0xff]
    %v4639 = vld [vmem:[#allocation11 + $0xbf8] sm:$0xff]
    %v4640 = vld [vmem:[#allocation11 + $0xc00] sm:$0xff]
    %v4641 = vld [vmem:[#allocation11 + $0xc08] sm:$0xff]
    %v4642 = vld [vmem:[#allocation11 + $0xc10] sm:$0xff]
    %v4643 = vld [vmem:[#allocation11 + $0xc18] sm:$0xff]
    %v4644 = vld [vmem:[#allocation11 + $0xc20] sm:$0xff]
    %v4645 = vld [vmem:[#allocation11 + $0xc28] sm:$0xff]
    %v4646 = vld [vmem:[#allocation11 + $0xc30] sm:$0xff]
    %v4647 = vld [vmem:[#allocation11 + $0xc38] sm:$0xff]
    %v4648 = vld [vmem:[#allocation11 + $0xc40] sm:$0xff]
    %v4649 = vld [vmem:[#allocation11 + $0xc48] sm:$0xff]
    %v4650 = vld [vmem:[#allocation11 + $0xc50] sm:$0xff]
    %v4651 = vld [vmem:[#allocation11 + $0xc58] sm:$0xff]
    %v4652 = vld [vmem:[#allocation11 + $0xc60] sm:$0xff]
    %v4653 = vld [vmem:[#allocation11 + $0xc68] sm:$0xff]
    %v4654 = vld [vmem:[#allocation11 + $0xc70] sm:$0xff]
    %v4655 = vld [vmem:[#allocation11 + $0xc78] sm:$0xff]
    %v4656 = vld [vmem:[#allocation11 + $0xc80] sm:$0xff]
    %v4657 = vld [vmem:[#allocation11 + $0xc88] sm:$0xff]
    %v4658 = vld [vmem:[#allocation11 + $0xc90] sm:$0xff]
    %v4659 = vld [vmem:[#allocation11 + $0xc98] sm:$0xff]
    %v4660 = vld [vmem:[#allocation11 + $0xca0] sm:$0xff]
    %v4661 = vld [vmem:[#allocation11 + $0xca8] sm:$0xff]
    %v4662 = vld [vmem:[#allocation11 + $0xcb0] sm:$0xff]
    %v4663 = vld [vmem:[#allocation11 + $0xcb8] sm:$0xff]
    %v4664 = vld [vmem:[#allocation11 + $0xcc0] sm:$0xff]
    %v4665 = vld [vmem:[#allocation11 + $0xcc8] sm:$0xff]
    %v4666 = vld [vmem:[#allocation11 + $0xcd0] sm:$0xff]
    %v4667 = vld [vmem:[#allocation11 + $0xcd8] sm:$0xff]
    %v4668 = vld [vmem:[#allocation11 + $0xce0] sm:$0xff]
    %v4669 = vld [vmem:[#allocation11 + $0xce8] sm:$0xff]
    %v4670 = vld [vmem:[#allocation11 + $0xcf0] sm:$0xff]
    %v4671 = vld [vmem:[#allocation11 + $0xcf8] sm:$0xff]
    %v4672 = vld [vmem:[#allocation11 + $0xd00] sm:$0xff]
    %v4673 = vld [vmem:[#allocation11 + $0xd08] sm:$0xff]
    %v4674 = vld [vmem:[#allocation11 + $0xd10] sm:$0xff]
    %v4675 = vld [vmem:[#allocation11 + $0xd18] sm:$0xff]
    %v4676 = vld [vmem:[#allocation11 + $0xd20] sm:$0xff]
    %v4677 = vld [vmem:[#allocation11 + $0xd28] sm:$0xff]
    %v4678 = vld [vmem:[#allocation11 + $0xd30] sm:$0xff]
    %v4679 = vld [vmem:[#allocation11 + $0xd38] sm:$0xff]
    %v4680 = vld [vmem:[#allocation11 + $0xd40] sm:$0xff]
    %v4681 = vld [vmem:[#allocation11 + $0xd48] sm:$0xff]
    %v4682 = vld [vmem:[#allocation11 + $0xd50] sm:$0xff]
    %v4683 = vld [vmem:[#allocation11 + $0xd58] sm:$0xff]
    %v4684 = vld [vmem:[#allocation11 + $0xd60] sm:$0xff]
    %v4685 = vld [vmem:[#allocation11 + $0xd68] sm:$0xff]
    %v4686 = vld [vmem:[#allocation11 + $0xd70] sm:$0xff]
    %v4687 = vld [vmem:[#allocation11 + $0xd78] sm:$0xff]
    %v4688 = vld [vmem:[#allocation11 + $0xd80] sm:$0xff]
    %v4689 = vld [vmem:[#allocation11 + $0xd88] sm:$0xff]
    %v4690 = vld [vmem:[#allocation11 + $0xd90] sm:$0xff]
    %v4691 = vld [vmem:[#allocation11 + $0xd98] sm:$0xff]
    %v4692 = vld [vmem:[#allocation11 + $0xda0] sm:$0xff]
    %v4693 = vld [vmem:[#allocation11 + $0xda8] sm:$0xff]
    %v4694 = vld [vmem:[#allocation11 + $0xdb0] sm:$0xff]
    %v4695 = vld [vmem:[#allocation11 + $0xdb8] sm:$0xff]
    %v4696 = vld [vmem:[#allocation11 + $0xdc0] sm:$0xff]
    %v4697 = vld [vmem:[#allocation11 + $0xdc8] sm:$0xff]
    %v4698 = vld [vmem:[#allocation11 + $0xdd0] sm:$0xff]
    %v4699 = vld [vmem:[#allocation11 + $0xdd8] sm:$0xff]
    %v4700 = vld [vmem:[#allocation11 + $0xde0] sm:$0xff]
    %v4701 = vld [vmem:[#allocation11 + $0xde8] sm:$0xff]
    %v4702 = vld [vmem:[#allocation11 + $0xdf0] sm:$0xff]
    %v4703 = vld [vmem:[#allocation11 + $0xdf8] sm:$0xff]
    %v4704 = vld [vmem:[#allocation11 + $0xe00] sm:$0xff]
    %v4705 = vld [vmem:[#allocation11 + $0xe08] sm:$0xff]
    %v4706 = vld [vmem:[#allocation11 + $0xe10] sm:$0xff]
    %v4707 = vld [vmem:[#allocation11 + $0xe18] sm:$0xff]
    %v4708 = vld [vmem:[#allocation11 + $0xe20] sm:$0xff]
    %v4709 = vld [vmem:[#allocation11 + $0xe28] sm:$0xff]
    %v4710 = vld [vmem:[#allocation11 + $0xe30] sm:$0xff]
    %v4711 = vld [vmem:[#allocation11 + $0xe38] sm:$0xff]
    %v4712 = vld [vmem:[#allocation11 + $0xe40] sm:$0xff]
    %v4713 = vld [vmem:[#allocation11 + $0xe48] sm:$0xff]
    %v4714 = vld [vmem:[#allocation11 + $0xe50] sm:$0xff]
    %v4715 = vld [vmem:[#allocation11 + $0xe58] sm:$0xff]
    %v4716 = vld [vmem:[#allocation11 + $0xe60] sm:$0xff]
    %v4717 = vld [vmem:[#allocation11 + $0xe68] sm:$0xff]
    %v4718 = vld [vmem:[#allocation11 + $0xe70] sm:$0xff]
    %v4719 = vld [vmem:[#allocation11 + $0xe78] sm:$0xff]
    %v4720 = vld [vmem:[#allocation11 + $0xe80] sm:$0xff]
    %v4721 = vld [vmem:[#allocation11 + $0xe88] sm:$0xff]
    %v4722 = vld [vmem:[#allocation11 + $0xe90] sm:$0xff]
    %v4723 = vld [vmem:[#allocation11 + $0xe98] sm:$0xff]
    %v4724 = vld [vmem:[#allocation11 + $0xea0] sm:$0xff]
    %v4725 = vld [vmem:[#allocation11 + $0xea8] sm:$0xff]
    %v4726 = vld [vmem:[#allocation11 + $0xeb0] sm:$0xff]
    %v4727 = vld [vmem:[#allocation11 + $0xeb8] sm:$0xff]
    %v4728 = vld [vmem:[#allocation11 + $0xec0] sm:$0xff]
    %v4729 = vld [vmem:[#allocation11 + $0xec8] sm:$0xff]
    %v4730 = vld [vmem:[#allocation11 + $0xed0] sm:$0xff]
    %v4731 = vld [vmem:[#allocation11 + $0xed8] sm:$0xff]
    %v4732 = vld [vmem:[#allocation11 + $0xee0] sm:$0xff]
    %v4733 = vld [vmem:[#allocation11 + $0xee8] sm:$0xff]
    %v4734 = vld [vmem:[#allocation11 + $0xef0] sm:$0xff]
    %v4735 = vld [vmem:[#allocation11 + $0xef8] sm:$0xff]
    %v4736 = vld [vmem:[#allocation11 + $0xf00] sm:$0xff]
    %v4737 = vld [vmem:[#allocation11 + $0xf08] sm:$0xff]
    %v4738 = vld [vmem:[#allocation11 + $0xf10] sm:$0xff]
    %v4739 = vld [vmem:[#allocation11 + $0xf18] sm:$0xff]
    %v4740 = vld [vmem:[#allocation11 + $0xf20] sm:$0xff]
    %v4741 = vld [vmem:[#allocation11 + $0xf28] sm:$0xff]
    %v4742 = vld [vmem:[#allocation11 + $0xf30] sm:$0xff]
    %v4743 = vld [vmem:[#allocation11 + $0xf38] sm:$0xff]
    %v4744 = vld [vmem:[#allocation11 + $0xf40] sm:$0xff]
    %v4745 = vld [vmem:[#allocation11 + $0xf48] sm:$0xff]
    %v4746 = vld [vmem:[#allocation11 + $0xf50] sm:$0xff]
    %v4747 = vld [vmem:[#allocation11 + $0xf58] sm:$0xff]
    %v4748 = vld [vmem:[#allocation11 + $0xf60] sm:$0xff]
    %v4749 = vld [vmem:[#allocation11 + $0xf68] sm:$0xff]
    %v4750 = vld [vmem:[#allocation11 + $0xf70] sm:$0xff]
    %v4751 = vld [vmem:[#allocation11 + $0xf78] sm:$0xff]
    %v4752 = vld [vmem:[#allocation11 + $0xf80] sm:$0xff]
    %v4753 = vld [vmem:[#allocation11 + $0xf88] sm:$0xff]
    %v4754 = vld [vmem:[#allocation11 + $0xf90] sm:$0xff]
    %v4755 = vld [vmem:[#allocation11 + $0xf98] sm:$0xff]
    %v4756 = vld [vmem:[#allocation11 + $0xfa0] sm:$0xff]
    %v4757 = vld [vmem:[#allocation11 + $0xfa8] sm:$0xff]
    %v4758 = vld [vmem:[#allocation11 + $0xfb0] sm:$0xff]
    %v4759 = vld [vmem:[#allocation11 + $0xfb8] sm:$0xff]
    %v4760 = vld [vmem:[#allocation11 + $0xfc0] sm:$0xff]
    %v4761 = vld [vmem:[#allocation11 + $0xfc8] sm:$0xff]
    %v4762 = vld [vmem:[#allocation11 + $0xfd0] sm:$0xff]
    %v4763 = vld [vmem:[#allocation11 + $0xfd8] sm:$0xff]
    %v4764 = vld [vmem:[#allocation11 + $0xfe0] sm:$0xff]
    %v4765 = vld [vmem:[#allocation11 + $0xfe8] sm:$0xff]
    %v4766 = vld [vmem:[#allocation11 + $0xff0] sm:$0xff]
    %v4767 = vld [vmem:[#allocation11 + $0xff8] sm:$0xff]
    %v4768 = vld [vmem:[#allocation13] sm:$0xff]
    %v4770 = vlaneseq
    %v4771 = vshrl.u32 %v4770, 7
    %v4772 = vsub.s32 0, %v4771
    %v4773 = vrot.slane %v4768, %v4772
    %v4774 = vlaneseq
    %v4775 = vshrl.u32 %v4774, 7
    %v4776 = vsub.s32 1, %v4775
    %v4777 = vrot.slane %v4768, %v4776
    %v4778 = vlaneseq
    %v4779 = vshrl.u32 %v4778, 7
    %v4780 = vsub.s32 2, %v4779
    %v4781 = vrot.slane %v4768, %v4780
    %v4782 = vlaneseq
    %v4783 = vshrl.u32 %v4782, 7
    %v4784 = vsub.s32 3, %v4783
    %v4785 = vrot.slane %v4768, %v4784
    %v4786 = vlaneseq
    %v4787 = vshrl.u32 %v4786, 7
    %v4788 = vsub.s32 4, %v4787
    %v4789 = vrot.slane %v4768, %v4788
    %v4790 = vlaneseq
    %v4791 = vshrl.u32 %v4790, 7
    %v4792 = vsub.s32 5, %v4791
    %v4793 = vrot.slane %v4768, %v4792
    %v4794 = vlaneseq
    %v4795 = vshrl.u32 %v4794, 7
    %v4796 = vsub.s32 6, %v4795
    %v4797 = vrot.slane %v4768, %v4796
    %v4798 = vlaneseq
    %v4799 = vshrl.u32 %v4798, 7
    %v4800 = vsub.s32 7, %v4799
    %v4801 = vrot.slane %v4768, %v4800
    %v5322 = vunpack.c.l.b16 %v4256
    %v5323 = vunpack.c.h.b16 %v4256
    %v5324 = vunpack.c.l.b16 %v4257
    %v5325 = vunpack.c.h.b16 %v4257
    %v5326 = vunpack.c.l.b16 %v4258
    %v5327 = vunpack.c.h.b16 %v4258
    %v5328 = vunpack.c.l.b16 %v4259
    %v5329 = vunpack.c.h.b16 %v4259
    %v5330 = vunpack.c.l.b16 %v4260
    %v5331 = vunpack.c.h.b16 %v4260
    %v5332 = vunpack.c.l.b16 %v4261
    %v5333 = vunpack.c.h.b16 %v4261
    %v5334 = vunpack.c.l.b16 %v4262
    %v5335 = vunpack.c.h.b16 %v4262
    %v5336 = vunpack.c.l.b16 %v4263
    %v5337 = vunpack.c.h.b16 %v4263
    %v5338 = vunpack.c.l.b16 %v4264
    %v5339 = vunpack.c.h.b16 %v4264
    %v5340 = vunpack.c.l.b16 %v4265
    %v5341 = vunpack.c.h.b16 %v4265
    %v5342 = vunpack.c.l.b16 %v4266
    %v5343 = vunpack.c.h.b16 %v4266
    %v5344 = vunpack.c.l.b16 %v4267
    %v5345 = vunpack.c.h.b16 %v4267
    %v5346 = vunpack.c.l.b16 %v4268
    %v5347 = vunpack.c.h.b16 %v4268
    %v5348 = vunpack.c.l.b16 %v4269
    %v5349 = vunpack.c.h.b16 %v4269
    %v5350 = vunpack.c.l.b16 %v4270
    %v5351 = vunpack.c.h.b16 %v4270
    %v5352 = vunpack.c.l.b16 %v4271
    %v5353 = vunpack.c.h.b16 %v4271
    %v5354 = vunpack.c.l.b16 %v4272
    %v5355 = vunpack.c.h.b16 %v4272
    %v5356 = vunpack.c.l.b16 %v4273
    %v5357 = vunpack.c.h.b16 %v4273
    %v5358 = vunpack.c.l.b16 %v4274
    %v5359 = vunpack.c.h.b16 %v4274
    %v5360 = vunpack.c.l.b16 %v4275
    %v5361 = vunpack.c.h.b16 %v4275
    %v5362 = vunpack.c.l.b16 %v4276
    %v5363 = vunpack.c.h.b16 %v4276
    %v5364 = vunpack.c.l.b16 %v4277
    %v5365 = vunpack.c.h.b16 %v4277
    %v5366 = vunpack.c.l.b16 %v4278
    %v5367 = vunpack.c.h.b16 %v4278
    %v5368 = vunpack.c.l.b16 %v4279
    %v5369 = vunpack.c.h.b16 %v4279
    %v5370 = vunpack.c.l.b16 %v4280
    %v5371 = vunpack.c.h.b16 %v4280
    %v5372 = vunpack.c.l.b16 %v4281
    %v5373 = vunpack.c.h.b16 %v4281
    %v5374 = vunpack.c.l.b16 %v4282
    %v5375 = vunpack.c.h.b16 %v4282
    %v5376 = vunpack.c.l.b16 %v4283
    %v5377 = vunpack.c.h.b16 %v4283
    %v5378 = vunpack.c.l.b16 %v4284
    %v5379 = vunpack.c.h.b16 %v4284
    %v5380 = vunpack.c.l.b16 %v4285
    %v5381 = vunpack.c.h.b16 %v4285
    %v5382 = vunpack.c.l.b16 %v4286
    %v5383 = vunpack.c.h.b16 %v4286
    %v5384 = vunpack.c.l.b16 %v4287
    %v5385 = vunpack.c.h.b16 %v4287
    %v5386 = vunpack.c.l.b16 %v4288
    %v5387 = vunpack.c.h.b16 %v4288
    %v5388 = vunpack.c.l.b16 %v4289
    %v5389 = vunpack.c.h.b16 %v4289
    %v5390 = vunpack.c.l.b16 %v4290
    %v5391 = vunpack.c.h.b16 %v4290
    %v5392 = vunpack.c.l.b16 %v4291
    %v5393 = vunpack.c.h.b16 %v4291
    %v5394 = vunpack.c.l.b16 %v4292
    %v5395 = vunpack.c.h.b16 %v4292
    %v5396 = vunpack.c.l.b16 %v4293
    %v5397 = vunpack.c.h.b16 %v4293
    %v5398 = vunpack.c.l.b16 %v4294
    %v5399 = vunpack.c.h.b16 %v4294
    %v5400 = vunpack.c.l.b16 %v4295
    %v5401 = vunpack.c.h.b16 %v4295
    %v5402 = vunpack.c.l.b16 %v4296
    %v5403 = vunpack.c.h.b16 %v4296
    %v5404 = vunpack.c.l.b16 %v4297
    %v5405 = vunpack.c.h.b16 %v4297
    %v5406 = vunpack.c.l.b16 %v4298
    %v5407 = vunpack.c.h.b16 %v4298
    %v5408 = vunpack.c.l.b16 %v4299
    %v5409 = vunpack.c.h.b16 %v4299
    %v5410 = vunpack.c.l.b16 %v4300
    %v5411 = vunpack.c.h.b16 %v4300
    %v5412 = vunpack.c.l.b16 %v4301
    %v5413 = vunpack.c.h.b16 %v4301
    %v5414 = vunpack.c.l.b16 %v4302
    %v5415 = vunpack.c.h.b16 %v4302
    %v5416 = vunpack.c.l.b16 %v4303
    %v5417 = vunpack.c.h.b16 %v4303
    %v5418 = vunpack.c.l.b16 %v4304
    %v5419 = vunpack.c.h.b16 %v4304
    %v5420 = vunpack.c.l.b16 %v4305
    %v5421 = vunpack.c.h.b16 %v4305
    %v5422 = vunpack.c.l.b16 %v4306
    %v5423 = vunpack.c.h.b16 %v4306
    %v5424 = vunpack.c.l.b16 %v4307
    %v5425 = vunpack.c.h.b16 %v4307
    %v5426 = vunpack.c.l.b16 %v4308
    %v5427 = vunpack.c.h.b16 %v4308
    %v5428 = vunpack.c.l.b16 %v4309
    %v5429 = vunpack.c.h.b16 %v4309
    %v5430 = vunpack.c.l.b16 %v4310
    %v5431 = vunpack.c.h.b16 %v4310
    %v5432 = vunpack.c.l.b16 %v4311
    %v5433 = vunpack.c.h.b16 %v4311
    %v5434 = vunpack.c.l.b16 %v4312
    %v5435 = vunpack.c.h.b16 %v4312
    %v5436 = vunpack.c.l.b16 %v4313
    %v5437 = vunpack.c.h.b16 %v4313
    %v5438 = vunpack.c.l.b16 %v4314
    %v5439 = vunpack.c.h.b16 %v4314
    %v5440 = vunpack.c.l.b16 %v4315
    %v5441 = vunpack.c.h.b16 %v4315
    %v5442 = vunpack.c.l.b16 %v4316
    %v5443 = vunpack.c.h.b16 %v4316
    %v5444 = vunpack.c.l.b16 %v4317
    %v5445 = vunpack.c.h.b16 %v4317
    %v5446 = vunpack.c.l.b16 %v4318
    %v5447 = vunpack.c.h.b16 %v4318
    %v5448 = vunpack.c.l.b16 %v4319
    %v5449 = vunpack.c.h.b16 %v4319
    %v5450 = vunpack.c.l.b16 %v4320
    %v5451 = vunpack.c.h.b16 %v4320
    %v5452 = vunpack.c.l.b16 %v4321
    %v5453 = vunpack.c.h.b16 %v4321
    %v5454 = vunpack.c.l.b16 %v4322
    %v5455 = vunpack.c.h.b16 %v4322
    %v5456 = vunpack.c.l.b16 %v4323
    %v5457 = vunpack.c.h.b16 %v4323
    %v5458 = vunpack.c.l.b16 %v4324
    %v5459 = vunpack.c.h.b16 %v4324
    %v5460 = vunpack.c.l.b16 %v4325
    %v5461 = vunpack.c.h.b16 %v4325
    %v5462 = vunpack.c.l.b16 %v4326
    %v5463 = vunpack.c.h.b16 %v4326
    %v5464 = vunpack.c.l.b16 %v4327
    %v5465 = vunpack.c.h.b16 %v4327
    %v5466 = vunpack.c.l.b16 %v4328
    %v5467 = vunpack.c.h.b16 %v4328
    %v5468 = vunpack.c.l.b16 %v4329
    %v5469 = vunpack.c.h.b16 %v4329
    %v5470 = vunpack.c.l.b16 %v4330
    %v5471 = vunpack.c.h.b16 %v4330
    %v5472 = vunpack.c.l.b16 %v4331
    %v5473 = vunpack.c.h.b16 %v4331
    %v5474 = vunpack.c.l.b16 %v4332
    %v5475 = vunpack.c.h.b16 %v4332
    %v5476 = vunpack.c.l.b16 %v4333
    %v5477 = vunpack.c.h.b16 %v4333
    %v5478 = vunpack.c.l.b16 %v4334
    %v5479 = vunpack.c.h.b16 %v4334
    %v5480 = vunpack.c.l.b16 %v4335
    %v5481 = vunpack.c.h.b16 %v4335
    %v5482 = vunpack.c.l.b16 %v4336
    %v5483 = vunpack.c.h.b16 %v4336
    %v5484 = vunpack.c.l.b16 %v4337
    %v5485 = vunpack.c.h.b16 %v4337
    %v5486 = vunpack.c.l.b16 %v4338
    %v5487 = vunpack.c.h.b16 %v4338
    %v5488 = vunpack.c.l.b16 %v4339
    %v5489 = vunpack.c.h.b16 %v4339
    %v5490 = vunpack.c.l.b16 %v4340
    %v5491 = vunpack.c.h.b16 %v4340
    %v5492 = vunpack.c.l.b16 %v4341
    %v5493 = vunpack.c.h.b16 %v4341
    %v5494 = vunpack.c.l.b16 %v4342
    %v5495 = vunpack.c.h.b16 %v4342
    %v5496 = vunpack.c.l.b16 %v4343
    %v5497 = vunpack.c.h.b16 %v4343
    %v5498 = vunpack.c.l.b16 %v4344
    %v5499 = vunpack.c.h.b16 %v4344
    %v5500 = vunpack.c.l.b16 %v4345
    %v5501 = vunpack.c.h.b16 %v4345
    %v5502 = vunpack.c.l.b16 %v4346
    %v5503 = vunpack.c.h.b16 %v4346
    %v5504 = vunpack.c.l.b16 %v4347
    %v5505 = vunpack.c.h.b16 %v4347
    %v5506 = vunpack.c.l.b16 %v4348
    %v5507 = vunpack.c.h.b16 %v4348
    %v5508 = vunpack.c.l.b16 %v4349
    %v5509 = vunpack.c.h.b16 %v4349
    %v5510 = vunpack.c.l.b16 %v4350
    %v5511 = vunpack.c.h.b16 %v4350
    %v5512 = vunpack.c.l.b16 %v4351
    %v5513 = vunpack.c.h.b16 %v4351
    %v5514 = vunpack.c.l.b16 %v4352
    %v5515 = vunpack.c.h.b16 %v4352
    %v5516 = vunpack.c.l.b16 %v4353
    %v5517 = vunpack.c.h.b16 %v4353
    %v5518 = vunpack.c.l.b16 %v4354
    %v5519 = vunpack.c.h.b16 %v4354
    %v5520 = vunpack.c.l.b16 %v4355
    %v5521 = vunpack.c.h.b16 %v4355
    %v5522 = vunpack.c.l.b16 %v4356
    %v5523 = vunpack.c.h.b16 %v4356
    %v5524 = vunpack.c.l.b16 %v4357
    %v5525 = vunpack.c.h.b16 %v4357
    %v5526 = vunpack.c.l.b16 %v4358
    %v5527 = vunpack.c.h.b16 %v4358
    %v5528 = vunpack.c.l.b16 %v4359
    %v5529 = vunpack.c.h.b16 %v4359
    %v5530 = vunpack.c.l.b16 %v4360
    %v5531 = vunpack.c.h.b16 %v4360
    %v5532 = vunpack.c.l.b16 %v4361
    %v5533 = vunpack.c.h.b16 %v4361
    %v5534 = vunpack.c.l.b16 %v4362
    %v5535 = vunpack.c.h.b16 %v4362
    %v5536 = vunpack.c.l.b16 %v4363
    %v5537 = vunpack.c.h.b16 %v4363
    %v5538 = vunpack.c.l.b16 %v4364
    %v5539 = vunpack.c.h.b16 %v4364
    %v5540 = vunpack.c.l.b16 %v4365
    %v5541 = vunpack.c.h.b16 %v4365
    %v5542 = vunpack.c.l.b16 %v4366
    %v5543 = vunpack.c.h.b16 %v4366
    %v5544 = vunpack.c.l.b16 %v4367
    %v5545 = vunpack.c.h.b16 %v4367
    %v5546 = vunpack.c.l.b16 %v4368
    %v5547 = vunpack.c.h.b16 %v4368
    %v5548 = vunpack.c.l.b16 %v4369
    %v5549 = vunpack.c.h.b16 %v4369
    %v5550 = vunpack.c.l.b16 %v4370
    %v5551 = vunpack.c.h.b16 %v4370
    %v5552 = vunpack.c.l.b16 %v4371
    %v5553 = vunpack.c.h.b16 %v4371
    %v5554 = vunpack.c.l.b16 %v4372
    %v5555 = vunpack.c.h.b16 %v4372
    %v5556 = vunpack.c.l.b16 %v4373
    %v5557 = vunpack.c.h.b16 %v4373
    %v5558 = vunpack.c.l.b16 %v4374
    %v5559 = vunpack.c.h.b16 %v4374
    %v5560 = vunpack.c.l.b16 %v4375
    %v5561 = vunpack.c.h.b16 %v4375
    %v5562 = vunpack.c.l.b16 %v4376
    %v5563 = vunpack.c.h.b16 %v4376
    %v5564 = vunpack.c.l.b16 %v4377
    %v5565 = vunpack.c.h.b16 %v4377
    %v5566 = vunpack.c.l.b16 %v4378
    %v5567 = vunpack.c.h.b16 %v4378
    %v5568 = vunpack.c.l.b16 %v4379
    %v5569 = vunpack.c.h.b16 %v4379
    %v5570 = vunpack.c.l.b16 %v4380
    %v5571 = vunpack.c.h.b16 %v4380
    %v5572 = vunpack.c.l.b16 %v4381
    %v5573 = vunpack.c.h.b16 %v4381
    %v5574 = vunpack.c.l.b16 %v4382
    %v5575 = vunpack.c.h.b16 %v4382
    %v5576 = vunpack.c.l.b16 %v4383
    %v5577 = vunpack.c.h.b16 %v4383
    %v5578 = vunpack.c.l.b16 %v4384
    %v5579 = vunpack.c.h.b16 %v4384
    %v5580 = vunpack.c.l.b16 %v4385
    %v5581 = vunpack.c.h.b16 %v4385
    %v5582 = vunpack.c.l.b16 %v4386
    %v5583 = vunpack.c.h.b16 %v4386
    %v5584 = vunpack.c.l.b16 %v4387
    %v5585 = vunpack.c.h.b16 %v4387
    %v5586 = vunpack.c.l.b16 %v4388
    %v5587 = vunpack.c.h.b16 %v4388
    %v5588 = vunpack.c.l.b16 %v4389
    %v5589 = vunpack.c.h.b16 %v4389
    %v5590 = vunpack.c.l.b16 %v4390
    %v5591 = vunpack.c.h.b16 %v4390
    %v5592 = vunpack.c.l.b16 %v4391
    %v5593 = vunpack.c.h.b16 %v4391
    %v5594 = vunpack.c.l.b16 %v4392
    %v5595 = vunpack.c.h.b16 %v4392
    %v5596 = vunpack.c.l.b16 %v4393
    %v5597 = vunpack.c.h.b16 %v4393
    %v5598 = vunpack.c.l.b16 %v4394
    %v5599 = vunpack.c.h.b16 %v4394
    %v5600 = vunpack.c.l.b16 %v4395
    %v5601 = vunpack.c.h.b16 %v4395
    %v5602 = vunpack.c.l.b16 %v4396
    %v5603 = vunpack.c.h.b16 %v4396
    %v5604 = vunpack.c.l.b16 %v4397
    %v5605 = vunpack.c.h.b16 %v4397
    %v5606 = vunpack.c.l.b16 %v4398
    %v5607 = vunpack.c.h.b16 %v4398
    %v5608 = vunpack.c.l.b16 %v4399
    %v5609 = vunpack.c.h.b16 %v4399
    %v5610 = vunpack.c.l.b16 %v4400
    %v5611 = vunpack.c.h.b16 %v4400
    %v5612 = vunpack.c.l.b16 %v4401
    %v5613 = vunpack.c.h.b16 %v4401
    %v5614 = vunpack.c.l.b16 %v4402
    %v5615 = vunpack.c.h.b16 %v4402
    %v5616 = vunpack.c.l.b16 %v4403
    %v5617 = vunpack.c.h.b16 %v4403
    %v5618 = vunpack.c.l.b16 %v4404
    %v5619 = vunpack.c.h.b16 %v4404
    %v5620 = vunpack.c.l.b16 %v4405
    %v5621 = vunpack.c.h.b16 %v4405
    %v5622 = vunpack.c.l.b16 %v4406
    %v5623 = vunpack.c.h.b16 %v4406
    %v5624 = vunpack.c.l.b16 %v4407
    %v5625 = vunpack.c.h.b16 %v4407
    %v5626 = vunpack.c.l.b16 %v4408
    %v5627 = vunpack.c.h.b16 %v4408
    %v5628 = vunpack.c.l.b16 %v4409
    %v5629 = vunpack.c.h.b16 %v4409
    %v5630 = vunpack.c.l.b16 %v4410
    %v5631 = vunpack.c.h.b16 %v4410
    %v5632 = vunpack.c.l.b16 %v4411
    %v5633 = vunpack.c.h.b16 %v4411
    %v5634 = vunpack.c.l.b16 %v4412
    %v5635 = vunpack.c.h.b16 %v4412
    %v5636 = vunpack.c.l.b16 %v4413
    %v5637 = vunpack.c.h.b16 %v4413
    %v5638 = vunpack.c.l.b16 %v4414
    %v5639 = vunpack.c.h.b16 %v4414
    %v5640 = vunpack.c.l.b16 %v4415
    %v5641 = vunpack.c.h.b16 %v4415
    %v5642 = vunpack.c.l.b16 %v4416
    %v5643 = vunpack.c.h.b16 %v4416
    %v5644 = vunpack.c.l.b16 %v4417
    %v5645 = vunpack.c.h.b16 %v4417
    %v5646 = vunpack.c.l.b16 %v4418
    %v5647 = vunpack.c.h.b16 %v4418
    %v5648 = vunpack.c.l.b16 %v4419
    %v5649 = vunpack.c.h.b16 %v4419
    %v5650 = vunpack.c.l.b16 %v4420
    %v5651 = vunpack.c.h.b16 %v4420
    %v5652 = vunpack.c.l.b16 %v4421
    %v5653 = vunpack.c.h.b16 %v4421
    %v5654 = vunpack.c.l.b16 %v4422
    %v5655 = vunpack.c.h.b16 %v4422
    %v5656 = vunpack.c.l.b16 %v4423
    %v5657 = vunpack.c.h.b16 %v4423
    %v5658 = vunpack.c.l.b16 %v4424
    %v5659 = vunpack.c.h.b16 %v4424
    %v5660 = vunpack.c.l.b16 %v4425
    %v5661 = vunpack.c.h.b16 %v4425
    %v5662 = vunpack.c.l.b16 %v4426
    %v5663 = vunpack.c.h.b16 %v4426
    %v5664 = vunpack.c.l.b16 %v4427
    %v5665 = vunpack.c.h.b16 %v4427
    %v5666 = vunpack.c.l.b16 %v4428
    %v5667 = vunpack.c.h.b16 %v4428
    %v5668 = vunpack.c.l.b16 %v4429
    %v5669 = vunpack.c.h.b16 %v4429
    %v5670 = vunpack.c.l.b16 %v4430
    %v5671 = vunpack.c.h.b16 %v4430
    %v5672 = vunpack.c.l.b16 %v4431
    %v5673 = vunpack.c.h.b16 %v4431
    %v5674 = vunpack.c.l.b16 %v4432
    %v5675 = vunpack.c.h.b16 %v4432
    %v5676 = vunpack.c.l.b16 %v4433
    %v5677 = vunpack.c.h.b16 %v4433
    %v5678 = vunpack.c.l.b16 %v4434
    %v5679 = vunpack.c.h.b16 %v4434
    %v5680 = vunpack.c.l.b16 %v4435
    %v5681 = vunpack.c.h.b16 %v4435
    %v5682 = vunpack.c.l.b16 %v4436
    %v5683 = vunpack.c.h.b16 %v4436
    %v5684 = vunpack.c.l.b16 %v4437
    %v5685 = vunpack.c.h.b16 %v4437
    %v5686 = vunpack.c.l.b16 %v4438
    %v5687 = vunpack.c.h.b16 %v4438
    %v5688 = vunpack.c.l.b16 %v4439
    %v5689 = vunpack.c.h.b16 %v4439
    %v5690 = vunpack.c.l.b16 %v4440
    %v5691 = vunpack.c.h.b16 %v4440
    %v5692 = vunpack.c.l.b16 %v4441
    %v5693 = vunpack.c.h.b16 %v4441
    %v5694 = vunpack.c.l.b16 %v4442
    %v5695 = vunpack.c.h.b16 %v4442
    %v5696 = vunpack.c.l.b16 %v4443
    %v5697 = vunpack.c.h.b16 %v4443
    %v5698 = vunpack.c.l.b16 %v4444
    %v5699 = vunpack.c.h.b16 %v4444
    %v5700 = vunpack.c.l.b16 %v4445
    %v5701 = vunpack.c.h.b16 %v4445
    %v5702 = vunpack.c.l.b16 %v4446
    %v5703 = vunpack.c.h.b16 %v4446
    %v5704 = vunpack.c.l.b16 %v4447
    %v5705 = vunpack.c.h.b16 %v4447
    %v5706 = vunpack.c.l.b16 %v4448
    %v5707 = vunpack.c.h.b16 %v4448
    %v5708 = vunpack.c.l.b16 %v4449
    %v5709 = vunpack.c.h.b16 %v4449
    %v5710 = vunpack.c.l.b16 %v4450
    %v5711 = vunpack.c.h.b16 %v4450
    %v5712 = vunpack.c.l.b16 %v4451
    %v5713 = vunpack.c.h.b16 %v4451
    %v5714 = vunpack.c.l.b16 %v4452
    %v5715 = vunpack.c.h.b16 %v4452
    %v5716 = vunpack.c.l.b16 %v4453
    %v5717 = vunpack.c.h.b16 %v4453
    %v5718 = vunpack.c.l.b16 %v4454
    %v5719 = vunpack.c.h.b16 %v4454
    %v5720 = vunpack.c.l.b16 %v4455
    %v5721 = vunpack.c.h.b16 %v4455
    %v5722 = vunpack.c.l.b16 %v4456
    %v5723 = vunpack.c.h.b16 %v4456
    %v5724 = vunpack.c.l.b16 %v4457
    %v5725 = vunpack.c.h.b16 %v4457
    %v5726 = vunpack.c.l.b16 %v4458
    %v5727 = vunpack.c.h.b16 %v4458
    %v5728 = vunpack.c.l.b16 %v4459
    %v5729 = vunpack.c.h.b16 %v4459
    %v5730 = vunpack.c.l.b16 %v4460
    %v5731 = vunpack.c.h.b16 %v4460
    %v5732 = vunpack.c.l.b16 %v4461
    %v5733 = vunpack.c.h.b16 %v4461
    %v5734 = vunpack.c.l.b16 %v4462
    %v5735 = vunpack.c.h.b16 %v4462
    %v5736 = vunpack.c.l.b16 %v4463
    %v5737 = vunpack.c.h.b16 %v4463
    %v5738 = vunpack.c.l.b16 %v4464
    %v5739 = vunpack.c.h.b16 %v4464
    %v5740 = vunpack.c.l.b16 %v4465
    %v5741 = vunpack.c.h.b16 %v4465
    %v5742 = vunpack.c.l.b16 %v4466
    %v5743 = vunpack.c.h.b16 %v4466
    %v5744 = vunpack.c.l.b16 %v4467
    %v5745 = vunpack.c.h.b16 %v4467
    %v5746 = vunpack.c.l.b16 %v4468
    %v5747 = vunpack.c.h.b16 %v4468
    %v5748 = vunpack.c.l.b16 %v4469
    %v5749 = vunpack.c.h.b16 %v4469
    %v5750 = vunpack.c.l.b16 %v4470
    %v5751 = vunpack.c.h.b16 %v4470
    %v5752 = vunpack.c.l.b16 %v4471
    %v5753 = vunpack.c.h.b16 %v4471
    %v5754 = vunpack.c.l.b16 %v4472
    %v5755 = vunpack.c.h.b16 %v4472
    %v5756 = vunpack.c.l.b16 %v4473
    %v5757 = vunpack.c.h.b16 %v4473
    %v5758 = vunpack.c.l.b16 %v4474
    %v5759 = vunpack.c.h.b16 %v4474
    %v5760 = vunpack.c.l.b16 %v4475
    %v5761 = vunpack.c.h.b16 %v4475
    %v5762 = vunpack.c.l.b16 %v4476
    %v5763 = vunpack.c.h.b16 %v4476
    %v5764 = vunpack.c.l.b16 %v4477
    %v5765 = vunpack.c.h.b16 %v4477
    %v5766 = vunpack.c.l.b16 %v4478
    %v5767 = vunpack.c.h.b16 %v4478
    %v5768 = vunpack.c.l.b16 %v4479
    %v5769 = vunpack.c.h.b16 %v4479
    %v5770 = vunpack.c.l.b16 %v4480
    %v5771 = vunpack.c.h.b16 %v4480
    %v5772 = vunpack.c.l.b16 %v4481
    %v5773 = vunpack.c.h.b16 %v4481
    %v5774 = vunpack.c.l.b16 %v4482
    %v5775 = vunpack.c.h.b16 %v4482
    %v5776 = vunpack.c.l.b16 %v4483
    %v5777 = vunpack.c.h.b16 %v4483
    %v5778 = vunpack.c.l.b16 %v4484
    %v5779 = vunpack.c.h.b16 %v4484
    %v5780 = vunpack.c.l.b16 %v4485
    %v5781 = vunpack.c.h.b16 %v4485
    %v5782 = vunpack.c.l.b16 %v4486
    %v5783 = vunpack.c.h.b16 %v4486
    %v5784 = vunpack.c.l.b16 %v4487
    %v5785 = vunpack.c.h.b16 %v4487
    %v5786 = vunpack.c.l.b16 %v4488
    %v5787 = vunpack.c.h.b16 %v4488
    %v5788 = vunpack.c.l.b16 %v4489
    %v5789 = vunpack.c.h.b16 %v4489
    %v5790 = vunpack.c.l.b16 %v4490
    %v5791 = vunpack.c.h.b16 %v4490
    %v5792 = vunpack.c.l.b16 %v4491
    %v5793 = vunpack.c.h.b16 %v4491
    %v5794 = vunpack.c.l.b16 %v4492
    %v5795 = vunpack.c.h.b16 %v4492
    %v5796 = vunpack.c.l.b16 %v4493
    %v5797 = vunpack.c.h.b16 %v4493
    %v5798 = vunpack.c.l.b16 %v4494
    %v5799 = vunpack.c.h.b16 %v4494
    %v5800 = vunpack.c.l.b16 %v4495
    %v5801 = vunpack.c.h.b16 %v4495
    %v5802 = vunpack.c.l.b16 %v4496
    %v5803 = vunpack.c.h.b16 %v4496
    %v5804 = vunpack.c.l.b16 %v4497
    %v5805 = vunpack.c.h.b16 %v4497
    %v5806 = vunpack.c.l.b16 %v4498
    %v5807 = vunpack.c.h.b16 %v4498
    %v5808 = vunpack.c.l.b16 %v4499
    %v5809 = vunpack.c.h.b16 %v4499
    %v5810 = vunpack.c.l.b16 %v4500
    %v5811 = vunpack.c.h.b16 %v4500
    %v5812 = vunpack.c.l.b16 %v4501
    %v5813 = vunpack.c.h.b16 %v4501
    %v5814 = vunpack.c.l.b16 %v4502
    %v5815 = vunpack.c.h.b16 %v4502
    %v5816 = vunpack.c.l.b16 %v4503
    %v5817 = vunpack.c.h.b16 %v4503
    %v5818 = vunpack.c.l.b16 %v4504
    %v5819 = vunpack.c.h.b16 %v4504
    %v5820 = vunpack.c.l.b16 %v4505
    %v5821 = vunpack.c.h.b16 %v4505
    %v5822 = vunpack.c.l.b16 %v4506
    %v5823 = vunpack.c.h.b16 %v4506
    %v5824 = vunpack.c.l.b16 %v4507
    %v5825 = vunpack.c.h.b16 %v4507
    %v5826 = vunpack.c.l.b16 %v4508
    %v5827 = vunpack.c.h.b16 %v4508
    %v5828 = vunpack.c.l.b16 %v4509
    %v5829 = vunpack.c.h.b16 %v4509
    %v5830 = vunpack.c.l.b16 %v4510
    %v5831 = vunpack.c.h.b16 %v4510
    %v5832 = vunpack.c.l.b16 %v4511
    %v5833 = vunpack.c.h.b16 %v4511
    %v5834 = vunpack.c.l.b16 %v4512
    %v5835 = vunpack.c.h.b16 %v4512
    %v5836 = vunpack.c.l.b16 %v4513
    %v5837 = vunpack.c.h.b16 %v4513
    %v5838 = vunpack.c.l.b16 %v4514
    %v5839 = vunpack.c.h.b16 %v4514
    %v5840 = vunpack.c.l.b16 %v4515
    %v5841 = vunpack.c.h.b16 %v4515
    %v5842 = vunpack.c.l.b16 %v4516
    %v5843 = vunpack.c.h.b16 %v4516
    %v5844 = vunpack.c.l.b16 %v4517
    %v5845 = vunpack.c.h.b16 %v4517
    %v5846 = vunpack.c.l.b16 %v4518
    %v5847 = vunpack.c.h.b16 %v4518
    %v5848 = vunpack.c.l.b16 %v4519
    %v5849 = vunpack.c.h.b16 %v4519
    %v5850 = vunpack.c.l.b16 %v4520
    %v5851 = vunpack.c.h.b16 %v4520
    %v5852 = vunpack.c.l.b16 %v4521
    %v5853 = vunpack.c.h.b16 %v4521
    %v5854 = vunpack.c.l.b16 %v4522
    %v5855 = vunpack.c.h.b16 %v4522
    %v5856 = vunpack.c.l.b16 %v4523
    %v5857 = vunpack.c.h.b16 %v4523
    %v5858 = vunpack.c.l.b16 %v4524
    %v5859 = vunpack.c.h.b16 %v4524
    %v5860 = vunpack.c.l.b16 %v4525
    %v5861 = vunpack.c.h.b16 %v4525
    %v5862 = vunpack.c.l.b16 %v4526
    %v5863 = vunpack.c.h.b16 %v4526
    %v5864 = vunpack.c.l.b16 %v4527
    %v5865 = vunpack.c.h.b16 %v4527
    %v5866 = vunpack.c.l.b16 %v4528
    %v5867 = vunpack.c.h.b16 %v4528
    %v5868 = vunpack.c.l.b16 %v4529
    %v5869 = vunpack.c.h.b16 %v4529
    %v5870 = vunpack.c.l.b16 %v4530
    %v5871 = vunpack.c.h.b16 %v4530
    %v5872 = vunpack.c.l.b16 %v4531
    %v5873 = vunpack.c.h.b16 %v4531
    %v5874 = vunpack.c.l.b16 %v4532
    %v5875 = vunpack.c.h.b16 %v4532
    %v5876 = vunpack.c.l.b16 %v4533
    %v5877 = vunpack.c.h.b16 %v4533
    %v5878 = vunpack.c.l.b16 %v4534
    %v5879 = vunpack.c.h.b16 %v4534
    %v5880 = vunpack.c.l.b16 %v4535
    %v5881 = vunpack.c.h.b16 %v4535
    %v5882 = vunpack.c.l.b16 %v4536
    %v5883 = vunpack.c.h.b16 %v4536
    %v5884 = vunpack.c.l.b16 %v4537
    %v5885 = vunpack.c.h.b16 %v4537
    %v5886 = vunpack.c.l.b16 %v4538
    %v5887 = vunpack.c.h.b16 %v4538
    %v5888 = vunpack.c.l.b16 %v4539
    %v5889 = vunpack.c.h.b16 %v4539
    %v5890 = vunpack.c.l.b16 %v4540
    %v5891 = vunpack.c.h.b16 %v4540
    %v5892 = vunpack.c.l.b16 %v4541
    %v5893 = vunpack.c.h.b16 %v4541
    %v5894 = vunpack.c.l.b16 %v4542
    %v5895 = vunpack.c.h.b16 %v4542
    %v5896 = vunpack.c.l.b16 %v4543
    %v5897 = vunpack.c.h.b16 %v4543
    %v5898 = vunpack.c.l.b16 %v4544
    %v5899 = vunpack.c.h.b16 %v4544
    %v5900 = vunpack.c.l.b16 %v4545
    %v5901 = vunpack.c.h.b16 %v4545
    %v5902 = vunpack.c.l.b16 %v4546
    %v5903 = vunpack.c.h.b16 %v4546
    %v5904 = vunpack.c.l.b16 %v4547
    %v5905 = vunpack.c.h.b16 %v4547
    %v5906 = vunpack.c.l.b16 %v4548
    %v5907 = vunpack.c.h.b16 %v4548
    %v5908 = vunpack.c.l.b16 %v4549
    %v5909 = vunpack.c.h.b16 %v4549
    %v5910 = vunpack.c.l.b16 %v4550
    %v5911 = vunpack.c.h.b16 %v4550
    %v5912 = vunpack.c.l.b16 %v4551
    %v5913 = vunpack.c.h.b16 %v4551
    %v5914 = vunpack.c.l.b16 %v4552
    %v5915 = vunpack.c.h.b16 %v4552
    %v5916 = vunpack.c.l.b16 %v4553
    %v5917 = vunpack.c.h.b16 %v4553
    %v5918 = vunpack.c.l.b16 %v4554
    %v5919 = vunpack.c.h.b16 %v4554
    %v5920 = vunpack.c.l.b16 %v4555
    %v5921 = vunpack.c.h.b16 %v4555
    %v5922 = vunpack.c.l.b16 %v4556
    %v5923 = vunpack.c.h.b16 %v4556
    %v5924 = vunpack.c.l.b16 %v4557
    %v5925 = vunpack.c.h.b16 %v4557
    %v5926 = vunpack.c.l.b16 %v4558
    %v5927 = vunpack.c.h.b16 %v4558
    %v5928 = vunpack.c.l.b16 %v4559
    %v5929 = vunpack.c.h.b16 %v4559
    %v5930 = vunpack.c.l.b16 %v4560
    %v5931 = vunpack.c.h.b16 %v4560
    %v5932 = vunpack.c.l.b16 %v4561
    %v5933 = vunpack.c.h.b16 %v4561
    %v5934 = vunpack.c.l.b16 %v4562
    %v5935 = vunpack.c.h.b16 %v4562
    %v5936 = vunpack.c.l.b16 %v4563
    %v5937 = vunpack.c.h.b16 %v4563
    %v5938 = vunpack.c.l.b16 %v4564
    %v5939 = vunpack.c.h.b16 %v4564
    %v5940 = vunpack.c.l.b16 %v4565
    %v5941 = vunpack.c.h.b16 %v4565
    %v5942 = vunpack.c.l.b16 %v4566
    %v5943 = vunpack.c.h.b16 %v4566
    %v5944 = vunpack.c.l.b16 %v4567
    %v5945 = vunpack.c.h.b16 %v4567
    %v5946 = vunpack.c.l.b16 %v4568
    %v5947 = vunpack.c.h.b16 %v4568
    %v5948 = vunpack.c.l.b16 %v4569
    %v5949 = vunpack.c.h.b16 %v4569
    %v5950 = vunpack.c.l.b16 %v4570
    %v5951 = vunpack.c.h.b16 %v4570
    %v5952 = vunpack.c.l.b16 %v4571
    %v5953 = vunpack.c.h.b16 %v4571
    %v5954 = vunpack.c.l.b16 %v4572
    %v5955 = vunpack.c.h.b16 %v4572
    %v5956 = vunpack.c.l.b16 %v4573
    %v5957 = vunpack.c.h.b16 %v4573
    %v5958 = vunpack.c.l.b16 %v4574
    %v5959 = vunpack.c.h.b16 %v4574
    %v5960 = vunpack.c.l.b16 %v4575
    %v5961 = vunpack.c.h.b16 %v4575
    %v5962 = vunpack.c.l.b16 %v4576
    %v5963 = vunpack.c.h.b16 %v4576
    %v5964 = vunpack.c.l.b16 %v4577
    %v5965 = vunpack.c.h.b16 %v4577
    %v5966 = vunpack.c.l.b16 %v4578
    %v5967 = vunpack.c.h.b16 %v4578
    %v5968 = vunpack.c.l.b16 %v4579
    %v5969 = vunpack.c.h.b16 %v4579
    %v5970 = vunpack.c.l.b16 %v4580
    %v5971 = vunpack.c.h.b16 %v4580
    %v5972 = vunpack.c.l.b16 %v4581
    %v5973 = vunpack.c.h.b16 %v4581
    %v5974 = vunpack.c.l.b16 %v4582
    %v5975 = vunpack.c.h.b16 %v4582
    %v5976 = vunpack.c.l.b16 %v4583
    %v5977 = vunpack.c.h.b16 %v4583
    %v5978 = vunpack.c.l.b16 %v4584
    %v5979 = vunpack.c.h.b16 %v4584
    %v5980 = vunpack.c.l.b16 %v4585
    %v5981 = vunpack.c.h.b16 %v4585
    %v5982 = vunpack.c.l.b16 %v4586
    %v5983 = vunpack.c.h.b16 %v4586
    %v5984 = vunpack.c.l.b16 %v4587
    %v5985 = vunpack.c.h.b16 %v4587
    %v5986 = vunpack.c.l.b16 %v4588
    %v5987 = vunpack.c.h.b16 %v4588
    %v5988 = vunpack.c.l.b16 %v4589
    %v5989 = vunpack.c.h.b16 %v4589
    %v5990 = vunpack.c.l.b16 %v4590
    %v5991 = vunpack.c.h.b16 %v4590
    %v5992 = vunpack.c.l.b16 %v4591
    %v5993 = vunpack.c.h.b16 %v4591
    %v5994 = vunpack.c.l.b16 %v4592
    %v5995 = vunpack.c.h.b16 %v4592
    %v5996 = vunpack.c.l.b16 %v4593
    %v5997 = vunpack.c.h.b16 %v4593
    %v5998 = vunpack.c.l.b16 %v4594
    %v5999 = vunpack.c.h.b16 %v4594
    %v6000 = vunpack.c.l.b16 %v4595
    %v6001 = vunpack.c.h.b16 %v4595
    %v6002 = vunpack.c.l.b16 %v4596
    %v6003 = vunpack.c.h.b16 %v4596
    %v6004 = vunpack.c.l.b16 %v4597
    %v6005 = vunpack.c.h.b16 %v4597
    %v6006 = vunpack.c.l.b16 %v4598
    %v6007 = vunpack.c.h.b16 %v4598
    %v6008 = vunpack.c.l.b16 %v4599
    %v6009 = vunpack.c.h.b16 %v4599
    %v6010 = vunpack.c.l.b16 %v4600
    %v6011 = vunpack.c.h.b16 %v4600
    %v6012 = vunpack.c.l.b16 %v4601
    %v6013 = vunpack.c.h.b16 %v4601
    %v6014 = vunpack.c.l.b16 %v4602
    %v6015 = vunpack.c.h.b16 %v4602
    %v6016 = vunpack.c.l.b16 %v4603
    %v6017 = vunpack.c.h.b16 %v4603
    %v6018 = vunpack.c.l.b16 %v4604
    %v6019 = vunpack.c.h.b16 %v4604
    %v6020 = vunpack.c.l.b16 %v4605
    %v6021 = vunpack.c.h.b16 %v4605
    %v6022 = vunpack.c.l.b16 %v4606
    %v6023 = vunpack.c.h.b16 %v4606
    %v6024 = vunpack.c.l.b16 %v4607
    %v6025 = vunpack.c.h.b16 %v4607
    %v6026 = vunpack.c.l.b16 %v4608
    %v6027 = vunpack.c.h.b16 %v4608
    %v6028 = vunpack.c.l.b16 %v4609
    %v6029 = vunpack.c.h.b16 %v4609
    %v6030 = vunpack.c.l.b16 %v4610
    %v6031 = vunpack.c.h.b16 %v4610
    %v6032 = vunpack.c.l.b16 %v4611
    %v6033 = vunpack.c.h.b16 %v4611
    %v6034 = vunpack.c.l.b16 %v4612
    %v6035 = vunpack.c.h.b16 %v4612
    %v6036 = vunpack.c.l.b16 %v4613
    %v6037 = vunpack.c.h.b16 %v4613
    %v6038 = vunpack.c.l.b16 %v4614
    %v6039 = vunpack.c.h.b16 %v4614
    %v6040 = vunpack.c.l.b16 %v4615
    %v6041 = vunpack.c.h.b16 %v4615
    %v6042 = vunpack.c.l.b16 %v4616
    %v6043 = vunpack.c.h.b16 %v4616
    %v6044 = vunpack.c.l.b16 %v4617
    %v6045 = vunpack.c.h.b16 %v4617
    %v6046 = vunpack.c.l.b16 %v4618
    %v6047 = vunpack.c.h.b16 %v4618
    %v6048 = vunpack.c.l.b16 %v4619
    %v6049 = vunpack.c.h.b16 %v4619
    %v6050 = vunpack.c.l.b16 %v4620
    %v6051 = vunpack.c.h.b16 %v4620
    %v6052 = vunpack.c.l.b16 %v4621
    %v6053 = vunpack.c.h.b16 %v4621
    %v6054 = vunpack.c.l.b16 %v4622
    %v6055 = vunpack.c.h.b16 %v4622
    %v6056 = vunpack.c.l.b16 %v4623
    %v6057 = vunpack.c.h.b16 %v4623
    %v6058 = vunpack.c.l.b16 %v4624
    %v6059 = vunpack.c.h.b16 %v4624
    %v6060 = vunpack.c.l.b16 %v4625
    %v6061 = vunpack.c.h.b16 %v4625
    %v6062 = vunpack.c.l.b16 %v4626
    %v6063 = vunpack.c.h.b16 %v4626
    %v6064 = vunpack.c.l.b16 %v4627
    %v6065 = vunpack.c.h.b16 %v4627
    %v6066 = vunpack.c.l.b16 %v4628
    %v6067 = vunpack.c.h.b16 %v4628
    %v6068 = vunpack.c.l.b16 %v4629
    %v6069 = vunpack.c.h.b16 %v4629
    %v6070 = vunpack.c.l.b16 %v4630
    %v6071 = vunpack.c.h.b16 %v4630
    %v6072 = vunpack.c.l.b16 %v4631
    %v6073 = vunpack.c.h.b16 %v4631
    %v6074 = vunpack.c.l.b16 %v4632
    %v6075 = vunpack.c.h.b16 %v4632
    %v6076 = vunpack.c.l.b16 %v4633
    %v6077 = vunpack.c.h.b16 %v4633
    %v6078 = vunpack.c.l.b16 %v4634
    %v6079 = vunpack.c.h.b16 %v4634
    %v6080 = vunpack.c.l.b16 %v4635
    %v6081 = vunpack.c.h.b16 %v4635
    %v6082 = vunpack.c.l.b16 %v4636
    %v6083 = vunpack.c.h.b16 %v4636
    %v6084 = vunpack.c.l.b16 %v4637
    %v6085 = vunpack.c.h.b16 %v4637
    %v6086 = vunpack.c.l.b16 %v4638
    %v6087 = vunpack.c.h.b16 %v4638
    %v6088 = vunpack.c.l.b16 %v4639
    %v6089 = vunpack.c.h.b16 %v4639
    %v6090 = vunpack.c.l.b16 %v4640
    %v6091 = vunpack.c.h.b16 %v4640
    %v6092 = vunpack.c.l.b16 %v4641
    %v6093 = vunpack.c.h.b16 %v4641
    %v6094 = vunpack.c.l.b16 %v4642
    %v6095 = vunpack.c.h.b16 %v4642
    %v6096 = vunpack.c.l.b16 %v4643
    %v6097 = vunpack.c.h.b16 %v4643
    %v6098 = vunpack.c.l.b16 %v4644
    %v6099 = vunpack.c.h.b16 %v4644
    %v6100 = vunpack.c.l.b16 %v4645
    %v6101 = vunpack.c.h.b16 %v4645
    %v6102 = vunpack.c.l.b16 %v4646
    %v6103 = vunpack.c.h.b16 %v4646
    %v6104 = vunpack.c.l.b16 %v4647
    %v6105 = vunpack.c.h.b16 %v4647
    %v6106 = vunpack.c.l.b16 %v4648
    %v6107 = vunpack.c.h.b16 %v4648
    %v6108 = vunpack.c.l.b16 %v4649
    %v6109 = vunpack.c.h.b16 %v4649
    %v6110 = vunpack.c.l.b16 %v4650
    %v6111 = vunpack.c.h.b16 %v4650
    %v6112 = vunpack.c.l.b16 %v4651
    %v6113 = vunpack.c.h.b16 %v4651
    %v6114 = vunpack.c.l.b16 %v4652
    %v6115 = vunpack.c.h.b16 %v4652
    %v6116 = vunpack.c.l.b16 %v4653
    %v6117 = vunpack.c.h.b16 %v4653
    %v6118 = vunpack.c.l.b16 %v4654
    %v6119 = vunpack.c.h.b16 %v4654
    %v6120 = vunpack.c.l.b16 %v4655
    %v6121 = vunpack.c.h.b16 %v4655
    %v6122 = vunpack.c.l.b16 %v4656
    %v6123 = vunpack.c.h.b16 %v4656
    %v6124 = vunpack.c.l.b16 %v4657
    %v6125 = vunpack.c.h.b16 %v4657
    %v6126 = vunpack.c.l.b16 %v4658
    %v6127 = vunpack.c.h.b16 %v4658
    %v6128 = vunpack.c.l.b16 %v4659
    %v6129 = vunpack.c.h.b16 %v4659
    %v6130 = vunpack.c.l.b16 %v4660
    %v6131 = vunpack.c.h.b16 %v4660
    %v6132 = vunpack.c.l.b16 %v4661
    %v6133 = vunpack.c.h.b16 %v4661
    %v6134 = vunpack.c.l.b16 %v4662
    %v6135 = vunpack.c.h.b16 %v4662
    %v6136 = vunpack.c.l.b16 %v4663
    %v6137 = vunpack.c.h.b16 %v4663
    %v6138 = vunpack.c.l.b16 %v4664
    %v6139 = vunpack.c.h.b16 %v4664
    %v6140 = vunpack.c.l.b16 %v4665
    %v6141 = vunpack.c.h.b16 %v4665
    %v6142 = vunpack.c.l.b16 %v4666
    %v6143 = vunpack.c.h.b16 %v4666
    %v6144 = vunpack.c.l.b16 %v4667
    %v6145 = vunpack.c.h.b16 %v4667
    %v6146 = vunpack.c.l.b16 %v4668
    %v6147 = vunpack.c.h.b16 %v4668
    %v6148 = vunpack.c.l.b16 %v4669
    %v6149 = vunpack.c.h.b16 %v4669
    %v6150 = vunpack.c.l.b16 %v4670
    %v6151 = vunpack.c.h.b16 %v4670
    %v6152 = vunpack.c.l.b16 %v4671
    %v6153 = vunpack.c.h.b16 %v4671
    %v6154 = vunpack.c.l.b16 %v4672
    %v6155 = vunpack.c.h.b16 %v4672
    %v6156 = vunpack.c.l.b16 %v4673
    %v6157 = vunpack.c.h.b16 %v4673
    %v6158 = vunpack.c.l.b16 %v4674
    %v6159 = vunpack.c.h.b16 %v4674
    %v6160 = vunpack.c.l.b16 %v4675
    %v6161 = vunpack.c.h.b16 %v4675
    %v6162 = vunpack.c.l.b16 %v4676
    %v6163 = vunpack.c.h.b16 %v4676
    %v6164 = vunpack.c.l.b16 %v4677
    %v6165 = vunpack.c.h.b16 %v4677
    %v6166 = vunpack.c.l.b16 %v4678
    %v6167 = vunpack.c.h.b16 %v4678
    %v6168 = vunpack.c.l.b16 %v4679
    %v6169 = vunpack.c.h.b16 %v4679
    %v6170 = vunpack.c.l.b16 %v4680
    %v6171 = vunpack.c.h.b16 %v4680
    %v6172 = vunpack.c.l.b16 %v4681
    %v6173 = vunpack.c.h.b16 %v4681
    %v6174 = vunpack.c.l.b16 %v4682
    %v6175 = vunpack.c.h.b16 %v4682
    %v6176 = vunpack.c.l.b16 %v4683
    %v6177 = vunpack.c.h.b16 %v4683
    %v6178 = vunpack.c.l.b16 %v4684
    %v6179 = vunpack.c.h.b16 %v4684
    %v6180 = vunpack.c.l.b16 %v4685
    %v6181 = vunpack.c.h.b16 %v4685
    %v6182 = vunpack.c.l.b16 %v4686
    %v6183 = vunpack.c.h.b16 %v4686
    %v6184 = vunpack.c.l.b16 %v4687
    %v6185 = vunpack.c.h.b16 %v4687
    %v6186 = vunpack.c.l.b16 %v4688
    %v6187 = vunpack.c.h.b16 %v4688
    %v6188 = vunpack.c.l.b16 %v4689
    %v6189 = vunpack.c.h.b16 %v4689
    %v6190 = vunpack.c.l.b16 %v4690
    %v6191 = vunpack.c.h.b16 %v4690
    %v6192 = vunpack.c.l.b16 %v4691
    %v6193 = vunpack.c.h.b16 %v4691
    %v6194 = vunpack.c.l.b16 %v4692
    %v6195 = vunpack.c.h.b16 %v4692
    %v6196 = vunpack.c.l.b16 %v4693
    %v6197 = vunpack.c.h.b16 %v4693
    %v6198 = vunpack.c.l.b16 %v4694
    %v6199 = vunpack.c.h.b16 %v4694
    %v6200 = vunpack.c.l.b16 %v4695
    %v6201 = vunpack.c.h.b16 %v4695
    %v6202 = vunpack.c.l.b16 %v4696
    %v6203 = vunpack.c.h.b16 %v4696
    %v6204 = vunpack.c.l.b16 %v4697
    %v6205 = vunpack.c.h.b16 %v4697
    %v6206 = vunpack.c.l.b16 %v4698
    %v6207 = vunpack.c.h.b16 %v4698
    %v6208 = vunpack.c.l.b16 %v4699
    %v6209 = vunpack.c.h.b16 %v4699
    %v6210 = vunpack.c.l.b16 %v4700
    %v6211 = vunpack.c.h.b16 %v4700
    %v6212 = vunpack.c.l.b16 %v4701
    %v6213 = vunpack.c.h.b16 %v4701
    %v6214 = vunpack.c.l.b16 %v4702
    %v6215 = vunpack.c.h.b16 %v4702
    %v6216 = vunpack.c.l.b16 %v4703
    %v6217 = vunpack.c.h.b16 %v4703
    %v6218 = vunpack.c.l.b16 %v4704
    %v6219 = vunpack.c.h.b16 %v4704
    %v6220 = vunpack.c.l.b16 %v4705
    %v6221 = vunpack.c.h.b16 %v4705
    %v6222 = vunpack.c.l.b16 %v4706
    %v6223 = vunpack.c.h.b16 %v4706
    %v6224 = vunpack.c.l.b16 %v4707
    %v6225 = vunpack.c.h.b16 %v4707
    %v6226 = vunpack.c.l.b16 %v4708
    %v6227 = vunpack.c.h.b16 %v4708
    %v6228 = vunpack.c.l.b16 %v4709
    %v6229 = vunpack.c.h.b16 %v4709
    %v6230 = vunpack.c.l.b16 %v4710
    %v6231 = vunpack.c.h.b16 %v4710
    %v6232 = vunpack.c.l.b16 %v4711
    %v6233 = vunpack.c.h.b16 %v4711
    %v6234 = vunpack.c.l.b16 %v4712
    %v6235 = vunpack.c.h.b16 %v4712
    %v6236 = vunpack.c.l.b16 %v4713
    %v6237 = vunpack.c.h.b16 %v4713
    %v6238 = vunpack.c.l.b16 %v4714
    %v6239 = vunpack.c.h.b16 %v4714
    %v6240 = vunpack.c.l.b16 %v4715
    %v6241 = vunpack.c.h.b16 %v4715
    %v6242 = vunpack.c.l.b16 %v4716
    %v6243 = vunpack.c.h.b16 %v4716
    %v6244 = vunpack.c.l.b16 %v4717
    %v6245 = vunpack.c.h.b16 %v4717
    %v6246 = vunpack.c.l.b16 %v4718
    %v6247 = vunpack.c.h.b16 %v4718
    %v6248 = vunpack.c.l.b16 %v4719
    %v6249 = vunpack.c.h.b16 %v4719
    %v6250 = vunpack.c.l.b16 %v4720
    %v6251 = vunpack.c.h.b16 %v4720
    %v6252 = vunpack.c.l.b16 %v4721
    %v6253 = vunpack.c.h.b16 %v4721
    %v6254 = vunpack.c.l.b16 %v4722
    %v6255 = vunpack.c.h.b16 %v4722
    %v6256 = vunpack.c.l.b16 %v4723
    %v6257 = vunpack.c.h.b16 %v4723
    %v6258 = vunpack.c.l.b16 %v4724
    %v6259 = vunpack.c.h.b16 %v4724
    %v6260 = vunpack.c.l.b16 %v4725
    %v6261 = vunpack.c.h.b16 %v4725
    %v6262 = vunpack.c.l.b16 %v4726
    %v6263 = vunpack.c.h.b16 %v4726
    %v6264 = vunpack.c.l.b16 %v4727
    %v6265 = vunpack.c.h.b16 %v4727
    %v6266 = vunpack.c.l.b16 %v4728
    %v6267 = vunpack.c.h.b16 %v4728
    %v6268 = vunpack.c.l.b16 %v4729
    %v6269 = vunpack.c.h.b16 %v4729
    %v6270 = vunpack.c.l.b16 %v4730
    %v6271 = vunpack.c.h.b16 %v4730
    %v6272 = vunpack.c.l.b16 %v4731
    %v6273 = vunpack.c.h.b16 %v4731
    %v6274 = vunpack.c.l.b16 %v4732
    %v6275 = vunpack.c.h.b16 %v4732
    %v6276 = vunpack.c.l.b16 %v4733
    %v6277 = vunpack.c.h.b16 %v4733
    %v6278 = vunpack.c.l.b16 %v4734
    %v6279 = vunpack.c.h.b16 %v4734
    %v6280 = vunpack.c.l.b16 %v4735
    %v6281 = vunpack.c.h.b16 %v4735
    %v6282 = vunpack.c.l.b16 %v4736
    %v6283 = vunpack.c.h.b16 %v4736
    %v6284 = vunpack.c.l.b16 %v4737
    %v6285 = vunpack.c.h.b16 %v4737
    %v6286 = vunpack.c.l.b16 %v4738
    %v6287 = vunpack.c.h.b16 %v4738
    %v6288 = vunpack.c.l.b16 %v4739
    %v6289 = vunpack.c.h.b16 %v4739
    %v6290 = vunpack.c.l.b16 %v4740
    %v6291 = vunpack.c.h.b16 %v4740
    %v6292 = vunpack.c.l.b16 %v4741
    %v6293 = vunpack.c.h.b16 %v4741
    %v6294 = vunpack.c.l.b16 %v4742
    %v6295 = vunpack.c.h.b16 %v4742
    %v6296 = vunpack.c.l.b16 %v4743
    %v6297 = vunpack.c.h.b16 %v4743
    %v6298 = vunpack.c.l.b16 %v4744
    %v6299 = vunpack.c.h.b16 %v4744
    %v6300 = vunpack.c.l.b16 %v4745
    %v6301 = vunpack.c.h.b16 %v4745
    %v6302 = vunpack.c.l.b16 %v4746
    %v6303 = vunpack.c.h.b16 %v4746
    %v6304 = vunpack.c.l.b16 %v4747
    %v6305 = vunpack.c.h.b16 %v4747
    %v6306 = vunpack.c.l.b16 %v4748
    %v6307 = vunpack.c.h.b16 %v4748
    %v6308 = vunpack.c.l.b16 %v4749
    %v6309 = vunpack.c.h.b16 %v4749
    %v6310 = vunpack.c.l.b16 %v4750
    %v6311 = vunpack.c.h.b16 %v4750
    %v6312 = vunpack.c.l.b16 %v4751
    %v6313 = vunpack.c.h.b16 %v4751
    %v6314 = vunpack.c.l.b16 %v4752
    %v6315 = vunpack.c.h.b16 %v4752
    %v6316 = vunpack.c.l.b16 %v4753
    %v6317 = vunpack.c.h.b16 %v4753
    %v6318 = vunpack.c.l.b16 %v4754
    %v6319 = vunpack.c.h.b16 %v4754
    %v6320 = vunpack.c.l.b16 %v4755
    %v6321 = vunpack.c.h.b16 %v4755
    %v6322 = vunpack.c.l.b16 %v4756
    %v6323 = vunpack.c.h.b16 %v4756
    %v6324 = vunpack.c.l.b16 %v4757
    %v6325 = vunpack.c.h.b16 %v4757
    %v6326 = vunpack.c.l.b16 %v4758
    %v6327 = vunpack.c.h.b16 %v4758
    %v6328 = vunpack.c.l.b16 %v4759
    %v6329 = vunpack.c.h.b16 %v4759
    %v6330 = vunpack.c.l.b16 %v4760
    %v6331 = vunpack.c.h.b16 %v4760
    %v6332 = vunpack.c.l.b16 %v4761
    %v6333 = vunpack.c.h.b16 %v4761
    %v6334 = vunpack.c.l.b16 %v4762
    %v6335 = vunpack.c.h.b16 %v4762
    %v6336 = vunpack.c.l.b16 %v4763
    %v6337 = vunpack.c.h.b16 %v4763
    %v6338 = vunpack.c.l.b16 %v4764
    %v6339 = vunpack.c.h.b16 %v4764
    %v6340 = vunpack.c.l.b16 %v4765
    %v6341 = vunpack.c.h.b16 %v4765
    %v6342 = vunpack.c.l.b16 %v4766
    %v6343 = vunpack.c.h.b16 %v4766
    %v6344 = vunpack.c.l.b16 %v4767
    %v6345 = vunpack.c.h.b16 %v4767
    %v6346 = vpack.c.b16 %v5330, %v5322
    %v6347 = vpack.c.b16 %v5331, %v5323
    %v6348 = vpack.c.b16 %v5332, %v5324
    %v6349 = vpack.c.b16 %v5333, %v5325
    %v6350 = vpack.c.b16 %v5334, %v5326
    %v6351 = vpack.c.b16 %v5335, %v5327
    %v6352 = vpack.c.b16 %v5336, %v5328
    %v6353 = vpack.c.b16 %v5337, %v5329
    %v6354 = vpack.c.b16 %v5346, %v5338
    %v6355 = vpack.c.b16 %v5347, %v5339
    %v6356 = vpack.c.b16 %v5348, %v5340
    %v6357 = vpack.c.b16 %v5349, %v5341
    %v6358 = vpack.c.b16 %v5350, %v5342
    %v6359 = vpack.c.b16 %v5351, %v5343
    %v6360 = vpack.c.b16 %v5352, %v5344
    %v6361 = vpack.c.b16 %v5353, %v5345
    %v6362 = vpack.c.b16 %v5362, %v5354
    %v6363 = vpack.c.b16 %v5363, %v5355
    %v6364 = vpack.c.b16 %v5364, %v5356
    %v6365 = vpack.c.b16 %v5365, %v5357
    %v6366 = vpack.c.b16 %v5366, %v5358
    %v6367 = vpack.c.b16 %v5367, %v5359
    %v6368 = vpack.c.b16 %v5368, %v5360
    %v6369 = vpack.c.b16 %v5369, %v5361
    %v6370 = vpack.c.b16 %v5378, %v5370
    %v6371 = vpack.c.b16 %v5379, %v5371
    %v6372 = vpack.c.b16 %v5380, %v5372
    %v6373 = vpack.c.b16 %v5381, %v5373
    %v6374 = vpack.c.b16 %v5382, %v5374
    %v6375 = vpack.c.b16 %v5383, %v5375
    %v6376 = vpack.c.b16 %v5384, %v5376
    %v6377 = vpack.c.b16 %v5385, %v5377
    %v6378 = vpack.c.b16 %v5394, %v5386
    %v6379 = vpack.c.b16 %v5395, %v5387
    %v6380 = vpack.c.b16 %v5396, %v5388
    %v6381 = vpack.c.b16 %v5397, %v5389
    %v6382 = vpack.c.b16 %v5398, %v5390
    %v6383 = vpack.c.b16 %v5399, %v5391
    %v6384 = vpack.c.b16 %v5400, %v5392
    %v6385 = vpack.c.b16 %v5401, %v5393
    %v6386 = vpack.c.b16 %v5410, %v5402
    %v6387 = vpack.c.b16 %v5411, %v5403
    %v6388 = vpack.c.b16 %v5412, %v5404
    %v6389 = vpack.c.b16 %v5413, %v5405
    %v6390 = vpack.c.b16 %v5414, %v5406
    %v6391 = vpack.c.b16 %v5415, %v5407
    %v6392 = vpack.c.b16 %v5416, %v5408
    %v6393 = vpack.c.b16 %v5417, %v5409
    %v6394 = vpack.c.b16 %v5426, %v5418
    %v6395 = vpack.c.b16 %v5427, %v5419
    %v6396 = vpack.c.b16 %v5428, %v5420
    %v6397 = vpack.c.b16 %v5429, %v5421
    %v6398 = vpack.c.b16 %v5430, %v5422
    %v6399 = vpack.c.b16 %v5431, %v5423
    %v6400 = vpack.c.b16 %v5432, %v5424
    %v6401 = vpack.c.b16 %v5433, %v5425
    %v6402 = vpack.c.b16 %v5442, %v5434
    %v6403 = vpack.c.b16 %v5443, %v5435
    %v6404 = vpack.c.b16 %v5444, %v5436
    %v6405 = vpack.c.b16 %v5445, %v5437
    %v6406 = vpack.c.b16 %v5446, %v5438
    %v6407 = vpack.c.b16 %v5447, %v5439
    %v6408 = vpack.c.b16 %v5448, %v5440
    %v6409 = vpack.c.b16 %v5449, %v5441
    %v6410 = vpack.c.b16 %v5458, %v5450
    %v6411 = vpack.c.b16 %v5459, %v5451
    %v6412 = vpack.c.b16 %v5460, %v5452
    %v6413 = vpack.c.b16 %v5461, %v5453
    %v6414 = vpack.c.b16 %v5462, %v5454
    %v6415 = vpack.c.b16 %v5463, %v5455
    %v6416 = vpack.c.b16 %v5464, %v5456
    %v6417 = vpack.c.b16 %v5465, %v5457
    %v6418 = vpack.c.b16 %v5474, %v5466
    %v6419 = vpack.c.b16 %v5475, %v5467
    %v6420 = vpack.c.b16 %v5476, %v5468
    %v6421 = vpack.c.b16 %v5477, %v5469
    %v6422 = vpack.c.b16 %v5478, %v5470
    %v6423 = vpack.c.b16 %v5479, %v5471
    %v6424 = vpack.c.b16 %v5480, %v5472
    %v6425 = vpack.c.b16 %v5481, %v5473
    %v6426 = vpack.c.b16 %v5490, %v5482
    %v6427 = vpack.c.b16 %v5491, %v5483
    %v6428 = vpack.c.b16 %v5492, %v5484
    %v6429 = vpack.c.b16 %v5493, %v5485
    %v6430 = vpack.c.b16 %v5494, %v5486
    %v6431 = vpack.c.b16 %v5495, %v5487
    %v6432 = vpack.c.b16 %v5496, %v5488
    %v6433 = vpack.c.b16 %v5497, %v5489
    %v6434 = vpack.c.b16 %v5506, %v5498
    %v6435 = vpack.c.b16 %v5507, %v5499
    %v6436 = vpack.c.b16 %v5508, %v5500
    %v6437 = vpack.c.b16 %v5509, %v5501
    %v6438 = vpack.c.b16 %v5510, %v5502
    %v6439 = vpack.c.b16 %v5511, %v5503
    %v6440 = vpack.c.b16 %v5512, %v5504
    %v6441 = vpack.c.b16 %v5513, %v5505
    %v6442 = vpack.c.b16 %v5522, %v5514
    %v6443 = vpack.c.b16 %v5523, %v5515
    %v6444 = vpack.c.b16 %v5524, %v5516
    %v6445 = vpack.c.b16 %v5525, %v5517
    %v6446 = vpack.c.b16 %v5526, %v5518
    %v6447 = vpack.c.b16 %v5527, %v5519
    %v6448 = vpack.c.b16 %v5528, %v5520
    %v6449 = vpack.c.b16 %v5529, %v5521
    %v6450 = vpack.c.b16 %v5538, %v5530
    %v6451 = vpack.c.b16 %v5539, %v5531
    %v6452 = vpack.c.b16 %v5540, %v5532
    %v6453 = vpack.c.b16 %v5541, %v5533
    %v6454 = vpack.c.b16 %v5542, %v5534
    %v6455 = vpack.c.b16 %v5543, %v5535
    %v6456 = vpack.c.b16 %v5544, %v5536
    %v6457 = vpack.c.b16 %v5545, %v5537
    %v6458 = vpack.c.b16 %v5554, %v5546
    %v6459 = vpack.c.b16 %v5555, %v5547
    %v6460 = vpack.c.b16 %v5556, %v5548
    %v6461 = vpack.c.b16 %v5557, %v5549
    %v6462 = vpack.c.b16 %v5558, %v5550
    %v6463 = vpack.c.b16 %v5559, %v5551
    %v6464 = vpack.c.b16 %v5560, %v5552
    %v6465 = vpack.c.b16 %v5561, %v5553
    %v6466 = vpack.c.b16 %v5570, %v5562
    %v6467 = vpack.c.b16 %v5571, %v5563
    %v6468 = vpack.c.b16 %v5572, %v5564
    %v6469 = vpack.c.b16 %v5573, %v5565
    %v6470 = vpack.c.b16 %v5574, %v5566
    %v6471 = vpack.c.b16 %v5575, %v5567
    %v6472 = vpack.c.b16 %v5576, %v5568
    %v6473 = vpack.c.b16 %v5577, %v5569
    %v6474 = vpack.c.b16 %v5586, %v5578
    %v6475 = vpack.c.b16 %v5587, %v5579
    %v6476 = vpack.c.b16 %v5588, %v5580
    %v6477 = vpack.c.b16 %v5589, %v5581
    %v6478 = vpack.c.b16 %v5590, %v5582
    %v6479 = vpack.c.b16 %v5591, %v5583
    %v6480 = vpack.c.b16 %v5592, %v5584
    %v6481 = vpack.c.b16 %v5593, %v5585
    %v6482 = vpack.c.b16 %v5602, %v5594
    %v6483 = vpack.c.b16 %v5603, %v5595
    %v6484 = vpack.c.b16 %v5604, %v5596
    %v6485 = vpack.c.b16 %v5605, %v5597
    %v6486 = vpack.c.b16 %v5606, %v5598
    %v6487 = vpack.c.b16 %v5607, %v5599
    %v6488 = vpack.c.b16 %v5608, %v5600
    %v6489 = vpack.c.b16 %v5609, %v5601
    %v6490 = vpack.c.b16 %v5618, %v5610
    %v6491 = vpack.c.b16 %v5619, %v5611
    %v6492 = vpack.c.b16 %v5620, %v5612
    %v6493 = vpack.c.b16 %v5621, %v5613
    %v6494 = vpack.c.b16 %v5622, %v5614
    %v6495 = vpack.c.b16 %v5623, %v5615
    %v6496 = vpack.c.b16 %v5624, %v5616
    %v6497 = vpack.c.b16 %v5625, %v5617
    %v6498 = vpack.c.b16 %v5634, %v5626
    %v6499 = vpack.c.b16 %v5635, %v5627
    %v6500 = vpack.c.b16 %v5636, %v5628
    %v6501 = vpack.c.b16 %v5637, %v5629
    %v6502 = vpack.c.b16 %v5638, %v5630
    %v6503 = vpack.c.b16 %v5639, %v5631
    %v6504 = vpack.c.b16 %v5640, %v5632
    %v6505 = vpack.c.b16 %v5641, %v5633
    %v6506 = vpack.c.b16 %v5650, %v5642
    %v6507 = vpack.c.b16 %v5651, %v5643
    %v6508 = vpack.c.b16 %v5652, %v5644
    %v6509 = vpack.c.b16 %v5653, %v5645
    %v6510 = vpack.c.b16 %v5654, %v5646
    %v6511 = vpack.c.b16 %v5655, %v5647
    %v6512 = vpack.c.b16 %v5656, %v5648
    %v6513 = vpack.c.b16 %v5657, %v5649
    %v6514 = vpack.c.b16 %v5666, %v5658
    %v6515 = vpack.c.b16 %v5667, %v5659
    %v6516 = vpack.c.b16 %v5668, %v5660
    %v6517 = vpack.c.b16 %v5669, %v5661
    %v6518 = vpack.c.b16 %v5670, %v5662
    %v6519 = vpack.c.b16 %v5671, %v5663
    %v6520 = vpack.c.b16 %v5672, %v5664
    %v6521 = vpack.c.b16 %v5673, %v5665
    %v6522 = vpack.c.b16 %v5682, %v5674
    %v6523 = vpack.c.b16 %v5683, %v5675
    %v6524 = vpack.c.b16 %v5684, %v5676
    %v6525 = vpack.c.b16 %v5685, %v5677
    %v6526 = vpack.c.b16 %v5686, %v5678
    %v6527 = vpack.c.b16 %v5687, %v5679
    %v6528 = vpack.c.b16 %v5688, %v5680
    %v6529 = vpack.c.b16 %v5689, %v5681
    %v6530 = vpack.c.b16 %v5698, %v5690
    %v6531 = vpack.c.b16 %v5699, %v5691
    %v6532 = vpack.c.b16 %v5700, %v5692
    %v6533 = vpack.c.b16 %v5701, %v5693
    %v6534 = vpack.c.b16 %v5702, %v5694
    %v6535 = vpack.c.b16 %v5703, %v5695
    %v6536 = vpack.c.b16 %v5704, %v5696
    %v6537 = vpack.c.b16 %v5705, %v5697
    %v6538 = vpack.c.b16 %v5714, %v5706
    %v6539 = vpack.c.b16 %v5715, %v5707
    %v6540 = vpack.c.b16 %v5716, %v5708
    %v6541 = vpack.c.b16 %v5717, %v5709
    %v6542 = vpack.c.b16 %v5718, %v5710
    %v6543 = vpack.c.b16 %v5719, %v5711
    %v6544 = vpack.c.b16 %v5720, %v5712
    %v6545 = vpack.c.b16 %v5721, %v5713
    %v6546 = vpack.c.b16 %v5730, %v5722
    %v6547 = vpack.c.b16 %v5731, %v5723
    %v6548 = vpack.c.b16 %v5732, %v5724
    %v6549 = vpack.c.b16 %v5733, %v5725
    %v6550 = vpack.c.b16 %v5734, %v5726
    %v6551 = vpack.c.b16 %v5735, %v5727
    %v6552 = vpack.c.b16 %v5736, %v5728
    %v6553 = vpack.c.b16 %v5737, %v5729
    %v6554 = vpack.c.b16 %v5746, %v5738
    %v6555 = vpack.c.b16 %v5747, %v5739
    %v6556 = vpack.c.b16 %v5748, %v5740
    %v6557 = vpack.c.b16 %v5749, %v5741
    %v6558 = vpack.c.b16 %v5750, %v5742
    %v6559 = vpack.c.b16 %v5751, %v5743
    %v6560 = vpack.c.b16 %v5752, %v5744
    %v6561 = vpack.c.b16 %v5753, %v5745
    %v6562 = vpack.c.b16 %v5762, %v5754
    %v6563 = vpack.c.b16 %v5763, %v5755
    %v6564 = vpack.c.b16 %v5764, %v5756
    %v6565 = vpack.c.b16 %v5765, %v5757
    %v6566 = vpack.c.b16 %v5766, %v5758
    %v6567 = vpack.c.b16 %v5767, %v5759
    %v6568 = vpack.c.b16 %v5768, %v5760
    %v6569 = vpack.c.b16 %v5769, %v5761
    %v6570 = vpack.c.b16 %v5778, %v5770
    %v6571 = vpack.c.b16 %v5779, %v5771
    %v6572 = vpack.c.b16 %v5780, %v5772
    %v6573 = vpack.c.b16 %v5781, %v5773
    %v6574 = vpack.c.b16 %v5782, %v5774
    %v6575 = vpack.c.b16 %v5783, %v5775
    %v6576 = vpack.c.b16 %v5784, %v5776
    %v6577 = vpack.c.b16 %v5785, %v5777
    %v6578 = vpack.c.b16 %v5794, %v5786
    %v6579 = vpack.c.b16 %v5795, %v5787
    %v6580 = vpack.c.b16 %v5796, %v5788
    %v6581 = vpack.c.b16 %v5797, %v5789
    %v6582 = vpack.c.b16 %v5798, %v5790
    %v6583 = vpack.c.b16 %v5799, %v5791
    %v6584 = vpack.c.b16 %v5800, %v5792
    %v6585 = vpack.c.b16 %v5801, %v5793
    %v6586 = vpack.c.b16 %v5810, %v5802
    %v6587 = vpack.c.b16 %v5811, %v5803
    %v6588 = vpack.c.b16 %v5812, %v5804
    %v6589 = vpack.c.b16 %v5813, %v5805
    %v6590 = vpack.c.b16 %v5814, %v5806
    %v6591 = vpack.c.b16 %v5815, %v5807
    %v6592 = vpack.c.b16 %v5816, %v5808
    %v6593 = vpack.c.b16 %v5817, %v5809
    %v6594 = vpack.c.b16 %v5826, %v5818
    %v6595 = vpack.c.b16 %v5827, %v5819
    %v6596 = vpack.c.b16 %v5828, %v5820
    %v6597 = vpack.c.b16 %v5829, %v5821
    %v6598 = vpack.c.b16 %v5830, %v5822
    %v6599 = vpack.c.b16 %v5831, %v5823
    %v6600 = vpack.c.b16 %v5832, %v5824
    %v6601 = vpack.c.b16 %v5833, %v5825
    %v6602 = vpack.c.b16 %v5842, %v5834
    %v6603 = vpack.c.b16 %v5843, %v5835
    %v6604 = vpack.c.b16 %v5844, %v5836
    %v6605 = vpack.c.b16 %v5845, %v5837
    %v6606 = vpack.c.b16 %v5846, %v5838
    %v6607 = vpack.c.b16 %v5847, %v5839
    %v6608 = vpack.c.b16 %v5848, %v5840
    %v6609 = vpack.c.b16 %v5849, %v5841
    %v6610 = vpack.c.b16 %v5858, %v5850
    %v6611 = vpack.c.b16 %v5859, %v5851
    %v6612 = vpack.c.b16 %v5860, %v5852
    %v6613 = vpack.c.b16 %v5861, %v5853
    %v6614 = vpack.c.b16 %v5862, %v5854
    %v6615 = vpack.c.b16 %v5863, %v5855
    %v6616 = vpack.c.b16 %v5864, %v5856
    %v6617 = vpack.c.b16 %v5865, %v5857
    %v6618 = vpack.c.b16 %v5874, %v5866
    %v6619 = vpack.c.b16 %v5875, %v5867
    %v6620 = vpack.c.b16 %v5876, %v5868
    %v6621 = vpack.c.b16 %v5877, %v5869
    %v6622 = vpack.c.b16 %v5878, %v5870
    %v6623 = vpack.c.b16 %v5879, %v5871
    %v6624 = vpack.c.b16 %v5880, %v5872
    %v6625 = vpack.c.b16 %v5881, %v5873
    %v6626 = vpack.c.b16 %v5890, %v5882
    %v6627 = vpack.c.b16 %v5891, %v5883
    %v6628 = vpack.c.b16 %v5892, %v5884
    %v6629 = vpack.c.b16 %v5893, %v5885
    %v6630 = vpack.c.b16 %v5894, %v5886
    %v6631 = vpack.c.b16 %v5895, %v5887
    %v6632 = vpack.c.b16 %v5896, %v5888
    %v6633 = vpack.c.b16 %v5897, %v5889
    %v6634 = vpack.c.b16 %v5906, %v5898
    %v6635 = vpack.c.b16 %v5907, %v5899
    %v6636 = vpack.c.b16 %v5908, %v5900
    %v6637 = vpack.c.b16 %v5909, %v5901
    %v6638 = vpack.c.b16 %v5910, %v5902
    %v6639 = vpack.c.b16 %v5911, %v5903
    %v6640 = vpack.c.b16 %v5912, %v5904
    %v6641 = vpack.c.b16 %v5913, %v5905
    %v6642 = vpack.c.b16 %v5922, %v5914
    %v6643 = vpack.c.b16 %v5923, %v5915
    %v6644 = vpack.c.b16 %v5924, %v5916
    %v6645 = vpack.c.b16 %v5925, %v5917
    %v6646 = vpack.c.b16 %v5926, %v5918
    %v6647 = vpack.c.b16 %v5927, %v5919
    %v6648 = vpack.c.b16 %v5928, %v5920
    %v6649 = vpack.c.b16 %v5929, %v5921
    %v6650 = vpack.c.b16 %v5938, %v5930
    %v6651 = vpack.c.b16 %v5939, %v5931
    %v6652 = vpack.c.b16 %v5940, %v5932
    %v6653 = vpack.c.b16 %v5941, %v5933
    %v6654 = vpack.c.b16 %v5942, %v5934
    %v6655 = vpack.c.b16 %v5943, %v5935
    %v6656 = vpack.c.b16 %v5944, %v5936
    %v6657 = vpack.c.b16 %v5945, %v5937
    %v6658 = vpack.c.b16 %v5954, %v5946
    %v6659 = vpack.c.b16 %v5955, %v5947
    %v6660 = vpack.c.b16 %v5956, %v5948
    %v6661 = vpack.c.b16 %v5957, %v5949
    %v6662 = vpack.c.b16 %v5958, %v5950
    %v6663 = vpack.c.b16 %v5959, %v5951
    %v6664 = vpack.c.b16 %v5960, %v5952
    %v6665 = vpack.c.b16 %v5961, %v5953
    %v6666 = vpack.c.b16 %v5970, %v5962
    %v6667 = vpack.c.b16 %v5971, %v5963
    %v6668 = vpack.c.b16 %v5972, %v5964
    %v6669 = vpack.c.b16 %v5973, %v5965
    %v6670 = vpack.c.b16 %v5974, %v5966
    %v6671 = vpack.c.b16 %v5975, %v5967
    %v6672 = vpack.c.b16 %v5976, %v5968
    %v6673 = vpack.c.b16 %v5977, %v5969
    %v6674 = vpack.c.b16 %v5986, %v5978
    %v6675 = vpack.c.b16 %v5987, %v5979
    %v6676 = vpack.c.b16 %v5988, %v5980
    %v6677 = vpack.c.b16 %v5989, %v5981
    %v6678 = vpack.c.b16 %v5990, %v5982
    %v6679 = vpack.c.b16 %v5991, %v5983
    %v6680 = vpack.c.b16 %v5992, %v5984
    %v6681 = vpack.c.b16 %v5993, %v5985
    %v6682 = vpack.c.b16 %v6002, %v5994
    %v6683 = vpack.c.b16 %v6003, %v5995
    %v6684 = vpack.c.b16 %v6004, %v5996
    %v6685 = vpack.c.b16 %v6005, %v5997
    %v6686 = vpack.c.b16 %v6006, %v5998
    %v6687 = vpack.c.b16 %v6007, %v5999
    %v6688 = vpack.c.b16 %v6008, %v6000
    %v6689 = vpack.c.b16 %v6009, %v6001
    %v6690 = vpack.c.b16 %v6018, %v6010
    %v6691 = vpack.c.b16 %v6019, %v6011
    %v6692 = vpack.c.b16 %v6020, %v6012
    %v6693 = vpack.c.b16 %v6021, %v6013
    %v6694 = vpack.c.b16 %v6022, %v6014
    %v6695 = vpack.c.b16 %v6023, %v6015
    %v6696 = vpack.c.b16 %v6024, %v6016
    %v6697 = vpack.c.b16 %v6025, %v6017
    %v6698 = vpack.c.b16 %v6034, %v6026
    %v6699 = vpack.c.b16 %v6035, %v6027
    %v6700 = vpack.c.b16 %v6036, %v6028
    %v6701 = vpack.c.b16 %v6037, %v6029
    %v6702 = vpack.c.b16 %v6038, %v6030
    %v6703 = vpack.c.b16 %v6039, %v6031
    %v6704 = vpack.c.b16 %v6040, %v6032
    %v6705 = vpack.c.b16 %v6041, %v6033
    %v6706 = vpack.c.b16 %v6050, %v6042
    %v6707 = vpack.c.b16 %v6051, %v6043
    %v6708 = vpack.c.b16 %v6052, %v6044
    %v6709 = vpack.c.b16 %v6053, %v6045
    %v6710 = vpack.c.b16 %v6054, %v6046
    %v6711 = vpack.c.b16 %v6055, %v6047
    %v6712 = vpack.c.b16 %v6056, %v6048
    %v6713 = vpack.c.b16 %v6057, %v6049
    %v6714 = vpack.c.b16 %v6066, %v6058
    %v6715 = vpack.c.b16 %v6067, %v6059
    %v6716 = vpack.c.b16 %v6068, %v6060
    %v6717 = vpack.c.b16 %v6069, %v6061
    %v6718 = vpack.c.b16 %v6070, %v6062
    %v6719 = vpack.c.b16 %v6071, %v6063
    %v6720 = vpack.c.b16 %v6072, %v6064
    %v6721 = vpack.c.b16 %v6073, %v6065
    %v6722 = vpack.c.b16 %v6082, %v6074
    %v6723 = vpack.c.b16 %v6083, %v6075
    %v6724 = vpack.c.b16 %v6084, %v6076
    %v6725 = vpack.c.b16 %v6085, %v6077
    %v6726 = vpack.c.b16 %v6086, %v6078
    %v6727 = vpack.c.b16 %v6087, %v6079
    %v6728 = vpack.c.b16 %v6088, %v6080
    %v6729 = vpack.c.b16 %v6089, %v6081
    %v6730 = vpack.c.b16 %v6098, %v6090
    %v6731 = vpack.c.b16 %v6099, %v6091
    %v6732 = vpack.c.b16 %v6100, %v6092
    %v6733 = vpack.c.b16 %v6101, %v6093
    %v6734 = vpack.c.b16 %v6102, %v6094
    %v6735 = vpack.c.b16 %v6103, %v6095
    %v6736 = vpack.c.b16 %v6104, %v6096
    %v6737 = vpack.c.b16 %v6105, %v6097
    %v6738 = vpack.c.b16 %v6114, %v6106
    %v6739 = vpack.c.b16 %v6115, %v6107
    %v6740 = vpack.c.b16 %v6116, %v6108
    %v6741 = vpack.c.b16 %v6117, %v6109
    %v6742 = vpack.c.b16 %v6118, %v6110
    %v6743 = vpack.c.b16 %v6119, %v6111
    %v6744 = vpack.c.b16 %v6120, %v6112
    %v6745 = vpack.c.b16 %v6121, %v6113
    %v6746 = vpack.c.b16 %v6130, %v6122
    %v6747 = vpack.c.b16 %v6131, %v6123
    %v6748 = vpack.c.b16 %v6132, %v6124
    %v6749 = vpack.c.b16 %v6133, %v6125
    %v6750 = vpack.c.b16 %v6134, %v6126
    %v6751 = vpack.c.b16 %v6135, %v6127
    %v6752 = vpack.c.b16 %v6136, %v6128
    %v6753 = vpack.c.b16 %v6137, %v6129
    %v6754 = vpack.c.b16 %v6146, %v6138
    %v6755 = vpack.c.b16 %v6147, %v6139
    %v6756 = vpack.c.b16 %v6148, %v6140
    %v6757 = vpack.c.b16 %v6149, %v6141
    %v6758 = vpack.c.b16 %v6150, %v6142
    %v6759 = vpack.c.b16 %v6151, %v6143
    %v6760 = vpack.c.b16 %v6152, %v6144
    %v6761 = vpack.c.b16 %v6153, %v6145
    %v6762 = vpack.c.b16 %v6162, %v6154
    %v6763 = vpack.c.b16 %v6163, %v6155
    %v6764 = vpack.c.b16 %v6164, %v6156
    %v6765 = vpack.c.b16 %v6165, %v6157
    %v6766 = vpack.c.b16 %v6166, %v6158
    %v6767 = vpack.c.b16 %v6167, %v6159
    %v6768 = vpack.c.b16 %v6168, %v6160
    %v6769 = vpack.c.b16 %v6169, %v6161
    %v6770 = vpack.c.b16 %v6178, %v6170
    %v6771 = vpack.c.b16 %v6179, %v6171
    %v6772 = vpack.c.b16 %v6180, %v6172
    %v6773 = vpack.c.b16 %v6181, %v6173
    %v6774 = vpack.c.b16 %v6182, %v6174
    %v6775 = vpack.c.b16 %v6183, %v6175
    %v6776 = vpack.c.b16 %v6184, %v6176
    %v6777 = vpack.c.b16 %v6185, %v6177
    %v6778 = vpack.c.b16 %v6194, %v6186
    %v6779 = vpack.c.b16 %v6195, %v6187
    %v6780 = vpack.c.b16 %v6196, %v6188
    %v6781 = vpack.c.b16 %v6197, %v6189
    %v6782 = vpack.c.b16 %v6198, %v6190
    %v6783 = vpack.c.b16 %v6199, %v6191
    %v6784 = vpack.c.b16 %v6200, %v6192
    %v6785 = vpack.c.b16 %v6201, %v6193
    %v6786 = vpack.c.b16 %v6210, %v6202
    %v6787 = vpack.c.b16 %v6211, %v6203
    %v6788 = vpack.c.b16 %v6212, %v6204
    %v6789 = vpack.c.b16 %v6213, %v6205
    %v6790 = vpack.c.b16 %v6214, %v6206
    %v6791 = vpack.c.b16 %v6215, %v6207
    %v6792 = vpack.c.b16 %v6216, %v6208
    %v6793 = vpack.c.b16 %v6217, %v6209
    %v6794 = vpack.c.b16 %v6226, %v6218
    %v6795 = vpack.c.b16 %v6227, %v6219
    %v6796 = vpack.c.b16 %v6228, %v6220
    %v6797 = vpack.c.b16 %v6229, %v6221
    %v6798 = vpack.c.b16 %v6230, %v6222
    %v6799 = vpack.c.b16 %v6231, %v6223
    %v6800 = vpack.c.b16 %v6232, %v6224
    %v6801 = vpack.c.b16 %v6233, %v6225
    %v6802 = vpack.c.b16 %v6242, %v6234
    %v6803 = vpack.c.b16 %v6243, %v6235
    %v6804 = vpack.c.b16 %v6244, %v6236
    %v6805 = vpack.c.b16 %v6245, %v6237
    %v6806 = vpack.c.b16 %v6246, %v6238
    %v6807 = vpack.c.b16 %v6247, %v6239
    %v6808 = vpack.c.b16 %v6248, %v6240
    %v6809 = vpack.c.b16 %v6249, %v6241
    %v6810 = vpack.c.b16 %v6258, %v6250
    %v6811 = vpack.c.b16 %v6259, %v6251
    %v6812 = vpack.c.b16 %v6260, %v6252
    %v6813 = vpack.c.b16 %v6261, %v6253
    %v6814 = vpack.c.b16 %v6262, %v6254
    %v6815 = vpack.c.b16 %v6263, %v6255
    %v6816 = vpack.c.b16 %v6264, %v6256
    %v6817 = vpack.c.b16 %v6265, %v6257
    %v6818 = vpack.c.b16 %v6274, %v6266
    %v6819 = vpack.c.b16 %v6275, %v6267
    %v6820 = vpack.c.b16 %v6276, %v6268
    %v6821 = vpack.c.b16 %v6277, %v6269
    %v6822 = vpack.c.b16 %v6278, %v6270
    %v6823 = vpack.c.b16 %v6279, %v6271
    %v6824 = vpack.c.b16 %v6280, %v6272
    %v6825 = vpack.c.b16 %v6281, %v6273
    %v6826 = vpack.c.b16 %v6290, %v6282
    %v6827 = vpack.c.b16 %v6291, %v6283
    %v6828 = vpack.c.b16 %v6292, %v6284
    %v6829 = vpack.c.b16 %v6293, %v6285
    %v6830 = vpack.c.b16 %v6294, %v6286
    %v6831 = vpack.c.b16 %v6295, %v6287
    %v6832 = vpack.c.b16 %v6296, %v6288
    %v6833 = vpack.c.b16 %v6297, %v6289
    %v6834 = vpack.c.b16 %v6306, %v6298
    %v6835 = vpack.c.b16 %v6307, %v6299
    %v6836 = vpack.c.b16 %v6308, %v6300
    %v6837 = vpack.c.b16 %v6309, %v6301
    %v6838 = vpack.c.b16 %v6310, %v6302
    %v6839 = vpack.c.b16 %v6311, %v6303
    %v6840 = vpack.c.b16 %v6312, %v6304
    %v6841 = vpack.c.b16 %v6313, %v6305
    %v6842 = vpack.c.b16 %v6322, %v6314
    %v6843 = vpack.c.b16 %v6323, %v6315
    %v6844 = vpack.c.b16 %v6324, %v6316
    %v6845 = vpack.c.b16 %v6325, %v6317
    %v6846 = vpack.c.b16 %v6326, %v6318
    %v6847 = vpack.c.b16 %v6327, %v6319
    %v6848 = vpack.c.b16 %v6328, %v6320
    %v6849 = vpack.c.b16 %v6329, %v6321
    %v6850 = vpack.c.b16 %v6338, %v6330
    %v6851 = vpack.c.b16 %v6339, %v6331
    %v6852 = vpack.c.b16 %v6340, %v6332
    %v6853 = vpack.c.b16 %v6341, %v6333
    %v6854 = vpack.c.b16 %v6342, %v6334
    %v6855 = vpack.c.b16 %v6343, %v6335
    %v6856 = vpack.c.b16 %v6344, %v6336
    %v6857 = vpack.c.b16 %v6345, %v6337
    %7370 = vmatprep.subr.bf16.mxu0 %v6347
    %7371 = vmatpush1.bf16.msra.mxu0 %v6346
    %7372 = vmatprep.subr.bf16.mxu0 %v6355
    %7373 = vmatpush1.bf16.msra.mxu0 %v6354
    %7374 = vmatprep.subr.bf16.mxu0 %v6363
    %7375 = vmatpush1.bf16.msra.mxu0 %v6362
    %7376 = vmatprep.subr.bf16.mxu0 %v6371
    %7377 = vmatpush1.bf16.msra.mxu0 %v6370
    %7378 = vmatprep.subr.bf16.mxu0 %v6379
    %7379 = vmatpush1.bf16.msra.mxu0 %v6378
    %7380 = vmatprep.subr.bf16.mxu0 %v6387
    %7381 = vmatpush1.bf16.msra.mxu0 %v6386
    %7382 = vmatprep.subr.bf16.mxu0 %v6395
    %7383 = vmatpush1.bf16.msra.mxu0 %v6394
    %7384 = vmatprep.subr.bf16.mxu0 %v6403
    %7385 = vmatpush1.bf16.msra.mxu0 %v6402
    %7386 = vmatprep.subr.bf16.mxu0 %v6411
    %7387 = vmatpush1.bf16.msra.mxu0 %v6410
    %7388 = vmatprep.subr.bf16.mxu0 %v6419
    %7389 = vmatpush1.bf16.msra.mxu0 %v6418
    %7390 = vmatprep.subr.bf16.mxu0 %v6427
    %7391 = vmatpush1.bf16.msra.mxu0 %v6426
    %7392 = vmatprep.subr.bf16.mxu0 %v6435
    %7393 = vmatpush1.bf16.msra.mxu0 %v6434
    %7394 = vmatprep.subr.bf16.mxu0 %v6443
    %7395 = vmatpush1.bf16.msra.mxu0 %v6442
    %7396 = vmatprep.subr.bf16.mxu0 %v6451
    %7397 = vmatpush1.bf16.msra.mxu0 %v6450
    %7398 = vmatprep.subr.bf16.mxu0 %v6459
    %7399 = vmatpush1.bf16.msra.mxu0 %v6458
    %7400 = vmatprep.subr.bf16.mxu0 %v6467
    %7401 = vmatpush1.bf16.msra.mxu0 %v6466
    %7402 = vmatprep.mubr.bf16.mxu0 %v4249
    %7403 = vmatmul.mubr.bf16.gmra.mrb[0].mxu0 %v4248
    %v7404 = vpop.f32.mrb[0].mxu0
    %v7405 = vadd.f32 %v4773, %v7404
    %v7406 = vpop.f32.mrb[0].mxu0
    %v7407 = vadd.f32 %v4777, %v7406
    %v7408 = vpop.f32.mrb[0].mxu0
    %v7409 = vpop.f32.mrb[0].mxu0
    %7410 = vdwg.mxu0
    %7411 = vmatprep.subr.bf16.mxu0 %v6475
    %7412 = vmatpush1.bf16.msra.mxu0 %v6474
    %7413 = vmatprep.subr.bf16.mxu0 %v6483
    %7414 = vmatpush1.bf16.msra.mxu0 %v6482
    %7415 = vmatprep.subr.bf16.mxu0 %v6491
    %7416 = vmatpush1.bf16.msra.mxu0 %v6490
    %7417 = vmatprep.subr.bf16.mxu0 %v6499
    %7418 = vmatpush1.bf16.msra.mxu0 %v6498
    %7419 = vmatprep.subr.bf16.mxu0 %v6507
    %7420 = vmatpush1.bf16.msra.mxu0 %v6506
    %7421 = vmatprep.subr.bf16.mxu0 %v6515
    %7422 = vmatpush1.bf16.msra.mxu0 %v6514
    %7423 = vmatprep.subr.bf16.mxu0 %v6523
    %7424 = vmatpush1.bf16.msra.mxu0 %v6522
    %7425 = vmatprep.subr.bf16.mxu0 %v6531
    %7426 = vmatpush1.bf16.msra.mxu0 %v6530
    %7427 = vmatprep.subr.bf16.mxu0 %v6539
    %7428 = vmatpush1.bf16.msra.mxu0 %v6538
    %7429 = vmatprep.subr.bf16.mxu0 %v6547
    %7430 = vmatpush1.bf16.msra.mxu0 %v6546
    %7431 = vmatprep.subr.bf16.mxu0 %v6555
    %7432 = vmatpush1.bf16.msra.mxu0 %v6554
    %7433 = vmatprep.subr.bf16.mxu0 %v6563
    %7434 = vmatpush1.bf16.msra.mxu0 %v6562
    %7435 = vmatprep.subr.bf16.mxu0 %v6571
    %7436 = vmatpush1.bf16.msra.mxu0 %v6570
    %7437 = vmatprep.subr.bf16.mxu0 %v6579
    %7438 = vmatpush1.bf16.msra.mxu0 %v6578
    %7439 = vmatprep.subr.bf16.mxu0 %v6587
    %7440 = vmatpush1.bf16.msra.mxu0 %v6586
    %7441 = vmatprep.subr.bf16.mxu0 %v6595
    %7442 = vmatpush1.bf16.msra.mxu0 %v6594
    %7443 = vmatprep.mubr.bf16.mxu0 %v4251
    %7444 = vmatmul.mubr.bf16.gmra.mrb[0].mxu0 %v4250
    %v7445 = vpop.f32.mrb[0].mxu0
    %v7446 = vadd.f32 %v7405, %v7445
    %v7447 = vpop.f32.mrb[0].mxu0
    %v7448 = vadd.f32 %v7407, %v7447
    %v7449 = vpop.f32.mrb[0].mxu0
    %v7450 = vpop.f32.mrb[0].mxu0
    %7451 = vdwg.mxu0
    %7452 = vmatprep.subr.bf16.mxu0 %v6603
    %7453 = vmatpush1.bf16.msra.mxu0 %v6602
    %7454 = vmatprep.subr.bf16.mxu0 %v6611
    %7455 = vmatpush1.bf16.msra.mxu0 %v6610
    %7456 = vmatprep.subr.bf16.mxu0 %v6619
    %7457 = vmatpush1.bf16.msra.mxu0 %v6618
    %7458 = vmatprep.subr.bf16.mxu0 %v6627
    %7459 = vmatpush1.bf16.msra.mxu0 %v6626
    %7460 = vmatprep.subr.bf16.mxu0 %v6635
    %7461 = vmatpush1.bf16.msra.mxu0 %v6634
    %7462 = vmatprep.subr.bf16.mxu0 %v6643
    %7463 = vmatpush1.bf16.msra.mxu0 %v6642
    %7464 = vmatprep.subr.bf16.mxu0 %v6651
    %7465 = vmatpush1.bf16.msra.mxu0 %v6650
    %7466 = vmatprep.subr.bf16.mxu0 %v6659
    %7467 = vmatpush1.bf16.msra.mxu0 %v6658
    %7468 = vmatprep.subr.bf16.mxu0 %v6667
    %7469 = vmatpush1.bf16.msra.mxu0 %v6666
    %7470 = vmatprep.subr.bf16.mxu0 %v6675
    %7471 = vmatpush1.bf16.msra.mxu0 %v6674
    %7472 = vmatprep.subr.bf16.mxu0 %v6683
    %7473 = vmatpush1.bf16.msra.mxu0 %v6682
    %7474 = vmatprep.subr.bf16.mxu0 %v6691
    %7475 = vmatpush1.bf16.msra.mxu0 %v6690
    %7476 = vmatprep.subr.bf16.mxu0 %v6699
    %7477 = vmatpush1.bf16.msra.mxu0 %v6698
    %7478 = vmatprep.subr.bf16.mxu0 %v6707
    %7479 = vmatpush1.bf16.msra.mxu0 %v6706
    %7480 = vmatprep.subr.bf16.mxu0 %v6715
    %7481 = vmatpush1.bf16.msra.mxu0 %v6714
    %7482 = vmatprep.subr.bf16.mxu0 %v6723
    %7483 = vmatpush1.bf16.msra.mxu0 %v6722
    %7484 = vmatprep.mubr.bf16.mxu0 %v4253
    %7485 = vmatmul.mubr.bf16.gmra.mrb[0].mxu0 %v4252
    %v7486 = vpop.f32.mrb[0].mxu0
    %v7487 = vadd.f32 %v7446, %v7486
    %v7488 = vpop.f32.mrb[0].mxu0
    %v7489 = vadd.f32 %v7448, %v7488
    %v7490 = vpop.f32.mrb[0].mxu0
    %v7491 = vpop.f32.mrb[0].mxu0
    %7492 = vdwg.mxu0
    %7493 = vmatprep.subr.bf16.mxu0 %v6731
    %7494 = vmatpush1.bf16.msra.mxu0 %v6730
    %7495 = vmatprep.subr.bf16.mxu0 %v6739
    %7496 = vmatpush1.bf16.msra.mxu0 %v6738
    %7497 = vmatprep.subr.bf16.mxu0 %v6747
    %7498 = vmatpush1.bf16.msra.mxu0 %v6746
    %7499 = vmatprep.subr.bf16.mxu0 %v6755
    %7500 = vmatpush1.bf16.msra.mxu0 %v6754
    %7501 = vmatprep.subr.bf16.mxu0 %v6763
    %7502 = vmatpush1.bf16.msra.mxu0 %v6762
    %7503 = vmatprep.subr.bf16.mxu0 %v6771
    %7504 = vmatpush1.bf16.msra.mxu0 %v6770
    %7505 = vmatprep.subr.bf16.mxu0 %v6779
    %7506 = vmatpush1.bf16.msra.mxu0 %v6778
    %7507 = vmatprep.subr.bf16.mxu0 %v6787
    %7508 = vmatpush1.bf16.msra.mxu0 %v6786
    %7509 = vmatprep.subr.bf16.mxu0 %v6795
    %7510 = vmatpush1.bf16.msra.mxu0 %v6794
    %7511 = vmatprep.subr.bf16.mxu0 %v6803
    %7512 = vmatpush1.bf16.msra.mxu0 %v6802
    %7513 = vmatprep.subr.bf16.mxu0 %v6811
    %7514 = vmatpush1.bf16.msra.mxu0 %v6810
    %7515 = vmatprep.subr.bf16.mxu0 %v6819
    %7516 = vmatpush1.bf16.msra.mxu0 %v6818
    %7517 = vmatprep.subr.bf16.mxu0 %v6827
    %7518 = vmatpush1.bf16.msra.mxu0 %v6826
    %7519 = vmatprep.subr.bf16.mxu0 %v6835
    %7520 = vmatpush1.bf16.msra.mxu0 %v6834
    %7521 = vmatprep.subr.bf16.mxu0 %v6843
    %7522 = vmatpush1.bf16.msra.mxu0 %v6842
    %7523 = vmatprep.subr.bf16.mxu0 %v6851
    %7524 = vmatpush1.bf16.msra.mxu0 %v6850
    %7525 = vmatprep.mubr.bf16.mxu0 %v4255
    %7526 = vmatmul.mubr.bf16.gmra.mrb[0].mxu0 %v4254
    %v7527 = vpop.f32.mrb[0].mxu0
    %v7528 = vadd.f32 %v7487, %v7527
    %v7529 = vpop.f32.mrb[0].mxu0
    %v7530 = vadd.f32 %v7489, %v7529
    %v7531 = vpop.f32.mrb[0].mxu0
    %v7532 = vpop.f32.mrb[0].mxu0
    %7533 = vdwg.mxu0
    %7534 = vmatprep.subr.bf16.mxu0 %v6349
    %7535 = vmatpush1.bf16.msra.mxu0 %v6348
    %7536 = vmatprep.subr.bf16.mxu0 %v6357
    %7537 = vmatpush1.bf16.msra.mxu0 %v6356
    %7538 = vmatprep.subr.bf16.mxu0 %v6365
    %7539 = vmatpush1.bf16.msra.mxu0 %v6364
    %7540 = vmatprep.subr.bf16.mxu0 %v6373
    %7541 = vmatpush1.bf16.msra.mxu0 %v6372
    %7542 = vmatprep.subr.bf16.mxu0 %v6381
    %7543 = vmatpush1.bf16.msra.mxu0 %v6380
    %7544 = vmatprep.subr.bf16.mxu0 %v6389
    %7545 = vmatpush1.bf16.msra.mxu0 %v6388
    %7546 = vmatprep.subr.bf16.mxu0 %v6397
    %7547 = vmatpush1.bf16.msra.mxu0 %v6396
    %7548 = vmatprep.subr.bf16.mxu0 %v6405
    %7549 = vmatpush1.bf16.msra.mxu0 %v6404
    %7550 = vmatprep.subr.bf16.mxu0 %v6413
    %7551 = vmatpush1.bf16.msra.mxu0 %v6412
    %7552 = vmatprep.subr.bf16.mxu0 %v6421
    %7553 = vmatpush1.bf16.msra.mxu0 %v6420
    %7554 = vmatprep.subr.bf16.mxu0 %v6429
    %7555 = vmatpush1.bf16.msra.mxu0 %v6428
    %7556 = vmatprep.subr.bf16.mxu0 %v6437
    %7557 = vmatpush1.bf16.msra.mxu0 %v6436
    %7558 = vmatprep.subr.bf16.mxu0 %v6445
    %7559 = vmatpush1.bf16.msra.mxu0 %v6444
    %7560 = vmatprep.subr.bf16.mxu0 %v6453
    %7561 = vmatpush1.bf16.msra.mxu0 %v6452
    %7562 = vmatprep.subr.bf16.mxu0 %v6461
    %7563 = vmatpush1.bf16.msra.mxu0 %v6460
    %7564 = vmatprep.subr.bf16.mxu0 %v6469
    %7565 = vmatpush1.bf16.msra.mxu0 %v6468
    %7566 = vmatprep.mubr.bf16.mxu0 %v4249
    %7567 = vmatmul.mubr.bf16.gmra.mrb[0].mxu0 %v4248
    %v7568 = vpop.f32.mrb[0].mxu0
    %v7569 = vadd.f32 %v4781, %v7568
    %v7570 = vpop.f32.mrb[0].mxu0
    %v7571 = vadd.f32 %v4785, %v7570
    %v7572 = vpop.f32.mrb[0].mxu0
    %v7573 = vpop.f32.mrb[0].mxu0
    %7574 = vdwg.mxu0
    %7575 = vmatprep.subr.bf16.mxu0 %v6477
    %7576 = vmatpush1.bf16.msra.mxu0 %v6476
    %7577 = vmatprep.subr.bf16.mxu0 %v6485
    %7578 = vmatpush1.bf16.msra.mxu0 %v6484
    %7579 = vmatprep.subr.bf16.mxu0 %v6493
    %7580 = vmatpush1.bf16.msra.mxu0 %v6492
    %7581 = vmatprep.subr.bf16.mxu0 %v6501
    %7582 = vmatpush1.bf16.msra.mxu0 %v6500
    %7583 = vmatprep.subr.bf16.mxu0 %v6509
    %7584 = vmatpush1.bf16.msra.mxu0 %v6508
    %7585 = vmatprep.subr.bf16.mxu0 %v6517
    %7586 = vmatpush1.bf16.msra.mxu0 %v6516
    %7587 = vmatprep.subr.bf16.mxu0 %v6525
    %7588 = vmatpush1.bf16.msra.mxu0 %v6524
    %7589 = vmatprep.subr.bf16.mxu0 %v6533
    %7590 = vmatpush1.bf16.msra.mxu0 %v6532
    %7591 = vmatprep.subr.bf16.mxu0 %v6541
    %7592 = vmatpush1.bf16.msra.mxu0 %v6540
    %7593 = vmatprep.subr.bf16.mxu0 %v6549
    %7594 = vmatpush1.bf16.msra.mxu0 %v6548
    %7595 = vmatprep.subr.bf16.mxu0 %v6557
    %7596 = vmatpush1.bf16.msra.mxu0 %v6556
    %7597 = vmatprep.subr.bf16.mxu0 %v6565
    %7598 = vmatpush1.bf16.msra.mxu0 %v6564
    %7599 = vmatprep.subr.bf16.mxu0 %v6573
    %7600 = vmatpush1.bf16.msra.mxu0 %v6572
    %7601 = vmatprep.subr.bf16.mxu0 %v6581
    %7602 = vmatpush1.bf16.msra.mxu0 %v6580
    %7603 = vmatprep.subr.bf16.mxu0 %v6589
    %7604 = vmatpush1.bf16.msra.mxu0 %v6588
    %7605 = vmatprep.subr.bf16.mxu0 %v6597
    %7606 = vmatpush1.bf16.msra.mxu0 %v6596
    %7607 = vmatprep.mubr.bf16.mxu0 %v4251
    %7608 = vmatmul.mubr.bf16.gmra.mrb[0].mxu0 %v4250
    %v7609 = vpop.f32.mrb[0].mxu0
    %v7610 = vadd.f32 %v7569, %v7609
    %v7611 = vpop.f32.mrb[0].mxu0
    %v7612 = vadd.f32 %v7571, %v7611
    %v7613 = vpop.f32.mrb[0].mxu0
    %v7614 = vpop.f32.mrb[0].mxu0
    %7615 = vdwg.mxu0
    %7616 = vmatprep.subr.bf16.mxu0 %v6605
    %7617 = vmatpush1.bf16.msra.mxu0 %v6604
    %7618 = vmatprep.subr.bf16.mxu0 %v6613
    %7619 = vmatpush1.bf16.msra.mxu0 %v6612
    %7620 = vmatprep.subr.bf16.mxu0 %v6621
    %7621 = vmatpush1.bf16.msra.mxu0 %v6620
    %7622 = vmatprep.subr.bf16.mxu0 %v6629
    %7623 = vmatpush1.bf16.msra.mxu0 %v6628
    %7624 = vmatprep.subr.bf16.mxu0 %v6637
    %7625 = vmatpush1.bf16.msra.mxu0 %v6636
    %7626 = vmatprep.subr.bf16.mxu0 %v6645
    %7627 = vmatpush1.bf16.msra.mxu0 %v6644
    %7628 = vmatprep.subr.bf16.mxu0 %v6653
    %7629 = vmatpush1.bf16.msra.mxu0 %v6652
    %7630 = vmatprep.subr.bf16.mxu0 %v6661
    %7631 = vmatpush1.bf16.msra.mxu0 %v6660
    %7632 = vmatprep.subr.bf16.mxu0 %v6669
    %7633 = vmatpush1.bf16.msra.mxu0 %v6668
    %7634 = vmatprep.subr.bf16.mxu0 %v6677
    %7635 = vmatpush1.bf16.msra.mxu0 %v6676
    %7636 = vmatprep.subr.bf16.mxu0 %v6685
    %7637 = vmatpush1.bf16.msra.mxu0 %v6684
    %7638 = vmatprep.subr.bf16.mxu0 %v6693
    %7639 = vmatpush1.bf16.msra.mxu0 %v6692
    %7640 = vmatprep.subr.bf16.mxu0 %v6701
    %7641 = vmatpush1.bf16.msra.mxu0 %v6700
    %7642 = vmatprep.subr.bf16.mxu0 %v6709
    %7643 = vmatpush1.bf16.msra.mxu0 %v6708
    %7644 = vmatprep.subr.bf16.mxu0 %v6717
    %7645 = vmatpush1.bf16.msra.mxu0 %v6716
    %7646 = vmatprep.subr.bf16.mxu0 %v6725
    %7647 = vmatpush1.bf16.msra.mxu0 %v6724
    %7648 = vmatprep.mubr.bf16.mxu0 %v4253
    %7649 = vmatmul.mubr.bf16.gmra.mrb[0].mxu0 %v4252
    %v7650 = vpop.f32.mrb[0].mxu0
    %v7651 = vadd.f32 %v7610, %v7650
    %v7652 = vpop.f32.mrb[0].mxu0
    %v7653 = vadd.f32 %v7612, %v7652
    %v7654 = vpop.f32.mrb[0].mxu0
    %v7655 = vpop.f32.mrb[0].mxu0
    %7656 = vdwg.mxu0
    %7657 = vmatprep.subr.bf16.mxu0 %v6733
    %7658 = vmatpush1.bf16.msra.mxu0 %v6732
    %7659 = vmatprep.subr.bf16.mxu0 %v6741
    %7660 = vmatpush1.bf16.msra.mxu0 %v6740
    %7661 = vmatprep.subr.bf16.mxu0 %v6749
    %7662 = vmatpush1.bf16.msra.mxu0 %v6748
    %7663 = vmatprep.subr.bf16.mxu0 %v6757
    %7664 = vmatpush1.bf16.msra.mxu0 %v6756
    %7665 = vmatprep.subr.bf16.mxu0 %v6765
    %7666 = vmatpush1.bf16.msra.mxu0 %v6764
    %7667 = vmatprep.subr.bf16.mxu0 %v6773
    %7668 = vmatpush1.bf16.msra.mxu0 %v6772
    %7669 = vmatprep.subr.bf16.mxu0 %v6781
    %7670 = vmatpush1.bf16.msra.mxu0 %v6780
    %7671 = vmatprep.subr.bf16.mxu0 %v6789
    %7672 = vmatpush1.bf16.msra.mxu0 %v6788
    %7673 = vmatprep.subr.bf16.mxu0 %v6797
    %7674 = vmatpush1.bf16.msra.mxu0 %v6796
    %7675 = vmatprep.subr.bf16.mxu0 %v6805
    %7676 = vmatpush1.bf16.msra.mxu0 %v6804
    %7677 = vmatprep.subr.bf16.mxu0 %v6813
    %7678 = vmatpush1.bf16.msra.mxu0 %v6812
    %7679 = vmatprep.subr.bf16.mxu0 %v6821
    %7680 = vmatpush1.bf16.msra.mxu0 %v6820
    %7681 = vmatprep.subr.bf16.mxu0 %v6829
    %7682 = vmatpush1.bf16.msra.mxu0 %v6828
    %7683 = vmatprep.subr.bf16.mxu0 %v6837
    %7684 = vmatpush1.bf16.msra.mxu0 %v6836
    %7685 = vmatprep.subr.bf16.mxu0 %v6845
    %7686 = vmatpush1.bf16.msra.mxu0 %v6844
    %7687 = vmatprep.subr.bf16.mxu0 %v6853
    %7688 = vmatpush1.bf16.msra.mxu0 %v6852
    %7689 = vmatprep.mubr.bf16.mxu0 %v4255
    %7690 = vmatmul.mubr.bf16.gmra.mrb[0].mxu0 %v4254
    %v7691 = vpop.f32.mrb[0].mxu0
    %v7692 = vadd.f32 %v7651, %v7691
    %v7693 = vpop.f32.mrb[0].mxu0
    %v7694 = vadd.f32 %v7653, %v7693
    %v7695 = vpop.f32.mrb[0].mxu0
    %v7696 = vpop.f32.mrb[0].mxu0
    %7697 = vdwg.mxu0
    %7698 = vmatprep.subr.bf16.mxu0 %v6351
    %7699 = vmatpush1.bf16.msra.mxu0 %v6350
    %7700 = vmatprep.subr.bf16.mxu0 %v6359
    %7701 = vmatpush1.bf16.msra.mxu0 %v6358
    %7702 = vmatprep.subr.bf16.mxu0 %v6367
    %7703 = vmatpush1.bf16.msra.mxu0 %v6366
    %7704 = vmatprep.subr.bf16.mxu0 %v6375
    %7705 = vmatpush1.bf16.msra.mxu0 %v6374
    %7706 = vmatprep.subr.bf16.mxu0 %v6383
    %7707 = vmatpush1.bf16.msra.mxu0 %v6382
    %7708 = vmatprep.subr.bf16.mxu0 %v6391
    %7709 = vmatpush1.bf16.msra.mxu0 %v6390
    %7710 = vmatprep.subr.bf16.mxu0 %v6399
    %7711 = vmatpush1.bf16.msra.mxu0 %v6398
    %7712 = vmatprep.subr.bf16.mxu0 %v6407
    %7713 = vmatpush1.bf16.msra.mxu0 %v6406
    %7714 = vmatprep.subr.bf16.mxu0 %v6415
    %7715 = vmatpush1.bf16.msra.mxu0 %v6414
    %7716 = vmatprep.subr.bf16.mxu0 %v6423
    %7717 = vmatpush1.bf16.msra.mxu0 %v6422
    %7718 = vmatprep.subr.bf16.mxu0 %v6431
    %7719 = vmatpush1.bf16.msra.mxu0 %v6430
    %7720 = vmatprep.subr.bf16.mxu0 %v6439
    %7721 = vmatpush1.bf16.msra.mxu0 %v6438
    %7722 = vmatprep.subr.bf16.mxu0 %v6447
    %7723 = vmatpush1.bf16.msra.mxu0 %v6446
    %7724 = vmatprep.subr.bf16.mxu0 %v6455
    %7725 = vmatpush1.bf16.msra.mxu0 %v6454
    %7726 = vmatprep.subr.bf16.mxu0 %v6463
    %7727 = vmatpush1.bf16.msra.mxu0 %v6462
    %7728 = vmatprep.subr.bf16.mxu0 %v6471
    %7729 = vmatpush1.bf16.msra.mxu0 %v6470
    %7730 = vmatprep.mubr.bf16.mxu0 %v4249
    %7731 = vmatmul.mubr.bf16.gmra.mrb[0].mxu0 %v4248
    %v7732 = vpop.f32.mrb[0].mxu0
    %v7733 = vadd.f32 %v4789, %v7732
    %v7734 = vpop.f32.mrb[0].mxu0
    %v7735 = vadd.f32 %v4793, %v7734
    %v7736 = vpop.f32.mrb[0].mxu0
    %v7737 = vpop.f32.mrb[0].mxu0
    %7738 = vdwg.mxu0
    %7739 = vmatprep.subr.bf16.mxu0 %v6479
    %7740 = vmatpush1.bf16.msra.mxu0 %v6478
    %7741 = vmatprep.subr.bf16.mxu0 %v6487
    %7742 = vmatpush1.bf16.msra.mxu0 %v6486
    %7743 = vmatprep.subr.bf16.mxu0 %v6495
    %7744 = vmatpush1.bf16.msra.mxu0 %v6494
    %7745 = vmatprep.subr.bf16.mxu0 %v6503
    %7746 = vmatpush1.bf16.msra.mxu0 %v6502
    %7747 = vmatprep.subr.bf16.mxu0 %v6511
    %7748 = vmatpush1.bf16.msra.mxu0 %v6510
    %7749 = vmatprep.subr.bf16.mxu0 %v6519
    %7750 = vmatpush1.bf16.msra.mxu0 %v6518
    %7751 = vmatprep.subr.bf16.mxu0 %v6527
    %7752 = vmatpush1.bf16.msra.mxu0 %v6526
    %7753 = vmatprep.subr.bf16.mxu0 %v6535
    %7754 = vmatpush1.bf16.msra.mxu0 %v6534
    %7755 = vmatprep.subr.bf16.mxu0 %v6543
    %7756 = vmatpush1.bf16.msra.mxu0 %v6542
    %7757 = vmatprep.subr.bf16.mxu0 %v6551
    %7758 = vmatpush1.bf16.msra.mxu0 %v6550
    %7759 = vmatprep.subr.bf16.mxu0 %v6559
    %7760 = vmatpush1.bf16.msra.mxu0 %v6558
    %7761 = vmatprep.subr.bf16.mxu0 %v6567
    %7762 = vmatpush1.bf16.msra.mxu0 %v6566
    %7763 = vmatprep.subr.bf16.mxu0 %v6575
    %7764 = vmatpush1.bf16.msra.mxu0 %v6574
    %7765 = vmatprep.subr.bf16.mxu0 %v6583
    %7766 = vmatpush1.bf16.msra.mxu0 %v6582
    %7767 = vmatprep.subr.bf16.mxu0 %v6591
    %7768 = vmatpush1.bf16.msra.mxu0 %v6590
    %7769 = vmatprep.subr.bf16.mxu0 %v6599
    %7770 = vmatpush1.bf16.msra.mxu0 %v6598
    %7771 = vmatprep.mubr.bf16.mxu0 %v4251
    %7772 = vmatmul.mubr.bf16.gmra.mrb[0].mxu0 %v4250
    %v7773 = vpop.f32.mrb[0].mxu0
    %v7774 = vadd.f32 %v7733, %v7773
    %v7775 = vpop.f32.mrb[0].mxu0
    %v7776 = vadd.f32 %v7735, %v7775
    %v7777 = vpop.f32.mrb[0].mxu0
    %v7778 = vpop.f32.mrb[0].mxu0
    %7779 = vdwg.mxu0
    %7780 = vmatprep.subr.bf16.mxu0 %v6607
    %7781 = vmatpush1.bf16.msra.mxu0 %v6606
    %7782 = vmatprep.subr.bf16.mxu0 %v6615
    %7783 = vmatpush1.bf16.msra.mxu0 %v6614
    %7784 = vmatprep.subr.bf16.mxu0 %v6623
    %7785 = vmatpush1.bf16.msra.mxu0 %v6622
    %7786 = vmatprep.subr.bf16.mxu0 %v6631
    %7787 = vmatpush1.bf16.msra.mxu0 %v6630
    %7788 = vmatprep.subr.bf16.mxu0 %v6639
    %7789 = vmatpush1.bf16.msra.mxu0 %v6638
    %7790 = vmatprep.subr.bf16.mxu0 %v6647
    %7791 = vmatpush1.bf16.msra.mxu0 %v6646
    %7792 = vmatprep.subr.bf16.mxu0 %v6655
    %7793 = vmatpush1.bf16.msra.mxu0 %v6654
    %7794 = vmatprep.subr.bf16.mxu0 %v6663
    %7795 = vmatpush1.bf16.msra.mxu0 %v6662
    %7796 = vmatprep.subr.bf16.mxu0 %v6671
    %7797 = vmatpush1.bf16.msra.mxu0 %v6670
    %7798 = vmatprep.subr.bf16.mxu0 %v6679
    %7799 = vmatpush1.bf16.msra.mxu0 %v6678
    %7800 = vmatprep.subr.bf16.mxu0 %v6687
    %7801 = vmatpush1.bf16.msra.mxu0 %v6686
    %7802 = vmatprep.subr.bf16.mxu0 %v6695
    %7803 = vmatpush1.bf16.msra.mxu0 %v6694
    %7804 = vmatprep.subr.bf16.mxu0 %v6703
    %7805 = vmatpush1.bf16.msra.mxu0 %v6702
    %7806 = vmatprep.subr.bf16.mxu0 %v6711
    %7807 = vmatpush1.bf16.msra.mxu0 %v6710
    %7808 = vmatprep.subr.bf16.mxu0 %v6719
    %7809 = vmatpush1.bf16.msra.mxu0 %v6718
    %7810 = vmatprep.subr.bf16.mxu0 %v6727
    %7811 = vmatpush1.bf16.msra.mxu0 %v6726
    %7812 = vmatprep.mubr.bf16.mxu0 %v4253
    %7813 = vmatmul.mubr.bf16.gmra.mrb[0].mxu0 %v4252
    %v7814 = vpop.f32.mrb[0].mxu0
    %v7815 = vadd.f32 %v7774, %v7814
    %v7816 = vpop.f32.mrb[0].mxu0
    %v7817 = vadd.f32 %v7776, %v7816
    %v7818 = vpop.f32.mrb[0].mxu0
    %v7819 = vpop.f32.mrb[0].mxu0
    %7820 = vdwg.mxu0
    %7821 = vmatprep.subr.bf16.mxu0 %v6735
    %7822 = vmatpush1.bf16.msra.mxu0 %v6734
    %7823 = vmatprep.subr.bf16.mxu0 %v6743
    %7824 = vmatpush1.bf16.msra.mxu0 %v6742
    %7825 = vmatprep.subr.bf16.mxu0 %v6751
    %7826 = vmatpush1.bf16.msra.mxu0 %v6750
    %7827 = vmatprep.subr.bf16.mxu0 %v6759
    %7828 = vmatpush1.bf16.msra.mxu0 %v6758
    %7829 = vmatprep.subr.bf16.mxu0 %v6767
    %7830 = vmatpush1.bf16.msra.mxu0 %v6766
    %7831 = vmatprep.subr.bf16.mxu0 %v6775
    %7832 = vmatpush1.bf16.msra.mxu0 %v6774
    %7833 = vmatprep.subr.bf16.mxu0 %v6783
    %7834 = vmatpush1.bf16.msra.mxu0 %v6782
    %7835 = vmatprep.subr.bf16.mxu0 %v6791
    %7836 = vmatpush1.bf16.msra.mxu0 %v6790
    %7837 = vmatprep.subr.bf16.mxu0 %v6799
    %7838 = vmatpush1.bf16.msra.mxu0 %v6798
    %7839 = vmatprep.subr.bf16.mxu0 %v6807
    %7840 = vmatpush1.bf16.msra.mxu0 %v6806
    %7841 = vmatprep.subr.bf16.mxu0 %v6815
    %7842 = vmatpush1.bf16.msra.mxu0 %v6814
    %7843 = vmatprep.subr.bf16.mxu0 %v6823
    %7844 = vmatpush1.bf16.msra.mxu0 %v6822
    %7845 = vmatprep.subr.bf16.mxu0 %v6831
    %7846 = vmatpush1.bf16.msra.mxu0 %v6830
    %7847 = vmatprep.subr.bf16.mxu0 %v6839
    %7848 = vmatpush1.bf16.msra.mxu0 %v6838
    %7849 = vmatprep.subr.bf16.mxu0 %v6847
    %7850 = vmatpush1.bf16.msra.mxu0 %v6846
    %7851 = vmatprep.subr.bf16.mxu0 %v6855
    %7852 = vmatpush1.bf16.msra.mxu0 %v6854
    %7853 = vmatprep.mubr.bf16.mxu0 %v4255
    %7854 = vmatmul.mubr.bf16.gmra.mrb[0].mxu0 %v4254
    %v7855 = vpop.f32.mrb[0].mxu0
    %v7856 = vadd.f32 %v7815, %v7855
    %v7857 = vpop.f32.mrb[0].mxu0
    %v7858 = vadd.f32 %v7817, %v7857
    %v7859 = vpop.f32.mrb[0].mxu0
    %v7860 = vpop.f32.mrb[0].mxu0
    %7861 = vdwg.mxu0
    %7862 = vmatprep.subr.bf16.mxu0 %v6353
    %7863 = vmatpush1.bf16.msra.mxu0 %v6352
    %7864 = vmatprep.subr.bf16.mxu0 %v6361
    %7865 = vmatpush1.bf16.msra.mxu0 %v6360
    %7866 = vmatprep.subr.bf16.mxu0 %v6369
    %7867 = vmatpush1.bf16.msra.mxu0 %v6368
    %7868 = vmatprep.subr.bf16.mxu0 %v6377
    %7869 = vmatpush1.bf16.msra.mxu0 %v6376
    %7870 = vmatprep.subr.bf16.mxu0 %v6385
    %7871 = vmatpush1.bf16.msra.mxu0 %v6384
    %7872 = vmatprep.subr.bf16.mxu0 %v6393
    %7873 = vmatpush1.bf16.msra.mxu0 %v6392
    %7874 = vmatprep.subr.bf16.mxu0 %v6401
    %7875 = vmatpush1.bf16.msra.mxu0 %v6400
    %7876 = vmatprep.subr.bf16.mxu0 %v6409
    %7877 = vmatpush1.bf16.msra.mxu0 %v6408
    %7878 = vmatprep.subr.bf16.mxu0 %v6417
    %7879 = vmatpush1.bf16.msra.mxu0 %v6416
    %7880 = vmatprep.subr.bf16.mxu0 %v6425
    %7881 = vmatpush1.bf16.msra.mxu0 %v6424
    %7882 = vmatprep.subr.bf16.mxu0 %v6433
    %7883 = vmatpush1.bf16.msra.mxu0 %v6432
    %7884 = vmatprep.subr.bf16.mxu0 %v6441
    %7885 = vmatpush1.bf16.msra.mxu0 %v6440
    %7886 = vmatprep.subr.bf16.mxu0 %v6449
    %7887 = vmatpush1.bf16.msra.mxu0 %v6448
    %7888 = vmatprep.subr.bf16.mxu0 %v6457
    %7889 = vmatpush1.bf16.msra.mxu0 %v6456
    %7890 = vmatprep.subr.bf16.mxu0 %v6465
    %7891 = vmatpush1.bf16.msra.mxu0 %v6464
    %7892 = vmatprep.subr.bf16.mxu0 %v6473
    %7893 = vmatpush1.bf16.msra.mxu0 %v6472
    %7894 = vmatprep.mubr.bf16.mxu0 %v4249
    %7895 = vmatmul.mubr.bf16.gmra.mrb[0].mxu0 %v4248
    %v7896 = vpop.f32.mrb[0].mxu0
    %v7897 = vadd.f32 %v4797, %v7896
    %v7898 = vpop.f32.mrb[0].mxu0
    %v7899 = vadd.f32 %v4801, %v7898
    %v7900 = vpop.f32.mrb[0].mxu0
    %v7901 = vpop.f32.mrb[0].mxu0
    %7902 = vdwg.mxu0
    %7903 = vmatprep.subr.bf16.mxu0 %v6481
    %7904 = vmatpush1.bf16.msra.mxu0 %v6480
    %7905 = vmatprep.subr.bf16.mxu0 %v6489
    %7906 = vmatpush1.bf16.msra.mxu0 %v6488
    %7907 = vmatprep.subr.bf16.mxu0 %v6497
    %7908 = vmatpush1.bf16.msra.mxu0 %v6496
    %7909 = vmatprep.subr.bf16.mxu0 %v6505
    %7910 = vmatpush1.bf16.msra.mxu0 %v6504
    %7911 = vmatprep.subr.bf16.mxu0 %v6513
    %7912 = vmatpush1.bf16.msra.mxu0 %v6512
    %7913 = vmatprep.subr.bf16.mxu0 %v6521
    %7914 = vmatpush1.bf16.msra.mxu0 %v6520
    %7915 = vmatprep.subr.bf16.mxu0 %v6529
    %7916 = vmatpush1.bf16.msra.mxu0 %v6528
    %7917 = vmatprep.subr.bf16.mxu0 %v6537
    %7918 = vmatpush1.bf16.msra.mxu0 %v6536
    %7919 = vmatprep.subr.bf16.mxu0 %v6545
    %7920 = vmatpush1.bf16.msra.mxu0 %v6544
    %7921 = vmatprep.subr.bf16.mxu0 %v6553
    %7922 = vmatpush1.bf16.msra.mxu0 %v6552
    %7923 = vmatprep.subr.bf16.mxu0 %v6561
    %7924 = vmatpush1.bf16.msra.mxu0 %v6560
    %7925 = vmatprep.subr.bf16.mxu0 %v6569
    %7926 = vmatpush1.bf16.msra.mxu0 %v6568
    %7927 = vmatprep.subr.bf16.mxu0 %v6577
    %7928 = vmatpush1.bf16.msra.mxu0 %v6576
    %7929 = vmatprep.subr.bf16.mxu0 %v6585
    %7930 = vmatpush1.bf16.msra.mxu0 %v6584
    %7931 = vmatprep.subr.bf16.mxu0 %v6593
    %7932 = vmatpush1.bf16.msra.mxu0 %v6592
    %7933 = vmatprep.subr.bf16.mxu0 %v6601
    %7934 = vmatpush1.bf16.msra.mxu0 %v6600
    %7935 = vmatprep.mubr.bf16.mxu0 %v4251
    %7936 = vmatmul.mubr.bf16.gmra.mrb[0].mxu0 %v4250
    %v7937 = vpop.f32.mrb[0].mxu0
    %v7938 = vadd.f32 %v7897, %v7937
    %v7939 = vpop.f32.mrb[0].mxu0
    %v7940 = vadd.f32 %v7899, %v7939
    %v7941 = vpop.f32.mrb[0].mxu0
    %v7942 = vpop.f32.mrb[0].mxu0
    %7943 = vdwg.mxu0
    %7944 = vmatprep.subr.bf16.mxu0 %v6609
    %7945 = vmatpush1.bf16.msra.mxu0 %v6608
    %7946 = vmatprep.subr.bf16.mxu0 %v6617
    %7947 = vmatpush1.bf16.msra.mxu0 %v6616
    %7948 = vmatprep.subr.bf16.mxu0 %v6625
    %7949 = vmatpush1.bf16.msra.mxu0 %v6624
    %7950 = vmatprep.subr.bf16.mxu0 %v6633
    %7951 = vmatpush1.bf16.msra.mxu0 %v6632
    %7952 = vmatprep.subr.bf16.mxu0 %v6641
    %7953 = vmatpush1.bf16.msra.mxu0 %v6640
    %7954 = vmatprep.subr.bf16.mxu0 %v6649
    %7955 = vmatpush1.bf16.msra.mxu0 %v6648
    %7956 = vmatprep.subr.bf16.mxu0 %v6657
    %7957 = vmatpush1.bf16.msra.mxu0 %v6656
    %7958 = vmatprep.subr.bf16.mxu0 %v6665
    %7959 = vmatpush1.bf16.msra.mxu0 %v6664
    %7960 = vmatprep.subr.bf16.mxu0 %v6673
    %7961 = vmatpush1.bf16.msra.mxu0 %v6672
    %7962 = vmatprep.subr.bf16.mxu0 %v6681
    %7963 = vmatpush1.bf16.msra.mxu0 %v6680
    %7964 = vmatprep.subr.bf16.mxu0 %v6689
    %7965 = vmatpush1.bf16.msra.mxu0 %v6688
    %7966 = vmatprep.subr.bf16.mxu0 %v6697
    %7967 = vmatpush1.bf16.msra.mxu0 %v6696
    %7968 = vmatprep.subr.bf16.mxu0 %v6705
    %7969 = vmatpush1.bf16.msra.mxu0 %v6704
    %7970 = vmatprep.subr.bf16.mxu0 %v6713
    %7971 = vmatpush1.bf16.msra.mxu0 %v6712
    %7972 = vmatprep.subr.bf16.mxu0 %v6721
    %7973 = vmatpush1.bf16.msra.mxu0 %v6720
    %7974 = vmatprep.subr.bf16.mxu0 %v6729
    %7975 = vmatpush1.bf16.msra.mxu0 %v6728
    %7976 = vmatprep.mubr.bf16.mxu0 %v4253
    %7977 = vmatmul.mubr.bf16.gmra.mrb[0].mxu0 %v4252
    %v7978 = vpop.f32.mrb[0].mxu0
    %v7979 = vadd.f32 %v7938, %v7978
    %v7980 = vpop.f32.mrb[0].mxu0
    %v7981 = vadd.f32 %v7940, %v7980
    %v7982 = vpop.f32.mrb[0].mxu0
    %v7983 = vpop.f32.mrb[0].mxu0
    %7984 = vdwg.mxu0
    %7985 = vmatprep.subr.bf16.mxu0 %v6737
    %7986 = vmatpush1.bf16.msra.mxu0 %v6736
    %7987 = vmatprep.subr.bf16.mxu0 %v6745
    %7988 = vmatpush1.bf16.msra.mxu0 %v6744
    %7989 = vmatprep.subr.bf16.mxu0 %v6753
    %7990 = vmatpush1.bf16.msra.mxu0 %v6752
    %7991 = vmatprep.subr.bf16.mxu0 %v6761
    %7992 = vmatpush1.bf16.msra.mxu0 %v6760
    %7993 = vmatprep.subr.bf16.mxu0 %v6769
    %7994 = vmatpush1.bf16.msra.mxu0 %v6768
    %7995 = vmatprep.subr.bf16.mxu0 %v6777
    %7996 = vmatpush1.bf16.msra.mxu0 %v6776
    %7997 = vmatprep.subr.bf16.mxu0 %v6785
    %7998 = vmatpush1.bf16.msra.mxu0 %v6784
    %7999 = vmatprep.subr.bf16.mxu0 %v6793
    %8000 = vmatpush1.bf16.msra.mxu0 %v6792
    %8001 = vmatprep.subr.bf16.mxu0 %v6801
    %8002 = vmatpush1.bf16.msra.mxu0 %v6800
    %8003 = vmatprep.subr.bf16.mxu0 %v6809
    %8004 = vmatpush1.bf16.msra.mxu0 %v6808
    %8005 = vmatprep.subr.bf16.mxu0 %v6817
    %8006 = vmatpush1.bf16.msra.mxu0 %v6816
    %8007 = vmatprep.subr.bf16.mxu0 %v6825
    %8008 = vmatpush1.bf16.msra.mxu0 %v6824
    %8009 = vmatprep.subr.bf16.mxu0 %v6833
    %8010 = vmatpush1.bf16.msra.mxu0 %v6832
    %8011 = vmatprep.subr.bf16.mxu0 %v6841
    %8012 = vmatpush1.bf16.msra.mxu0 %v6840
    %8013 = vmatprep.subr.bf16.mxu0 %v6849
    %8014 = vmatpush1.bf16.msra.mxu0 %v6848
    %8015 = vmatprep.subr.bf16.mxu0 %v6857
    %8016 = vmatpush1.bf16.msra.mxu0 %v6856
    %8017 = vmatprep.mubr.bf16.mxu0 %v4255
    %8018 = vmatmul.mubr.bf16.gmra.mrb[0].mxu0 %v4254
    %v8019 = vpop.f32.mrb[0].mxu0
    %v8020 = vadd.f32 %v7979, %v8019
    %v8021 = vpop.f32.mrb[0].mxu0
    %v8022 = vadd.f32 %v7981, %v8021
    %v8023 = vpop.f32.mrb[0].mxu0
    %v8024 = vpop.f32.mrb[0].mxu0
    %8025 = vdwg.mxu0
    %v8026 = vmax.f32 %v7528, 0.0
    %v8027 = vmax.f32 %v7530, 0.0
    %v8028 = vmax.f32 %v7692, 0.0
    %v8029 = vmax.f32 %v7694, 0.0
    %v8030 = vmax.f32 %v7856, 0.0
    %v8031 = vmax.f32 %v7858, 0.0
    %v8032 = vmax.f32 %v8020, 0.0
    %v8033 = vmax.f32 %v8022, 0.0
    %v8034 = vpack.c.bf16 %v8026, %v8026
    %v8035 = vpack.c.bf16 %v8027, %v8027
    %v8036 = vpack.c.bf16 %v8028, %v8028
    %v8037 = vpack.c.bf16 %v8029, %v8029
    %v8038 = vpack.c.bf16 %v8030, %v8030
    %v8039 = vpack.c.bf16 %v8031, %v8031
    %v8040 = vpack.c.bf16 %v8032, %v8032
    %v8041 = vpack.c.bf16 %v8033, %v8033
    %v8042 = vld [vmem:[#allocation14] sm:$0xf]
    %v8043 = vld [vmem:[#allocation14 + $0x4] sm:$0xf]
    %v8044 = vld [vmem:[#allocation14 + $0x8] sm:$0xf]
    %v8045 = vld [vmem:[#allocation14 + $0xc] sm:$0xf]
    %v8046 = vld [vmem:[#allocation14 + $0x10] sm:$0xf]
    %v8047 = vld [vmem:[#allocation14 + $0x14] sm:$0xf]
    %v8048 = vld [vmem:[#allocation14 + $0x18] sm:$0xf]
    %v8049 = vld [vmem:[#allocation14 + $0x1c] sm:$0xf]
    %v8050 = vld [vmem:[#allocation14 + $0x20] sm:$0xf]
    %v8051 = vld [vmem:[#allocation14 + $0x24] sm:$0xf]
    %v8052 = vld [vmem:[#allocation14 + $0x28] sm:$0xf]
    %v8053 = vld [vmem:[#allocation14 + $0x2c] sm:$0xf]
    %v8054 = vld [vmem:[#allocation14 + $0x30] sm:$0xf]
    %v8055 = vld [vmem:[#allocation14 + $0x34] sm:$0xf]
    %v8056 = vld [vmem:[#allocation14 + $0x38] sm:$0xf]
    %v8057 = vld [vmem:[#allocation14 + $0x3c] sm:$0xf]
    %v8058 = vld [vmem:[#allocation14 + $0x40] sm:$0xf]
    %v8059 = vld [vmem:[#allocation14 + $0x44] sm:$0xf]
    %v8060 = vld [vmem:[#allocation14 + $0x48] sm:$0xf]
    %v8061 = vld [vmem:[#allocation14 + $0x4c] sm:$0xf]
    %v8062 = vld [vmem:[#allocation14 + $0x50] sm:$0xf]
    %v8063 = vld [vmem:[#allocation14 + $0x54] sm:$0xf]
    %v8064 = vld [vmem:[#allocation14 + $0x58] sm:$0xf]
    %v8065 = vld [vmem:[#allocation14 + $0x5c] sm:$0xf]
    %v8066 = vld [vmem:[#allocation14 + $0x60] sm:$0xf]
    %v8067 = vld [vmem:[#allocation14 + $0x64] sm:$0xf]
    %v8068 = vld [vmem:[#allocation14 + $0x68] sm:$0xf]
    %v8069 = vld [vmem:[#allocation14 + $0x6c] sm:$0xf]
    %v8070 = vld [vmem:[#allocation14 + $0x70] sm:$0xf]
    %v8071 = vld [vmem:[#allocation14 + $0x74] sm:$0xf]
    %v8072 = vld [vmem:[#allocation14 + $0x78] sm:$0xf]
    %v8073 = vld [vmem:[#allocation14 + $0x7c] sm:$0xf]
    %v8074 = vld [vmem:[#allocation14 + $0x80] sm:$0xf]
    %v8075 = vld [vmem:[#allocation14 + $0x84] sm:$0xf]
    %v8076 = vld [vmem:[#allocation14 + $0x88] sm:$0xf]
    %v8077 = vld [vmem:[#allocation14 + $0x8c] sm:$0xf]
    %v8078 = vld [vmem:[#allocation14 + $0x90] sm:$0xf]
    %v8079 = vld [vmem:[#allocation14 + $0x94] sm:$0xf]
    %v8080 = vld [vmem:[#allocation14 + $0x98] sm:$0xf]
    %v8081 = vld [vmem:[#allocation14 + $0x9c] sm:$0xf]
    %v8082 = vld [vmem:[#allocation14 + $0xa0] sm:$0xf]
    %v8083 = vld [vmem:[#allocation14 + $0xa4] sm:$0xf]
    %v8084 = vld [vmem:[#allocation14 + $0xa8] sm:$0xf]
    %v8085 = vld [vmem:[#allocation14 + $0xac] sm:$0xf]
    %v8086 = vld [vmem:[#allocation14 + $0xb0] sm:$0xf]
    %v8087 = vld [vmem:[#allocation14 + $0xb4] sm:$0xf]
    %v8088 = vld [vmem:[#allocation14 + $0xb8] sm:$0xf]
    %v8089 = vld [vmem:[#allocation14 + $0xbc] sm:$0xf]
    %v8090 = vld [vmem:[#allocation14 + $0xc0] sm:$0xf]
    %v8091 = vld [vmem:[#allocation14 + $0xc4] sm:$0xf]
    %v8092 = vld [vmem:[#allocation14 + $0xc8] sm:$0xf]
    %v8093 = vld [vmem:[#allocation14 + $0xcc] sm:$0xf]
    %v8094 = vld [vmem:[#allocation14 + $0xd0] sm:$0xf]
    %v8095 = vld [vmem:[#allocation14 + $0xd4] sm:$0xf]
    %v8096 = vld [vmem:[#allocation14 + $0xd8] sm:$0xf]
    %v8097 = vld [vmem:[#allocation14 + $0xdc] sm:$0xf]
    %v8098 = vld [vmem:[#allocation14 + $0xe0] sm:$0xf]
    %v8099 = vld [vmem:[#allocation14 + $0xe4] sm:$0xf]
    %v8100 = vld [vmem:[#allocation14 + $0xe8] sm:$0xf]
    %v8101 = vld [vmem:[#allocation14 + $0xec] sm:$0xf]
    %v8102 = vld [vmem:[#allocation14 + $0xf0] sm:$0xf]
    %v8103 = vld [vmem:[#allocation14 + $0xf4] sm:$0xf]
    %v8104 = vld [vmem:[#allocation14 + $0xf8] sm:$0xf]
    %v8105 = vld [vmem:[#allocation14 + $0xfc] sm:$0xf]
    %v8106 = vld [vmem:[#allocation14 + $0x100] sm:$0xf]
    %v8107 = vld [vmem:[#allocation14 + $0x104] sm:$0xf]
    %v8108 = vld [vmem:[#allocation14 + $0x108] sm:$0xf]
    %v8109 = vld [vmem:[#allocation14 + $0x10c] sm:$0xf]
    %v8110 = vld [vmem:[#allocation14 + $0x110] sm:$0xf]
    %v8111 = vld [vmem:[#allocation14 + $0x114] sm:$0xf]
    %v8112 = vld [vmem:[#allocation14 + $0x118] sm:$0xf]
    %v8113 = vld [vmem:[#allocation14 + $0x11c] sm:$0xf]
    %v8114 = vld [vmem:[#allocation14 + $0x120] sm:$0xf]
    %v8115 = vld [vmem:[#allocation14 + $0x124] sm:$0xf]
    %v8116 = vld [vmem:[#allocation14 + $0x128] sm:$0xf]
    %v8117 = vld [vmem:[#allocation14 + $0x12c] sm:$0xf]
    %v8118 = vld [vmem:[#allocation14 + $0x130] sm:$0xf]
    %v8119 = vld [vmem:[#allocation14 + $0x134] sm:$0xf]
    %v8120 = vld [vmem:[#allocation14 + $0x138] sm:$0xf]
    %v8121 = vld [vmem:[#allocation14 + $0x13c] sm:$0xf]
    %v8122 = vld [vmem:[#allocation14 + $0x140] sm:$0xf]
    %v8123 = vld [vmem:[#allocation14 + $0x144] sm:$0xf]
    %v8124 = vld [vmem:[#allocation14 + $0x148] sm:$0xf]
    %v8125 = vld [vmem:[#allocation14 + $0x14c] sm:$0xf]
    %v8126 = vld [vmem:[#allocation14 + $0x150] sm:$0xf]
    %v8127 = vld [vmem:[#allocation14 + $0x154] sm:$0xf]
    %v8128 = vld [vmem:[#allocation14 + $0x158] sm:$0xf]
    %v8129 = vld [vmem:[#allocation14 + $0x15c] sm:$0xf]
    %v8130 = vld [vmem:[#allocation14 + $0x160] sm:$0xf]
    %v8131 = vld [vmem:[#allocation14 + $0x164] sm:$0xf]
    %v8132 = vld [vmem:[#allocation14 + $0x168] sm:$0xf]
    %v8133 = vld [vmem:[#allocation14 + $0x16c] sm:$0xf]
    %v8134 = vld [vmem:[#allocation14 + $0x170] sm:$0xf]
    %v8135 = vld [vmem:[#allocation14 + $0x174] sm:$0xf]
    %v8136 = vld [vmem:[#allocation14 + $0x178] sm:$0xf]
    %v8137 = vld [vmem:[#allocation14 + $0x17c] sm:$0xf]
    %v8138 = vld [vmem:[#allocation14 + $0x180] sm:$0xf]
    %v8139 = vld [vmem:[#allocation14 + $0x184] sm:$0xf]
    %v8140 = vld [vmem:[#allocation14 + $0x188] sm:$0xf]
    %v8141 = vld [vmem:[#allocation14 + $0x18c] sm:$0xf]
    %v8142 = vld [vmem:[#allocation14 + $0x190] sm:$0xf]
    %v8143 = vld [vmem:[#allocation14 + $0x194] sm:$0xf]
    %v8144 = vld [vmem:[#allocation14 + $0x198] sm:$0xf]
    %v8145 = vld [vmem:[#allocation14 + $0x19c] sm:$0xf]
    %v8146 = vld [vmem:[#allocation14 + $0x1a0] sm:$0xf]
    %v8147 = vld [vmem:[#allocation14 + $0x1a4] sm:$0xf]
    %v8148 = vld [vmem:[#allocation14 + $0x1a8] sm:$0xf]
    %v8149 = vld [vmem:[#allocation14 + $0x1ac] sm:$0xf]
    %v8150 = vld [vmem:[#allocation14 + $0x1b0] sm:$0xf]
    %v8151 = vld [vmem:[#allocation14 + $0x1b4] sm:$0xf]
    %v8152 = vld [vmem:[#allocation14 + $0x1b8] sm:$0xf]
    %v8153 = vld [vmem:[#allocation14 + $0x1bc] sm:$0xf]
    %v8154 = vld [vmem:[#allocation14 + $0x1c0] sm:$0xf]
    %v8155 = vld [vmem:[#allocation14 + $0x1c4] sm:$0xf]
    %v8156 = vld [vmem:[#allocation14 + $0x1c8] sm:$0xf]
    %v8157 = vld [vmem:[#allocation14 + $0x1cc] sm:$0xf]
    %v8158 = vld [vmem:[#allocation14 + $0x1d0] sm:$0xf]
    %v8159 = vld [vmem:[#allocation14 + $0x1d4] sm:$0xf]
    %v8160 = vld [vmem:[#allocation14 + $0x1d8] sm:$0xf]
    %v8161 = vld [vmem:[#allocation14 + $0x1dc] sm:$0xf]
    %v8162 = vld [vmem:[#allocation14 + $0x1e0] sm:$0xf]
    %v8163 = vld [vmem:[#allocation14 + $0x1e4] sm:$0xf]
    %v8164 = vld [vmem:[#allocation14 + $0x1e8] sm:$0xf]
    %v8165 = vld [vmem:[#allocation14 + $0x1ec] sm:$0xf]
    %v8166 = vld [vmem:[#allocation14 + $0x1f0] sm:$0xf]
    %v8167 = vld [vmem:[#allocation14 + $0x1f4] sm:$0xf]
    %v8168 = vld [vmem:[#allocation14 + $0x1f8] sm:$0xf]
    %v8169 = vld [vmem:[#allocation14 + $0x1fc] sm:$0xf]
    %v8170 = vld [vmem:[#allocation16] sm:$0x1]
    %v8172 = vlaneseq
    %v8173 = vshrl.u32 %v8172, 7
    %v8174 = vsub.s32 0, %v8173
    %v8175 = vrot.slane %v8170, %v8174
    %v8305 = vunpack.c.l.b16 %v8042
    %v8306 = vunpack.c.l.b16 %v8043
    %v8307 = vunpack.c.l.b16 %v8044
    %v8308 = vunpack.c.l.b16 %v8045
    %v8309 = vunpack.c.l.b16 %v8046
    %v8310 = vunpack.c.l.b16 %v8047
    %v8311 = vunpack.c.l.b16 %v8048
    %v8312 = vunpack.c.l.b16 %v8049
    %v8313 = vunpack.c.l.b16 %v8050
    %v8314 = vunpack.c.l.b16 %v8051
    %v8315 = vunpack.c.l.b16 %v8052
    %v8316 = vunpack.c.l.b16 %v8053
    %v8317 = vunpack.c.l.b16 %v8054
    %v8318 = vunpack.c.l.b16 %v8055
    %v8319 = vunpack.c.l.b16 %v8056
    %v8320 = vunpack.c.l.b16 %v8057
    %v8321 = vunpack.c.l.b16 %v8058
    %v8322 = vunpack.c.l.b16 %v8059
    %v8323 = vunpack.c.l.b16 %v8060
    %v8324 = vunpack.c.l.b16 %v8061
    %v8325 = vunpack.c.l.b16 %v8062
    %v8326 = vunpack.c.l.b16 %v8063
    %v8327 = vunpack.c.l.b16 %v8064
    %v8328 = vunpack.c.l.b16 %v8065
    %v8329 = vunpack.c.l.b16 %v8066
    %v8330 = vunpack.c.l.b16 %v8067
    %v8331 = vunpack.c.l.b16 %v8068
    %v8332 = vunpack.c.l.b16 %v8069
    %v8333 = vunpack.c.l.b16 %v8070
    %v8334 = vunpack.c.l.b16 %v8071
    %v8335 = vunpack.c.l.b16 %v8072
    %v8336 = vunpack.c.l.b16 %v8073
    %v8337 = vunpack.c.l.b16 %v8074
    %v8338 = vunpack.c.l.b16 %v8075
    %v8339 = vunpack.c.l.b16 %v8076
    %v8340 = vunpack.c.l.b16 %v8077
    %v8341 = vunpack.c.l.b16 %v8078
    %v8342 = vunpack.c.l.b16 %v8079
    %v8343 = vunpack.c.l.b16 %v8080
    %v8344 = vunpack.c.l.b16 %v8081
    %v8345 = vunpack.c.l.b16 %v8082
    %v8346 = vunpack.c.l.b16 %v8083
    %v8347 = vunpack.c.l.b16 %v8084
    %v8348 = vunpack.c.l.b16 %v8085
    %v8349 = vunpack.c.l.b16 %v8086
    %v8350 = vunpack.c.l.b16 %v8087
    %v8351 = vunpack.c.l.b16 %v8088
    %v8352 = vunpack.c.l.b16 %v8089
    %v8353 = vunpack.c.l.b16 %v8090
    %v8354 = vunpack.c.l.b16 %v8091
    %v8355 = vunpack.c.l.b16 %v8092
    %v8356 = vunpack.c.l.b16 %v8093
    %v8357 = vunpack.c.l.b16 %v8094
    %v8358 = vunpack.c.l.b16 %v8095
    %v8359 = vunpack.c.l.b16 %v8096
    %v8360 = vunpack.c.l.b16 %v8097
    %v8361 = vunpack.c.l.b16 %v8098
    %v8362 = vunpack.c.l.b16 %v8099
    %v8363 = vunpack.c.l.b16 %v8100
    %v8364 = vunpack.c.l.b16 %v8101
    %v8365 = vunpack.c.l.b16 %v8102
    %v8366 = vunpack.c.l.b16 %v8103
    %v8367 = vunpack.c.l.b16 %v8104
    %v8368 = vunpack.c.l.b16 %v8105
    %v8369 = vunpack.c.l.b16 %v8106
    %v8370 = vunpack.c.l.b16 %v8107
    %v8371 = vunpack.c.l.b16 %v8108
    %v8372 = vunpack.c.l.b16 %v8109
    %v8373 = vunpack.c.l.b16 %v8110
    %v8374 = vunpack.c.l.b16 %v8111
    %v8375 = vunpack.c.l.b16 %v8112
    %v8376 = vunpack.c.l.b16 %v8113
    %v8377 = vunpack.c.l.b16 %v8114
    %v8378 = vunpack.c.l.b16 %v8115
    %v8379 = vunpack.c.l.b16 %v8116
    %v8380 = vunpack.c.l.b16 %v8117
    %v8381 = vunpack.c.l.b16 %v8118
    %v8382 = vunpack.c.l.b16 %v8119
    %v8383 = vunpack.c.l.b16 %v8120
    %v8384 = vunpack.c.l.b16 %v8121
    %v8385 = vunpack.c.l.b16 %v8122
    %v8386 = vunpack.c.l.b16 %v8123
    %v8387 = vunpack.c.l.b16 %v8124
    %v8388 = vunpack.c.l.b16 %v8125
    %v8389 = vunpack.c.l.b16 %v8126
    %v8390 = vunpack.c.l.b16 %v8127
    %v8391 = vunpack.c.l.b16 %v8128
    %v8392 = vunpack.c.l.b16 %v8129
    %v8393 = vunpack.c.l.b16 %v8130
    %v8394 = vunpack.c.l.b16 %v8131
    %v8395 = vunpack.c.l.b16 %v8132
    %v8396 = vunpack.c.l.b16 %v8133
    %v8397 = vunpack.c.l.b16 %v8134
    %v8398 = vunpack.c.l.b16 %v8135
    %v8399 = vunpack.c.l.b16 %v8136
    %v8400 = vunpack.c.l.b16 %v8137
    %v8401 = vunpack.c.l.b16 %v8138
    %v8402 = vunpack.c.l.b16 %v8139
    %v8403 = vunpack.c.l.b16 %v8140
    %v8404 = vunpack.c.l.b16 %v8141
    %v8405 = vunpack.c.l.b16 %v8142
    %v8406 = vunpack.c.l.b16 %v8143
    %v8407 = vunpack.c.l.b16 %v8144
    %v8408 = vunpack.c.l.b16 %v8145
    %v8409 = vunpack.c.l.b16 %v8146
    %v8410 = vunpack.c.l.b16 %v8147
    %v8411 = vunpack.c.l.b16 %v8148
    %v8412 = vunpack.c.l.b16 %v8149
    %v8413 = vunpack.c.l.b16 %v8150
    %v8414 = vunpack.c.l.b16 %v8151
    %v8415 = vunpack.c.l.b16 %v8152
    %v8416 = vunpack.c.l.b16 %v8153
    %v8417 = vunpack.c.l.b16 %v8154
    %v8418 = vunpack.c.l.b16 %v8155
    %v8419 = vunpack.c.l.b16 %v8156
    %v8420 = vunpack.c.l.b16 %v8157
    %v8421 = vunpack.c.l.b16 %v8158
    %v8422 = vunpack.c.l.b16 %v8159
    %v8423 = vunpack.c.l.b16 %v8160
    %v8424 = vunpack.c.l.b16 %v8161
    %v8425 = vunpack.c.l.b16 %v8162
    %v8426 = vunpack.c.l.b16 %v8163
    %v8427 = vunpack.c.l.b16 %v8164
    %v8428 = vunpack.c.l.b16 %v8165
    %v8429 = vunpack.c.l.b16 %v8166
    %v8430 = vunpack.c.l.b16 %v8167
    %v8431 = vunpack.c.l.b16 %v8168
    %v8432 = vunpack.c.l.b16 %v8169
    %v8433 = vpack.c.b16 %v8306, %v8305
    %v8434 = vpack.c.b16 %v8308, %v8307
    %v8435 = vpack.c.b16 %v8310, %v8309
    %v8436 = vpack.c.b16 %v8312, %v8311
    %v8437 = vpack.c.b16 %v8314, %v8313
    %v8438 = vpack.c.b16 %v8316, %v8315
    %v8439 = vpack.c.b16 %v8318, %v8317
    %v8440 = vpack.c.b16 %v8320, %v8319
    %v8441 = vpack.c.b16 %v8322, %v8321
    %v8442 = vpack.c.b16 %v8324, %v8323
    %v8443 = vpack.c.b16 %v8326, %v8325
    %v8444 = vpack.c.b16 %v8328, %v8327
    %v8445 = vpack.c.b16 %v8330, %v8329
    %v8446 = vpack.c.b16 %v8332, %v8331
    %v8447 = vpack.c.b16 %v8334, %v8333
    %v8448 = vpack.c.b16 %v8336, %v8335
    %v8449 = vpack.c.b16 %v8338, %v8337
    %v8450 = vpack.c.b16 %v8340, %v8339
    %v8451 = vpack.c.b16 %v8342, %v8341
    %v8452 = vpack.c.b16 %v8344, %v8343
    %v8453 = vpack.c.b16 %v8346, %v8345
    %v8454 = vpack.c.b16 %v8348, %v8347
    %v8455 = vpack.c.b16 %v8350, %v8349
    %v8456 = vpack.c.b16 %v8352, %v8351
    %v8457 = vpack.c.b16 %v8354, %v8353
    %v8458 = vpack.c.b16 %v8356, %v8355
    %v8459 = vpack.c.b16 %v8358, %v8357
    %v8460 = vpack.c.b16 %v8360, %v8359
    %v8461 = vpack.c.b16 %v8362, %v8361
    %v8462 = vpack.c.b16 %v8364, %v8363
    %v8463 = vpack.c.b16 %v8366, %v8365
    %v8464 = vpack.c.b16 %v8368, %v8367
    %v8465 = vpack.c.b16 %v8370, %v8369
    %v8466 = vpack.c.b16 %v8372, %v8371
    %v8467 = vpack.c.b16 %v8374, %v8373
    %v8468 = vpack.c.b16 %v8376, %v8375
    %v8469 = vpack.c.b16 %v8378, %v8377
    %v8470 = vpack.c.b16 %v8380, %v8379
    %v8471 = vpack.c.b16 %v8382, %v8381
    %v8472 = vpack.c.b16 %v8384, %v8383
    %v8473 = vpack.c.b16 %v8386, %v8385
    %v8474 = vpack.c.b16 %v8388, %v8387
    %v8475 = vpack.c.b16 %v8390, %v8389
    %v8476 = vpack.c.b16 %v8392, %v8391
    %v8477 = vpack.c.b16 %v8394, %v8393
    %v8478 = vpack.c.b16 %v8396, %v8395
    %v8479 = vpack.c.b16 %v8398, %v8397
    %v8480 = vpack.c.b16 %v8400, %v8399
    %v8481 = vpack.c.b16 %v8402, %v8401
    %v8482 = vpack.c.b16 %v8404, %v8403
    %v8483 = vpack.c.b16 %v8406, %v8405
    %v8484 = vpack.c.b16 %v8408, %v8407
    %v8485 = vpack.c.b16 %v8410, %v8409
    %v8486 = vpack.c.b16 %v8412, %v8411
    %v8487 = vpack.c.b16 %v8414, %v8413
    %v8488 = vpack.c.b16 %v8416, %v8415
    %v8489 = vpack.c.b16 %v8418, %v8417
    %v8490 = vpack.c.b16 %v8420, %v8419
    %v8491 = vpack.c.b16 %v8422, %v8421
    %v8492 = vpack.c.b16 %v8424, %v8423
    %v8493 = vpack.c.b16 %v8426, %v8425
    %v8494 = vpack.c.b16 %v8428, %v8427
    %v8495 = vpack.c.b16 %v8430, %v8429
    %v8496 = vpack.c.b16 %v8432, %v8431
    %8561 = vmatprep.subr.bf16.mxu0 0
    %8562 = vmatpush1.bf16.msra.mxu0 %v8433
    %8563 = vmatprep.subr.bf16.mxu0 0
    %8564 = vmatpush1.bf16.msra.mxu0 %v8434
    %8565 = vmatprep.subr.bf16.mxu0 0
    %8566 = vmatpush1.bf16.msra.mxu0 %v8435
    %8567 = vmatprep.subr.bf16.mxu0 0
    %8568 = vmatpush1.bf16.msra.mxu0 %v8436
    %8569 = vmatprep.subr.bf16.mxu0 0
    %8570 = vmatpush1.bf16.msra.mxu0 %v8437
    %8571 = vmatprep.subr.bf16.mxu0 0
    %8572 = vmatpush1.bf16.msra.mxu0 %v8438
    %8573 = vmatprep.subr.bf16.mxu0 0
    %8574 = vmatpush1.bf16.msra.mxu0 %v8439
    %8575 = vmatprep.subr.bf16.mxu0 0
    %8576 = vmatpush1.bf16.msra.mxu0 %v8440
    %8577 = vmatprep.subr.bf16.mxu0 0
    %8578 = vmatpush1.bf16.msra.mxu0 %v8441
    %8579 = vmatprep.subr.bf16.mxu0 0
    %8580 = vmatpush1.bf16.msra.mxu0 %v8442
    %8581 = vmatprep.subr.bf16.mxu0 0
    %8582 = vmatpush1.bf16.msra.mxu0 %v8443
    %8583 = vmatprep.subr.bf16.mxu0 0
    %8584 = vmatpush1.bf16.msra.mxu0 %v8444
    %8585 = vmatprep.subr.bf16.mxu0 0
    %8586 = vmatpush1.bf16.msra.mxu0 %v8445
    %8587 = vmatprep.subr.bf16.mxu0 0
    %8588 = vmatpush1.bf16.msra.mxu0 %v8446
    %8589 = vmatprep.subr.bf16.mxu0 0
    %8590 = vmatpush1.bf16.msra.mxu0 %v8447
    %8591 = vmatprep.subr.bf16.mxu0 0
    %8592 = vmatpush1.bf16.msra.mxu0 %v8448
    %8593 = vmatprep.mubr.bf16.mxu0 %v8035
    %8594 = vmatmul.mubr.bf16.gmra.mrb[0].mxu0 %v8034
    %v8595 = vpop.f32.mrb[0].mxu0
    %v8596 = vadd.f32 %v8175, %v8595
    %v8597 = vpop.f32.mrb[0].mxu0
    %v8598 = vpop.f32.mrb[0].mxu0
    %v8599 = vpop.f32.mrb[0].mxu0
    %8600 = vdwg.mxu0
    %8601 = vmatprep.subr.bf16.mxu0 0
    %8602 = vmatpush1.bf16.msra.mxu0 %v8449
    %8603 = vmatprep.subr.bf16.mxu0 0
    %8604 = vmatpush1.bf16.msra.mxu0 %v8450
    %8605 = vmatprep.subr.bf16.mxu0 0
    %8606 = vmatpush1.bf16.msra.mxu0 %v8451
    %8607 = vmatprep.subr.bf16.mxu0 0
    %8608 = vmatpush1.bf16.msra.mxu0 %v8452
    %8609 = vmatprep.subr.bf16.mxu0 0
    %8610 = vmatpush1.bf16.msra.mxu0 %v8453
    %8611 = vmatprep.subr.bf16.mxu0 0
    %8612 = vmatpush1.bf16.msra.mxu0 %v8454
    %8613 = vmatprep.subr.bf16.mxu0 0
    %8614 = vmatpush1.bf16.msra.mxu0 %v8455
    %8615 = vmatprep.subr.bf16.mxu0 0
    %8616 = vmatpush1.bf16.msra.mxu0 %v8456
    %8617 = vmatprep.subr.bf16.mxu0 0
    %8618 = vmatpush1.bf16.msra.mxu0 %v8457
    %8619 = vmatprep.subr.bf16.mxu0 0
    %8620 = vmatpush1.bf16.msra.mxu0 %v8458
    %8621 = vmatprep.subr.bf16.mxu0 0
    %8622 = vmatpush1.bf16.msra.mxu0 %v8459
    %8623 = vmatprep.subr.bf16.mxu0 0
    %8624 = vmatpush1.bf16.msra.mxu0 %v8460
    %8625 = vmatprep.subr.bf16.mxu0 0
    %8626 = vmatpush1.bf16.msra.mxu0 %v8461
    %8627 = vmatprep.subr.bf16.mxu0 0
    %8628 = vmatpush1.bf16.msra.mxu0 %v8462
    %8629 = vmatprep.subr.bf16.mxu0 0
    %8630 = vmatpush1.bf16.msra.mxu0 %v8463
    %8631 = vmatprep.subr.bf16.mxu0 0
    %8632 = vmatpush1.bf16.msra.mxu0 %v8464
    %8633 = vmatprep.mubr.bf16.mxu0 %v8037
    %8634 = vmatmul.mubr.bf16.gmra.mrb[0].mxu0 %v8036
    %v8635 = vpop.f32.mrb[0].mxu0
    %v8636 = vadd.f32 %v8596, %v8635
    %v8637 = vpop.f32.mrb[0].mxu0
    %v8638 = vpop.f32.mrb[0].mxu0
    %v8639 = vpop.f32.mrb[0].mxu0
    %8640 = vdwg.mxu0
    %8641 = vmatprep.subr.bf16.mxu0 0
    %8642 = vmatpush1.bf16.msra.mxu0 %v8465
    %8643 = vmatprep.subr.bf16.mxu0 0
    %8644 = vmatpush1.bf16.msra.mxu0 %v8466
    %8645 = vmatprep.subr.bf16.mxu0 0
    %8646 = vmatpush1.bf16.msra.mxu0 %v8467
    %8647 = vmatprep.subr.bf16.mxu0 0
    %8648 = vmatpush1.bf16.msra.mxu0 %v8468
    %8649 = vmatprep.subr.bf16.mxu0 0
    %8650 = vmatpush1.bf16.msra.mxu0 %v8469
    %8651 = vmatprep.subr.bf16.mxu0 0
    %8652 = vmatpush1.bf16.msra.mxu0 %v8470
    %8653 = vmatprep.subr.bf16.mxu0 0
    %8654 = vmatpush1.bf16.msra.mxu0 %v8471
    %8655 = vmatprep.subr.bf16.mxu0 0
    %8656 = vmatpush1.bf16.msra.mxu0 %v8472
    %8657 = vmatprep.subr.bf16.mxu0 0
    %8658 = vmatpush1.bf16.msra.mxu0 %v8473
    %8659 = vmatprep.subr.bf16.mxu0 0
    %8660 = vmatpush1.bf16.msra.mxu0 %v8474
    %8661 = vmatprep.subr.bf16.mxu0 0
    %8662 = vmatpush1.bf16.msra.mxu0 %v8475
    %8663 = vmatprep.subr.bf16.mxu0 0
    %8664 = vmatpush1.bf16.msra.mxu0 %v8476
    %8665 = vmatprep.subr.bf16.mxu0 0
    %8666 = vmatpush1.bf16.msra.mxu0 %v8477
    %8667 = vmatprep.subr.bf16.mxu0 0
    %8668 = vmatpush1.bf16.msra.mxu0 %v8478
    %8669 = vmatprep.subr.bf16.mxu0 0
    %8670 = vmatpush1.bf16.msra.mxu0 %v8479
    %8671 = vmatprep.subr.bf16.mxu0 0
    %8672 = vmatpush1.bf16.msra.mxu0 %v8480
    %8673 = vmatprep.mubr.bf16.mxu0 %v8039
    %8674 = vmatmul.mubr.bf16.gmra.mrb[0].mxu0 %v8038
    %v8675 = vpop.f32.mrb[0].mxu0
    %v8676 = vadd.f32 %v8636, %v8675
    %v8677 = vpop.f32.mrb[0].mxu0
    %v8678 = vpop.f32.mrb[0].mxu0
    %v8679 = vpop.f32.mrb[0].mxu0
    %8680 = vdwg.mxu0
    %8681 = vmatprep.subr.bf16.mxu0 0
    %8682 = vmatpush1.bf16.msra.mxu0 %v8481
    %8683 = vmatprep.subr.bf16.mxu0 0
    %8684 = vmatpush1.bf16.msra.mxu0 %v8482
    %8685 = vmatprep.subr.bf16.mxu0 0
    %8686 = vmatpush1.bf16.msra.mxu0 %v8483
    %8687 = vmatprep.subr.bf16.mxu0 0
    %8688 = vmatpush1.bf16.msra.mxu0 %v8484
    %8689 = vmatprep.subr.bf16.mxu0 0
    %8690 = vmatpush1.bf16.msra.mxu0 %v8485
    %8691 = vmatprep.subr.bf16.mxu0 0
    %8692 = vmatpush1.bf16.msra.mxu0 %v8486
    %8693 = vmatprep.subr.bf16.mxu0 0
    %8694 = vmatpush1.bf16.msra.mxu0 %v8487
    %8695 = vmatprep.subr.bf16.mxu0 0
    %8696 = vmatpush1.bf16.msra.mxu0 %v8488
    %8697 = vmatprep.subr.bf16.mxu0 0
    %8698 = vmatpush1.bf16.msra.mxu0 %v8489
    %8699 = vmatprep.subr.bf16.mxu0 0
    %8700 = vmatpush1.bf16.msra.mxu0 %v8490
    %8701 = vmatprep.subr.bf16.mxu0 0
    %8702 = vmatpush1.bf16.msra.mxu0 %v8491
    %8703 = vmatprep.subr.bf16.mxu0 0
    %8704 = vmatpush1.bf16.msra.mxu0 %v8492
    %8705 = vmatprep.subr.bf16.mxu0 0
    %8706 = vmatpush1.bf16.msra.mxu0 %v8493
    %8707 = vmatprep.subr.bf16.mxu0 0
    %8708 = vmatpush1.bf16.msra.mxu0 %v8494
    %8709 = vmatprep.subr.bf16.mxu0 0
    %8710 = vmatpush1.bf16.msra.mxu0 %v8495
    %8711 = vmatprep.subr.bf16.mxu0 0
    %8712 = vmatpush1.bf16.msra.mxu0 %v8496
    %8713 = vmatprep.mubr.bf16.mxu0 %v8041
    %8714 = vmatmul.mubr.bf16.gmra.mrb[0].mxu0 %v8040
    %v8715 = vpop.f32.mrb[0].mxu0
    %v8716 = vadd.f32 %v8676, %v8715
    %v8717 = vpop.f32.mrb[0].mxu0
    %v8718 = vpop.f32.mrb[0].mxu0
    %v8719 = vpop.f32.mrb[0].mxu0
    %8720 = vdwg.mxu0
    %8721 = vst [vmem:[#allocation17] sm:$0xff] %v8716
    // Predicated region
    $region74: #{decoder_forward.1} parent=1 // pred_check
      _
    $region75: #{decoder_forward.1} parent=1 // pred_check_branch
      %8723 = sbr.rel (0) target = $region77
    $region76: #{decoder_forward.1} parent=1 // pred_region
      %s8725 = ssub.s32 128, 128
      %8726 = vsyncadd [#allocation4], %s8725
      %s8728 = sshll.u32 [#allocation17], 4
      %s8729 = int_to_ptr.vmem [resolvable:$true] %s8728
      %8731 = dma.vmem_to_hbm [thread:$0]  %s8729, 128, %s9, [#allocation4]
    $region77: #{decoder_forward.1} parent=1 // pred_fallthru
      _
    // Predicated region
    $region78: #{decoder_forward.1} parent=1 // pred_check
      _
    $region79: #{decoder_forward.1} parent=1 // pred_check_branch
      %8733 = sbr.rel (0) target = $region81
    $region80: #{decoder_forward.1} parent=1 // pred_region
      %8734 = dma.done [#allocation4], 128
    $region81: #{decoder_forward.1} parent=1 // pred_fallthru
      _
    %8735 = vsyncpa [#allocation3], 1
    %8736 = vsyncpa [#allocation6], 1
    %8737 = vsyncpa [#allocation9], 1
    %8738 = vsyncpa [#allocation12], 1
    %8739 = vsyncpa [#allocation15], 1
    %8740 = vsyncpa [#allocation4], 1

</llo_original>
